<compile_context>
chip_gen: v5e
topology: v5e:2x2
jax: 0.10.0
libtpu: 0.0.40
codegen_flags: <defaults>
</compile_context>

<pallas_src>
import functools

import jax
import jax.numpy as jnp
import numpy as np
from jax.experimental import pallas as pl
from jax.experimental.pallas import tpu as pltpu

_EPS = 1e-5  # nn.BatchNorm2d default


# --------------------------------- kernel ---------------------------------- #
def _bottleneck_kernel(*refs, stride, dim_match, h, w):
    if dim_match:
        (xp_ref, xr_ref, w1_ref, w2_ref, wse1_ref, wse2_ref,
         b2_ref, a_ref, b3_ref, o_ref, rp_ref) = refs
        wsc_ref = bsc_ref = None
    else:
        (xp_ref, xr_ref, w1_ref, w2_ref, wsc_ref, wse1_ref, wse2_ref,
         b2_ref, a_ref, b3_ref, bsc_ref, o_ref, rp_ref) = refs

    bt = xp_ref.shape[0]
    cin = xp_ref.shape[-1]
    _, ho, wo, _ = xr_ref.shape
    cout = o_ref.shape[-1]
    m1 = bt * h * w
    m2 = bt * ho * wo

    # ---- conv1: 3x3 / stride 1 / pad 1 as 9 per-tap MXU matmuls, f32 acc.
    # No im2col scratch: taps are read straight off the pre-padded, pre-BN'ed
    # bf16 input block; w1_ref[k] is a static (cin, cout) weight slice.
    acc1 = None
    for dy in range(3):
        for dx in range(3):
            k = dy * 3 + dx
            tap = xp_ref[:, dy:dy + h, dx:dx + w, :].reshape(m1, cin)
            p = jnp.dot(tap, w1_ref[k], preferred_element_type=jnp.float32)
            acc1 = p if acc1 is None else acc1 + p

    # ---- folded BN2 bias + PReLU (f32 elementwise, VPU).
    r = acc1 + b2_ref[...]
    r = jnp.where(r > 0, r, a_ref[...] * r)

    # ---- conv2 input: padded VMEM scratch.  Zero ONLY the 1-px border strips
    # (rows 0 / h+1 and cols 0 / w+1); the interior is fully overwritten.
    wp_pad = rp_ref.shape[2]
    zrow = jnp.zeros((bt, 1, wp_pad, cout), rp_ref.dtype)
    zcol = jnp.zeros((bt, h + 2, 1, cout), rp_ref.dtype)
    rp_ref[:, 0:1, :, :] = zrow
    rp_ref[:, h + 1:h + 2, :, :] = zrow
    rp_ref[:, :, 0:1, :] = zcol
    rp_ref[:, :, w + 1:w + 2, :] = zcol
    rp_ref[:, 1:h + 1, 1:w + 1, :] = r.reshape(bt, h, w, cout).astype(rp_ref.dtype)

    # ---- conv2: 3x3 / stride / pad 1, again 9 per-tap matmuls with f32 acc.
    acc2 = None
    for dy in range(3):
        for dx in range(3):
            k = dy * 3 + dx
            if stride == 1:
                tap = rp_ref[:, dy:dy + h, dx:dx + w, :]
            else:  # output (yo, xo) reads padded (s*yo+dy, s*xo+dx)
                tap = rp_ref[:, pl.ds(dy, ho, stride=stride),
                             pl.ds(dx, wo, stride=stride), :]
            p = jnp.dot(tap.reshape(m2, cout), w2_ref[k],
                        preferred_element_type=jnp.float32)
            acc2 = p if acc2 is None else acc2 + p
    r2 = (acc2 + b3_ref[...]).reshape(bt, ho * wo, cout)      # folded BN3

    # ---- SE: global average pool -> fc1 -> relu -> fc2 -> sigmoid -> scale.
    se = jnp.mean(r2, axis=1)                                 # (bt, cout) f32
    se = jnp.dot(se.astype(jnp.bfloat16), wse1_ref[...],
                 preferred_element_type=jnp.float32)
    se = jnp.maximum(se, 0.0)
    se = jnp.dot(se.astype(jnp.bfloat16), wse2_ref[...],
                 preferred_element_type=jnp.float32)
    se = 1.0 / (1.0 + jnp.exp(-se))                           # exact sigmoid
    res = r2 * se.reshape(bt, 1, cout)

    # ---- shortcut: f32 identity, or folded (1x1 conv + BN) on pre-strided x.
    if dim_match:
        sc = xr_ref[...].astype(jnp.float32).reshape(bt, ho * wo, cout)
    else:
        sc = (jnp.dot(xr_ref[...].reshape(m2, cin), wsc_ref[...],
                      preferred_element_type=jnp.float32)
              + bsc_ref[...]).reshape(bt, ho * wo, cout)

    o_ref[...] = (sc + res).astype(o_ref.dtype)


# -------------------------------- wrapper ----------------------------------- #
def bottleneck_ir_se(x_nchw, params, *, stride=1, dim_match=False,
                     batch_tile=None, out_dtype=jnp.float32):
    """Forward pass of BottleNeck_IR_SE (eval-mode BN).  NCHW in / NCHW out."""
    n, cin, h, w = x_nchw.shape
    cout = params['conv1_w'].shape[0]
    if dim_match:
        # PyTorch's identity shortcut only shape-checks when stride == 1.
        assert stride == 1 and cin == cout, \
            "dim_match requires stride == 1 and in_channel == out_channel"
    if stride > 1:
        assert h % stride == 0 and w % stride == 0
    ho = (h - 1) // stride + 1
    wo = (w - 1) // stride + 1

    # Batch tile: keep the grid >= 4 steps (>= 2 per TC on v7x) while still
    # growing the MXU M dimension with N on v5e/v6e.
    if batch_tile is None:
        batch_tile = max(1, min(8, n // 4))
    bt = max(1, min(batch_tile, n))
    while n % bt:
        bt -= 1
    while bt > 1 and (n // bt) < 4:
        bt -= 1
        while n % bt:
            bt -= 1

    x = jnp.transpose(x_nchw, (0, 2, 3, 1)).astype(jnp.float32)      # NHWC

    def fold_bn(prefix):
        g, b = params[prefix + '_gamma'], params[prefix + '_beta']
        m, v = params[prefix + '_mean'], params[prefix + '_var']
        scale = (g / jnp.sqrt(v + _EPS)).astype(jnp.float32)
        bias = (b - m * scale).astype(jnp.float32)
        return scale, bias

    s1, b1 = fold_bn('bn1')
    s2, b2 = fold_bn('bn2')
    s3, b3 = fold_bn('bn3')

    # BN1 affine + zero padding precomputed here (fuses with the transpose).
    # Pad the W (sublane) dim to a multiple of 8 for tile-aligned planes.
    wp_pad = -(-(w + 2) // 8) * 8
    xbn = x * s1 + b1
    xp = jnp.pad(xbn, ((0, 0), (1, 1), (1, wp_pad - w - 1), (0, 0))
                 ).astype(jnp.bfloat16)

    # Shortcut-branch input, pre-strided when stride > 1.  f32 for the
    # identity path (no bf16 round trip), bf16 when fed into the 1x1 MXU conv.
    xr = x
    if stride > 1:
        xr = xr[:, ::stride, ::stride, :]
    xr = xr.astype(jnp.float32 if dim_match else jnp.bfloat16)

    # torch (O, I, 3, 3) -> (9, I, O); fold the following BN scale into O.
    def conv_w3(name, scale):
        wt = jnp.transpose(params[name], (2, 3, 1, 0))         # (3, 3, I, O)
        kh, kw, i, o = wt.shape
        return (wt.reshape(kh * kw, i, o) * scale[None, None, :]
                ).astype(jnp.bfloat16)

    w1 = conv_w3('conv1_w', s2)                                # (9, cin,  cout)
    w2 = conv_w3('conv2_w', s3)                                # (9, cout, cout)
    wse1 = params['se_fc1_w'][:, :, 0, 0].T.astype(jnp.bfloat16)  # (cout, cmid)
    wse2 = params['se_fc2_w'][:, :, 0, 0].T.astype(jnp.bfloat16)  # (cmid, cout)

    b2v = b2.reshape(1, cout)
    b3v = b3.reshape(1, cout)
    av = params['prelu_a'].reshape(1, cout).astype(jnp.float32)

    if dim_match:
        operands = (xp, xr, w1, w2, wse1, wse2, b2v, av, b3v)
    else:
        ssc, bsc = fold_bn('sc_bn')
        wsc = (params['sc_conv_w'][:, :, 0, 0].T * ssc[None, :]
               ).astype(jnp.bfloat16)                          # (cin, cout)
        bscv = bsc.reshape(1, cout)
        operands = (xp, xr, w1, w2, wsc, wse1, wse2, b2v, av, b3v, bscv)

    def const_spec(shape):
        nd = len(shape)
        return pl.BlockSpec(shape, lambda i, _nd=nd: (0,) * _nd)

    in_specs = [
        pl.BlockSpec((bt, h + 2, wp_pad, cin), lambda i: (i, 0, 0, 0)),
        pl.BlockSpec((bt, ho, wo, cin), lambda i: (i, 0, 0, 0)),
    ] + [const_spec(op.shape) for op in operands[2:]]

    # VMEM budget from the actual per-step footprint (double-buffered blocks,
    # scratch, plus headroom for the conv accumulators / tap staging).
    def nbytes(shape, dtype):
        return int(np.prod(shape)) * jnp.dtype(dtype).itemsize

    est = 2 * nbytes((bt, h + 2, wp_pad, cin), jnp.bfloat16)
    est += 2 * nbytes((bt, ho, wo, cin), xr.dtype)
    est += 2 * sum(nbytes(op.shape, op.dtype) for op in operands[2:])
    est += 2 * nbytes((bt, ho * wo, cout), out_dtype)
    est += nbytes((bt, h + 2, wp_pad, cout), jnp.bfloat16)     # rp scratch
    est += 6 * nbytes((bt, h * w, cout), jnp.float32)          # acc/tap temps
    vmem_limit = int(min(64 * 1024 * 1024, max(32 * 1024 * 1024, 2 * est)))

    out = pl.pallas_call(
        functools.partial(_bottleneck_kernel, stride=stride,
                          dim_match=dim_match, h=h, w=w),
        grid=(n // bt,),
        in_specs=in_specs,
        out_specs=pl.BlockSpec((bt, ho * wo, cout), lambda i: (i, 0, 0)),
        out_shape=jax.ShapeDtypeStruct((n, ho * wo, cout), out_dtype),
        scratch_shapes=[
            pltpu.VMEM((bt, h + 2, wp_pad, cout), jnp.bfloat16),  # padded act
        ],
        compiler_params=pltpu.CompilerParams(
            dimension_semantics=("parallel",),          # megacore / dual-TC v7x
            vmem_limit_bytes=vmem_limit,
        ),
    )(*operands)

    out = out.reshape(n, ho, wo, cout)
    return jnp.transpose(out, (0, 3, 1, 2))                       # back to NCHW


# ---------------------- pure-JAX reference (for checking) ------------------- #
def _conv_ref(x_nhwc, w_oihw, stride, pad):
    w = jnp.transpose(w_oihw, (2, 3, 1, 0))
    return jax.lax.conv_general_dilated(
        x_nhwc, w, (stride, stride), ((pad, pad), (pad, pad)),
        dimension_numbers=('NHWC', 'HWIO', 'NHWC'),
        precision=jax.lax.Precision.HIGHEST)


def reference_forward(x_nchw, p, *, stride=1, dim_match=False):
    x = jnp.transpose(x_nchw, (0, 2, 3, 1)).astype(jnp.float32)

    def bn(y, prefix):
        g, b = p[prefix + '_gamma'], p[prefix + '_beta']
        m, v = p[prefix + '_mean'], p[prefix + '_var']
        return (y - m) / jnp.sqrt(v + _EPS) * g + b

    r = bn(x, 'bn1')
    r = _conv_ref(r, p['conv1_w'], 1, 1)
    r = bn(r, 'bn2')
    r = jnp.where(r > 0, r, p['prelu_a'] * r)
    r = _conv_ref(r, p['conv2_w'], stride, 1)
    r = bn(r, 'bn3')
    se = jnp.mean(r, axis=(1, 2), keepdims=True)
    se = _conv_ref(se, p['se_fc1_w'], 1, 0)
    se = jnp.maximum(se, 0.0)
    se = _conv_ref(se, p['se_fc2_w'], 1, 0)
    se = 1.0 / (1.0 + jnp.exp(-se))
    r = r * se
    if dim_match:
        sc = x
    else:
        sc = _conv_ref(x, p['sc_conv_w'], stride, 0)
        sc = bn(sc, 'sc_bn')
    return jnp.transpose(sc + r, (0, 3, 1, 2))


# --------------------------- deterministic params --------------------------- #
def init_params(key, cin, cout, reduction=16):
    ks = jax.random.split(key, 24)

    def nrm(k, shape, s):
        return (s * jax.random.normal(k, shape)).astype(jnp.float32)

    def uni(k, shape):
        return jax.random.uniform(k, shape, jnp.float32, 0.5, 1.5)

    cmid = cout // reduction
    return {
        'bn1_gamma': uni(ks[0], (cin,)), 'bn1_beta': nrm(ks[1], (cin,), 0.1),
        'bn1_mean': nrm(ks[2], (cin,), 0.1), 'bn1_var': uni(ks[3], (cin,)),
        'conv1_w': nrm(ks[4], (cout, cin, 3, 3), 0.05),
        'bn2_gamma': uni(ks[5], (cout,)), 'bn2_beta': nrm(ks[6], (cout,), 0.1),
        'bn2_mean': nrm(ks[7], (cout,), 0.1), 'bn2_var': uni(ks[8], (cout,)),
        'prelu_a': jnp.full((cout,), 0.25, jnp.float32),
        'conv2_w': nrm(ks[9], (cout, cout, 3, 3), 0.05),
        'bn3_gamma': uni(ks[10], (cout,)), 'bn3_beta': nrm(ks[11], (cout,), 0.1),
        'bn3_mean': nrm(ks[12], (cout,), 0.1), 'bn3_var': uni(ks[13], (cout,)),
        'se_fc1_w': nrm(ks[14], (cmid, cout, 1, 1), 0.2),
        'se_fc2_w': nrm(ks[15], (cout, cmid, 1, 1), 0.2),
        'sc_conv_w': nrm(ks[16], (cout, cin, 1, 1), 0.1),
        'sc_bn_gamma': uni(ks[17], (cout,)), 'sc_bn_beta': nrm(ks[18], (cout,), 0.1),
        'sc_bn_mean': nrm(ks[19], (cout,), 0.1), 'sc_bn_var': uni(ks[20], (cout,)),
    }


if __name__ == "__main__":
    key = jax.random.PRNGKey(0)
    kx, kp = jax.random.split(key)

    # Small but lane-friendly shapes (IR-SE blocks use 64..512 channels; the SE
    # reduction of 16 needs channels >= 16 anyway).
    N, C, H, W = 4, 128, 16, 16
    x = jax.random.normal(kx, (N, C, H, W), jnp.float32)          # NCHW input
    params = init_params(kp, C, C)

    # (stride, dim_match): conv shortcut, identity shortcut, strided block.
    for stride, dim_match in ((1, False), (1, True), (2, False)):
        out = jax.block_until_ready(
            bottleneck_ir_se(x, params, stride=stride, dim_match=dim_match))
        ref = jax.block_until_ready(
            reference_forward(x, params, stride=stride, dim_match=dim_match))
        assert out.shape == ref.shape == (N, C, H // stride, W // stride)
        # Kernel matmul inputs/activations are bf16 (f32 accumulate); the
        # reference is full f32 -> tolerance sized for bf16 rounding only.
        np.testing.assert_allclose(np.asarray(out), np.asarray(ref),
                                   atol=7e-2, rtol=5e-2)
    print("KERNEL_OK")
</pallas_src>

<mosaic_0001>
module attributes {stable_mosaic.version = 11 : i64} {
  func.func @_bottleneck_kernel(%arg0: i32, %arg1: memref<1x18x24x128xbf16, #tpu.memory_space<vmem>>, %arg2: memref<1x16x16x128xbf16, #tpu.memory_space<vmem>>, %arg3: memref<9x128x128xbf16, #tpu.memory_space<vmem>>, %arg4: memref<9x128x128xbf16, #tpu.memory_space<vmem>>, %arg5: memref<128x128xbf16, #tpu.memory_space<vmem>>, %arg6: memref<128x8xbf16, #tpu.memory_space<vmem>>, %arg7: memref<8x128xbf16, #tpu.memory_space<vmem>>, %arg8: memref<1x128xf32, #tpu.memory_space<vmem>>, %arg9: memref<1x128xf32, #tpu.memory_space<vmem>>, %arg10: memref<1x128xf32, #tpu.memory_space<vmem>>, %arg11: memref<1x128xf32, #tpu.memory_space<vmem>>, %arg12: memref<1x256x128xf32, #tpu.memory_space<vmem>>, %arg13: memref<1x18x24x128xbf16, #tpu.memory_space<vmem>>) attributes {dimension_semantics = [#tpu.dimension_semantics<parallel>], iteration_bounds = array<i64: 4>, scalar_prefetch = 0 : i64, scratch_operands = 1 : i64, tpu.core_type = #tpu.core_type<tc>, window_params = [{transform_indices = @transform_0, window_bounds = array<i64: 1, 18, 24, 128>}, {transform_indices = @transform_1, window_bounds = array<i64: 1, 16, 16, 128>}, {pipeline_mode = #tpu.pipeline_mode<synchronous>, transform_indices = @transform_2, window_bounds = array<i64: 9, 128, 128>}, {pipeline_mode = #tpu.pipeline_mode<synchronous>, transform_indices = @transform_3, window_bounds = array<i64: 9, 128, 128>}, {pipeline_mode = #tpu.pipeline_mode<synchronous>, transform_indices = @transform_4, window_bounds = array<i64: 128, 128>}, {pipeline_mode = #tpu.pipeline_mode<synchronous>, transform_indices = @transform_5, window_bounds = array<i64: 128, 8>}, {pipeline_mode = #tpu.pipeline_mode<synchronous>, transform_indices = @transform_6, window_bounds = array<i64: 8, 128>}, {pipeline_mode = #tpu.pipeline_mode<synchronous>, transform_indices = @transform_7, window_bounds = array<i64: 1, 128>}, {pipeline_mode = #tpu.pipeline_mode<synchronous>, transform_indices = @transform_8, window_bounds = array<i64: 1, 128>}, {pipeline_mode = #tpu.pipeline_mode<synchronous>, transform_indices = @transform_9, window_bounds = array<i64: 1, 128>}, {pipeline_mode = #tpu.pipeline_mode<synchronous>, transform_indices = @transform_10, window_bounds = array<i64: 1, 128>}, {transform_indices = @transform_11, window_bounds = array<i64: 1, 256, 128>}]} {
    %c0 = arith.constant 0 : index
    %c0_0 = arith.constant 0 : index
    %c0_1 = arith.constant 0 : index
    %c0_2 = arith.constant 0 : index
    %0 = vector.load %arg1[%c0, %c0_0, %c0_1, %c0_2] : memref<1x18x24x128xbf16, #tpu.memory_space<vmem>>, vector<1x16x16x128xbf16>
    %1 = vector.shape_cast %0 : vector<1x16x16x128xbf16> to vector<256x128xbf16>
    %c0_3 = arith.constant 0 : index
    %c0_4 = arith.constant 0 : index
    %c0_5 = arith.constant 0 : index
    %2 = vector.load %arg3[%c0_3, %c0_4, %c0_5] : memref<9x128x128xbf16, #tpu.memory_space<vmem>>, vector<1x128x128xbf16>
    %3 = vector.shape_cast %2 : vector<1x128x128xbf16> to vector<128x128xbf16>
    %cst = arith.constant dense<0.000000e+00> : vector<256x128xf32>
    %4 = tpu.matmul %1, %3, %cst {dimension_numbers = #tpu.dot_dimension_numbers<[1], [0], [0], [1], [0, 0, 1, 1], [], []>} : vector<256x128xbf16>, vector<128x128xbf16>, vector<256x128xf32> -> vector<256x128xf32>
    %c0_6 = arith.constant 0 : index
    %c0_7 = arith.constant 0 : index
    %c1 = arith.constant 1 : index
    %c0_8 = arith.constant 0 : index
    %5 = vector.load %arg1[%c0_6, %c0_7, %c1, %c0_8] : memref<1x18x24x128xbf16, #tpu.memory_space<vmem>>, vector<1x16x16x128xbf16>
    %6 = vector.shape_cast %5 : vector<1x16x16x128xbf16> to vector<256x128xbf16>
    %c1_9 = arith.constant 1 : index
    %c0_10 = arith.constant 0 : index
    %c0_11 = arith.constant 0 : index
    %7 = vector.load %arg3[%c1_9, %c0_10, %c0_11] : memref<9x128x128xbf16, #tpu.memory_space<vmem>>, vector<1x128x128xbf16>
    %8 = vector.shape_cast %7 : vector<1x128x128xbf16> to vector<128x128xbf16>
    %cst_12 = arith.constant dense<0.000000e+00> : vector<256x128xf32>
    %9 = tpu.matmul %6, %8, %cst_12 {dimension_numbers = #tpu.dot_dimension_numbers<[1], [0], [0], [1], [0, 0, 1, 1], [], []>} : vector<256x128xbf16>, vector<128x128xbf16>, vector<256x128xf32> -> vector<256x128xf32>
    %10 = arith.addf %4, %9 : vector<256x128xf32>
    %c0_13 = arith.constant 0 : index
    %c0_14 = arith.constant 0 : index
    %c2 = arith.constant 2 : index
    %c0_15 = arith.constant 0 : index
    %11 = vector.load %arg1[%c0_13, %c0_14, %c2, %c0_15] : memref<1x18x24x128xbf16, #tpu.memory_space<vmem>>, vector<1x16x16x128xbf16>
    %12 = vector.shape_cast %11 : vector<1x16x16x128xbf16> to vector<256x128xbf16>
    %c2_16 = arith.constant 2 : index
    %c0_17 = arith.constant 0 : index
    %c0_18 = arith.constant 0 : index
    %13 = vector.load %arg3[%c2_16, %c0_17, %c0_18] : memref<9x128x128xbf16, #tpu.memory_space<vmem>>, vector<1x128x128xbf16>
    %14 = vector.shape_cast %13 : vector<1x128x128xbf16> to vector<128x128xbf16>
    %cst_19 = arith.constant dense<0.000000e+00> : vector<256x128xf32>
    %15 = tpu.matmul %12, %14, %cst_19 {dimension_numbers = #tpu.dot_dimension_numbers<[1], [0], [0], [1], [0, 0, 1, 1], [], []>} : vector<256x128xbf16>, vector<128x128xbf16>, vector<256x128xf32> -> vector<256x128xf32>
    %16 = arith.addf %10, %15 : vector<256x128xf32>
    %c0_20 = arith.constant 0 : index
    %c1_21 = arith.constant 1 : index
    %c0_22 = arith.constant 0 : index
    %c0_23 = arith.constant 0 : index
    %17 = vector.load %arg1[%c0_20, %c1_21, %c0_22, %c0_23] : memref<1x18x24x128xbf16, #tpu.memory_space<vmem>>, vector<1x16x16x128xbf16>
    %18 = vector.shape_cast %17 : vector<1x16x16x128xbf16> to vector<256x128xbf16>
    %c3 = arith.constant 3 : index
    %c0_24 = arith.constant 0 : index
    %c0_25 = arith.constant 0 : index
    %19 = vector.load %arg3[%c3, %c0_24, %c0_25] : memref<9x128x128xbf16, #tpu.memory_space<vmem>>, vector<1x128x128xbf16>
    %20 = vector.shape_cast %19 : vector<1x128x128xbf16> to vector<128x128xbf16>
    %cst_26 = arith.constant dense<0.000000e+00> : vector<256x128xf32>
    %21 = tpu.matmul %18, %20, %cst_26 {dimension_numbers = #tpu.dot_dimension_numbers<[1], [0], [0], [1], [0, 0, 1, 1], [], []>} : vector<256x128xbf16>, vector<128x128xbf16>, vector<256x128xf32> -> vector<256x128xf32>
    %22 = arith.addf %16, %21 : vector<256x128xf32>
    %c0_27 = arith.constant 0 : index
    %c1_28 = arith.constant 1 : index
    %c1_29 = arith.constant 1 : index
    %c0_30 = arith.constant 0 : index
    %23 = vector.load %arg1[%c0_27, %c1_28, %c1_29, %c0_30] : memref<1x18x24x128xbf16, #tpu.memory_space<vmem>>, vector<1x16x16x128xbf16>
    %24 = vector.shape_cast %23 : vector<1x16x16x128xbf16> to vector<256x128xbf16>
    %c4 = arith.constant 4 : index
    %c0_31 = arith.constant 0 : index
    %c0_32 = arith.constant 0 : index
    %25 = vector.load %arg3[%c4, %c0_31, %c0_32] : memref<9x128x128xbf16, #tpu.memory_space<vmem>>, vector<1x128x128xbf16>
    %26 = vector.shape_cast %25 : vector<1x128x128xbf16> to vector<128x128xbf16>
    %cst_33 = arith.constant dense<0.000000e+00> : vector<256x128xf32>
    %27 = tpu.matmul %24, %26, %cst_33 {dimension_numbers = #tpu.dot_dimension_numbers<[1], [0], [0], [1], [0, 0, 1, 1], [], []>} : vector<256x128xbf16>, vector<128x128xbf16>, vector<256x128xf32> -> vector<256x128xf32>
    %28 = arith.addf %22, %27 : vector<256x128xf32>
    %c0_34 = arith.constant 0 : index
    %c1_35 = arith.constant 1 : index
    %c2_36 = arith.constant 2 : index
    %c0_37 = arith.constant 0 : index
    %29 = vector.load %arg1[%c0_34, %c1_35, %c2_36, %c0_37] : memref<1x18x24x128xbf16, #tpu.memory_space<vmem>>, vector<1x16x16x128xbf16>
    %30 = vector.shape_cast %29 : vector<1x16x16x128xbf16> to vector<256x128xbf16>
    %c5 = arith.constant 5 : index
    %c0_38 = arith.constant 0 : index
    %c0_39 = arith.constant 0 : index
    %31 = vector.load %arg3[%c5, %c0_38, %c0_39] : memref<9x128x128xbf16, #tpu.memory_space<vmem>>, vector<1x128x128xbf16>
    %32 = vector.shape_cast %31 : vector<1x128x128xbf16> to vector<128x128xbf16>
    %cst_40 = arith.constant dense<0.000000e+00> : vector<256x128xf32>
    %33 = tpu.matmul %30, %32, %cst_40 {dimension_numbers = #tpu.dot_dimension_numbers<[1], [0], [0], [1], [0, 0, 1, 1], [], []>} : vector<256x128xbf16>, vector<128x128xbf16>, vector<256x128xf32> -> vector<256x128xf32>
    %34 = arith.addf %28, %33 : vector<256x128xf32>
    %c0_41 = arith.constant 0 : index
    %c2_42 = arith.constant 2 : index
    %c0_43 = arith.constant 0 : index
    %c0_44 = arith.constant 0 : index
    %35 = vector.load %arg1[%c0_41, %c2_42, %c0_43, %c0_44] : memref<1x18x24x128xbf16, #tpu.memory_space<vmem>>, vector<1x16x16x128xbf16>
    %36 = vector.shape_cast %35 : vector<1x16x16x128xbf16> to vector<256x128xbf16>
    %c6 = arith.constant 6 : index
    %c0_45 = arith.constant 0 : index
    %c0_46 = arith.constant 0 : index
    %37 = vector.load %arg3[%c6, %c0_45, %c0_46] : memref<9x128x128xbf16, #tpu.memory_space<vmem>>, vector<1x128x128xbf16>
    %38 = vector.shape_cast %37 : vector<1x128x128xbf16> to vector<128x128xbf16>
    %cst_47 = arith.constant dense<0.000000e+00> : vector<256x128xf32>
    %39 = tpu.matmul %36, %38, %cst_47 {dimension_numbers = #tpu.dot_dimension_numbers<[1], [0], [0], [1], [0, 0, 1, 1], [], []>} : vector<256x128xbf16>, vector<128x128xbf16>, vector<256x128xf32> -> vector<256x128xf32>
    %40 = arith.addf %34, %39 : vector<256x128xf32>
    %c0_48 = arith.constant 0 : index
    %c2_49 = arith.constant 2 : index
    %c1_50 = arith.constant 1 : index
    %c0_51 = arith.constant 0 : index
    %41 = vector.load %arg1[%c0_48, %c2_49, %c1_50, %c0_51] : memref<1x18x24x128xbf16, #tpu.memory_space<vmem>>, vector<1x16x16x128xbf16>
    %42 = vector.shape_cast %41 : vector<1x16x16x128xbf16> to vector<256x128xbf16>
    %c7 = arith.constant 7 : index
    %c0_52 = arith.constant 0 : index
    %c0_53 = arith.constant 0 : index
    %43 = vector.load %arg3[%c7, %c0_52, %c0_53] : memref<9x128x128xbf16, #tpu.memory_space<vmem>>, vector<1x128x128xbf16>
    %44 = vector.shape_cast %43 : vector<1x128x128xbf16> to vector<128x128xbf16>
    %cst_54 = arith.constant dense<0.000000e+00> : vector<256x128xf32>
    %45 = tpu.matmul %42, %44, %cst_54 {dimension_numbers = #tpu.dot_dimension_numbers<[1], [0], [0], [1], [0, 0, 1, 1], [], []>} : vector<256x128xbf16>, vector<128x128xbf16>, vector<256x128xf32> -> vector<256x128xf32>
    %46 = arith.addf %40, %45 : vector<256x128xf32>
    %c0_55 = arith.constant 0 : index
    %c2_56 = arith.constant 2 : index
    %c2_57 = arith.constant 2 : index
    %c0_58 = arith.constant 0 : index
    %47 = vector.load %arg1[%c0_55, %c2_56, %c2_57, %c0_58] : memref<1x18x24x128xbf16, #tpu.memory_space<vmem>>, vector<1x16x16x128xbf16>
    %48 = vector.shape_cast %47 : vector<1x16x16x128xbf16> to vector<256x128xbf16>
    %c8 = arith.constant 8 : index
    %c0_59 = arith.constant 0 : index
    %c0_60 = arith.constant 0 : index
    %49 = vector.load %arg3[%c8, %c0_59, %c0_60] : memref<9x128x128xbf16, #tpu.memory_space<vmem>>, vector<1x128x128xbf16>
    %50 = vector.shape_cast %49 : vector<1x128x128xbf16> to vector<128x128xbf16>
    %cst_61 = arith.constant dense<0.000000e+00> : vector<256x128xf32>
    %51 = tpu.matmul %48, %50, %cst_61 {dimension_numbers = #tpu.dot_dimension_numbers<[1], [0], [0], [1], [0, 0, 1, 1], [], []>} : vector<256x128xbf16>, vector<128x128xbf16>, vector<256x128xf32> -> vector<256x128xf32>
    %52 = arith.addf %46, %51 : vector<256x128xf32>
    %c0_62 = arith.constant 0 : index
    %c0_63 = arith.constant 0 : index
    %53 = vector.load %arg8[%c0_62, %c0_63] : memref<1x128xf32, #tpu.memory_space<vmem>>, vector<1x128xf32>
    %54 = vector.broadcast %53 : vector<1x128xf32> to vector<256x128xf32>
    %55 = arith.addf %52, %54 : vector<256x128xf32>
    %cst_64 = arith.constant 0.000000e+00 : f32
    %56 = vector.broadcast %cst_64 : f32 to vector<256x128xf32>
    %57 = arith.cmpf ogt, %55, %56 : vector<256x128xf32>
    %c0_65 = arith.constant 0 : index
    %c0_66 = arith.constant 0 : index
    %58 = vector.load %arg9[%c0_65, %c0_66] : memref<1x128xf32, #tpu.memory_space<vmem>>, vector<1x128xf32>
    %59 = vector.broadcast %58 : vector<1x128xf32> to vector<256x128xf32>
    %60 = arith.mulf %59, %55 : vector<256x128xf32>
    %61 = arith.select %57, %55, %60 : vector<256x128xi1>, vector<256x128xf32>
    %cst_67 = arith.constant 0.000000e+00 : bf16
    %62 = vector.broadcast %cst_67 : bf16 to vector<1x1x24x128xbf16>
    %cst_68 = arith.constant 0.000000e+00 : bf16
    %63 = vector.broadcast %cst_68 : bf16 to vector<1x18x1x128xbf16>
    %c0_69 = arith.constant 0 : index
    %c0_70 = arith.constant 0 : index
    %c0_71 = arith.constant 0 : index
    %c0_72 = arith.constant 0 : index
    %64 = vector.load %arg13[%c0_69, %c0_70, %c0_71, %c0_72] : memref<1x18x24x128xbf16, #tpu.memory_space<vmem>>, vector<1x1x24x128xbf16>
    tpu.vector_store %arg13[%c0_69, %c0_70, %c0_71, %c0_72], %62 {strides = array<i32>} : memref<1x18x24x128xbf16, #tpu.memory_space<vmem>>, vector<1x1x24x128xbf16>,
    %c0_73 = arith.constant 0 : index
    %c17 = arith.constant 17 : index
    %c0_74 = arith.constant 0 : index
    %c0_75 = arith.constant 0 : index
    %65 = vector.load %arg13[%c0_73, %c17, %c0_74, %c0_75] : memref<1x18x24x128xbf16, #tpu.memory_space<vmem>>, vector<1x1x24x128xbf16>
    tpu.vector_store %arg13[%c0_73, %c17, %c0_74, %c0_75], %62 {strides = array<i32>} : memref<1x18x24x128xbf16, #tpu.memory_space<vmem>>, vector<1x1x24x128xbf16>,
    %c0_76 = arith.constant 0 : index
    %c0_77 = arith.constant 0 : index
    %c0_78 = arith.constant 0 : index
    %c0_79 = arith.constant 0 : index
    %66 = vector.load %arg13[%c0_76, %c0_77, %c0_78, %c0_79] : memref<1x18x24x128xbf16, #tpu.memory_space<vmem>>, vector<1x18x1x128xbf16>
    tpu.vector_store %arg13[%c0_76, %c0_77, %c0_78, %c0_79], %63 {strides = array<i32>} : memref<1x18x24x128xbf16, #tpu.memory_space<vmem>>, vector<1x18x1x128xbf16>,
    %c0_80 = arith.constant 0 : index
    %c0_81 = arith.constant 0 : index
    %c17_82 = arith.constant 17 : index
    %c0_83 = arith.constant 0 : index
    %67 = vector.load %arg13[%c0_80, %c0_81, %c17_82, %c0_83] : memref<1x18x24x128xbf16, #tpu.memory_space<vmem>>, vector<1x18x1x128xbf16>
    tpu.vector_store %arg13[%c0_80, %c0_81, %c17_82, %c0_83], %63 {strides = array<i32>} : memref<1x18x24x128xbf16, #tpu.memory_space<vmem>>, vector<1x18x1x128xbf16>,
    %68 = vector.shape_cast %61 : vector<256x128xf32> to vector<1x16x16x128xf32>
    %69 = arith.truncf %68 : vector<1x16x16x128xf32> to vector<1x16x16x128xbf16>
    %c0_84 = arith.constant 0 : index
    %c1_85 = arith.constant 1 : index
    %c1_86 = arith.constant 1 : index
    %c0_87 = arith.constant 0 : index
    %70 = vector.load %arg13[%c0_84, %c1_85, %c1_86, %c0_87] : memref<1x18x24x128xbf16, #tpu.memory_space<vmem>>, vector<1x16x16x128xbf16>
    tpu.vector_store %arg13[%c0_84, %c1_85, %c1_86, %c0_87], %69 {strides = array<i32>} : memref<1x18x24x128xbf16, #tpu.memory_space<vmem>>, vector<1x16x16x128xbf16>,
    %c0_88 = arith.constant 0 : index
    %c0_89 = arith.constant 0 : index
    %c0_90 = arith.constant 0 : index
    %c0_91 = arith.constant 0 : index
    %71 = vector.load %arg13[%c0_88, %c0_89, %c0_90, %c0_91] : memref<1x18x24x128xbf16, #tpu.memory_space<vmem>>, vector<1x16x16x128xbf16>
    %72 = vector.shape_cast %71 : vector<1x16x16x128xbf16> to vector<256x128xbf16>
    %c0_92 = arith.constant 0 : index
    %c0_93 = arith.constant 0 : index
    %c0_94 = arith.constant 0 : index
    %73 = vector.load %arg4[%c0_92, %c0_93, %c0_94] : memref<9x128x128xbf16, #tpu.memory_space<vmem>>, vector<1x128x128xbf16>
    %74 = vector.shape_cast %73 : vector<1x128x128xbf16> to vector<128x128xbf16>
    %cst_95 = arith.constant dense<0.000000e+00> : vector<256x128xf32>
    %75 = tpu.matmul %72, %74, %cst_95 {dimension_numbers = #tpu.dot_dimension_numbers<[1], [0], [0], [1], [0, 0, 1, 1], [], []>} : vector<256x128xbf16>, vector<128x128xbf16>, vector<256x128xf32> -> vector<256x128xf32>
    %c0_96 = arith.constant 0 : index
    %c0_97 = arith.constant 0 : index
    %c1_98 = arith.constant 1 : index
    %c0_99 = arith.constant 0 : index
    %76 = vector.load %arg13[%c0_96, %c0_97, %c1_98, %c0_99] : memref<1x18x24x128xbf16, #tpu.memory_space<vmem>>, vector<1x16x16x128xbf16>
    %77 = vector.shape_cast %76 : vector<1x16x16x128xbf16> to vector<256x128xbf16>
    %c1_100 = arith.constant 1 : index
    %c0_101 = arith.constant 0 : index
    %c0_102 = arith.constant 0 : index
    %78 = vector.load %arg4[%c1_100, %c0_101, %c0_102] : memref<9x128x128xbf16, #tpu.memory_space<vmem>>, vector<1x128x128xbf16>
    %79 = vector.shape_cast %78 : vector<1x128x128xbf16> to vector<128x128xbf16>
    %cst_103 = arith.constant dense<0.000000e+00> : vector<256x128xf32>
    %80 = tpu.matmul %77, %79, %cst_103 {dimension_numbers = #tpu.dot_dimension_numbers<[1], [0], [0], [1], [0, 0, 1, 1], [], []>} : vector<256x128xbf16>, vector<128x128xbf16>, vector<256x128xf32> -> vector<256x128xf32>
    %81 = arith.addf %75, %80 : vector<256x128xf32>
    %c0_104 = arith.constant 0 : index
    %c0_105 = arith.constant 0 : index
    %c2_106 = arith.constant 2 : index
    %c0_107 = arith.constant 0 : index
    %82 = vector.load %arg13[%c0_104, %c0_105, %c2_106, %c0_107] : memref<1x18x24x128xbf16, #tpu.memory_space<vmem>>, vector<1x16x16x128xbf16>
    %83 = vector.shape_cast %82 : vector<1x16x16x128xbf16> to vector<256x128xbf16>
    %c2_108 = arith.constant 2 : index
    %c0_109 = arith.constant 0 : index
    %c0_110 = arith.constant 0 : index
    %84 = vector.load %arg4[%c2_108, %c0_109, %c0_110] : memref<9x128x128xbf16, #tpu.memory_space<vmem>>, vector<1x128x128xbf16>
    %85 = vector.shape_cast %84 : vector<1x128x128xbf16> to vector<128x128xbf16>
    %cst_111 = arith.constant dense<0.000000e+00> : vector<256x128xf32>
    %86 = tpu.matmul %83, %85, %cst_111 {dimension_numbers = #tpu.dot_dimension_numbers<[1], [0], [0], [1], [0, 0, 1, 1], [], []>} : vector<256x128xbf16>, vector<128x128xbf16>, vector<256x128xf32> -> vector<256x128xf32>
    %87 = arith.addf %81, %86 : vector<256x128xf32>
    %c0_112 = arith.constant 0 : index
    %c1_113 = arith.constant 1 : index
    %c0_114 = arith.constant 0 : index
    %c0_115 = arith.constant 0 : index
    %88 = vector.load %arg13[%c0_112, %c1_113, %c0_114, %c0_115] : memref<1x18x24x128xbf16, #tpu.memory_space<vmem>>, vector<1x16x16x128xbf16>
    %89 = vector.shape_cast %88 : vector<1x16x16x128xbf16> to vector<256x128xbf16>
    %c3_116 = arith.constant 3 : index
    %c0_117 = arith.constant 0 : index
    %c0_118 = arith.constant 0 : index
    %90 = vector.load %arg4[%c3_116, %c0_117, %c0_118] : memref<9x128x128xbf16, #tpu.memory_space<vmem>>, vector<1x128x128xbf16>
    %91 = vector.shape_cast %90 : vector<1x128x128xbf16> to vector<128x128xbf16>
    %cst_119 = arith.constant dense<0.000000e+00> : vector<256x128xf32>
    %92 = tpu.matmul %89, %91, %cst_119 {dimension_numbers = #tpu.dot_dimension_numbers<[1], [0], [0], [1], [0, 0, 1, 1], [], []>} : vector<256x128xbf16>, vector<128x128xbf16>, vector<256x128xf32> -> vector<256x128xf32>
    %93 = arith.addf %87, %92 : vector<256x128xf32>
    %c0_120 = arith.constant 0 : index
    %c1_121 = arith.constant 1 : index
    %c1_122 = arith.constant 1 : index
    %c0_123 = arith.constant 0 : index
    %94 = vector.load %arg13[%c0_120, %c1_121, %c1_122, %c0_123] : memref<1x18x24x128xbf16, #tpu.memory_space<vmem>>, vector<1x16x16x128xbf16>
    %95 = vector.shape_cast %94 : vector<1x16x16x128xbf16> to vector<256x128xbf16>
    %c4_124 = arith.constant 4 : index
    %c0_125 = arith.constant 0 : index
    %c0_126 = arith.constant 0 : index
    %96 = vector.load %arg4[%c4_124, %c0_125, %c0_126] : memref<9x128x128xbf16, #tpu.memory_space<vmem>>, vector<1x128x128xbf16>
    %97 = vector.shape_cast %96 : vector<1x128x128xbf16> to vector<128x128xbf16>
    %cst_127 = arith.constant dense<0.000000e+00> : vector<256x128xf32>
    %98 = tpu.matmul %95, %97, %cst_127 {dimension_numbers = #tpu.dot_dimension_numbers<[1], [0], [0], [1], [0, 0, 1, 1], [], []>} : vector<256x128xbf16>, vector<128x128xbf16>, vector<256x128xf32> -> vector<256x128xf32>
    %99 = arith.addf %93, %98 : vector<256x128xf32>
    %c0_128 = arith.constant 0 : index
    %c1_129 = arith.constant 1 : index
    %c2_130 = arith.constant 2 : index
    %c0_131 = arith.constant 0 : index
    %100 = vector.load %arg13[%c0_128, %c1_129, %c2_130, %c0_131] : memref<1x18x24x128xbf16, #tpu.memory_space<vmem>>, vector<1x16x16x128xbf16>
    %101 = vector.shape_cast %100 : vector<1x16x16x128xbf16> to vector<256x128xbf16>
    %c5_132 = arith.constant 5 : index
    %c0_133 = arith.constant 0 : index
    %c0_134 = arith.constant 0 : index
    %102 = vector.load %arg4[%c5_132, %c0_133, %c0_134] : memref<9x128x128xbf16, #tpu.memory_space<vmem>>, vector<1x128x128xbf16>
    %103 = vector.shape_cast %102 : vector<1x128x128xbf16> to vector<128x128xbf16>
    %cst_135 = arith.constant dense<0.000000e+00> : vector<256x128xf32>
    %104 = tpu.matmul %101, %103, %cst_135 {dimension_numbers = #tpu.dot_dimension_numbers<[1], [0], [0], [1], [0, 0, 1, 1], [], []>} : vector<256x128xbf16>, vector<128x128xbf16>, vector<256x128xf32> -> vector<256x128xf32>
    %105 = arith.addf %99, %104 : vector<256x128xf32>
    %c0_136 = arith.constant 0 : index
    %c2_137 = arith.constant 2 : index
    %c0_138 = arith.constant 0 : index
    %c0_139 = arith.constant 0 : index
    %106 = vector.load %arg13[%c0_136, %c2_137, %c0_138, %c0_139] : memref<1x18x24x128xbf16, #tpu.memory_space<vmem>>, vector<1x16x16x128xbf16>
    %107 = vector.shape_cast %106 : vector<1x16x16x128xbf16> to vector<256x128xbf16>
    %c6_140 = arith.constant 6 : index
    %c0_141 = arith.constant 0 : index
    %c0_142 = arith.constant 0 : index
    %108 = vector.load %arg4[%c6_140, %c0_141, %c0_142] : memref<9x128x128xbf16, #tpu.memory_space<vmem>>, vector<1x128x128xbf16>
    %109 = vector.shape_cast %108 : vector<1x128x128xbf16> to vector<128x128xbf16>
    %cst_143 = arith.constant dense<0.000000e+00> : vector<256x128xf32>
    %110 = tpu.matmul %107, %109, %cst_143 {dimension_numbers = #tpu.dot_dimension_numbers<[1], [0], [0], [1], [0, 0, 1, 1], [], []>} : vector<256x128xbf16>, vector<128x128xbf16>, vector<256x128xf32> -> vector<256x128xf32>
    %111 = arith.addf %105, %110 : vector<256x128xf32>
    %c0_144 = arith.constant 0 : index
    %c2_145 = arith.constant 2 : index
    %c1_146 = arith.constant 1 : index
    %c0_147 = arith.constant 0 : index
    %112 = vector.load %arg13[%c0_144, %c2_145, %c1_146, %c0_147] : memref<1x18x24x128xbf16, #tpu.memory_space<vmem>>, vector<1x16x16x128xbf16>
    %113 = vector.shape_cast %112 : vector<1x16x16x128xbf16> to vector<256x128xbf16>
    %c7_148 = arith.constant 7 : index
    %c0_149 = arith.constant 0 : index
    %c0_150 = arith.constant 0 : index
    %114 = vector.load %arg4[%c7_148, %c0_149, %c0_150] : memref<9x128x128xbf16, #tpu.memory_space<vmem>>, vector<1x128x128xbf16>
    %115 = vector.shape_cast %114 : vector<1x128x128xbf16> to vector<128x128xbf16>
    %cst_151 = arith.constant dense<0.000000e+00> : vector<256x128xf32>
    %116 = tpu.matmul %113, %115, %cst_151 {dimension_numbers = #tpu.dot_dimension_numbers<[1], [0], [0], [1], [0, 0, 1, 1], [], []>} : vector<256x128xbf16>, vector<128x128xbf16>, vector<256x128xf32> -> vector<256x128xf32>
    %117 = arith.addf %111, %116 : vector<256x128xf32>
    %c0_152 = arith.constant 0 : index
    %c2_153 = arith.constant 2 : index
    %c2_154 = arith.constant 2 : index
    %c0_155 = arith.constant 0 : index
    %118 = vector.load %arg13[%c0_152, %c2_153, %c2_154, %c0_155] : memref<1x18x24x128xbf16, #tpu.memory_space<vmem>>, vector<1x16x16x128xbf16>
    %119 = vector.shape_cast %118 : vector<1x16x16x128xbf16> to vector<256x128xbf16>
    %c8_156 = arith.constant 8 : index
    %c0_157 = arith.constant 0 : index
    %c0_158 = arith.constant 0 : index
    %120 = vector.load %arg4[%c8_156, %c0_157, %c0_158] : memref<9x128x128xbf16, #tpu.memory_space<vmem>>, vector<1x128x128xbf16>
    %121 = vector.shape_cast %120 : vector<1x128x128xbf16> to vector<128x128xbf16>
    %cst_159 = arith.constant dense<0.000000e+00> : vector<256x128xf32>
    %122 = tpu.matmul %119, %121, %cst_159 {dimension_numbers = #tpu.dot_dimension_numbers<[1], [0], [0], [1], [0, 0, 1, 1], [], []>} : vector<256x128xbf16>, vector<128x128xbf16>, vector<256x128xf32> -> vector<256x128xf32>
    %123 = arith.addf %117, %122 : vector<256x128xf32>
    %c0_160 = arith.constant 0 : index
    %c0_161 = arith.constant 0 : index
    %124 = vector.load %arg10[%c0_160, %c0_161] : memref<1x128xf32, #tpu.memory_space<vmem>>, vector<1x128xf32>
    %125 = vector.broadcast %124 : vector<1x128xf32> to vector<256x128xf32>
    %126 = arith.addf %123, %125 : vector<256x128xf32>
    %127 = vector.shape_cast %126 : vector<256x128xf32> to vector<1x256x128xf32>
    %cst_162 = arith.constant dense<0.000000e+00> : vector<1x128xf32>
    %128 = vector.multi_reduction <add>, %127, %cst_162 [1] : vector<1x256x128xf32> to vector<1x128xf32>
    %cst_163 = arith.constant 2.560000e+02 : f32
    %129 = vector.broadcast %cst_163 : f32 to vector<1x128xf32>
    %130 = arith.divf %128, %129 : vector<1x128xf32>
    %131 = arith.truncf %130 : vector<1x128xf32> to vector<1x128xbf16>
    %c0_164 = arith.constant 0 : index
    %c0_165 = arith.constant 0 : index
    %132 = vector.load %arg6[%c0_164, %c0_165] : memref<128x8xbf16, #tpu.memory_space<vmem>>, vector<128x8xbf16>
    %cst_166 = arith.constant dense<0.000000e+00> : vector<1x8xf32>
    %133 = tpu.matmul %131, %132, %cst_166 {dimension_numbers = #tpu.dot_dimension_numbers<[1], [0], [0], [1], [0, 0, 1, 1], [], []>} : vector<1x128xbf16>, vector<128x8xbf16>, vector<1x8xf32> -> vector<1x8xf32>
    %cst_167 = arith.constant 0.000000e+00 : f32
    %134 = vector.broadcast %cst_167 : f32 to vector<1x8xf32>
    %135 = arith.maximumf %133, %134 : vector<1x8xf32>
    %136 = arith.truncf %135 : vector<1x8xf32> to vector<1x8xbf16>
    %c0_168 = arith.constant 0 : index
    %c0_169 = arith.constant 0 : index
    %137 = vector.load %arg7[%c0_168, %c0_169] : memref<8x128xbf16, #tpu.memory_space<vmem>>, vector<8x128xbf16>
    %cst_170 = arith.constant dense<0.000000e+00> : vector<1x128xf32>
    %138 = tpu.matmul %136, %137, %cst_170 {dimension_numbers = #tpu.dot_dimension_numbers<[1], [0], [0], [1], [0, 0, 1, 1], [], []>} : vector<1x8xbf16>, vector<8x128xbf16>, vector<1x128xf32> -> vector<1x128xf32>
    %cst_171 = arith.constant 0.000000e+00 : f32
    %139 = vector.broadcast %cst_171 : f32 to vector<1x128xf32>
    %140 = arith.subf %139, %138 : vector<1x128xf32>
    %141 = math.exp %140 : vector<1x128xf32>
    %cst_172 = arith.constant 1.000000e+00 : f32
    %142 = vector.broadcast %cst_172 : f32 to vector<1x128xf32>
    %143 = arith.addf %142, %141 : vector<1x128xf32>
    %cst_173 = arith.constant 1.000000e+00 : f32
    %144 = vector.broadcast %cst_173 : f32 to vector<1x128xf32>
    %145 = arith.divf %144, %143 : vector<1x128xf32>
    %146 = vector.shape_cast %145 : vector<1x128xf32> to vector<1x1x128xf32>
    %147 = vector.broadcast %146 : vector<1x1x128xf32> to vector<1x256x128xf32>
    %148 = arith.mulf %127, %147 : vector<1x256x128xf32>
    %c0_174 = arith.constant 0 : index
    %c0_175 = arith.constant 0 : index
    %c0_176 = arith.constant 0 : index
    %c0_177 = arith.constant 0 : index
    %149 = vector.load %arg2[%c0_174, %c0_175, %c0_176, %c0_177] : memref<1x16x16x128xbf16, #tpu.memory_space<vmem>>, vector<1x16x16x128xbf16>
    %150 = vector.shape_cast %149 : vector<1x16x16x128xbf16> to vector<256x128xbf16>
    %c0_178 = arith.constant 0 : index
    %c0_179 = arith.constant 0 : index
    %151 = vector.load %arg5[%c0_178, %c0_179] : memref<128x128xbf16, #tpu.memory_space<vmem>>, vector<128x128xbf16>
    %cst_180 = arith.constant dense<0.000000e+00> : vector<256x128xf32>
    %152 = tpu.matmul %150, %151, %cst_180 {dimension_numbers = #tpu.dot_dimension_numbers<[1], [0], [0], [1], [0, 0, 1, 1], [], []>} : vector<256x128xbf16>, vector<128x128xbf16>, vector<256x128xf32> -> vector<256x128xf32>
    %c0_181 = arith.constant 0 : index
    %c0_182 = arith.constant 0 : index
    %153 = vector.load %arg11[%c0_181, %c0_182] : memref<1x128xf32, #tpu.memory_space<vmem>>, vector<1x128xf32>
    %154 = vector.broadcast %153 : vector<1x128xf32> to vector<256x128xf32>
    %155 = arith.addf %152, %154 : vector<256x128xf32>
    %156 = vector.shape_cast %155 : vector<256x128xf32> to vector<1x256x128xf32>
    %157 = arith.addf %156, %148 : vector<1x256x128xf32>
    %c0_183 = arith.constant 0 : index
    %c0_184 = arith.constant 0 : index
    %c0_185 = arith.constant 0 : index
    %158 = vector.load %arg12[%c0_183, %c0_184, %c0_185] : memref<1x256x128xf32, #tpu.memory_space<vmem>>, vector<1x256x128xf32>
    tpu.vector_store %arg12[%c0_183, %c0_184, %c0_185], %157 {strides = array<i32>} : memref<1x256x128xf32, #tpu.memory_space<vmem>>, vector<1x256x128xf32>,
    return
  }
  func.func @transform_0(%arg0: i32) -> (i32, i32, i32, i32) {
    %c0_i32 = arith.constant 0 : i32
    %c0_i32_0 = arith.constant 0 : i32
    %c0_i32_1 = arith.constant 0 : i32
    %c0_i32_2 = arith.constant 0 : i32
    return %arg0, %c0_i32, %c0_i32_0, %c0_i32_1 : i32, i32, i32, i32
  }
  func.func @transform_1(%arg0: i32) -> (i32, i32, i32, i32) {
    %c0_i32 = arith.constant 0 : i32
    %c0_i32_0 = arith.constant 0 : i32
    %c0_i32_1 = arith.constant 0 : i32
    %c0_i32_2 = arith.constant 0 : i32
    return %arg0, %c0_i32, %c0_i32_0, %c0_i32_1 : i32, i32, i32, i32
  }
  func.func @transform_2(%arg0: i32) -> (i32, i32, i32) {
    %c0_i32 = arith.constant 0 : i32
    %c0_i32_0 = arith.constant 0 : i32
    %c0_i32_1 = arith.constant 0 : i32
    %c0_i32_2 = arith.constant 0 : i32
    return %c0_i32, %c0_i32_0, %c0_i32_1 : i32, i32, i32
  }
  func.func @transform_3(%arg0: i32) -> (i32, i32, i32) {
    %c0_i32 = arith.constant 0 : i32
    %c0_i32_0 = arith.constant 0 : i32
    %c0_i32_1 = arith.constant 0 : i32
    %c0_i32_2 = arith.constant 0 : i32
    return %c0_i32, %c0_i32_0, %c0_i32_1 : i32, i32, i32
  }
  func.func @transform_4(%arg0: i32) -> (i32, i32) {
    %c0_i32 = arith.constant 0 : i32
    %c0_i32_0 = arith.constant 0 : i32
    %c0_i32_1 = arith.constant 0 : i32
    return %c0_i32, %c0_i32_0 : i32, i32
  }
  func.func @transform_5(%arg0: i32) -> (i32, i32) {
    %c0_i32 = arith.constant 0 : i32
    %c0_i32_0 = arith.constant 0 : i32
    %c0_i32_1 = arith.constant 0 : i32
    return %c0_i32, %c0_i32_0 : i32, i32
  }
  func.func @transform_6(%arg0: i32) -> (i32, i32) {
    %c0_i32 = arith.constant 0 : i32
    %c0_i32_0 = arith.constant 0 : i32
    %c0_i32_1 = arith.constant 0 : i32
    return %c0_i32, %c0_i32_0 : i32, i32
  }
  func.func @transform_7(%arg0: i32) -> (i32, i32) {
    %c0_i32 = arith.constant 0 : i32
    %c0_i32_0 = arith.constant 0 : i32
    %c0_i32_1 = arith.constant 0 : i32
    return %c0_i32, %c0_i32_0 : i32, i32
  }
  func.func @transform_8(%arg0: i32) -> (i32, i32) {
    %c0_i32 = arith.constant 0 : i32
    %c0_i32_0 = arith.constant 0 : i32
    %c0_i32_1 = arith.constant 0 : i32
    return %c0_i32, %c0_i32_0 : i32, i32
  }
  func.func @transform_9(%arg0: i32) -> (i32, i32) {
    %c0_i32 = arith.constant 0 : i32
    %c0_i32_0 = arith.constant 0 : i32
    %c0_i32_1 = arith.constant 0 : i32
    return %c0_i32, %c0_i32_0 : i32, i32
  }
  func.func @transform_10(%arg0: i32) -> (i32, i32) {
    %c0_i32 = arith.constant 0 : i32
    %c0_i32_0 = arith.constant 0 : i32
    %c0_i32_1 = arith.constant 0 : i32
    return %c0_i32, %c0_i32_0 : i32, i32
  }
  func.func @transform_11(%arg0: i32) -> (i32, i32, i32) {
    %c0_i32 = arith.constant 0 : i32
    %c0_i32_0 = arith.constant 0 : i32
    %c0_i32_1 = arith.constant 0 : i32
    return %arg0, %c0_i32, %c0_i32_0 : i32, i32, i32
  }
}

</mosaic_0001>

<llo_original>
// kernel: tpu_custom_call.1
$region0: #{tpu_custom_call.1}
  #allocation0 [shape = 'u32[]', space=smem, size = 0x4, offset = 0x4, fixed_abs, tag = 'smem constant byte address 0x4 - core index']
  #allocation1 [shape = 'u32[72,128]{1,0:T(1,128)}', space=vmem, size = 0x9000, scoped, tag = 'internal scratch']
  #allocation2 [shape = 'bf16[1,18,24,128]{3,2,1,0:T(8,128)(2,1)}', space=vmem, size = 0x1b000, scoped, tag = 'scratch operand']
  %s0 = inlined_call_operand.hbm [shape: bf16[4,18,24,128], index: 0, kind: input, shape index: {}]
  %s1 = inlined_call_operand.hbm [shape: bf16[4,16,16,128], index: 1, kind: input, shape index: {}]
  %s2 = inlined_call_operand.hbm [shape: bf16[9,128,128], index: 2, kind: input, shape index: {}]
  %s3 = inlined_call_operand.hbm [shape: bf16[9,128,128], index: 3, kind: input, shape index: {}]
  %s4 = inlined_call_operand.vmem [shape: bf16[128,128], index: 4, kind: input, shape index: {}]
  %s5 = inlined_call_operand.vmem [shape: bf16[128,8], index: 5, kind: input, shape index: {}]
  %s6 = inlined_call_operand.vmem [shape: bf16[8,128], index: 6, kind: input, shape index: {}]
  %s7 = inlined_call_operand.vmem [shape: f32[1,128], index: 7, kind: input, shape index: {}]
  %s8 = inlined_call_operand.vmem [shape: f32[1,128], index: 8, kind: input, shape index: {}]
  %s9 = inlined_call_operand.vmem [shape: f32[1,128], index: 9, kind: input, shape index: {}]
  %s10 = inlined_call_operand.vmem [shape: f32[1,128], index: 10, kind: input, shape index: {}]
  %s11 = inlined_call_operand.hbm [shape: f32[4,256,128], index: 11, kind: output, shape index: {}]
  %s12 = sld [smem:[#allocation0]]
  $region93: #{tpu_custom_call.1} parent=0
    _
  %s14 = ssub.s32 1, %s12
  %s15 = scalar_select 0, %s14, %s12
  $region1: #{tpu_custom_call.1} parent=0
    #allocation3 [shape = 'u8[221184]{0}', space=vmem, size = 0x36000, scoped, tag = 'input window, operand 0']
    #allocation4 [shape = 's32[2]{0}', space=sflag, size = 0x8, scoped, tag = 'scoped memory for tpu_custom_call.1']
    #allocation5 [shape = 's32[2]{0}', space=sflag, size = 0x8, scoped, tag = 'scoped memory for tpu_custom_call.1']
    #allocation6 [shape = 'u8[131072]{0}', space=vmem, size = 0x20000, scoped, tag = 'input window, operand 1']
    #allocation7 [shape = 's32[2]{0}', space=sflag, size = 0x8, scoped, tag = 'scoped memory for tpu_custom_call.1']
    #allocation8 [shape = 'u8[294912]{0}', space=vmem, size = 0x48000, scoped, tag = 'input window, operand 2, single buffered']
    #allocation9 [shape = 'u8[294912]{0}', space=vmem, size = 0x48000, scoped, tag = 'input window, operand 3, single buffered']
    #allocation10 [shape = 's32[1]{0}', space=sflag, size = 0x4, scoped, tag = 'scoped memory for tpu_custom_call.1']
    #allocation11 [shape = 'u8[262144]{0}', space=vmem, size = 0x40000, scoped, tag = 'output window, operand 0']
    %16 = vsyncpa [#allocation4], 0
    %s17 = scalar_lea.sflag [#allocation4], 1
    %18 = vsyncpa %s17, 0
    %19 = vsyncpa [#allocation7], 0
    %s20 = scalar_lea.sflag [#allocation7], 1
    %21 = vsyncpa %s20, 0
    %22 = vsyncpa [#allocation10], 0
    %23 = vsyncpa [#allocation5], 0
    %s24 = scalar_lea.sflag [#allocation5], 1
    %25 = vsyncpa %s24, 0
    loop: start=0, step=1, limit=6
    $region2: #{tpu_custom_call.1} parent=1 // loop_pre_header
      _
    $region3: #{tpu_custom_call.1} parent=1 // loop_header
      %s27 = sphi 0, %s31
      %p28 = scmp.ge.s32.totalorder %s27, 6
      %s37 = sphi 0, %s39
      %s40 = sphi 0, %s37
      %s41 = sphi 0, %s40
      %s57 = sphi 0, %s41
      %s63 = sphi 0, %s65
      %s66 = sphi 0, %s63
      %s67 = sphi 0, %s66
      %s83 = sphi 0, %s67
      %s87 = sphi 0, %s87
      %s89 = sphi 0, %s87
      %s90 = sphi 0, %s89
      %s104 = sphi 0, %s90
      %s108 = sphi 0, %s108
      %s110 = sphi 0, %s108
      %s111 = sphi 0, %s110
      %s125 = sphi 0, %s111
      %s129 = sphi 0, %s129
      %s131 = sphi 0, %s129
      %s132 = sphi 0, %s131
      %s146 = sphi 0, %s132
      %s150 = sphi 0, %s150
      %s152 = sphi 0, %s150
      %s153 = sphi 0, %s152
      %s167 = sphi 0, %s153
      %s171 = sphi 0, %s171
      %s173 = sphi 0, %s171
      %s174 = sphi 0, %s173
      %s188 = sphi 0, %s174
      %s192 = sphi 0, %s192
      %s194 = sphi 0, %s192
      %s195 = sphi 0, %s194
      %s209 = sphi 0, %s195
      %s213 = sphi 0, %s213
      %s215 = sphi 0, %s213
      %s216 = sphi 0, %s215
      %s230 = sphi 0, %s216
      %s234 = sphi 0, %s234
      %s236 = sphi 0, %s234
      %s237 = sphi 0, %s236
      %s251 = sphi 0, %s237
      %s255 = sphi 0, %s255
      %s257 = sphi 0, %s255
      %s258 = sphi 0, %s257
      %s272 = sphi 0, %s258
      %s278 = sphi 0, %s280
      %s281 = sphi 0, %s278
      %s282 = sphi 0, %s281
      %s298 = sphi 0, %s282
    $region4: #{tpu_custom_call.1} parent=1 // loop_header_branch
      %30 = sbr.rel (%p28) target = $region8
    $region5: #{tpu_custom_call.1} parent=1 // loop_body
      %s32 = ssub.s32 %s27, 1
      %s33 = ssub.s32 %s27, 2
      %s34 = sadd.s32 %s27, 1
      %s35 = ssub.s32 %s27, %s34
      %p36 = scmp.eq.s32.totalorder %s35, 0
      %s38 = sadd.s32 %s37, 1
      %s39 = scalar_select %p36, %s37, %s38
      %p42 = pneg %p36
      %p43 = scmp.eq.s32.totalorder %s27, 3
      %p44 = por %p42, %p43
      %p45 = scmp.ne.s32.totalorder %s37, %s40
      %p46 = scmp.eq.s32.totalorder %s27, 0
      %p47 = por %p45, %p46
      %p48 = scmp.ne.s32.totalorder %s37, %s40
      %p49 = scmp.eq.s32.totalorder %s32, 3
      %p50 = por %p48, %p49
      %p51 = scmp.ne.s32.totalorder %s40, %s41
      %p52 = scmp.eq.s32.totalorder %s32, 0
      %p53 = por %p51, %p52
      %p54 = scmp.ne.s32.totalorder %s40, %s41
      %p55 = scmp.eq.s32.totalorder %s33, 3
      %p56 = por %p54, %p55
      %p58 = scmp.ne.s32.totalorder %s41, %s57
      %p59 = scmp.eq.s32.totalorder %s33, 0
      %p60 = por %p58, %p59
      %s61 = ssub.s32 %s27, %s34
      %p62 = scmp.eq.s32.totalorder %s61, 0
      %s64 = sadd.s32 %s63, 1
      %s65 = scalar_select %p62, %s63, %s64
      %p68 = pneg %p62
      %p69 = scmp.eq.s32.totalorder %s27, 3
      %p70 = por %p68, %p69
      %p71 = scmp.ne.s32.totalorder %s63, %s66
      %p72 = scmp.eq.s32.totalorder %s27, 0
      %p73 = por %p71, %p72
      %p74 = scmp.ne.s32.totalorder %s63, %s66
      %p75 = scmp.eq.s32.totalorder %s32, 3
      %p76 = por %p74, %p75
      %p77 = scmp.ne.s32.totalorder %s66, %s67
      %p78 = scmp.eq.s32.totalorder %s32, 0
      %p79 = por %p77, %p78
      %p80 = scmp.ne.s32.totalorder %s66, %s67
      %p81 = scmp.eq.s32.totalorder %s33, 3
      %p82 = por %p80, %p81
      %p84 = scmp.ne.s32.totalorder %s67, %s83
      %p85 = scmp.eq.s32.totalorder %s33, 0
      %p86 = por %p84, %p85
      %s88 = sadd.s32 %s87, 1
      %p91 = scmp.eq.s32.totalorder %s27, 3
      %p92 = scmp.ne.s32.totalorder %s87, %s89
      %p93 = scmp.eq.s32.totalorder %s27, 0
      %p94 = por %p92, %p93
      %p95 = scmp.ne.s32.totalorder %s87, %s89
      %p96 = scmp.eq.s32.totalorder %s32, 3
      %p97 = por %p95, %p96
      %p98 = scmp.ne.s32.totalorder %s89, %s90
      %p99 = scmp.eq.s32.totalorder %s32, 0
      %p100 = por %p98, %p99
      %p101 = scmp.ne.s32.totalorder %s89, %s90
      %p102 = scmp.eq.s32.totalorder %s33, 3
      %p103 = por %p101, %p102
      %p105 = scmp.ne.s32.totalorder %s90, %s104
      %p106 = scmp.eq.s32.totalorder %s33, 0
      %p107 = por %p105, %p106
      %s109 = sadd.s32 %s108, 1
      %p112 = scmp.eq.s32.totalorder %s27, 3
      %p113 = scmp.ne.s32.totalorder %s108, %s110
      %p114 = scmp.eq.s32.totalorder %s27, 0
      %p115 = por %p113, %p114
      %p116 = scmp.ne.s32.totalorder %s108, %s110
      %p117 = scmp.eq.s32.totalorder %s32, 3
      %p118 = por %p116, %p117
      %p119 = scmp.ne.s32.totalorder %s110, %s111
      %p120 = scmp.eq.s32.totalorder %s32, 0
      %p121 = por %p119, %p120
      %p122 = scmp.ne.s32.totalorder %s110, %s111
      %p123 = scmp.eq.s32.totalorder %s33, 3
      %p124 = por %p122, %p123
      %p126 = scmp.ne.s32.totalorder %s111, %s125
      %p127 = scmp.eq.s32.totalorder %s33, 0
      %p128 = por %p126, %p127
      %s130 = sadd.s32 %s129, 1
      %p133 = scmp.eq.s32.totalorder %s27, 3
      %p134 = scmp.ne.s32.totalorder %s129, %s131
      %p135 = scmp.eq.s32.totalorder %s27, 0
      %p136 = por %p134, %p135
      %p137 = scmp.ne.s32.totalorder %s129, %s131
      %p138 = scmp.eq.s32.totalorder %s32, 3
      %p139 = por %p137, %p138
      %p140 = scmp.ne.s32.totalorder %s131, %s132
      %p141 = scmp.eq.s32.totalorder %s32, 0
      %p142 = por %p140, %p141
      %p143 = scmp.ne.s32.totalorder %s131, %s132
      %p144 = scmp.eq.s32.totalorder %s33, 3
      %p145 = por %p143, %p144
      %p147 = scmp.ne.s32.totalorder %s132, %s146
      %p148 = scmp.eq.s32.totalorder %s33, 0
      %p149 = por %p147, %p148
      %s151 = sadd.s32 %s150, 1
      %p154 = scmp.eq.s32.totalorder %s27, 3
      %p155 = scmp.ne.s32.totalorder %s150, %s152
      %p156 = scmp.eq.s32.totalorder %s27, 0
      %p157 = por %p155, %p156
      %p158 = scmp.ne.s32.totalorder %s150, %s152
      %p159 = scmp.eq.s32.totalorder %s32, 3
      %p160 = por %p158, %p159
      %p161 = scmp.ne.s32.totalorder %s152, %s153
      %p162 = scmp.eq.s32.totalorder %s32, 0
      %p163 = por %p161, %p162
      %p164 = scmp.ne.s32.totalorder %s152, %s153
      %p165 = scmp.eq.s32.totalorder %s33, 3
      %p166 = por %p164, %p165
      %p168 = scmp.ne.s32.totalorder %s153, %s167
      %p169 = scmp.eq.s32.totalorder %s33, 0
      %p170 = por %p168, %p169
      %s172 = sadd.s32 %s171, 1
      %p175 = scmp.eq.s32.totalorder %s27, 3
      %p176 = scmp.ne.s32.totalorder %s171, %s173
      %p177 = scmp.eq.s32.totalorder %s27, 0
      %p178 = por %p176, %p177
      %p179 = scmp.ne.s32.totalorder %s171, %s173
      %p180 = scmp.eq.s32.totalorder %s32, 3
      %p181 = por %p179, %p180
      %p182 = scmp.ne.s32.totalorder %s173, %s174
      %p183 = scmp.eq.s32.totalorder %s32, 0
      %p184 = por %p182, %p183
      %p185 = scmp.ne.s32.totalorder %s173, %s174
      %p186 = scmp.eq.s32.totalorder %s33, 3
      %p187 = por %p185, %p186
      %p189 = scmp.ne.s32.totalorder %s174, %s188
      %p190 = scmp.eq.s32.totalorder %s33, 0
      %p191 = por %p189, %p190
      %s193 = sadd.s32 %s192, 1
      %p196 = scmp.eq.s32.totalorder %s27, 3
      %p197 = scmp.ne.s32.totalorder %s192, %s194
      %p198 = scmp.eq.s32.totalorder %s27, 0
      %p199 = por %p197, %p198
      %p200 = scmp.ne.s32.totalorder %s192, %s194
      %p201 = scmp.eq.s32.totalorder %s32, 3
      %p202 = por %p200, %p201
      %p203 = scmp.ne.s32.totalorder %s194, %s195
      %p204 = scmp.eq.s32.totalorder %s32, 0
      %p205 = por %p203, %p204
      %p206 = scmp.ne.s32.totalorder %s194, %s195
      %p207 = scmp.eq.s32.totalorder %s33, 3
      %p208 = por %p206, %p207
      %p210 = scmp.ne.s32.totalorder %s195, %s209
      %p211 = scmp.eq.s32.totalorder %s33, 0
      %p212 = por %p210, %p211
      %s214 = sadd.s32 %s213, 1
      %p217 = scmp.eq.s32.totalorder %s27, 3
      %p218 = scmp.ne.s32.totalorder %s213, %s215
      %p219 = scmp.eq.s32.totalorder %s27, 0
      %p220 = por %p218, %p219
      %p221 = scmp.ne.s32.totalorder %s213, %s215
      %p222 = scmp.eq.s32.totalorder %s32, 3
      %p223 = por %p221, %p222
      %p224 = scmp.ne.s32.totalorder %s215, %s216
      %p225 = scmp.eq.s32.totalorder %s32, 0
      %p226 = por %p224, %p225
      %p227 = scmp.ne.s32.totalorder %s215, %s216
      %p228 = scmp.eq.s32.totalorder %s33, 3
      %p229 = por %p227, %p228
      %p231 = scmp.ne.s32.totalorder %s216, %s230
      %p232 = scmp.eq.s32.totalorder %s33, 0
      %p233 = por %p231, %p232
      %s235 = sadd.s32 %s234, 1
      %p238 = scmp.eq.s32.totalorder %s27, 3
      %p239 = scmp.ne.s32.totalorder %s234, %s236
      %p240 = scmp.eq.s32.totalorder %s27, 0
      %p241 = por %p239, %p240
      %p242 = scmp.ne.s32.totalorder %s234, %s236
      %p243 = scmp.eq.s32.totalorder %s32, 3
      %p244 = por %p242, %p243
      %p245 = scmp.ne.s32.totalorder %s236, %s237
      %p246 = scmp.eq.s32.totalorder %s32, 0
      %p247 = por %p245, %p246
      %p248 = scmp.ne.s32.totalorder %s236, %s237
      %p249 = scmp.eq.s32.totalorder %s33, 3
      %p250 = por %p248, %p249
      %p252 = scmp.ne.s32.totalorder %s237, %s251
      %p253 = scmp.eq.s32.totalorder %s33, 0
      %p254 = por %p252, %p253
      %s256 = sadd.s32 %s255, 1
      %p259 = scmp.eq.s32.totalorder %s27, 3
      %p260 = scmp.ne.s32.totalorder %s255, %s257
      %p261 = scmp.eq.s32.totalorder %s27, 0
      %p262 = por %p260, %p261
      %p263 = scmp.ne.s32.totalorder %s255, %s257
      %p264 = scmp.eq.s32.totalorder %s32, 3
      %p265 = por %p263, %p264
      %p266 = scmp.ne.s32.totalorder %s257, %s258
      %p267 = scmp.eq.s32.totalorder %s32, 0
      %p268 = por %p266, %p267
      %p269 = scmp.ne.s32.totalorder %s257, %s258
      %p270 = scmp.eq.s32.totalorder %s33, 3
      %p271 = por %p269, %p270
      %p273 = scmp.ne.s32.totalorder %s258, %s272
      %p274 = scmp.eq.s32.totalorder %s33, 0
      %p275 = por %p273, %p274
      %s276 = ssub.s32 %s27, %s34
      %p277 = scmp.eq.s32.totalorder %s276, 0
      %s279 = sadd.s32 %s278, 1
      %s280 = scalar_select %p277, %s278, %s279
      %p283 = pneg %p277
      %p284 = scmp.eq.s32.totalorder %s27, 3
      %p285 = por %p283, %p284
      %p286 = scmp.ne.s32.totalorder %s278, %s281
      %p287 = scmp.eq.s32.totalorder %s27, 0
      %p288 = por %p286, %p287
      %p289 = scmp.ne.s32.totalorder %s278, %s281
      %p290 = scmp.eq.s32.totalorder %s32, 3
      %p291 = por %p289, %p290
      %p292 = scmp.ne.s32.totalorder %s281, %s282
      %p293 = scmp.eq.s32.totalorder %s32, 0
      %p294 = por %p292, %p293
      %p295 = scmp.ne.s32.totalorder %s281, %s282
      %p296 = scmp.eq.s32.totalorder %s33, 3
      %p297 = por %p295, %p296
      %p299 = scmp.ne.s32.totalorder %s282, %s298
      %p300 = scmp.eq.s32.totalorder %s33, 0
      %p301 = por %p299, %p300
      %p302 = scmp.le.s32.totalorder 1, %s27
      %p303 = scmp.lt.s32.totalorder %s27, 5
      %p304 = pnand %p302, %p303
      %p305 = pneg %p304
      // Predicated region
      $region9: #{tpu_custom_call.1} parent=5 // pred_check
        _
      $region10: #{tpu_custom_call.1} parent=5 // pred_check_branch
        %307 = sbr.rel (%p304) target = $region12
      $region11: #{tpu_custom_call.1} parent=5 // pred_region
        %s308 = ssub.s32 %s27, 1
        // Predicated region
        $region13: #{tpu_custom_call.1} parent=11 // pred_check
          %p309 = pneg %p100
        $region14: #{tpu_custom_call.1} parent=11 // pred_check_branch
          %311 = sbr.rel (%p309) target = $region16
        $region15: #{tpu_custom_call.1} parent=11 // pred_region
          %313 = vsyncadd [#allocation7], 0
          %s314 = sshll.u32 %s2, 4
          %s315 = int_to_ptr.hbm [resolvable:$true] %s314
          %s316 = sshll.u32 [#allocation8], 4
          %s317 = int_to_ptr.vmem [resolvable:$true] %s316
          %322 = dma.hbm_to_vmem [thread:$0]  %s315, 9216, %s317, [#allocation7], 64, 64, 4
        $region16: #{tpu_custom_call.1} parent=11 // pred_fallthru
          _
        // Predicated region
        $region17: #{tpu_custom_call.1} parent=11 // pred_check
          %p323 = pneg %p121
        $region18: #{tpu_custom_call.1} parent=11 // pred_check_branch
          %325 = sbr.rel (%p323) target = $region20
        $region19: #{tpu_custom_call.1} parent=11 // pred_region
          %327 = vsyncadd [#allocation10], 0
          %s328 = sshll.u32 %s3, 4
          %s329 = int_to_ptr.hbm [resolvable:$true] %s328
          %s330 = sshll.u32 [#allocation9], 4
          %s331 = int_to_ptr.vmem [resolvable:$true] %s330
          %336 = dma.hbm_to_vmem [thread:$0]  %s329, 9216, %s331, [#allocation10], 64, 64, 4
        $region20: #{tpu_custom_call.1} parent=11 // pred_fallthru
          _
        // Predicated region
        $region21: #{tpu_custom_call.1} parent=11 // pred_check
          %p337 = pneg %p142
        $region22: #{tpu_custom_call.1} parent=11 // pred_check_branch
          %339 = sbr.rel (%p337) target = $region24
        $region23: #{tpu_custom_call.1} parent=11 // pred_region
          _
        $region24: #{tpu_custom_call.1} parent=11 // pred_fallthru
          _
        // Predicated region
        $region25: #{tpu_custom_call.1} parent=11 // pred_check
          %p340 = pneg %p163
        $region26: #{tpu_custom_call.1} parent=11 // pred_check_branch
          %342 = sbr.rel (%p340) target = $region28
        $region27: #{tpu_custom_call.1} parent=11 // pred_region
          _
        $region28: #{tpu_custom_call.1} parent=11 // pred_fallthru
          _
        // Predicated region
        $region29: #{tpu_custom_call.1} parent=11 // pred_check
          %p343 = pneg %p184
        $region30: #{tpu_custom_call.1} parent=11 // pred_check_branch
          %345 = sbr.rel (%p343) target = $region32
        $region31: #{tpu_custom_call.1} parent=11 // pred_region
          _
        $region32: #{tpu_custom_call.1} parent=11 // pred_fallthru
          _
        // Predicated region
        $region33: #{tpu_custom_call.1} parent=11 // pred_check
          %p346 = pneg %p205
        $region34: #{tpu_custom_call.1} parent=11 // pred_check_branch
          %348 = sbr.rel (%p346) target = $region36
        $region35: #{tpu_custom_call.1} parent=11 // pred_region
          _
        $region36: #{tpu_custom_call.1} parent=11 // pred_fallthru
          _
        // Predicated region
        $region37: #{tpu_custom_call.1} parent=11 // pred_check
          %p349 = pneg %p226
        $region38: #{tpu_custom_call.1} parent=11 // pred_check_branch
          %351 = sbr.rel (%p349) target = $region40
        $region39: #{tpu_custom_call.1} parent=11 // pred_region
          _
        $region40: #{tpu_custom_call.1} parent=11 // pred_fallthru
          _
        // Predicated region
        $region41: #{tpu_custom_call.1} parent=11 // pred_check
          %p352 = pneg %p247
        $region42: #{tpu_custom_call.1} parent=11 // pred_check_branch
          %354 = sbr.rel (%p352) target = $region44
        $region43: #{tpu_custom_call.1} parent=11 // pred_region
          _
        $region44: #{tpu_custom_call.1} parent=11 // pred_fallthru
          _
        // Predicated region
        $region45: #{tpu_custom_call.1} parent=11 // pred_check
          %p355 = pneg %p268
        $region46: #{tpu_custom_call.1} parent=11 // pred_check_branch
          %357 = sbr.rel (%p355) target = $region48
        $region47: #{tpu_custom_call.1} parent=11 // pred_region
          _
        $region48: #{tpu_custom_call.1} parent=11 // pred_fallthru
          _
      $region12: #{tpu_custom_call.1} parent=5 // pred_fallthru
        _
      %p358 = scmp.lt.s32.totalorder %s27, 4
      // Predicated region
      $region49: #{tpu_custom_call.1} parent=5 // pred_check
        %p359 = pneg %p358
      $region50: #{tpu_custom_call.1} parent=5 // pred_check_branch
        %361 = sbr.rel (%p359) target = $region52
      $region51: #{tpu_custom_call.1} parent=5 // pred_region
        // Predicated region
        $region53: #{tpu_custom_call.1} parent=51 // pred_check
          %p362 = pneg %p47
        $region54: #{tpu_custom_call.1} parent=51 // pred_check_branch
          %364 = sbr.rel (%p362) target = $region56
        $region55: #{tpu_custom_call.1} parent=51 // pred_region
          %s365 = sand.u32 %s37, 1
          %s366 = scalar_lea.sflag [#allocation4], %s365
          %s367 = sand.u32 %s37, 1
          %s368 = smul.addr %s367, 216
          %s369 = scalar_lea.vmem [#allocation3], %s368
          %371 = vsyncadd %s366, 0
          %s372 = smul.addr %s27, 54
          %s373 = smul.addr %s372, 4
          %s374 = scalar_lea.hbm %s0, %s373
          %s375 = sshll.u32 %s374, 4
          %s376 = int_to_ptr.hbm [resolvable:$true] %s375
          %s377 = sshll.u32 %s369, 4
          %s378 = int_to_ptr.vmem [resolvable:$true] %s377
          %383 = dma.hbm_to_vmem [thread:$0]  %s376, 3456, %s378, %s366, 64, 64, 4
        $region56: #{tpu_custom_call.1} parent=51 // pred_fallthru
          _
        // Predicated region
        $region57: #{tpu_custom_call.1} parent=51 // pred_check
          %p384 = pneg %p73
        $region58: #{tpu_custom_call.1} parent=51 // pred_check_branch
          %386 = sbr.rel (%p384) target = $region60
        $region59: #{tpu_custom_call.1} parent=51 // pred_region
          %s387 = sand.u32 %s27, 1
          %s388 = scalar_lea.sflag [#allocation7], %s387
          %s389 = sand.u32 %s63, 1
          %s390 = smul.addr %s389, 128
          %s391 = scalar_lea.vmem [#allocation6], %s390
          %393 = vsyncadd %s388, 0
          %s394 = smul.addr %s27, 32
          %s395 = smul.addr %s394, 4
          %s396 = scalar_lea.hbm %s1, %s395
          %s397 = sshll.u32 %s396, 4
          %s398 = int_to_ptr.hbm [resolvable:$true] %s397
          %s399 = sshll.u32 %s391, 4
          %s400 = int_to_ptr.vmem [resolvable:$true] %s399
          %405 = dma.hbm_to_vmem [thread:$0]  %s398, 2048, %s400, %s388, 64, 64, 4
        $region60: #{tpu_custom_call.1} parent=51 // pred_fallthru
          _
      $region52: #{tpu_custom_call.1} parent=5 // pred_fallthru
        _
      %p406 = scmp.le.s32.totalorder 1, %s27
      %p407 = scmp.lt.s32.totalorder %s27, 5
      %p408 = pnand %p406, %p407
      %p409 = pneg %p408
      // Predicated region
      $region61: #{tpu_custom_call.1} parent=5 // pred_check
        _
      $region62: #{tpu_custom_call.1} parent=5 // pred_check_branch
        %411 = sbr.rel (%p408) target = $region64
      $region63: #{tpu_custom_call.1} parent=5 // pred_region
        %s412 = ssub.s32 %s27, 1
        %s413 = sand.u32 %s40, 1
        %s414 = scalar_lea.sflag [#allocation4], %s413
        %s415 = sand.u32 %s40, 1
        %s416 = smul.addr %s415, 216
        %s417 = scalar_lea.vmem [#allocation3], %s416
        // Predicated region
        $region65: #{tpu_custom_call.1} parent=63 // pred_check
          %p418 = pneg %p53
        $region66: #{tpu_custom_call.1} parent=63 // pred_check_branch
          %420 = sbr.rel (%p418) target = $region68
        $region67: #{tpu_custom_call.1} parent=63 // pred_region
          %422 = dma.done %s414, 3456
        $region68: #{tpu_custom_call.1} parent=63 // pred_fallthru
          _
        %s423 = sand.u32 %s32, 1
        %s424 = scalar_lea.sflag [#allocation7], %s423
        %s425 = sand.u32 %s66, 1
        %s426 = smul.addr %s425, 128
        %s427 = scalar_lea.vmem [#allocation6], %s426
        // Predicated region
        $region69: #{tpu_custom_call.1} parent=63 // pred_check
          %p428 = pneg %p79
        $region70: #{tpu_custom_call.1} parent=63 // pred_check_branch
          %430 = sbr.rel (%p428) target = $region72
        $region71: #{tpu_custom_call.1} parent=63 // pred_region
          %432 = dma.done %s424, 2048
        $region72: #{tpu_custom_call.1} parent=63 // pred_fallthru
          _
        // Predicated region
        $region73: #{tpu_custom_call.1} parent=63 // pred_check
          %p433 = pneg %p100
        $region74: #{tpu_custom_call.1} parent=63 // pred_check_branch
          %435 = sbr.rel (%p433) target = $region76
        $region75: #{tpu_custom_call.1} parent=63 // pred_region
          %437 = dma.done [#allocation7], 9216
        $region76: #{tpu_custom_call.1} parent=63 // pred_fallthru
          _
        // Predicated region
        $region77: #{tpu_custom_call.1} parent=63 // pred_check
          %p438 = pneg %p121
        $region78: #{tpu_custom_call.1} parent=63 // pred_check_branch
          %440 = sbr.rel (%p438) target = $region80
        $region79: #{tpu_custom_call.1} parent=63 // pred_region
          %442 = dma.done [#allocation10], 9216
        $region80: #{tpu_custom_call.1} parent=63 // pred_fallthru
          _
        %s443 = sand.u32 %s40, 1
        %s444 = scalar_lea.sflag [#allocation4], %s443
        %s445 = sand.u32 %s40, 1
        %s446 = smul.addr %s445, 216
        %s447 = scalar_lea.vmem [#allocation3], %s446
        %p448 = pneg %p53
        %p449 = pneg %p50
        %s450 = sand.u32 %s32, 1
        %s451 = scalar_lea.sflag [#allocation7], %s450
        %s452 = sand.u32 %s66, 1
        %s453 = smul.addr %s452, 128
        %s454 = scalar_lea.vmem [#allocation6], %s453
        %p455 = pneg %p79
        %p456 = pneg %p76
        %p457 = pneg %p100
        %p458 = pneg %p97
        %p459 = pneg %p121
        %p460 = pneg %p118
        %p461 = pneg %p142
        %p462 = pneg %p139
        %p463 = pneg %p163
        %p464 = pneg %p160
        %p465 = pneg %p184
        %p466 = pneg %p181
        %p467 = pneg %p205
        %p468 = pneg %p202
        %p469 = pneg %p226
        %p470 = pneg %p223
        %p471 = pneg %p247
        %p472 = pneg %p244
        %p473 = pneg %p268
        %p474 = pneg %p265
        %p475 = pneg %p294
        %p476 = pneg %p291
        %s477 = sand.u32 %s281, 1
        %s478 = scalar_lea.sflag [#allocation5], %s477
        %s479 = sand.u32 %s281, 1
        %s480 = smul.addr %s479, 256
        %s481 = scalar_lea.vmem [#allocation11], %s480
        %v483 = vld [vmem:[%s417] sm:$0xf]
        %v484 = vld [vmem:[%s417 + $0x4] sm:$0xf]
        %v485 = vld [vmem:[%s417 + $0xc] sm:$0xf]
        %v486 = vld [vmem:[%s417 + $0x10] sm:$0xf]
        %v487 = vld [vmem:[%s417 + $0x18] sm:$0xf]
        %v488 = vld [vmem:[%s417 + $0x1c] sm:$0xf]
        %v489 = vld [vmem:[%s417 + $0x24] sm:$0xf]
        %v490 = vld [vmem:[%s417 + $0x28] sm:$0xf]
        %v491 = vld [vmem:[%s417 + $0x30] sm:$0xf]
        %v492 = vld [vmem:[%s417 + $0x34] sm:$0xf]
        %v493 = vld [vmem:[%s417 + $0x3c] sm:$0xf]
        %v494 = vld [vmem:[%s417 + $0x40] sm:$0xf]
        %v495 = vld [vmem:[%s417 + $0x48] sm:$0xf]
        %v496 = vld [vmem:[%s417 + $0x4c] sm:$0xf]
        %v497 = vld [vmem:[%s417 + $0x54] sm:$0xf]
        %v498 = vld [vmem:[%s417 + $0x58] sm:$0xf]
        %v499 = vld [vmem:[%s417 + $0x60] sm:$0xf]
        %v500 = vld [vmem:[%s417 + $0x64] sm:$0xf]
        %v501 = vld [vmem:[%s417 + $0x6c] sm:$0xf]
        %v502 = vld [vmem:[%s417 + $0x70] sm:$0xf]
        %v503 = vld [vmem:[%s417 + $0x78] sm:$0xf]
        %v504 = vld [vmem:[%s417 + $0x7c] sm:$0xf]
        %v505 = vld [vmem:[%s417 + $0x84] sm:$0xf]
        %v506 = vld [vmem:[%s417 + $0x88] sm:$0xf]
        %v507 = vld [vmem:[%s417 + $0x90] sm:$0xf]
        %v508 = vld [vmem:[%s417 + $0x94] sm:$0xf]
        %v509 = vld [vmem:[%s417 + $0x9c] sm:$0xf]
        %v510 = vld [vmem:[%s417 + $0xa0] sm:$0xf]
        %v511 = vld [vmem:[%s417 + $0xa8] sm:$0xf]
        %v512 = vld [vmem:[%s417 + $0xac] sm:$0xf]
        %v513 = vld [vmem:[%s417 + $0xb4] sm:$0xf]
        %v514 = vld [vmem:[%s417 + $0xb8] sm:$0xf]
        %v515 = vld [vmem:[#allocation8] sm:$0xf]
        %v516 = vld [vmem:[#allocation8 + $0x4] sm:$0xf]
        %v517 = vld [vmem:[#allocation8 + $0x8] sm:$0xf]
        %v518 = vld [vmem:[#allocation8 + $0xc] sm:$0xf]
        %v519 = vld [vmem:[#allocation8 + $0x10] sm:$0xf]
        %v520 = vld [vmem:[#allocation8 + $0x14] sm:$0xf]
        %v521 = vld [vmem:[#allocation8 + $0x18] sm:$0xf]
        %v522 = vld [vmem:[#allocation8 + $0x1c] sm:$0xf]
        %v523 = vld [vmem:[#allocation8 + $0x20] sm:$0xf]
        %v524 = vld [vmem:[#allocation8 + $0x24] sm:$0xf]
        %v525 = vld [vmem:[#allocation8 + $0x28] sm:$0xf]
        %v526 = vld [vmem:[#allocation8 + $0x2c] sm:$0xf]
        %v527 = vld [vmem:[#allocation8 + $0x30] sm:$0xf]
        %v528 = vld [vmem:[#allocation8 + $0x34] sm:$0xf]
        %v529 = vld [vmem:[#allocation8 + $0x38] sm:$0xf]
        %v530 = vld [vmem:[#allocation8 + $0x3c] sm:$0xf]
        %v531 = vld [vmem:[%s417 + $0x8] sm:$0x1]
        %v532 = vld [vmem:[%s417 + $0x14] sm:$0x1]
        %v533 = vld [vmem:[%s417 + $0x20] sm:$0x1]
        %v534 = vld [vmem:[%s417 + $0x2c] sm:$0x1]
        %v535 = vld [vmem:[%s417 + $0x38] sm:$0x1]
        %v536 = vld [vmem:[%s417 + $0x44] sm:$0x1]
        %v537 = vld [vmem:[%s417 + $0x50] sm:$0x1]
        %v538 = vld [vmem:[%s417 + $0x5c] sm:$0x1]
        %v539 = vld [vmem:[%s417 + $0x68] sm:$0x1]
        %v540 = vld [vmem:[%s417 + $0x74] sm:$0x1]
        %v541 = vld [vmem:[%s417 + $0x80] sm:$0x1]
        %v542 = vld [vmem:[%s417 + $0x8c] sm:$0x1]
        %v543 = vld [vmem:[%s417 + $0x98] sm:$0x1]
        %v544 = vld [vmem:[%s417 + $0xa4] sm:$0x1]
        %v545 = vld [vmem:[%s417 + $0xb0] sm:$0x1]
        %v546 = vld [vmem:[%s417 + $0xbc] sm:$0x1]
        %vm547 = vsmask.f32 3328
        %vm548 = vsmask.f32 7440
        %vm549 = vmor %vm547, %vm548
        %v551 = vshrl.u32 %v483, 16
        %v553 = vrot.slane %v551, 4
        %v554 = vshll.u32 %v483, 16
        %v556 = vrot.slane %v554, 5
        %v557 = vor.u32 %v553, %v556
        %v558 = vrot.slane %v557, 4
        %v560 = vshll.u32 %v484, 16
        %v562 = vrot.slane %v560, 5
        %v563 = vsel %vm549, %v558, %v562
        %v564 = vshrl.u32 %v484, 16
        %v566 = vrot.slane %v564, 4
        %v567 = vor.u32 %v566, %v562
        %v568 = vrot.slane %v567, 4
        %v570 = vshll.u32 %v531, 16
        %v572 = vrot.slane %v570, 5
        %v573 = vsel %vm549, %v568, %v572
        %v575 = vshrl.u32 %v485, 16
        %v577 = vrot.slane %v575, 4
        %v578 = vshll.u32 %v485, 16
        %v580 = vrot.slane %v578, 5
        %v581 = vor.u32 %v577, %v580
        %v582 = vrot.slane %v581, 4
        %v584 = vshll.u32 %v486, 16
        %v586 = vrot.slane %v584, 5
        %v587 = vsel %vm549, %v582, %v586
        %v588 = vshrl.u32 %v486, 16
        %v590 = vrot.slane %v588, 4
        %v591 = vor.u32 %v590, %v586
        %v592 = vrot.slane %v591, 4
        %v594 = vshll.u32 %v532, 16
        %v596 = vrot.slane %v594, 5
        %v597 = vsel %vm549, %v592, %v596
        %v599 = vshrl.u32 %v487, 16
        %v601 = vrot.slane %v599, 4
        %v602 = vshll.u32 %v487, 16
        %v604 = vrot.slane %v602, 5
        %v605 = vor.u32 %v601, %v604
        %v606 = vrot.slane %v605, 4
        %v608 = vshll.u32 %v488, 16
        %v610 = vrot.slane %v608, 5
        %v611 = vsel %vm549, %v606, %v610
        %v612 = vshrl.u32 %v488, 16
        %v614 = vrot.slane %v612, 4
        %v615 = vor.u32 %v614, %v610
        %v616 = vrot.slane %v615, 4
        %v618 = vshll.u32 %v533, 16
        %v620 = vrot.slane %v618, 5
        %v621 = vsel %vm549, %v616, %v620
        %v623 = vshrl.u32 %v489, 16
        %v625 = vrot.slane %v623, 4
        %v626 = vshll.u32 %v489, 16
        %v628 = vrot.slane %v626, 5
        %v629 = vor.u32 %v625, %v628
        %v630 = vrot.slane %v629, 4
        %v632 = vshll.u32 %v490, 16
        %v634 = vrot.slane %v632, 5
        %v635 = vsel %vm549, %v630, %v634
        %v636 = vshrl.u32 %v490, 16
        %v638 = vrot.slane %v636, 4
        %v639 = vor.u32 %v638, %v634
        %v640 = vrot.slane %v639, 4
        %v642 = vshll.u32 %v534, 16
        %v644 = vrot.slane %v642, 5
        %v645 = vsel %vm549, %v640, %v644
        %v647 = vshrl.u32 %v491, 16
        %v649 = vrot.slane %v647, 4
        %v650 = vshll.u32 %v491, 16
        %v652 = vrot.slane %v650, 5
        %v653 = vor.u32 %v649, %v652
        %v654 = vrot.slane %v653, 4
        %v656 = vshll.u32 %v492, 16
        %v658 = vrot.slane %v656, 5
        %v659 = vsel %vm549, %v654, %v658
        %v660 = vshrl.u32 %v492, 16
        %v662 = vrot.slane %v660, 4
        %v663 = vor.u32 %v662, %v658
        %v664 = vrot.slane %v663, 4
        %v666 = vshll.u32 %v535, 16
        %v668 = vrot.slane %v666, 5
        %v669 = vsel %vm549, %v664, %v668
        %v671 = vshrl.u32 %v493, 16
        %v673 = vrot.slane %v671, 4
        %v674 = vshll.u32 %v493, 16
        %v676 = vrot.slane %v674, 5
        %v677 = vor.u32 %v673, %v676
        %v678 = vrot.slane %v677, 4
        %v680 = vshll.u32 %v494, 16
        %v682 = vrot.slane %v680, 5
        %v683 = vsel %vm549, %v678, %v682
        %v684 = vshrl.u32 %v494, 16
        %v686 = vrot.slane %v684, 4
        %v687 = vor.u32 %v686, %v682
        %v688 = vrot.slane %v687, 4
        %v690 = vshll.u32 %v536, 16
        %v692 = vrot.slane %v690, 5
        %v693 = vsel %vm549, %v688, %v692
        %v695 = vshrl.u32 %v495, 16
        %v697 = vrot.slane %v695, 4
        %v698 = vshll.u32 %v495, 16
        %v700 = vrot.slane %v698, 5
        %v701 = vor.u32 %v697, %v700
        %v702 = vrot.slane %v701, 4
        %v704 = vshll.u32 %v496, 16
        %v706 = vrot.slane %v704, 5
        %v707 = vsel %vm549, %v702, %v706
        %v708 = vshrl.u32 %v496, 16
        %v710 = vrot.slane %v708, 4
        %v711 = vor.u32 %v710, %v706
        %v712 = vrot.slane %v711, 4
        %v714 = vshll.u32 %v537, 16
        %v716 = vrot.slane %v714, 5
        %v717 = vsel %vm549, %v712, %v716
        %v719 = vshrl.u32 %v497, 16
        %v721 = vrot.slane %v719, 4
        %v722 = vshll.u32 %v497, 16
        %v724 = vrot.slane %v722, 5
        %v725 = vor.u32 %v721, %v724
        %v726 = vrot.slane %v725, 4
        %v728 = vshll.u32 %v498, 16
        %v730 = vrot.slane %v728, 5
        %v731 = vsel %vm549, %v726, %v730
        %v732 = vshrl.u32 %v498, 16
        %v734 = vrot.slane %v732, 4
        %v735 = vor.u32 %v734, %v730
        %v736 = vrot.slane %v735, 4
        %v738 = vshll.u32 %v538, 16
        %v740 = vrot.slane %v738, 5
        %v741 = vsel %vm549, %v736, %v740
        %v743 = vshrl.u32 %v499, 16
        %v745 = vrot.slane %v743, 4
        %v746 = vshll.u32 %v499, 16
        %v748 = vrot.slane %v746, 5
        %v749 = vor.u32 %v745, %v748
        %v750 = vrot.slane %v749, 4
        %v752 = vshll.u32 %v500, 16
        %v754 = vrot.slane %v752, 5
        %v755 = vsel %vm549, %v750, %v754
        %v756 = vshrl.u32 %v500, 16
        %v758 = vrot.slane %v756, 4
        %v759 = vor.u32 %v758, %v754
        %v760 = vrot.slane %v759, 4
        %v762 = vshll.u32 %v539, 16
        %v764 = vrot.slane %v762, 5
        %v765 = vsel %vm549, %v760, %v764
        %v767 = vshrl.u32 %v501, 16
        %v769 = vrot.slane %v767, 4
        %v770 = vshll.u32 %v501, 16
        %v772 = vrot.slane %v770, 5
        %v773 = vor.u32 %v769, %v772
        %v774 = vrot.slane %v773, 4
        %v776 = vshll.u32 %v502, 16
        %v778 = vrot.slane %v776, 5
        %v779 = vsel %vm549, %v774, %v778
        %v780 = vshrl.u32 %v502, 16
        %v782 = vrot.slane %v780, 4
        %v783 = vor.u32 %v782, %v778
        %v784 = vrot.slane %v783, 4
        %v786 = vshll.u32 %v540, 16
        %v788 = vrot.slane %v786, 5
        %v789 = vsel %vm549, %v784, %v788
        %v791 = vshrl.u32 %v503, 16
        %v793 = vrot.slane %v791, 4
        %v794 = vshll.u32 %v503, 16
        %v796 = vrot.slane %v794, 5
        %v797 = vor.u32 %v793, %v796
        %v798 = vrot.slane %v797, 4
        %v800 = vshll.u32 %v504, 16
        %v802 = vrot.slane %v800, 5
        %v803 = vsel %vm549, %v798, %v802
        %v804 = vshrl.u32 %v504, 16
        %v806 = vrot.slane %v804, 4
        %v807 = vor.u32 %v806, %v802
        %v808 = vrot.slane %v807, 4
        %v810 = vshll.u32 %v541, 16
        %v812 = vrot.slane %v810, 5
        %v813 = vsel %vm549, %v808, %v812
        %v815 = vshrl.u32 %v505, 16
        %v817 = vrot.slane %v815, 4
        %v818 = vshll.u32 %v505, 16
        %v820 = vrot.slane %v818, 5
        %v821 = vor.u32 %v817, %v820
        %v822 = vrot.slane %v821, 4
        %v824 = vshll.u32 %v506, 16
        %v826 = vrot.slane %v824, 5
        %v827 = vsel %vm549, %v822, %v826
        %v828 = vshrl.u32 %v506, 16
        %v830 = vrot.slane %v828, 4
        %v831 = vor.u32 %v830, %v826
        %v832 = vrot.slane %v831, 4
        %v834 = vshll.u32 %v542, 16
        %v836 = vrot.slane %v834, 5
        %v837 = vsel %vm549, %v832, %v836
        %v839 = vshrl.u32 %v507, 16
        %v841 = vrot.slane %v839, 4
        %v842 = vshll.u32 %v507, 16
        %v844 = vrot.slane %v842, 5
        %v845 = vor.u32 %v841, %v844
        %v846 = vrot.slane %v845, 4
        %v848 = vshll.u32 %v508, 16
        %v850 = vrot.slane %v848, 5
        %v851 = vsel %vm549, %v846, %v850
        %v852 = vshrl.u32 %v508, 16
        %v854 = vrot.slane %v852, 4
        %v855 = vor.u32 %v854, %v850
        %v856 = vrot.slane %v855, 4
        %v858 = vshll.u32 %v543, 16
        %v860 = vrot.slane %v858, 5
        %v861 = vsel %vm549, %v856, %v860
        %v863 = vshrl.u32 %v509, 16
        %v865 = vrot.slane %v863, 4
        %v866 = vshll.u32 %v509, 16
        %v868 = vrot.slane %v866, 5
        %v869 = vor.u32 %v865, %v868
        %v870 = vrot.slane %v869, 4
        %v872 = vshll.u32 %v510, 16
        %v874 = vrot.slane %v872, 5
        %v875 = vsel %vm549, %v870, %v874
        %v876 = vshrl.u32 %v510, 16
        %v878 = vrot.slane %v876, 4
        %v879 = vor.u32 %v878, %v874
        %v880 = vrot.slane %v879, 4
        %v882 = vshll.u32 %v544, 16
        %v884 = vrot.slane %v882, 5
        %v885 = vsel %vm549, %v880, %v884
        %v887 = vshrl.u32 %v511, 16
        %v889 = vrot.slane %v887, 4
        %v890 = vshll.u32 %v511, 16
        %v892 = vrot.slane %v890, 5
        %v893 = vor.u32 %v889, %v892
        %v894 = vrot.slane %v893, 4
        %v896 = vshll.u32 %v512, 16
        %v898 = vrot.slane %v896, 5
        %v899 = vsel %vm549, %v894, %v898
        %v900 = vshrl.u32 %v512, 16
        %v902 = vrot.slane %v900, 4
        %v903 = vor.u32 %v902, %v898
        %v904 = vrot.slane %v903, 4
        %v906 = vshll.u32 %v545, 16
        %v908 = vrot.slane %v906, 5
        %v909 = vsel %vm549, %v904, %v908
        %v911 = vshrl.u32 %v513, 16
        %v913 = vrot.slane %v911, 4
        %v914 = vshll.u32 %v513, 16
        %v916 = vrot.slane %v914, 5
        %v917 = vor.u32 %v913, %v916
        %v918 = vrot.slane %v917, 4
        %v920 = vshll.u32 %v514, 16
        %v922 = vrot.slane %v920, 5
        %v923 = vsel %vm549, %v918, %v922
        %v924 = vshrl.u32 %v514, 16
        %v926 = vrot.slane %v924, 4
        %v927 = vor.u32 %v926, %v922
        %v928 = vrot.slane %v927, 4
        %v930 = vshll.u32 %v546, 16
        %v932 = vrot.slane %v930, 5
        %v933 = vsel %vm549, %v928, %v932
        %s934 = scalar_lea.vmem [#allocation8], 64
        %v935 = vld [vmem:[%s934] sm:$0xf]
        %v936 = vld [vmem:[%s934 + $0x4] sm:$0xf]
        %v937 = vld [vmem:[%s934 + $0x8] sm:$0xf]
        %v938 = vld [vmem:[%s934 + $0xc] sm:$0xf]
        %v939 = vld [vmem:[%s934 + $0x10] sm:$0xf]
        %v940 = vld [vmem:[%s934 + $0x14] sm:$0xf]
        %v941 = vld [vmem:[%s934 + $0x18] sm:$0xf]
        %v942 = vld [vmem:[%s934 + $0x1c] sm:$0xf]
        %v943 = vld [vmem:[%s934 + $0x20] sm:$0xf]
        %v944 = vld [vmem:[%s934 + $0x24] sm:$0xf]
        %v945 = vld [vmem:[%s934 + $0x28] sm:$0xf]
        %v946 = vld [vmem:[%s934 + $0x2c] sm:$0xf]
        %v947 = vld [vmem:[%s934 + $0x30] sm:$0xf]
        %v948 = vld [vmem:[%s934 + $0x34] sm:$0xf]
        %v949 = vld [vmem:[%s934 + $0x38] sm:$0xf]
        %v950 = vld [vmem:[%s934 + $0x3c] sm:$0xf]
        %v951 = vunpack.c.l.b16 %v563
        %v952 = vunpack.c.l.b16 %v573
        %v953 = vunpack.c.l.b16 %v587
        %v954 = vunpack.c.l.b16 %v597
        %v955 = vunpack.c.l.b16 %v611
        %v956 = vunpack.c.l.b16 %v621
        %v957 = vunpack.c.l.b16 %v635
        %v958 = vunpack.c.l.b16 %v645
        %v959 = vunpack.c.l.b16 %v659
        %v960 = vunpack.c.l.b16 %v669
        %v961 = vunpack.c.l.b16 %v683
        %v962 = vunpack.c.l.b16 %v693
        %v963 = vunpack.c.l.b16 %v707
        %v964 = vunpack.c.l.b16 %v717
        %v965 = vunpack.c.l.b16 %v731
        %v966 = vunpack.c.l.b16 %v741
        %v967 = vunpack.c.l.b16 %v755
        %v968 = vunpack.c.l.b16 %v765
        %v969 = vunpack.c.l.b16 %v779
        %v970 = vunpack.c.l.b16 %v789
        %v971 = vunpack.c.l.b16 %v803
        %v972 = vunpack.c.l.b16 %v813
        %v973 = vunpack.c.l.b16 %v827
        %v974 = vunpack.c.l.b16 %v837
        %v975 = vunpack.c.l.b16 %v851
        %v976 = vunpack.c.l.b16 %v861
        %v977 = vunpack.c.l.b16 %v875
        %v978 = vunpack.c.l.b16 %v885
        %v979 = vunpack.c.l.b16 %v899
        %v980 = vunpack.c.l.b16 %v909
        %v981 = vunpack.c.l.b16 %v923
        %v982 = vunpack.c.l.b16 %v933
        %v983 = vpack.c.b16 %v952, %v951
        %v984 = vpack.c.b16 %v954, %v953
        %v985 = vpack.c.b16 %v956, %v955
        %v986 = vpack.c.b16 %v958, %v957
        %v987 = vpack.c.b16 %v960, %v959
        %v988 = vpack.c.b16 %v962, %v961
        %v989 = vpack.c.b16 %v964, %v963
        %v990 = vpack.c.b16 %v966, %v965
        %v991 = vpack.c.b16 %v968, %v967
        %v992 = vpack.c.b16 %v970, %v969
        %v993 = vpack.c.b16 %v972, %v971
        %v994 = vpack.c.b16 %v974, %v973
        %v995 = vpack.c.b16 %v976, %v975
        %v996 = vpack.c.b16 %v978, %v977
        %v997 = vpack.c.b16 %v980, %v979
        %v998 = vpack.c.b16 %v982, %v981
        %v1031 = vunpack.c.l.b16 %v935
        %v1032 = vunpack.c.l.b16 %v936
        %v1033 = vunpack.c.l.b16 %v937
        %v1034 = vunpack.c.l.b16 %v938
        %v1035 = vunpack.c.l.b16 %v939
        %v1036 = vunpack.c.l.b16 %v940
        %v1037 = vunpack.c.l.b16 %v941
        %v1038 = vunpack.c.l.b16 %v942
        %v1039 = vunpack.c.l.b16 %v943
        %v1040 = vunpack.c.l.b16 %v944
        %v1041 = vunpack.c.l.b16 %v945
        %v1042 = vunpack.c.l.b16 %v946
        %v1043 = vunpack.c.l.b16 %v947
        %v1044 = vunpack.c.l.b16 %v948
        %v1045 = vunpack.c.l.b16 %v949
        %v1046 = vunpack.c.l.b16 %v950
        %v1047 = vpack.c.b16 %v1032, %v1031
        %v1048 = vpack.c.b16 %v1034, %v1033
        %v1049 = vpack.c.b16 %v1036, %v1035
        %v1050 = vpack.c.b16 %v1038, %v1037
        %v1051 = vpack.c.b16 %v1040, %v1039
        %v1052 = vpack.c.b16 %v1042, %v1041
        %v1053 = vpack.c.b16 %v1044, %v1043
        %v1054 = vpack.c.b16 %v1046, %v1045
        %1063 = vmatpush.bf16.msra.mxu0 %v1054
        %1064 = vmatpush.bf16.msra.mxu0 %v1053
        %1065 = vmatpush.bf16.msra.mxu0 %v1052
        %1066 = vmatpush.bf16.msra.mxu0 %v1051
        %1067 = vmatpush.bf16.msra.mxu0 %v1050
        %1068 = vmatpush.bf16.msra.mxu0 %v1049
        %1069 = vmatpush.bf16.msra.mxu0 %v1048
        %1070 = vmatpush.bf16.msra.mxu0 %v1047
        %1071 = vmatmul.bf16.gmra.mxu0 %v983
        %v1072 = vpop.f32.mrf.mxu0
        %v1073 = vadd.f32 0.0, %v1072
        %v1074 = vpop.f32.mrf.mxu0
        %v1075 = vadd.f32 0.0, %v1074
        %1076 = vmatmul.bf16.gmra.mxu0 %v984
        %v1077 = vpop.f32.mrf.mxu0
        %v1078 = vadd.f32 0.0, %v1077
        %v1079 = vpop.f32.mrf.mxu0
        %v1080 = vadd.f32 0.0, %v1079
        %1081 = vmatmul.bf16.gmra.mxu0 %v985
        %v1082 = vpop.f32.mrf.mxu0
        %v1083 = vadd.f32 0.0, %v1082
        %v1084 = vpop.f32.mrf.mxu0
        %v1085 = vadd.f32 0.0, %v1084
        %1086 = vmatmul.bf16.gmra.mxu0 %v986
        %v1087 = vpop.f32.mrf.mxu0
        %v1088 = vadd.f32 0.0, %v1087
        %v1089 = vpop.f32.mrf.mxu0
        %v1090 = vadd.f32 0.0, %v1089
        %1091 = vmatmul.bf16.gmra.mxu0 %v987
        %v1092 = vpop.f32.mrf.mxu0
        %v1093 = vadd.f32 0.0, %v1092
        %v1094 = vpop.f32.mrf.mxu0
        %v1095 = vadd.f32 0.0, %v1094
        %1096 = vmatmul.bf16.gmra.mxu0 %v988
        %v1097 = vpop.f32.mrf.mxu0
        %v1098 = vadd.f32 0.0, %v1097
        %v1099 = vpop.f32.mrf.mxu0
        %v1100 = vadd.f32 0.0, %v1099
        %1101 = vmatmul.bf16.gmra.mxu0 %v989
        %v1102 = vpop.f32.mrf.mxu0
        %v1103 = vadd.f32 0.0, %v1102
        %v1104 = vpop.f32.mrf.mxu0
        %v1105 = vadd.f32 0.0, %v1104
        %1106 = vmatmul.bf16.gmra.mxu0 %v990
        %v1107 = vpop.f32.mrf.mxu0
        %v1108 = vadd.f32 0.0, %v1107
        %v1109 = vpop.f32.mrf.mxu0
        %v1110 = vadd.f32 0.0, %v1109
        %1111 = vmatmul.bf16.gmra.mxu0 %v991
        %v1112 = vpop.f32.mrf.mxu0
        %v1113 = vadd.f32 0.0, %v1112
        %v1114 = vpop.f32.mrf.mxu0
        %v1115 = vadd.f32 0.0, %v1114
        %1116 = vmatmul.bf16.gmra.mxu0 %v992
        %v1117 = vpop.f32.mrf.mxu0
        %v1118 = vadd.f32 0.0, %v1117
        %v1119 = vpop.f32.mrf.mxu0
        %v1120 = vadd.f32 0.0, %v1119
        %1121 = vmatmul.bf16.gmra.mxu0 %v993
        %v1122 = vpop.f32.mrf.mxu0
        %v1123 = vadd.f32 0.0, %v1122
        %v1124 = vpop.f32.mrf.mxu0
        %v1125 = vadd.f32 0.0, %v1124
        %1126 = vmatmul.bf16.gmra.mxu0 %v994
        %v1127 = vpop.f32.mrf.mxu0
        %v1128 = vadd.f32 0.0, %v1127
        %v1129 = vpop.f32.mrf.mxu0
        %v1130 = vadd.f32 0.0, %v1129
        %1131 = vmatmul.bf16.gmra.mxu0 %v995
        %v1132 = vpop.f32.mrf.mxu0
        %v1133 = vadd.f32 0.0, %v1132
        %v1134 = vpop.f32.mrf.mxu0
        %v1135 = vadd.f32 0.0, %v1134
        %1136 = vmatmul.bf16.gmra.mxu0 %v996
        %v1137 = vpop.f32.mrf.mxu0
        %v1138 = vadd.f32 0.0, %v1137
        %v1139 = vpop.f32.mrf.mxu0
        %v1140 = vadd.f32 0.0, %v1139
        %1141 = vmatmul.bf16.gmra.mxu0 %v997
        %v1142 = vpop.f32.mrf.mxu0
        %v1143 = vadd.f32 0.0, %v1142
        %v1144 = vpop.f32.mrf.mxu0
        %v1145 = vadd.f32 0.0, %v1144
        %1146 = vmatmul.bf16.gmra.mxu0 %v998
        %v1147 = vpop.f32.mrf.mxu0
        %v1148 = vadd.f32 0.0, %v1147
        %v1149 = vpop.f32.mrf.mxu0
        %v1150 = vadd.f32 0.0, %v1149
        %1151 = vdwg.mxu0
        %v1184 = vunpack.c.l.b16 %v483
        %v1185 = vunpack.c.l.b16 %v484
        %v1186 = vunpack.c.l.b16 %v485
        %v1187 = vunpack.c.l.b16 %v486
        %v1188 = vunpack.c.l.b16 %v487
        %v1189 = vunpack.c.l.b16 %v488
        %v1190 = vunpack.c.l.b16 %v489
        %v1191 = vunpack.c.l.b16 %v490
        %v1192 = vunpack.c.l.b16 %v491
        %v1193 = vunpack.c.l.b16 %v492
        %v1194 = vunpack.c.l.b16 %v493
        %v1195 = vunpack.c.l.b16 %v494
        %v1196 = vunpack.c.l.b16 %v495
        %v1197 = vunpack.c.l.b16 %v496
        %v1198 = vunpack.c.l.b16 %v497
        %v1199 = vunpack.c.l.b16 %v498
        %v1200 = vunpack.c.l.b16 %v499
        %v1201 = vunpack.c.l.b16 %v500
        %v1202 = vunpack.c.l.b16 %v501
        %v1203 = vunpack.c.l.b16 %v502
        %v1204 = vunpack.c.l.b16 %v503
        %v1205 = vunpack.c.l.b16 %v504
        %v1206 = vunpack.c.l.b16 %v505
        %v1207 = vunpack.c.l.b16 %v506
        %v1208 = vunpack.c.l.b16 %v507
        %v1209 = vunpack.c.l.b16 %v508
        %v1210 = vunpack.c.l.b16 %v509
        %v1211 = vunpack.c.l.b16 %v510
        %v1212 = vunpack.c.l.b16 %v511
        %v1213 = vunpack.c.l.b16 %v512
        %v1214 = vunpack.c.l.b16 %v513
        %v1215 = vunpack.c.l.b16 %v514
        %v1216 = vpack.c.b16 %v1185, %v1184
        %v1217 = vpack.c.b16 %v1187, %v1186
        %v1218 = vpack.c.b16 %v1189, %v1188
        %v1219 = vpack.c.b16 %v1191, %v1190
        %v1220 = vpack.c.b16 %v1193, %v1192
        %v1221 = vpack.c.b16 %v1195, %v1194
        %v1222 = vpack.c.b16 %v1197, %v1196
        %v1223 = vpack.c.b16 %v1199, %v1198
        %v1224 = vpack.c.b16 %v1201, %v1200
        %v1225 = vpack.c.b16 %v1203, %v1202
        %v1226 = vpack.c.b16 %v1205, %v1204
        %v1227 = vpack.c.b16 %v1207, %v1206
        %v1228 = vpack.c.b16 %v1209, %v1208
        %v1229 = vpack.c.b16 %v1211, %v1210
        %v1230 = vpack.c.b16 %v1213, %v1212
        %v1231 = vpack.c.b16 %v1215, %v1214
        %v1264 = vunpack.c.l.b16 %v515
        %v1265 = vunpack.c.l.b16 %v516
        %v1266 = vunpack.c.l.b16 %v517
        %v1267 = vunpack.c.l.b16 %v518
        %v1268 = vunpack.c.l.b16 %v519
        %v1269 = vunpack.c.l.b16 %v520
        %v1270 = vunpack.c.l.b16 %v521
        %v1271 = vunpack.c.l.b16 %v522
        %v1272 = vunpack.c.l.b16 %v523
        %v1273 = vunpack.c.l.b16 %v524
        %v1274 = vunpack.c.l.b16 %v525
        %v1275 = vunpack.c.l.b16 %v526
        %v1276 = vunpack.c.l.b16 %v527
        %v1277 = vunpack.c.l.b16 %v528
        %v1278 = vunpack.c.l.b16 %v529
        %v1279 = vunpack.c.l.b16 %v530
        %v1280 = vpack.c.b16 %v1265, %v1264
        %v1281 = vpack.c.b16 %v1267, %v1266
        %v1282 = vpack.c.b16 %v1269, %v1268
        %v1283 = vpack.c.b16 %v1271, %v1270
        %v1284 = vpack.c.b16 %v1273, %v1272
        %v1285 = vpack.c.b16 %v1275, %v1274
        %v1286 = vpack.c.b16 %v1277, %v1276
        %v1287 = vpack.c.b16 %v1279, %v1278
        %1296 = vmatpush.bf16.msra.mxu0 %v1287
        %1297 = vmatpush.bf16.msra.mxu0 %v1286
        %1298 = vmatpush.bf16.msra.mxu0 %v1285
        %1299 = vmatpush.bf16.msra.mxu0 %v1284
        %1300 = vmatpush.bf16.msra.mxu0 %v1283
        %1301 = vmatpush.bf16.msra.mxu0 %v1282
        %1302 = vmatpush.bf16.msra.mxu0 %v1281
        %1303 = vmatpush.bf16.msra.mxu0 %v1280
        %1304 = vmatmul.bf16.gmra.mxu0 %v1216
        %v1305 = vpop.f32.mrf.mxu0
        %v1306 = vadd.f32 %v1073, %v1305
        %v1307 = vpop.f32.mrf.mxu0
        %v1308 = vadd.f32 %v1075, %v1307
        %1309 = vmatmul.bf16.gmra.mxu0 %v1217
        %v1310 = vpop.f32.mrf.mxu0
        %v1311 = vadd.f32 %v1078, %v1310
        %v1312 = vpop.f32.mrf.mxu0
        %v1313 = vadd.f32 %v1080, %v1312
        %1314 = vmatmul.bf16.gmra.mxu0 %v1218
        %v1315 = vpop.f32.mrf.mxu0
        %v1316 = vadd.f32 %v1083, %v1315
        %v1317 = vpop.f32.mrf.mxu0
        %v1318 = vadd.f32 %v1085, %v1317
        %1319 = vmatmul.bf16.gmra.mxu0 %v1219
        %v1320 = vpop.f32.mrf.mxu0
        %v1321 = vadd.f32 %v1088, %v1320
        %v1322 = vpop.f32.mrf.mxu0
        %v1323 = vadd.f32 %v1090, %v1322
        %1324 = vmatmul.bf16.gmra.mxu0 %v1220
        %v1325 = vpop.f32.mrf.mxu0
        %v1326 = vadd.f32 %v1093, %v1325
        %v1327 = vpop.f32.mrf.mxu0
        %v1328 = vadd.f32 %v1095, %v1327
        %1329 = vmatmul.bf16.gmra.mxu0 %v1221
        %v1330 = vpop.f32.mrf.mxu0
        %v1331 = vadd.f32 %v1098, %v1330
        %v1332 = vpop.f32.mrf.mxu0
        %v1333 = vadd.f32 %v1100, %v1332
        %1334 = vmatmul.bf16.gmra.mxu0 %v1222
        %v1335 = vpop.f32.mrf.mxu0
        %v1336 = vadd.f32 %v1103, %v1335
        %v1337 = vpop.f32.mrf.mxu0
        %v1338 = vadd.f32 %v1105, %v1337
        %1339 = vmatmul.bf16.gmra.mxu0 %v1223
        %v1340 = vpop.f32.mrf.mxu0
        %v1341 = vadd.f32 %v1108, %v1340
        %v1342 = vpop.f32.mrf.mxu0
        %v1343 = vadd.f32 %v1110, %v1342
        %1344 = vmatmul.bf16.gmra.mxu0 %v1224
        %v1345 = vpop.f32.mrf.mxu0
        %v1346 = vadd.f32 %v1113, %v1345
        %v1347 = vpop.f32.mrf.mxu0
        %v1348 = vadd.f32 %v1115, %v1347
        %1349 = vmatmul.bf16.gmra.mxu0 %v1225
        %v1350 = vpop.f32.mrf.mxu0
        %v1351 = vadd.f32 %v1118, %v1350
        %v1352 = vpop.f32.mrf.mxu0
        %v1353 = vadd.f32 %v1120, %v1352
        %1354 = vmatmul.bf16.gmra.mxu0 %v1226
        %v1355 = vpop.f32.mrf.mxu0
        %v1356 = vadd.f32 %v1123, %v1355
        %v1357 = vpop.f32.mrf.mxu0
        %v1358 = vadd.f32 %v1125, %v1357
        %1359 = vmatmul.bf16.gmra.mxu0 %v1227
        %v1360 = vpop.f32.mrf.mxu0
        %v1361 = vadd.f32 %v1128, %v1360
        %v1362 = vpop.f32.mrf.mxu0
        %v1363 = vadd.f32 %v1130, %v1362
        %1364 = vmatmul.bf16.gmra.mxu0 %v1228
        %v1365 = vpop.f32.mrf.mxu0
        %v1366 = vadd.f32 %v1133, %v1365
        %v1367 = vpop.f32.mrf.mxu0
        %v1368 = vadd.f32 %v1135, %v1367
        %1369 = vmatmul.bf16.gmra.mxu0 %v1229
        %v1370 = vpop.f32.mrf.mxu0
        %v1371 = vadd.f32 %v1138, %v1370
        %v1372 = vpop.f32.mrf.mxu0
        %v1373 = vadd.f32 %v1140, %v1372
        %1374 = vmatmul.bf16.gmra.mxu0 %v1230
        %v1375 = vpop.f32.mrf.mxu0
        %v1376 = vadd.f32 %v1143, %v1375
        %v1377 = vpop.f32.mrf.mxu0
        %v1378 = vadd.f32 %v1145, %v1377
        %1379 = vmatmul.bf16.gmra.mxu0 %v1231
        %v1380 = vpop.f32.mrf.mxu0
        %v1381 = vadd.f32 %v1148, %v1380
        %v1382 = vpop.f32.mrf.mxu0
        %v1383 = vadd.f32 %v1150, %v1382
        %1384 = vdwg.mxu0
        %v1385 = vld [vmem:[%s417] sm:$0xe]
        %v1386 = vld [vmem:[%s417 + $0xc] sm:$0xe]
        %v1387 = vld [vmem:[%s417 + $0x18] sm:$0xe]
        %v1388 = vld [vmem:[%s417 + $0x24] sm:$0xe]
        %v1389 = vld [vmem:[%s417 + $0x30] sm:$0xe]
        %v1390 = vld [vmem:[%s417 + $0x3c] sm:$0xe]
        %v1391 = vld [vmem:[%s417 + $0x48] sm:$0xe]
        %v1392 = vld [vmem:[%s417 + $0x54] sm:$0xe]
        %v1393 = vld [vmem:[%s417 + $0x60] sm:$0xe]
        %v1394 = vld [vmem:[%s417 + $0x6c] sm:$0xe]
        %v1395 = vld [vmem:[%s417 + $0x78] sm:$0xe]
        %v1396 = vld [vmem:[%s417 + $0x84] sm:$0xe]
        %v1397 = vld [vmem:[%s417 + $0x90] sm:$0xe]
        %v1398 = vld [vmem:[%s417 + $0x9c] sm:$0xe]
        %v1399 = vld [vmem:[%s417 + $0xa8] sm:$0xe]
        %v1400 = vld [vmem:[%s417 + $0xb4] sm:$0xe]
        %vm1433 = vcmask 1042432
        %vm1434 = vcmask 1046532
        %vm1435 = vmor %vm1433, %vm1434
        %v1436 = vrot.slane %v1385, 5
        %v1437 = vrot.slane %v1436, 4
        %v1438 = vrot.slane %v484, 5
        %v1439 = vsel %vm1435, %v1437, %v1438
        %v1440 = vrot.slane %v1438, 4
        %v1441 = vrot.slane %v531, 5
        %v1442 = vsel %vm1435, %v1440, %v1441
        %v1443 = vrot.slane %v1386, 5
        %v1444 = vrot.slane %v1443, 4
        %v1445 = vrot.slane %v486, 5
        %v1446 = vsel %vm1435, %v1444, %v1445
        %v1447 = vrot.slane %v1445, 4
        %v1448 = vrot.slane %v532, 5
        %v1449 = vsel %vm1435, %v1447, %v1448
        %v1450 = vrot.slane %v1387, 5
        %v1451 = vrot.slane %v1450, 4
        %v1452 = vrot.slane %v488, 5
        %v1453 = vsel %vm1435, %v1451, %v1452
        %v1454 = vrot.slane %v1452, 4
        %v1455 = vrot.slane %v533, 5
        %v1456 = vsel %vm1435, %v1454, %v1455
        %v1457 = vrot.slane %v1388, 5
        %v1458 = vrot.slane %v1457, 4
        %v1459 = vrot.slane %v490, 5
        %v1460 = vsel %vm1435, %v1458, %v1459
        %v1461 = vrot.slane %v1459, 4
        %v1462 = vrot.slane %v534, 5
        %v1463 = vsel %vm1435, %v1461, %v1462
        %v1464 = vrot.slane %v1389, 5
        %v1465 = vrot.slane %v1464, 4
        %v1466 = vrot.slane %v492, 5
        %v1467 = vsel %vm1435, %v1465, %v1466
        %v1468 = vrot.slane %v1466, 4
        %v1469 = vrot.slane %v535, 5
        %v1470 = vsel %vm1435, %v1468, %v1469
        %v1471 = vrot.slane %v1390, 5
        %v1472 = vrot.slane %v1471, 4
        %v1473 = vrot.slane %v494, 5
        %v1474 = vsel %vm1435, %v1472, %v1473
        %v1475 = vrot.slane %v1473, 4
        %v1476 = vrot.slane %v536, 5
        %v1477 = vsel %vm1435, %v1475, %v1476
        %v1478 = vrot.slane %v1391, 5
        %v1479 = vrot.slane %v1478, 4
        %v1480 = vrot.slane %v496, 5
        %v1481 = vsel %vm1435, %v1479, %v1480
        %v1482 = vrot.slane %v1480, 4
        %v1483 = vrot.slane %v537, 5
        %v1484 = vsel %vm1435, %v1482, %v1483
        %v1485 = vrot.slane %v1392, 5
        %v1486 = vrot.slane %v1485, 4
        %v1487 = vrot.slane %v498, 5
        %v1488 = vsel %vm1435, %v1486, %v1487
        %v1489 = vrot.slane %v1487, 4
        %v1490 = vrot.slane %v538, 5
        %v1491 = vsel %vm1435, %v1489, %v1490
        %v1492 = vrot.slane %v1393, 5
        %v1493 = vrot.slane %v1492, 4
        %v1494 = vrot.slane %v500, 5
        %v1495 = vsel %vm1435, %v1493, %v1494
        %v1496 = vrot.slane %v1494, 4
        %v1497 = vrot.slane %v539, 5
        %v1498 = vsel %vm1435, %v1496, %v1497
        %v1499 = vrot.slane %v1394, 5
        %v1500 = vrot.slane %v1499, 4
        %v1501 = vrot.slane %v502, 5
        %v1502 = vsel %vm1435, %v1500, %v1501
        %v1503 = vrot.slane %v1501, 4
        %v1504 = vrot.slane %v540, 5
        %v1505 = vsel %vm1435, %v1503, %v1504
        %v1506 = vrot.slane %v1395, 5
        %v1507 = vrot.slane %v1506, 4
        %v1508 = vrot.slane %v504, 5
        %v1509 = vsel %vm1435, %v1507, %v1508
        %v1510 = vrot.slane %v1508, 4
        %v1511 = vrot.slane %v541, 5
        %v1512 = vsel %vm1435, %v1510, %v1511
        %v1513 = vrot.slane %v1396, 5
        %v1514 = vrot.slane %v1513, 4
        %v1515 = vrot.slane %v506, 5
        %v1516 = vsel %vm1435, %v1514, %v1515
        %v1517 = vrot.slane %v1515, 4
        %v1518 = vrot.slane %v542, 5
        %v1519 = vsel %vm1435, %v1517, %v1518
        %v1520 = vrot.slane %v1397, 5
        %v1521 = vrot.slane %v1520, 4
        %v1522 = vrot.slane %v508, 5
        %v1523 = vsel %vm1435, %v1521, %v1522
        %v1524 = vrot.slane %v1522, 4
        %v1525 = vrot.slane %v543, 5
        %v1526 = vsel %vm1435, %v1524, %v1525
        %v1527 = vrot.slane %v1398, 5
        %v1528 = vrot.slane %v1527, 4
        %v1529 = vrot.slane %v510, 5
        %v1530 = vsel %vm1435, %v1528, %v1529
        %v1531 = vrot.slane %v1529, 4
        %v1532 = vrot.slane %v544, 5
        %v1533 = vsel %vm1435, %v1531, %v1532
        %v1534 = vrot.slane %v1399, 5
        %v1535 = vrot.slane %v1534, 4
        %v1536 = vrot.slane %v512, 5
        %v1537 = vsel %vm1435, %v1535, %v1536
        %v1538 = vrot.slane %v1536, 4
        %v1539 = vrot.slane %v545, 5
        %v1540 = vsel %vm1435, %v1538, %v1539
        %v1541 = vrot.slane %v1400, 5
        %v1542 = vrot.slane %v1541, 4
        %v1543 = vrot.slane %v514, 5
        %v1544 = vsel %vm1435, %v1542, %v1543
        %v1545 = vrot.slane %v1543, 4
        %v1546 = vrot.slane %v546, 5
        %v1547 = vsel %vm1435, %v1545, %v1546
        %s1548 = scalar_lea.vmem [#allocation8], 128
        %v1549 = vld [vmem:[%s1548] sm:$0xf]
        %v1550 = vld [vmem:[%s1548 + $0x4] sm:$0xf]
        %v1551 = vld [vmem:[%s1548 + $0x8] sm:$0xf]
        %v1552 = vld [vmem:[%s1548 + $0xc] sm:$0xf]
        %v1553 = vld [vmem:[%s1548 + $0x10] sm:$0xf]
        %v1554 = vld [vmem:[%s1548 + $0x14] sm:$0xf]
        %v1555 = vld [vmem:[%s1548 + $0x18] sm:$0xf]
        %v1556 = vld [vmem:[%s1548 + $0x1c] sm:$0xf]
        %v1557 = vld [vmem:[%s1548 + $0x20] sm:$0xf]
        %v1558 = vld [vmem:[%s1548 + $0x24] sm:$0xf]
        %v1559 = vld [vmem:[%s1548 + $0x28] sm:$0xf]
        %v1560 = vld [vmem:[%s1548 + $0x2c] sm:$0xf]
        %v1561 = vld [vmem:[%s1548 + $0x30] sm:$0xf]
        %v1562 = vld [vmem:[%s1548 + $0x34] sm:$0xf]
        %v1563 = vld [vmem:[%s1548 + $0x38] sm:$0xf]
        %v1564 = vld [vmem:[%s1548 + $0x3c] sm:$0xf]
        %v1565 = vunpack.c.l.b16 %v1439
        %v1566 = vunpack.c.l.b16 %v1442
        %v1567 = vunpack.c.l.b16 %v1446
        %v1568 = vunpack.c.l.b16 %v1449
        %v1569 = vunpack.c.l.b16 %v1453
        %v1570 = vunpack.c.l.b16 %v1456
        %v1571 = vunpack.c.l.b16 %v1460
        %v1572 = vunpack.c.l.b16 %v1463
        %v1573 = vunpack.c.l.b16 %v1467
        %v1574 = vunpack.c.l.b16 %v1470
        %v1575 = vunpack.c.l.b16 %v1474
        %v1576 = vunpack.c.l.b16 %v1477
        %v1577 = vunpack.c.l.b16 %v1481
        %v1578 = vunpack.c.l.b16 %v1484
        %v1579 = vunpack.c.l.b16 %v1488
        %v1580 = vunpack.c.l.b16 %v1491
        %v1581 = vunpack.c.l.b16 %v1495
        %v1582 = vunpack.c.l.b16 %v1498
        %v1583 = vunpack.c.l.b16 %v1502
        %v1584 = vunpack.c.l.b16 %v1505
        %v1585 = vunpack.c.l.b16 %v1509
        %v1586 = vunpack.c.l.b16 %v1512
        %v1587 = vunpack.c.l.b16 %v1516
        %v1588 = vunpack.c.l.b16 %v1519
        %v1589 = vunpack.c.l.b16 %v1523
        %v1590 = vunpack.c.l.b16 %v1526
        %v1591 = vunpack.c.l.b16 %v1530
        %v1592 = vunpack.c.l.b16 %v1533
        %v1593 = vunpack.c.l.b16 %v1537
        %v1594 = vunpack.c.l.b16 %v1540
        %v1595 = vunpack.c.l.b16 %v1544
        %v1596 = vunpack.c.l.b16 %v1547
        %v1597 = vpack.c.b16 %v1566, %v1565
        %v1598 = vpack.c.b16 %v1568, %v1567
        %v1599 = vpack.c.b16 %v1570, %v1569
        %v1600 = vpack.c.b16 %v1572, %v1571
        %v1601 = vpack.c.b16 %v1574, %v1573
        %v1602 = vpack.c.b16 %v1576, %v1575
        %v1603 = vpack.c.b16 %v1578, %v1577
        %v1604 = vpack.c.b16 %v1580, %v1579
        %v1605 = vpack.c.b16 %v1582, %v1581
        %v1606 = vpack.c.b16 %v1584, %v1583
        %v1607 = vpack.c.b16 %v1586, %v1585
        %v1608 = vpack.c.b16 %v1588, %v1587
        %v1609 = vpack.c.b16 %v1590, %v1589
        %v1610 = vpack.c.b16 %v1592, %v1591
        %v1611 = vpack.c.b16 %v1594, %v1593
        %v1612 = vpack.c.b16 %v1596, %v1595
        %v1645 = vunpack.c.l.b16 %v1549
        %v1646 = vunpack.c.l.b16 %v1550
        %v1647 = vunpack.c.l.b16 %v1551
        %v1648 = vunpack.c.l.b16 %v1552
        %v1649 = vunpack.c.l.b16 %v1553
        %v1650 = vunpack.c.l.b16 %v1554
        %v1651 = vunpack.c.l.b16 %v1555
        %v1652 = vunpack.c.l.b16 %v1556
        %v1653 = vunpack.c.l.b16 %v1557
        %v1654 = vunpack.c.l.b16 %v1558
        %v1655 = vunpack.c.l.b16 %v1559
        %v1656 = vunpack.c.l.b16 %v1560
        %v1657 = vunpack.c.l.b16 %v1561
        %v1658 = vunpack.c.l.b16 %v1562
        %v1659 = vunpack.c.l.b16 %v1563
        %v1660 = vunpack.c.l.b16 %v1564
        %v1661 = vpack.c.b16 %v1646, %v1645
        %v1662 = vpack.c.b16 %v1648, %v1647
        %v1663 = vpack.c.b16 %v1650, %v1649
        %v1664 = vpack.c.b16 %v1652, %v1651
        %v1665 = vpack.c.b16 %v1654, %v1653
        %v1666 = vpack.c.b16 %v1656, %v1655
        %v1667 = vpack.c.b16 %v1658, %v1657
        %v1668 = vpack.c.b16 %v1660, %v1659
        %1677 = vmatpush.bf16.msra.mxu0 %v1668
        %1678 = vmatpush.bf16.msra.mxu0 %v1667
        %1679 = vmatpush.bf16.msra.mxu0 %v1666
        %1680 = vmatpush.bf16.msra.mxu0 %v1665
        %1681 = vmatpush.bf16.msra.mxu0 %v1664
        %1682 = vmatpush.bf16.msra.mxu0 %v1663
        %1683 = vmatpush.bf16.msra.mxu0 %v1662
        %1684 = vmatpush.bf16.msra.mxu0 %v1661
        %1685 = vmatmul.bf16.gmra.mxu0 %v1597
        %v1686 = vpop.f32.mrf.mxu0
        %v1687 = vadd.f32 0.0, %v1686
        %v1688 = vpop.f32.mrf.mxu0
        %v1689 = vadd.f32 0.0, %v1688
        %1690 = vmatmul.bf16.gmra.mxu0 %v1598
        %v1691 = vpop.f32.mrf.mxu0
        %v1692 = vadd.f32 0.0, %v1691
        %v1693 = vpop.f32.mrf.mxu0
        %v1694 = vadd.f32 0.0, %v1693
        %1695 = vmatmul.bf16.gmra.mxu0 %v1599
        %v1696 = vpop.f32.mrf.mxu0
        %v1697 = vadd.f32 0.0, %v1696
        %v1698 = vpop.f32.mrf.mxu0
        %v1699 = vadd.f32 0.0, %v1698
        %1700 = vmatmul.bf16.gmra.mxu0 %v1600
        %v1701 = vpop.f32.mrf.mxu0
        %v1702 = vadd.f32 0.0, %v1701
        %v1703 = vpop.f32.mrf.mxu0
        %v1704 = vadd.f32 0.0, %v1703
        %1705 = vmatmul.bf16.gmra.mxu0 %v1601
        %v1706 = vpop.f32.mrf.mxu0
        %v1707 = vadd.f32 0.0, %v1706
        %v1708 = vpop.f32.mrf.mxu0
        %v1709 = vadd.f32 0.0, %v1708
        %1710 = vmatmul.bf16.gmra.mxu0 %v1602
        %v1711 = vpop.f32.mrf.mxu0
        %v1712 = vadd.f32 0.0, %v1711
        %v1713 = vpop.f32.mrf.mxu0
        %v1714 = vadd.f32 0.0, %v1713
        %1715 = vmatmul.bf16.gmra.mxu0 %v1603
        %v1716 = vpop.f32.mrf.mxu0
        %v1717 = vadd.f32 0.0, %v1716
        %v1718 = vpop.f32.mrf.mxu0
        %v1719 = vadd.f32 0.0, %v1718
        %1720 = vmatmul.bf16.gmra.mxu0 %v1604
        %v1721 = vpop.f32.mrf.mxu0
        %v1722 = vadd.f32 0.0, %v1721
        %v1723 = vpop.f32.mrf.mxu0
        %v1724 = vadd.f32 0.0, %v1723
        %1725 = vmatmul.bf16.gmra.mxu0 %v1605
        %v1726 = vpop.f32.mrf.mxu0
        %v1727 = vadd.f32 0.0, %v1726
        %v1728 = vpop.f32.mrf.mxu0
        %v1729 = vadd.f32 0.0, %v1728
        %1730 = vmatmul.bf16.gmra.mxu0 %v1606
        %v1731 = vpop.f32.mrf.mxu0
        %v1732 = vadd.f32 0.0, %v1731
        %v1733 = vpop.f32.mrf.mxu0
        %v1734 = vadd.f32 0.0, %v1733
        %1735 = vmatmul.bf16.gmra.mxu0 %v1607
        %v1736 = vpop.f32.mrf.mxu0
        %v1737 = vadd.f32 0.0, %v1736
        %v1738 = vpop.f32.mrf.mxu0
        %v1739 = vadd.f32 0.0, %v1738
        %1740 = vmatmul.bf16.gmra.mxu0 %v1608
        %v1741 = vpop.f32.mrf.mxu0
        %v1742 = vadd.f32 0.0, %v1741
        %v1743 = vpop.f32.mrf.mxu0
        %v1744 = vadd.f32 0.0, %v1743
        %1745 = vmatmul.bf16.gmra.mxu0 %v1609
        %v1746 = vpop.f32.mrf.mxu0
        %v1747 = vadd.f32 0.0, %v1746
        %v1748 = vpop.f32.mrf.mxu0
        %v1749 = vadd.f32 0.0, %v1748
        %1750 = vmatmul.bf16.gmra.mxu0 %v1610
        %v1751 = vpop.f32.mrf.mxu0
        %v1752 = vadd.f32 0.0, %v1751
        %v1753 = vpop.f32.mrf.mxu0
        %v1754 = vadd.f32 0.0, %v1753
        %1755 = vmatmul.bf16.gmra.mxu0 %v1611
        %v1756 = vpop.f32.mrf.mxu0
        %v1757 = vadd.f32 0.0, %v1756
        %v1758 = vpop.f32.mrf.mxu0
        %v1759 = vadd.f32 0.0, %v1758
        %1760 = vmatmul.bf16.gmra.mxu0 %v1612
        %v1761 = vpop.f32.mrf.mxu0
        %v1762 = vadd.f32 0.0, %v1761
        %v1763 = vpop.f32.mrf.mxu0
        %v1764 = vadd.f32 0.0, %v1763
        %1765 = vdwg.mxu0
        %v1766 = vadd.f32 %v1306, %v1687
        %v1767 = vadd.f32 %v1308, %v1689
        %v1768 = vadd.f32 %v1311, %v1692
        %v1769 = vadd.f32 %v1313, %v1694
        %v1770 = vadd.f32 %v1316, %v1697
        %v1771 = vadd.f32 %v1318, %v1699
        %v1772 = vadd.f32 %v1321, %v1702
        %v1773 = vadd.f32 %v1323, %v1704
        %v1774 = vadd.f32 %v1326, %v1707
        %v1775 = vadd.f32 %v1328, %v1709
        %v1776 = vadd.f32 %v1331, %v1712
        %v1777 = vadd.f32 %v1333, %v1714
        %v1778 = vadd.f32 %v1336, %v1717
        %v1779 = vadd.f32 %v1338, %v1719
        %v1780 = vadd.f32 %v1341, %v1722
        %v1781 = vadd.f32 %v1343, %v1724
        %v1782 = vadd.f32 %v1346, %v1727
        %v1783 = vadd.f32 %v1348, %v1729
        %v1784 = vadd.f32 %v1351, %v1732
        %v1785 = vadd.f32 %v1353, %v1734
        %v1786 = vadd.f32 %v1356, %v1737
        %v1787 = vadd.f32 %v1358, %v1739
        %v1788 = vadd.f32 %v1361, %v1742
        %v1789 = vadd.f32 %v1363, %v1744
        %v1790 = vadd.f32 %v1366, %v1747
        %v1791 = vadd.f32 %v1368, %v1749
        %v1792 = vadd.f32 %v1371, %v1752
        %v1793 = vadd.f32 %v1373, %v1754
        %v1794 = vadd.f32 %v1376, %v1757
        %v1795 = vadd.f32 %v1378, %v1759
        %v1796 = vadd.f32 %v1381, %v1762
        %v1797 = vadd.f32 %v1383, %v1764
        %s1798 = scalar_lea.vmem %s417, 12 [#allocation3]
        %v1799 = vld [vmem:[%s1798] sm:$0xf]
        %v1800 = vld [vmem:[%s1798 + $0x4] sm:$0xf]
        %v1801 = vld [vmem:[%s1798 + $0xc] sm:$0xf]
        %v1802 = vld [vmem:[%s1798 + $0x10] sm:$0xf]
        %v1803 = vld [vmem:[%s1798 + $0x18] sm:$0xf]
        %v1804 = vld [vmem:[%s1798 + $0x1c] sm:$0xf]
        %v1805 = vld [vmem:[%s1798 + $0x24] sm:$0xf]
        %v1806 = vld [vmem:[%s1798 + $0x28] sm:$0xf]
        %v1807 = vld [vmem:[%s1798 + $0x30] sm:$0xf]
        %v1808 = vld [vmem:[%s1798 + $0x34] sm:$0xf]
        %v1809 = vld [vmem:[%s1798 + $0x3c] sm:$0xf]
        %v1810 = vld [vmem:[%s1798 + $0x40] sm:$0xf]
        %v1811 = vld [vmem:[%s1798 + $0x48] sm:$0xf]
        %v1812 = vld [vmem:[%s1798 + $0x4c] sm:$0xf]
        %v1813 = vld [vmem:[%s1798 + $0x54] sm:$0xf]
        %v1814 = vld [vmem:[%s1798 + $0x58] sm:$0xf]
        %v1815 = vld [vmem:[%s1798 + $0x60] sm:$0xf]
        %v1816 = vld [vmem:[%s1798 + $0x64] sm:$0xf]
        %v1817 = vld [vmem:[%s1798 + $0x6c] sm:$0xf]
        %v1818 = vld [vmem:[%s1798 + $0x70] sm:$0xf]
        %v1819 = vld [vmem:[%s1798 + $0x78] sm:$0xf]
        %v1820 = vld [vmem:[%s1798 + $0x7c] sm:$0xf]
        %v1821 = vld [vmem:[%s1798 + $0x84] sm:$0xf]
        %v1822 = vld [vmem:[%s1798 + $0x88] sm:$0xf]
        %v1823 = vld [vmem:[%s1798 + $0x90] sm:$0xf]
        %v1824 = vld [vmem:[%s1798 + $0x94] sm:$0xf]
        %v1825 = vld [vmem:[%s1798 + $0x9c] sm:$0xf]
        %v1826 = vld [vmem:[%s1798 + $0xa0] sm:$0xf]
        %v1827 = vld [vmem:[%s1798 + $0xa8] sm:$0xf]
        %v1828 = vld [vmem:[%s1798 + $0xac] sm:$0xf]
        %v1829 = vld [vmem:[%s1798 + $0xb4] sm:$0xf]
        %v1830 = vld [vmem:[%s1798 + $0xb8] sm:$0xf]
        %s1831 = scalar_lea.vmem [#allocation8], 192
        %v1832 = vld [vmem:[%s1831] sm:$0xf]
        %v1833 = vld [vmem:[%s1831 + $0x4] sm:$0xf]
        %v1834 = vld [vmem:[%s1831 + $0x8] sm:$0xf]
        %v1835 = vld [vmem:[%s1831 + $0xc] sm:$0xf]
        %v1836 = vld [vmem:[%s1831 + $0x10] sm:$0xf]
        %v1837 = vld [vmem:[%s1831 + $0x14] sm:$0xf]
        %v1838 = vld [vmem:[%s1831 + $0x18] sm:$0xf]
        %v1839 = vld [vmem:[%s1831 + $0x1c] sm:$0xf]
        %v1840 = vld [vmem:[%s1831 + $0x20] sm:$0xf]
        %v1841 = vld [vmem:[%s1831 + $0x24] sm:$0xf]
        %v1842 = vld [vmem:[%s1831 + $0x28] sm:$0xf]
        %v1843 = vld [vmem:[%s1831 + $0x2c] sm:$0xf]
        %v1844 = vld [vmem:[%s1831 + $0x30] sm:$0xf]
        %v1845 = vld [vmem:[%s1831 + $0x34] sm:$0xf]
        %v1846 = vld [vmem:[%s1831 + $0x38] sm:$0xf]
        %v1847 = vld [vmem:[%s1831 + $0x3c] sm:$0xf]
        %v1880 = vunpack.c.l.b16 %v1799
        %v1881 = vunpack.c.l.b16 %v1800
        %v1882 = vunpack.c.l.b16 %v1801
        %v1883 = vunpack.c.l.b16 %v1802
        %v1884 = vunpack.c.l.b16 %v1803
        %v1885 = vunpack.c.l.b16 %v1804
        %v1886 = vunpack.c.l.b16 %v1805
        %v1887 = vunpack.c.l.b16 %v1806
        %v1888 = vunpack.c.l.b16 %v1807
        %v1889 = vunpack.c.l.b16 %v1808
        %v1890 = vunpack.c.l.b16 %v1809
        %v1891 = vunpack.c.l.b16 %v1810
        %v1892 = vunpack.c.l.b16 %v1811
        %v1893 = vunpack.c.l.b16 %v1812
        %v1894 = vunpack.c.l.b16 %v1813
        %v1895 = vunpack.c.l.b16 %v1814
        %v1896 = vunpack.c.l.b16 %v1815
        %v1897 = vunpack.c.l.b16 %v1816
        %v1898 = vunpack.c.l.b16 %v1817
        %v1899 = vunpack.c.l.b16 %v1818
        %v1900 = vunpack.c.l.b16 %v1819
        %v1901 = vunpack.c.l.b16 %v1820
        %v1902 = vunpack.c.l.b16 %v1821
        %v1903 = vunpack.c.l.b16 %v1822
        %v1904 = vunpack.c.l.b16 %v1823
        %v1905 = vunpack.c.l.b16 %v1824
        %v1906 = vunpack.c.l.b16 %v1825
        %v1907 = vunpack.c.l.b16 %v1826
        %v1908 = vunpack.c.l.b16 %v1827
        %v1909 = vunpack.c.l.b16 %v1828
        %v1910 = vunpack.c.l.b16 %v1829
        %v1911 = vunpack.c.l.b16 %v1830
        %v1912 = vpack.c.b16 %v1881, %v1880
        %v1913 = vpack.c.b16 %v1883, %v1882
        %v1914 = vpack.c.b16 %v1885, %v1884
        %v1915 = vpack.c.b16 %v1887, %v1886
        %v1916 = vpack.c.b16 %v1889, %v1888
        %v1917 = vpack.c.b16 %v1891, %v1890
        %v1918 = vpack.c.b16 %v1893, %v1892
        %v1919 = vpack.c.b16 %v1895, %v1894
        %v1920 = vpack.c.b16 %v1897, %v1896
        %v1921 = vpack.c.b16 %v1899, %v1898
        %v1922 = vpack.c.b16 %v1901, %v1900
        %v1923 = vpack.c.b16 %v1903, %v1902
        %v1924 = vpack.c.b16 %v1905, %v1904
        %v1925 = vpack.c.b16 %v1907, %v1906
        %v1926 = vpack.c.b16 %v1909, %v1908
        %v1927 = vpack.c.b16 %v1911, %v1910
        %v1960 = vunpack.c.l.b16 %v1832
        %v1961 = vunpack.c.l.b16 %v1833
        %v1962 = vunpack.c.l.b16 %v1834
        %v1963 = vunpack.c.l.b16 %v1835
        %v1964 = vunpack.c.l.b16 %v1836
        %v1965 = vunpack.c.l.b16 %v1837
        %v1966 = vunpack.c.l.b16 %v1838
        %v1967 = vunpack.c.l.b16 %v1839
        %v1968 = vunpack.c.l.b16 %v1840
        %v1969 = vunpack.c.l.b16 %v1841
        %v1970 = vunpack.c.l.b16 %v1842
        %v1971 = vunpack.c.l.b16 %v1843
        %v1972 = vunpack.c.l.b16 %v1844
        %v1973 = vunpack.c.l.b16 %v1845
        %v1974 = vunpack.c.l.b16 %v1846
        %v1975 = vunpack.c.l.b16 %v1847
        %v1976 = vpack.c.b16 %v1961, %v1960
        %v1977 = vpack.c.b16 %v1963, %v1962
        %v1978 = vpack.c.b16 %v1965, %v1964
        %v1979 = vpack.c.b16 %v1967, %v1966
        %v1980 = vpack.c.b16 %v1969, %v1968
        %v1981 = vpack.c.b16 %v1971, %v1970
        %v1982 = vpack.c.b16 %v1973, %v1972
        %v1983 = vpack.c.b16 %v1975, %v1974
        %1992 = vmatpush.bf16.msra.mxu0 %v1983
        %1993 = vmatpush.bf16.msra.mxu0 %v1982
        %1994 = vmatpush.bf16.msra.mxu0 %v1981
        %1995 = vmatpush.bf16.msra.mxu0 %v1980
        %1996 = vmatpush.bf16.msra.mxu0 %v1979
        %1997 = vmatpush.bf16.msra.mxu0 %v1978
        %1998 = vmatpush.bf16.msra.mxu0 %v1977
        %1999 = vmatpush.bf16.msra.mxu0 %v1976
        %2000 = vmatmul.bf16.gmra.mxu0 %v1912
        %v2001 = vpop.f32.mrf.mxu0
        %v2002 = vadd.f32 0.0, %v2001
        %v2003 = vpop.f32.mrf.mxu0
        %v2004 = vadd.f32 0.0, %v2003
        %2005 = vmatmul.bf16.gmra.mxu0 %v1913
        %v2006 = vpop.f32.mrf.mxu0
        %v2007 = vadd.f32 0.0, %v2006
        %v2008 = vpop.f32.mrf.mxu0
        %v2009 = vadd.f32 0.0, %v2008
        %2010 = vmatmul.bf16.gmra.mxu0 %v1914
        %v2011 = vpop.f32.mrf.mxu0
        %v2012 = vadd.f32 0.0, %v2011
        %v2013 = vpop.f32.mrf.mxu0
        %v2014 = vadd.f32 0.0, %v2013
        %2015 = vmatmul.bf16.gmra.mxu0 %v1915
        %v2016 = vpop.f32.mrf.mxu0
        %v2017 = vadd.f32 0.0, %v2016
        %v2018 = vpop.f32.mrf.mxu0
        %v2019 = vadd.f32 0.0, %v2018
        %2020 = vmatmul.bf16.gmra.mxu0 %v1916
        %v2021 = vpop.f32.mrf.mxu0
        %v2022 = vadd.f32 0.0, %v2021
        %v2023 = vpop.f32.mrf.mxu0
        %v2024 = vadd.f32 0.0, %v2023
        %2025 = vmatmul.bf16.gmra.mxu0 %v1917
        %v2026 = vpop.f32.mrf.mxu0
        %v2027 = vadd.f32 0.0, %v2026
        %v2028 = vpop.f32.mrf.mxu0
        %v2029 = vadd.f32 0.0, %v2028
        %2030 = vmatmul.bf16.gmra.mxu0 %v1918
        %v2031 = vpop.f32.mrf.mxu0
        %v2032 = vadd.f32 0.0, %v2031
        %v2033 = vpop.f32.mrf.mxu0
        %v2034 = vadd.f32 0.0, %v2033
        %2035 = vmatmul.bf16.gmra.mxu0 %v1919
        %v2036 = vpop.f32.mrf.mxu0
        %v2037 = vadd.f32 0.0, %v2036
        %v2038 = vpop.f32.mrf.mxu0
        %v2039 = vadd.f32 0.0, %v2038
        %2040 = vmatmul.bf16.gmra.mxu0 %v1920
        %v2041 = vpop.f32.mrf.mxu0
        %v2042 = vadd.f32 0.0, %v2041
        %v2043 = vpop.f32.mrf.mxu0
        %v2044 = vadd.f32 0.0, %v2043
        %2045 = vmatmul.bf16.gmra.mxu0 %v1921
        %v2046 = vpop.f32.mrf.mxu0
        %v2047 = vadd.f32 0.0, %v2046
        %v2048 = vpop.f32.mrf.mxu0
        %v2049 = vadd.f32 0.0, %v2048
        %2050 = vmatmul.bf16.gmra.mxu0 %v1922
        %v2051 = vpop.f32.mrf.mxu0
        %v2052 = vadd.f32 0.0, %v2051
        %v2053 = vpop.f32.mrf.mxu0
        %v2054 = vadd.f32 0.0, %v2053
        %2055 = vmatmul.bf16.gmra.mxu0 %v1923
        %v2056 = vpop.f32.mrf.mxu0
        %v2057 = vadd.f32 0.0, %v2056
        %v2058 = vpop.f32.mrf.mxu0
        %v2059 = vadd.f32 0.0, %v2058
        %2060 = vmatmul.bf16.gmra.mxu0 %v1924
        %v2061 = vpop.f32.mrf.mxu0
        %v2062 = vadd.f32 0.0, %v2061
        %v2063 = vpop.f32.mrf.mxu0
        %v2064 = vadd.f32 0.0, %v2063
        %2065 = vmatmul.bf16.gmra.mxu0 %v1925
        %v2066 = vpop.f32.mrf.mxu0
        %v2067 = vadd.f32 0.0, %v2066
        %v2068 = vpop.f32.mrf.mxu0
        %v2069 = vadd.f32 0.0, %v2068
        %2070 = vmatmul.bf16.gmra.mxu0 %v1926
        %v2071 = vpop.f32.mrf.mxu0
        %v2072 = vadd.f32 0.0, %v2071
        %v2073 = vpop.f32.mrf.mxu0
        %v2074 = vadd.f32 0.0, %v2073
        %2075 = vmatmul.bf16.gmra.mxu0 %v1927
        %v2076 = vpop.f32.mrf.mxu0
        %v2077 = vadd.f32 0.0, %v2076
        %v2078 = vpop.f32.mrf.mxu0
        %v2079 = vadd.f32 0.0, %v2078
        %2080 = vdwg.mxu0
        %v2081 = vadd.f32 %v1766, %v2002
        %v2082 = vadd.f32 %v1767, %v2004
        %v2083 = vadd.f32 %v1768, %v2007
        %v2084 = vadd.f32 %v1769, %v2009
        %v2085 = vadd.f32 %v1770, %v2012
        %v2086 = vadd.f32 %v1771, %v2014
        %v2087 = vadd.f32 %v1772, %v2017
        %v2088 = vadd.f32 %v1773, %v2019
        %v2089 = vadd.f32 %v1774, %v2022
        %v2090 = vadd.f32 %v1775, %v2024
        %v2091 = vadd.f32 %v1776, %v2027
        %v2092 = vadd.f32 %v1777, %v2029
        %v2093 = vadd.f32 %v1778, %v2032
        %v2094 = vadd.f32 %v1779, %v2034
        %v2095 = vadd.f32 %v1780, %v2037
        %v2096 = vadd.f32 %v1781, %v2039
        %v2097 = vadd.f32 %v1782, %v2042
        %v2098 = vadd.f32 %v1783, %v2044
        %v2099 = vadd.f32 %v1784, %v2047
        %v2100 = vadd.f32 %v1785, %v2049
        %v2101 = vadd.f32 %v1786, %v2052
        %v2102 = vadd.f32 %v1787, %v2054
        %v2103 = vadd.f32 %v1788, %v2057
        %v2104 = vadd.f32 %v1789, %v2059
        %v2105 = vadd.f32 %v1790, %v2062
        %v2106 = vadd.f32 %v1791, %v2064
        %v2107 = vadd.f32 %v1792, %v2067
        %v2108 = vadd.f32 %v1793, %v2069
        %v2109 = vadd.f32 %v1794, %v2072
        %v2110 = vadd.f32 %v1795, %v2074
        %v2111 = vadd.f32 %v1796, %v2077
        %v2112 = vadd.f32 %v1797, %v2079
        %v2113 = vld [vmem:[%s1798] sm:$0xf]
        %v2114 = vld [vmem:[%s1798 + $0x4] sm:$0xf]
        %v2115 = vld [vmem:[%s1798 + $0x8] sm:$0x1]
        %v2116 = vld [vmem:[%s1798 + $0xc] sm:$0xf]
        %v2117 = vld [vmem:[%s1798 + $0x10] sm:$0xf]
        %v2118 = vld [vmem:[%s1798 + $0x14] sm:$0x1]
        %v2119 = vld [vmem:[%s1798 + $0x18] sm:$0xf]
        %v2120 = vld [vmem:[%s1798 + $0x1c] sm:$0xf]
        %v2121 = vld [vmem:[%s1798 + $0x20] sm:$0x1]
        %v2122 = vld [vmem:[%s1798 + $0x24] sm:$0xf]
        %v2123 = vld [vmem:[%s1798 + $0x28] sm:$0xf]
        %v2124 = vld [vmem:[%s1798 + $0x2c] sm:$0x1]
        %v2125 = vld [vmem:[%s1798 + $0x30] sm:$0xf]
        %v2126 = vld [vmem:[%s1798 + $0x34] sm:$0xf]
        %v2127 = vld [vmem:[%s1798 + $0x38] sm:$0x1]
        %v2128 = vld [vmem:[%s1798 + $0x3c] sm:$0xf]
        %v2129 = vld [vmem:[%s1798 + $0x40] sm:$0xf]
        %v2130 = vld [vmem:[%s1798 + $0x44] sm:$0x1]
        %v2131 = vld [vmem:[%s1798 + $0x48] sm:$0xf]
        %v2132 = vld [vmem:[%s1798 + $0x4c] sm:$0xf]
        %v2133 = vld [vmem:[%s1798 + $0x50] sm:$0x1]
        %v2134 = vld [vmem:[%s1798 + $0x54] sm:$0xf]
        %v2135 = vld [vmem:[%s1798 + $0x58] sm:$0xf]
        %v2136 = vld [vmem:[%s1798 + $0x5c] sm:$0x1]
        %v2137 = vld [vmem:[%s1798 + $0x60] sm:$0xf]
        %v2138 = vld [vmem:[%s1798 + $0x64] sm:$0xf]
        %v2139 = vld [vmem:[%s1798 + $0x68] sm:$0x1]
        %v2140 = vld [vmem:[%s1798 + $0x6c] sm:$0xf]
        %v2141 = vld [vmem:[%s1798 + $0x70] sm:$0xf]
        %v2142 = vld [vmem:[%s1798 + $0x74] sm:$0x1]
        %v2143 = vld [vmem:[%s1798 + $0x78] sm:$0xf]
        %v2144 = vld [vmem:[%s1798 + $0x7c] sm:$0xf]
        %v2145 = vld [vmem:[%s1798 + $0x80] sm:$0x1]
        %v2146 = vld [vmem:[%s1798 + $0x84] sm:$0xf]
        %v2147 = vld [vmem:[%s1798 + $0x88] sm:$0xf]
        %v2148 = vld [vmem:[%s1798 + $0x8c] sm:$0x1]
        %v2149 = vld [vmem:[%s1798 + $0x90] sm:$0xf]
        %v2150 = vld [vmem:[%s1798 + $0x94] sm:$0xf]
        %v2151 = vld [vmem:[%s1798 + $0x98] sm:$0x1]
        %v2152 = vld [vmem:[%s1798 + $0x9c] sm:$0xf]
        %v2153 = vld [vmem:[%s1798 + $0xa0] sm:$0xf]
        %v2154 = vld [vmem:[%s1798 + $0xa4] sm:$0x1]
        %v2155 = vld [vmem:[%s1798 + $0xa8] sm:$0xf]
        %v2156 = vld [vmem:[%s1798 + $0xac] sm:$0xf]
        %v2157 = vld [vmem:[%s1798 + $0xb0] sm:$0x1]
        %v2158 = vld [vmem:[%s1798 + $0xb4] sm:$0xf]
        %v2159 = vld [vmem:[%s1798 + $0xb8] sm:$0xf]
        %v2160 = vld [vmem:[%s1798 + $0xbc] sm:$0x1]
        %v2162 = vshrl.u32 %v2113, 16
        %v2164 = vrot.slane %v2162, 4
        %v2165 = vshll.u32 %v2113, 16
        %v2167 = vrot.slane %v2165, 5
        %v2168 = vor.u32 %v2164, %v2167
        %v2169 = vrot.slane %v2168, 4
        %v2171 = vshll.u32 %v2114, 16
        %v2173 = vrot.slane %v2171, 5
        %v2174 = vsel %vm549, %v2169, %v2173
        %v2175 = vshrl.u32 %v2114, 16
        %v2177 = vrot.slane %v2175, 4
        %v2178 = vor.u32 %v2177, %v2173
        %v2179 = vrot.slane %v2178, 4
        %v2181 = vshll.u32 %v2115, 16
        %v2183 = vrot.slane %v2181, 5
        %v2184 = vsel %vm549, %v2179, %v2183
        %v2186 = vshrl.u32 %v2116, 16
        %v2188 = vrot.slane %v2186, 4
        %v2189 = vshll.u32 %v2116, 16
        %v2191 = vrot.slane %v2189, 5
        %v2192 = vor.u32 %v2188, %v2191
        %v2193 = vrot.slane %v2192, 4
        %v2195 = vshll.u32 %v2117, 16
        %v2197 = vrot.slane %v2195, 5
        %v2198 = vsel %vm549, %v2193, %v2197
        %v2199 = vshrl.u32 %v2117, 16
        %v2201 = vrot.slane %v2199, 4
        %v2202 = vor.u32 %v2201, %v2197
        %v2203 = vrot.slane %v2202, 4
        %v2205 = vshll.u32 %v2118, 16
        %v2207 = vrot.slane %v2205, 5
        %v2208 = vsel %vm549, %v2203, %v2207
        %v2210 = vshrl.u32 %v2119, 16
        %v2212 = vrot.slane %v2210, 4
        %v2213 = vshll.u32 %v2119, 16
        %v2215 = vrot.slane %v2213, 5
        %v2216 = vor.u32 %v2212, %v2215
        %v2217 = vrot.slane %v2216, 4
        %v2219 = vshll.u32 %v2120, 16
        %v2221 = vrot.slane %v2219, 5
        %v2222 = vsel %vm549, %v2217, %v2221
        %v2223 = vshrl.u32 %v2120, 16
        %v2225 = vrot.slane %v2223, 4
        %v2226 = vor.u32 %v2225, %v2221
        %v2227 = vrot.slane %v2226, 4
        %v2229 = vshll.u32 %v2121, 16
        %v2231 = vrot.slane %v2229, 5
        %v2232 = vsel %vm549, %v2227, %v2231
        %v2234 = vshrl.u32 %v2122, 16
        %v2236 = vrot.slane %v2234, 4
        %v2237 = vshll.u32 %v2122, 16
        %v2239 = vrot.slane %v2237, 5
        %v2240 = vor.u32 %v2236, %v2239
        %v2241 = vrot.slane %v2240, 4
        %v2243 = vshll.u32 %v2123, 16
        %v2245 = vrot.slane %v2243, 5
        %v2246 = vsel %vm549, %v2241, %v2245
        %v2247 = vshrl.u32 %v2123, 16
        %v2249 = vrot.slane %v2247, 4
        %v2250 = vor.u32 %v2249, %v2245
        %v2251 = vrot.slane %v2250, 4
        %v2253 = vshll.u32 %v2124, 16
        %v2255 = vrot.slane %v2253, 5
        %v2256 = vsel %vm549, %v2251, %v2255
        %v2258 = vshrl.u32 %v2125, 16
        %v2260 = vrot.slane %v2258, 4
        %v2261 = vshll.u32 %v2125, 16
        %v2263 = vrot.slane %v2261, 5
        %v2264 = vor.u32 %v2260, %v2263
        %v2265 = vrot.slane %v2264, 4
        %v2267 = vshll.u32 %v2126, 16
        %v2269 = vrot.slane %v2267, 5
        %v2270 = vsel %vm549, %v2265, %v2269
        %v2271 = vshrl.u32 %v2126, 16
        %v2273 = vrot.slane %v2271, 4
        %v2274 = vor.u32 %v2273, %v2269
        %v2275 = vrot.slane %v2274, 4
        %v2277 = vshll.u32 %v2127, 16
        %v2279 = vrot.slane %v2277, 5
        %v2280 = vsel %vm549, %v2275, %v2279
        %v2282 = vshrl.u32 %v2128, 16
        %v2284 = vrot.slane %v2282, 4
        %v2285 = vshll.u32 %v2128, 16
        %v2287 = vrot.slane %v2285, 5
        %v2288 = vor.u32 %v2284, %v2287
        %v2289 = vrot.slane %v2288, 4
        %v2291 = vshll.u32 %v2129, 16
        %v2293 = vrot.slane %v2291, 5
        %v2294 = vsel %vm549, %v2289, %v2293
        %v2295 = vshrl.u32 %v2129, 16
        %v2297 = vrot.slane %v2295, 4
        %v2298 = vor.u32 %v2297, %v2293
        %v2299 = vrot.slane %v2298, 4
        %v2301 = vshll.u32 %v2130, 16
        %v2303 = vrot.slane %v2301, 5
        %v2304 = vsel %vm549, %v2299, %v2303
        %v2306 = vshrl.u32 %v2131, 16
        %v2308 = vrot.slane %v2306, 4
        %v2309 = vshll.u32 %v2131, 16
        %v2311 = vrot.slane %v2309, 5
        %v2312 = vor.u32 %v2308, %v2311
        %v2313 = vrot.slane %v2312, 4
        %v2315 = vshll.u32 %v2132, 16
        %v2317 = vrot.slane %v2315, 5
        %v2318 = vsel %vm549, %v2313, %v2317
        %v2319 = vshrl.u32 %v2132, 16
        %v2321 = vrot.slane %v2319, 4
        %v2322 = vor.u32 %v2321, %v2317
        %v2323 = vrot.slane %v2322, 4
        %v2325 = vshll.u32 %v2133, 16
        %v2327 = vrot.slane %v2325, 5
        %v2328 = vsel %vm549, %v2323, %v2327
        %v2330 = vshrl.u32 %v2134, 16
        %v2332 = vrot.slane %v2330, 4
        %v2333 = vshll.u32 %v2134, 16
        %v2335 = vrot.slane %v2333, 5
        %v2336 = vor.u32 %v2332, %v2335
        %v2337 = vrot.slane %v2336, 4
        %v2339 = vshll.u32 %v2135, 16
        %v2341 = vrot.slane %v2339, 5
        %v2342 = vsel %vm549, %v2337, %v2341
        %v2343 = vshrl.u32 %v2135, 16
        %v2345 = vrot.slane %v2343, 4
        %v2346 = vor.u32 %v2345, %v2341
        %v2347 = vrot.slane %v2346, 4
        %v2349 = vshll.u32 %v2136, 16
        %v2351 = vrot.slane %v2349, 5
        %v2352 = vsel %vm549, %v2347, %v2351
        %v2354 = vshrl.u32 %v2137, 16
        %v2356 = vrot.slane %v2354, 4
        %v2357 = vshll.u32 %v2137, 16
        %v2359 = vrot.slane %v2357, 5
        %v2360 = vor.u32 %v2356, %v2359
        %v2361 = vrot.slane %v2360, 4
        %v2363 = vshll.u32 %v2138, 16
        %v2365 = vrot.slane %v2363, 5
        %v2366 = vsel %vm549, %v2361, %v2365
        %v2367 = vshrl.u32 %v2138, 16
        %v2369 = vrot.slane %v2367, 4
        %v2370 = vor.u32 %v2369, %v2365
        %v2371 = vrot.slane %v2370, 4
        %v2373 = vshll.u32 %v2139, 16
        %v2375 = vrot.slane %v2373, 5
        %v2376 = vsel %vm549, %v2371, %v2375
        %v2378 = vshrl.u32 %v2140, 16
        %v2380 = vrot.slane %v2378, 4
        %v2381 = vshll.u32 %v2140, 16
        %v2383 = vrot.slane %v2381, 5
        %v2384 = vor.u32 %v2380, %v2383
        %v2385 = vrot.slane %v2384, 4
        %v2387 = vshll.u32 %v2141, 16
        %v2389 = vrot.slane %v2387, 5
        %v2390 = vsel %vm549, %v2385, %v2389
        %v2391 = vshrl.u32 %v2141, 16
        %v2393 = vrot.slane %v2391, 4
        %v2394 = vor.u32 %v2393, %v2389
        %v2395 = vrot.slane %v2394, 4
        %v2397 = vshll.u32 %v2142, 16
        %v2399 = vrot.slane %v2397, 5
        %v2400 = vsel %vm549, %v2395, %v2399
        %v2402 = vshrl.u32 %v2143, 16
        %v2404 = vrot.slane %v2402, 4
        %v2405 = vshll.u32 %v2143, 16
        %v2407 = vrot.slane %v2405, 5
        %v2408 = vor.u32 %v2404, %v2407
        %v2409 = vrot.slane %v2408, 4
        %v2411 = vshll.u32 %v2144, 16
        %v2413 = vrot.slane %v2411, 5
        %v2414 = vsel %vm549, %v2409, %v2413
        %v2415 = vshrl.u32 %v2144, 16
        %v2417 = vrot.slane %v2415, 4
        %v2418 = vor.u32 %v2417, %v2413
        %v2419 = vrot.slane %v2418, 4
        %v2421 = vshll.u32 %v2145, 16
        %v2423 = vrot.slane %v2421, 5
        %v2424 = vsel %vm549, %v2419, %v2423
        %v2426 = vshrl.u32 %v2146, 16
        %v2428 = vrot.slane %v2426, 4
        %v2429 = vshll.u32 %v2146, 16
        %v2431 = vrot.slane %v2429, 5
        %v2432 = vor.u32 %v2428, %v2431
        %v2433 = vrot.slane %v2432, 4
        %v2435 = vshll.u32 %v2147, 16
        %v2437 = vrot.slane %v2435, 5
        %v2438 = vsel %vm549, %v2433, %v2437
        %v2439 = vshrl.u32 %v2147, 16
        %v2441 = vrot.slane %v2439, 4
        %v2442 = vor.u32 %v2441, %v2437
        %v2443 = vrot.slane %v2442, 4
        %v2445 = vshll.u32 %v2148, 16
        %v2447 = vrot.slane %v2445, 5
        %v2448 = vsel %vm549, %v2443, %v2447
        %v2450 = vshrl.u32 %v2149, 16
        %v2452 = vrot.slane %v2450, 4
        %v2453 = vshll.u32 %v2149, 16
        %v2455 = vrot.slane %v2453, 5
        %v2456 = vor.u32 %v2452, %v2455
        %v2457 = vrot.slane %v2456, 4
        %v2459 = vshll.u32 %v2150, 16
        %v2461 = vrot.slane %v2459, 5
        %v2462 = vsel %vm549, %v2457, %v2461
        %v2463 = vshrl.u32 %v2150, 16
        %v2465 = vrot.slane %v2463, 4
        %v2466 = vor.u32 %v2465, %v2461
        %v2467 = vrot.slane %v2466, 4
        %v2469 = vshll.u32 %v2151, 16
        %v2471 = vrot.slane %v2469, 5
        %v2472 = vsel %vm549, %v2467, %v2471
        %v2474 = vshrl.u32 %v2152, 16
        %v2476 = vrot.slane %v2474, 4
        %v2477 = vshll.u32 %v2152, 16
        %v2479 = vrot.slane %v2477, 5
        %v2480 = vor.u32 %v2476, %v2479
        %v2481 = vrot.slane %v2480, 4
        %v2483 = vshll.u32 %v2153, 16
        %v2485 = vrot.slane %v2483, 5
        %v2486 = vsel %vm549, %v2481, %v2485
        %v2487 = vshrl.u32 %v2153, 16
        %v2489 = vrot.slane %v2487, 4
        %v2490 = vor.u32 %v2489, %v2485
        %v2491 = vrot.slane %v2490, 4
        %v2493 = vshll.u32 %v2154, 16
        %v2495 = vrot.slane %v2493, 5
        %v2496 = vsel %vm549, %v2491, %v2495
        %v2498 = vshrl.u32 %v2155, 16
        %v2500 = vrot.slane %v2498, 4
        %v2501 = vshll.u32 %v2155, 16
        %v2503 = vrot.slane %v2501, 5
        %v2504 = vor.u32 %v2500, %v2503
        %v2505 = vrot.slane %v2504, 4
        %v2507 = vshll.u32 %v2156, 16
        %v2509 = vrot.slane %v2507, 5
        %v2510 = vsel %vm549, %v2505, %v2509
        %v2511 = vshrl.u32 %v2156, 16
        %v2513 = vrot.slane %v2511, 4
        %v2514 = vor.u32 %v2513, %v2509
        %v2515 = vrot.slane %v2514, 4
        %v2517 = vshll.u32 %v2157, 16
        %v2519 = vrot.slane %v2517, 5
        %v2520 = vsel %vm549, %v2515, %v2519
        %v2522 = vshrl.u32 %v2158, 16
        %v2524 = vrot.slane %v2522, 4
        %v2525 = vshll.u32 %v2158, 16
        %v2527 = vrot.slane %v2525, 5
        %v2528 = vor.u32 %v2524, %v2527
        %v2529 = vrot.slane %v2528, 4
        %v2531 = vshll.u32 %v2159, 16
        %v2533 = vrot.slane %v2531, 5
        %v2534 = vsel %vm549, %v2529, %v2533
        %v2535 = vshrl.u32 %v2159, 16
        %v2537 = vrot.slane %v2535, 4
        %v2538 = vor.u32 %v2537, %v2533
        %v2539 = vrot.slane %v2538, 4
        %v2541 = vshll.u32 %v2160, 16
        %v2543 = vrot.slane %v2541, 5
        %v2544 = vsel %vm549, %v2539, %v2543
        %s2545 = scalar_lea.vmem [#allocation8], 256
        %v2546 = vld [vmem:[%s2545] sm:$0xf]
        %v2547 = vld [vmem:[%s2545 + $0x4] sm:$0xf]
        %v2548 = vld [vmem:[%s2545 + $0x8] sm:$0xf]
        %v2549 = vld [vmem:[%s2545 + $0xc] sm:$0xf]
        %v2550 = vld [vmem:[%s2545 + $0x10] sm:$0xf]
        %v2551 = vld [vmem:[%s2545 + $0x14] sm:$0xf]
        %v2552 = vld [vmem:[%s2545 + $0x18] sm:$0xf]
        %v2553 = vld [vmem:[%s2545 + $0x1c] sm:$0xf]
        %v2554 = vld [vmem:[%s2545 + $0x20] sm:$0xf]
        %v2555 = vld [vmem:[%s2545 + $0x24] sm:$0xf]
        %v2556 = vld [vmem:[%s2545 + $0x28] sm:$0xf]
        %v2557 = vld [vmem:[%s2545 + $0x2c] sm:$0xf]
        %v2558 = vld [vmem:[%s2545 + $0x30] sm:$0xf]
        %v2559 = vld [vmem:[%s2545 + $0x34] sm:$0xf]
        %v2560 = vld [vmem:[%s2545 + $0x38] sm:$0xf]
        %v2561 = vld [vmem:[%s2545 + $0x3c] sm:$0xf]
        %v2562 = vunpack.c.l.b16 %v2174
        %v2563 = vunpack.c.l.b16 %v2184
        %v2564 = vunpack.c.l.b16 %v2198
        %v2565 = vunpack.c.l.b16 %v2208
        %v2566 = vunpack.c.l.b16 %v2222
        %v2567 = vunpack.c.l.b16 %v2232
        %v2568 = vunpack.c.l.b16 %v2246
        %v2569 = vunpack.c.l.b16 %v2256
        %v2570 = vunpack.c.l.b16 %v2270
        %v2571 = vunpack.c.l.b16 %v2280
        %v2572 = vunpack.c.l.b16 %v2294
        %v2573 = vunpack.c.l.b16 %v2304
        %v2574 = vunpack.c.l.b16 %v2318
        %v2575 = vunpack.c.l.b16 %v2328
        %v2576 = vunpack.c.l.b16 %v2342
        %v2577 = vunpack.c.l.b16 %v2352
        %v2578 = vunpack.c.l.b16 %v2366
        %v2579 = vunpack.c.l.b16 %v2376
        %v2580 = vunpack.c.l.b16 %v2390
        %v2581 = vunpack.c.l.b16 %v2400
        %v2582 = vunpack.c.l.b16 %v2414
        %v2583 = vunpack.c.l.b16 %v2424
        %v2584 = vunpack.c.l.b16 %v2438
        %v2585 = vunpack.c.l.b16 %v2448
        %v2586 = vunpack.c.l.b16 %v2462
        %v2587 = vunpack.c.l.b16 %v2472
        %v2588 = vunpack.c.l.b16 %v2486
        %v2589 = vunpack.c.l.b16 %v2496
        %v2590 = vunpack.c.l.b16 %v2510
        %v2591 = vunpack.c.l.b16 %v2520
        %v2592 = vunpack.c.l.b16 %v2534
        %v2593 = vunpack.c.l.b16 %v2544
        %v2594 = vpack.c.b16 %v2563, %v2562
        %v2595 = vpack.c.b16 %v2565, %v2564
        %v2596 = vpack.c.b16 %v2567, %v2566
        %v2597 = vpack.c.b16 %v2569, %v2568
        %v2598 = vpack.c.b16 %v2571, %v2570
        %v2599 = vpack.c.b16 %v2573, %v2572
        %v2600 = vpack.c.b16 %v2575, %v2574
        %v2601 = vpack.c.b16 %v2577, %v2576
        %v2602 = vpack.c.b16 %v2579, %v2578
        %v2603 = vpack.c.b16 %v2581, %v2580
        %v2604 = vpack.c.b16 %v2583, %v2582
        %v2605 = vpack.c.b16 %v2585, %v2584
        %v2606 = vpack.c.b16 %v2587, %v2586
        %v2607 = vpack.c.b16 %v2589, %v2588
        %v2608 = vpack.c.b16 %v2591, %v2590
        %v2609 = vpack.c.b16 %v2593, %v2592
        %v2642 = vunpack.c.l.b16 %v2546
        %v2643 = vunpack.c.l.b16 %v2547
        %v2644 = vunpack.c.l.b16 %v2548
        %v2645 = vunpack.c.l.b16 %v2549
        %v2646 = vunpack.c.l.b16 %v2550
        %v2647 = vunpack.c.l.b16 %v2551
        %v2648 = vunpack.c.l.b16 %v2552
        %v2649 = vunpack.c.l.b16 %v2553
        %v2650 = vunpack.c.l.b16 %v2554
        %v2651 = vunpack.c.l.b16 %v2555
        %v2652 = vunpack.c.l.b16 %v2556
        %v2653 = vunpack.c.l.b16 %v2557
        %v2654 = vunpack.c.l.b16 %v2558
        %v2655 = vunpack.c.l.b16 %v2559
        %v2656 = vunpack.c.l.b16 %v2560
        %v2657 = vunpack.c.l.b16 %v2561
        %v2658 = vpack.c.b16 %v2643, %v2642
        %v2659 = vpack.c.b16 %v2645, %v2644
        %v2660 = vpack.c.b16 %v2647, %v2646
        %v2661 = vpack.c.b16 %v2649, %v2648
        %v2662 = vpack.c.b16 %v2651, %v2650
        %v2663 = vpack.c.b16 %v2653, %v2652
        %v2664 = vpack.c.b16 %v2655, %v2654
        %v2665 = vpack.c.b16 %v2657, %v2656
        %2674 = vmatpush.bf16.msra.mxu0 %v2665
        %2675 = vmatpush.bf16.msra.mxu0 %v2664
        %2676 = vmatpush.bf16.msra.mxu0 %v2663
        %2677 = vmatpush.bf16.msra.mxu0 %v2662
        %2678 = vmatpush.bf16.msra.mxu0 %v2661
        %2679 = vmatpush.bf16.msra.mxu0 %v2660
        %2680 = vmatpush.bf16.msra.mxu0 %v2659
        %2681 = vmatpush.bf16.msra.mxu0 %v2658
        %2682 = vmatmul.bf16.gmra.mxu0 %v2594
        %v2683 = vpop.f32.mrf.mxu0
        %v2684 = vadd.f32 0.0, %v2683
        %v2685 = vpop.f32.mrf.mxu0
        %v2686 = vadd.f32 0.0, %v2685
        %2687 = vmatmul.bf16.gmra.mxu0 %v2595
        %v2688 = vpop.f32.mrf.mxu0
        %v2689 = vadd.f32 0.0, %v2688
        %v2690 = vpop.f32.mrf.mxu0
        %v2691 = vadd.f32 0.0, %v2690
        %2692 = vmatmul.bf16.gmra.mxu0 %v2596
        %v2693 = vpop.f32.mrf.mxu0
        %v2694 = vadd.f32 0.0, %v2693
        %v2695 = vpop.f32.mrf.mxu0
        %v2696 = vadd.f32 0.0, %v2695
        %2697 = vmatmul.bf16.gmra.mxu0 %v2597
        %v2698 = vpop.f32.mrf.mxu0
        %v2699 = vadd.f32 0.0, %v2698
        %v2700 = vpop.f32.mrf.mxu0
        %v2701 = vadd.f32 0.0, %v2700
        %2702 = vmatmul.bf16.gmra.mxu0 %v2598
        %v2703 = vpop.f32.mrf.mxu0
        %v2704 = vadd.f32 0.0, %v2703
        %v2705 = vpop.f32.mrf.mxu0
        %v2706 = vadd.f32 0.0, %v2705
        %2707 = vmatmul.bf16.gmra.mxu0 %v2599
        %v2708 = vpop.f32.mrf.mxu0
        %v2709 = vadd.f32 0.0, %v2708
        %v2710 = vpop.f32.mrf.mxu0
        %v2711 = vadd.f32 0.0, %v2710
        %2712 = vmatmul.bf16.gmra.mxu0 %v2600
        %v2713 = vpop.f32.mrf.mxu0
        %v2714 = vadd.f32 0.0, %v2713
        %v2715 = vpop.f32.mrf.mxu0
        %v2716 = vadd.f32 0.0, %v2715
        %2717 = vmatmul.bf16.gmra.mxu0 %v2601
        %v2718 = vpop.f32.mrf.mxu0
        %v2719 = vadd.f32 0.0, %v2718
        %v2720 = vpop.f32.mrf.mxu0
        %v2721 = vadd.f32 0.0, %v2720
        %2722 = vmatmul.bf16.gmra.mxu0 %v2602
        %v2723 = vpop.f32.mrf.mxu0
        %v2724 = vadd.f32 0.0, %v2723
        %v2725 = vpop.f32.mrf.mxu0
        %v2726 = vadd.f32 0.0, %v2725
        %2727 = vmatmul.bf16.gmra.mxu0 %v2603
        %v2728 = vpop.f32.mrf.mxu0
        %v2729 = vadd.f32 0.0, %v2728
        %v2730 = vpop.f32.mrf.mxu0
        %v2731 = vadd.f32 0.0, %v2730
        %2732 = vmatmul.bf16.gmra.mxu0 %v2604
        %v2733 = vpop.f32.mrf.mxu0
        %v2734 = vadd.f32 0.0, %v2733
        %v2735 = vpop.f32.mrf.mxu0
        %v2736 = vadd.f32 0.0, %v2735
        %2737 = vmatmul.bf16.gmra.mxu0 %v2605
        %v2738 = vpop.f32.mrf.mxu0
        %v2739 = vadd.f32 0.0, %v2738
        %v2740 = vpop.f32.mrf.mxu0
        %v2741 = vadd.f32 0.0, %v2740
        %2742 = vmatmul.bf16.gmra.mxu0 %v2606
        %v2743 = vpop.f32.mrf.mxu0
        %v2744 = vadd.f32 0.0, %v2743
        %v2745 = vpop.f32.mrf.mxu0
        %v2746 = vadd.f32 0.0, %v2745
        %2747 = vmatmul.bf16.gmra.mxu0 %v2607
        %v2748 = vpop.f32.mrf.mxu0
        %v2749 = vadd.f32 0.0, %v2748
        %v2750 = vpop.f32.mrf.mxu0
        %v2751 = vadd.f32 0.0, %v2750
        %2752 = vmatmul.bf16.gmra.mxu0 %v2608
        %v2753 = vpop.f32.mrf.mxu0
        %v2754 = vadd.f32 0.0, %v2753
        %v2755 = vpop.f32.mrf.mxu0
        %v2756 = vadd.f32 0.0, %v2755
        %2757 = vmatmul.bf16.gmra.mxu0 %v2609
        %v2758 = vpop.f32.mrf.mxu0
        %v2759 = vadd.f32 0.0, %v2758
        %v2760 = vpop.f32.mrf.mxu0
        %v2761 = vadd.f32 0.0, %v2760
        %2762 = vdwg.mxu0
        %v2763 = vadd.f32 %v2081, %v2684
        %v2764 = vadd.f32 %v2082, %v2686
        %v2765 = vadd.f32 %v2083, %v2689
        %v2766 = vadd.f32 %v2084, %v2691
        %v2767 = vadd.f32 %v2085, %v2694
        %v2768 = vadd.f32 %v2086, %v2696
        %v2769 = vadd.f32 %v2087, %v2699
        %v2770 = vadd.f32 %v2088, %v2701
        %v2771 = vadd.f32 %v2089, %v2704
        %v2772 = vadd.f32 %v2090, %v2706
        %v2773 = vadd.f32 %v2091, %v2709
        %v2774 = vadd.f32 %v2092, %v2711
        %v2775 = vadd.f32 %v2093, %v2714
        %v2776 = vadd.f32 %v2094, %v2716
        %v2777 = vadd.f32 %v2095, %v2719
        %v2778 = vadd.f32 %v2096, %v2721
        %v2779 = vadd.f32 %v2097, %v2724
        %v2780 = vadd.f32 %v2098, %v2726
        %v2781 = vadd.f32 %v2099, %v2729
        %v2782 = vadd.f32 %v2100, %v2731
        %v2783 = vadd.f32 %v2101, %v2734
        %v2784 = vadd.f32 %v2102, %v2736
        %v2785 = vadd.f32 %v2103, %v2739
        %v2786 = vadd.f32 %v2104, %v2741
        %v2787 = vadd.f32 %v2105, %v2744
        %v2788 = vadd.f32 %v2106, %v2746
        %v2789 = vadd.f32 %v2107, %v2749
        %v2790 = vadd.f32 %v2108, %v2751
        %v2791 = vadd.f32 %v2109, %v2754
        %v2792 = vadd.f32 %v2110, %v2756
        %v2793 = vadd.f32 %v2111, %v2759
        %v2794 = vadd.f32 %v2112, %v2761
        %v2795 = vld [vmem:[%s1798] sm:$0xe]
        %v2796 = vld [vmem:[%s1798 + $0xc] sm:$0xe]
        %v2797 = vld [vmem:[%s1798 + $0x18] sm:$0xe]
        %v2798 = vld [vmem:[%s1798 + $0x24] sm:$0xe]
        %v2799 = vld [vmem:[%s1798 + $0x30] sm:$0xe]
        %v2800 = vld [vmem:[%s1798 + $0x3c] sm:$0xe]
        %v2801 = vld [vmem:[%s1798 + $0x48] sm:$0xe]
        %v2802 = vld [vmem:[%s1798 + $0x54] sm:$0xe]
        %v2803 = vld [vmem:[%s1798 + $0x60] sm:$0xe]
        %v2804 = vld [vmem:[%s1798 + $0x6c] sm:$0xe]
        %v2805 = vld [vmem:[%s1798 + $0x78] sm:$0xe]
        %v2806 = vld [vmem:[%s1798 + $0x84] sm:$0xe]
        %v2807 = vld [vmem:[%s1798 + $0x90] sm:$0xe]
        %v2808 = vld [vmem:[%s1798 + $0x9c] sm:$0xe]
        %v2809 = vld [vmem:[%s1798 + $0xa8] sm:$0xe]
        %v2810 = vld [vmem:[%s1798 + $0xb4] sm:$0xe]
        %v2859 = vrot.slane %v2795, 5
        %v2860 = vrot.slane %v2859, 4
        %v2861 = vrot.slane %v2114, 5
        %v2862 = vsel %vm1435, %v2860, %v2861
        %v2863 = vrot.slane %v2861, 4
        %v2864 = vrot.slane %v2115, 5
        %v2865 = vsel %vm1435, %v2863, %v2864
        %v2866 = vrot.slane %v2796, 5
        %v2867 = vrot.slane %v2866, 4
        %v2868 = vrot.slane %v2117, 5
        %v2869 = vsel %vm1435, %v2867, %v2868
        %v2870 = vrot.slane %v2868, 4
        %v2871 = vrot.slane %v2118, 5
        %v2872 = vsel %vm1435, %v2870, %v2871
        %v2873 = vrot.slane %v2797, 5
        %v2874 = vrot.slane %v2873, 4
        %v2875 = vrot.slane %v2120, 5
        %v2876 = vsel %vm1435, %v2874, %v2875
        %v2877 = vrot.slane %v2875, 4
        %v2878 = vrot.slane %v2121, 5
        %v2879 = vsel %vm1435, %v2877, %v2878
        %v2880 = vrot.slane %v2798, 5
        %v2881 = vrot.slane %v2880, 4
        %v2882 = vrot.slane %v2123, 5
        %v2883 = vsel %vm1435, %v2881, %v2882
        %v2884 = vrot.slane %v2882, 4
        %v2885 = vrot.slane %v2124, 5
        %v2886 = vsel %vm1435, %v2884, %v2885
        %v2887 = vrot.slane %v2799, 5
        %v2888 = vrot.slane %v2887, 4
        %v2889 = vrot.slane %v2126, 5
        %v2890 = vsel %vm1435, %v2888, %v2889
        %v2891 = vrot.slane %v2889, 4
        %v2892 = vrot.slane %v2127, 5
        %v2893 = vsel %vm1435, %v2891, %v2892
        %v2894 = vrot.slane %v2800, 5
        %v2895 = vrot.slane %v2894, 4
        %v2896 = vrot.slane %v2129, 5
        %v2897 = vsel %vm1435, %v2895, %v2896
        %v2898 = vrot.slane %v2896, 4
        %v2899 = vrot.slane %v2130, 5
        %v2900 = vsel %vm1435, %v2898, %v2899
        %v2901 = vrot.slane %v2801, 5
        %v2902 = vrot.slane %v2901, 4
        %v2903 = vrot.slane %v2132, 5
        %v2904 = vsel %vm1435, %v2902, %v2903
        %v2905 = vrot.slane %v2903, 4
        %v2906 = vrot.slane %v2133, 5
        %v2907 = vsel %vm1435, %v2905, %v2906
        %v2908 = vrot.slane %v2802, 5
        %v2909 = vrot.slane %v2908, 4
        %v2910 = vrot.slane %v2135, 5
        %v2911 = vsel %vm1435, %v2909, %v2910
        %v2912 = vrot.slane %v2910, 4
        %v2913 = vrot.slane %v2136, 5
        %v2914 = vsel %vm1435, %v2912, %v2913
        %v2915 = vrot.slane %v2803, 5
        %v2916 = vrot.slane %v2915, 4
        %v2917 = vrot.slane %v2138, 5
        %v2918 = vsel %vm1435, %v2916, %v2917
        %v2919 = vrot.slane %v2917, 4
        %v2920 = vrot.slane %v2139, 5
        %v2921 = vsel %vm1435, %v2919, %v2920
        %v2922 = vrot.slane %v2804, 5
        %v2923 = vrot.slane %v2922, 4
        %v2924 = vrot.slane %v2141, 5
        %v2925 = vsel %vm1435, %v2923, %v2924
        %v2926 = vrot.slane %v2924, 4
        %v2927 = vrot.slane %v2142, 5
        %v2928 = vsel %vm1435, %v2926, %v2927
        %v2929 = vrot.slane %v2805, 5
        %v2930 = vrot.slane %v2929, 4
        %v2931 = vrot.slane %v2144, 5
        %v2932 = vsel %vm1435, %v2930, %v2931
        %v2933 = vrot.slane %v2931, 4
        %v2934 = vrot.slane %v2145, 5
        %v2935 = vsel %vm1435, %v2933, %v2934
        %v2936 = vrot.slane %v2806, 5
        %v2937 = vrot.slane %v2936, 4
        %v2938 = vrot.slane %v2147, 5
        %v2939 = vsel %vm1435, %v2937, %v2938
        %v2940 = vrot.slane %v2938, 4
        %v2941 = vrot.slane %v2148, 5
        %v2942 = vsel %vm1435, %v2940, %v2941
        %v2943 = vrot.slane %v2807, 5
        %v2944 = vrot.slane %v2943, 4
        %v2945 = vrot.slane %v2150, 5
        %v2946 = vsel %vm1435, %v2944, %v2945
        %v2947 = vrot.slane %v2945, 4
        %v2948 = vrot.slane %v2151, 5
        %v2949 = vsel %vm1435, %v2947, %v2948
        %v2950 = vrot.slane %v2808, 5
        %v2951 = vrot.slane %v2950, 4
        %v2952 = vrot.slane %v2153, 5
        %v2953 = vsel %vm1435, %v2951, %v2952
        %v2954 = vrot.slane %v2952, 4
        %v2955 = vrot.slane %v2154, 5
        %v2956 = vsel %vm1435, %v2954, %v2955
        %v2957 = vrot.slane %v2809, 5
        %v2958 = vrot.slane %v2957, 4
        %v2959 = vrot.slane %v2156, 5
        %v2960 = vsel %vm1435, %v2958, %v2959
        %v2961 = vrot.slane %v2959, 4
        %v2962 = vrot.slane %v2157, 5
        %v2963 = vsel %vm1435, %v2961, %v2962
        %v2964 = vrot.slane %v2810, 5
        %v2965 = vrot.slane %v2964, 4
        %v2966 = vrot.slane %v2159, 5
        %v2967 = vsel %vm1435, %v2965, %v2966
        %v2968 = vrot.slane %v2966, 4
        %v2969 = vrot.slane %v2160, 5
        %v2970 = vsel %vm1435, %v2968, %v2969
        %s2971 = scalar_lea.vmem [#allocation8], 320
        %v2972 = vld [vmem:[%s2971] sm:$0xf]
        %v2973 = vld [vmem:[%s2971 + $0x4] sm:$0xf]
        %v2974 = vld [vmem:[%s2971 + $0x8] sm:$0xf]
        %v2975 = vld [vmem:[%s2971 + $0xc] sm:$0xf]
        %v2976 = vld [vmem:[%s2971 + $0x10] sm:$0xf]
        %v2977 = vld [vmem:[%s2971 + $0x14] sm:$0xf]
        %v2978 = vld [vmem:[%s2971 + $0x18] sm:$0xf]
        %v2979 = vld [vmem:[%s2971 + $0x1c] sm:$0xf]
        %v2980 = vld [vmem:[%s2971 + $0x20] sm:$0xf]
        %v2981 = vld [vmem:[%s2971 + $0x24] sm:$0xf]
        %v2982 = vld [vmem:[%s2971 + $0x28] sm:$0xf]
        %v2983 = vld [vmem:[%s2971 + $0x2c] sm:$0xf]
        %v2984 = vld [vmem:[%s2971 + $0x30] sm:$0xf]
        %v2985 = vld [vmem:[%s2971 + $0x34] sm:$0xf]
        %v2986 = vld [vmem:[%s2971 + $0x38] sm:$0xf]
        %v2987 = vld [vmem:[%s2971 + $0x3c] sm:$0xf]
        %v2988 = vunpack.c.l.b16 %v2862
        %v2989 = vunpack.c.l.b16 %v2865
        %v2990 = vunpack.c.l.b16 %v2869
        %v2991 = vunpack.c.l.b16 %v2872
        %v2992 = vunpack.c.l.b16 %v2876
        %v2993 = vunpack.c.l.b16 %v2879
        %v2994 = vunpack.c.l.b16 %v2883
        %v2995 = vunpack.c.l.b16 %v2886
        %v2996 = vunpack.c.l.b16 %v2890
        %v2997 = vunpack.c.l.b16 %v2893
        %v2998 = vunpack.c.l.b16 %v2897
        %v2999 = vunpack.c.l.b16 %v2900
        %v3000 = vunpack.c.l.b16 %v2904
        %v3001 = vunpack.c.l.b16 %v2907
        %v3002 = vunpack.c.l.b16 %v2911
        %v3003 = vunpack.c.l.b16 %v2914
        %v3004 = vunpack.c.l.b16 %v2918
        %v3005 = vunpack.c.l.b16 %v2921
        %v3006 = vunpack.c.l.b16 %v2925
        %v3007 = vunpack.c.l.b16 %v2928
        %v3008 = vunpack.c.l.b16 %v2932
        %v3009 = vunpack.c.l.b16 %v2935
        %v3010 = vunpack.c.l.b16 %v2939
        %v3011 = vunpack.c.l.b16 %v2942
        %v3012 = vunpack.c.l.b16 %v2946
        %v3013 = vunpack.c.l.b16 %v2949
        %v3014 = vunpack.c.l.b16 %v2953
        %v3015 = vunpack.c.l.b16 %v2956
        %v3016 = vunpack.c.l.b16 %v2960
        %v3017 = vunpack.c.l.b16 %v2963
        %v3018 = vunpack.c.l.b16 %v2967
        %v3019 = vunpack.c.l.b16 %v2970
        %v3020 = vpack.c.b16 %v2989, %v2988
        %v3021 = vpack.c.b16 %v2991, %v2990
        %v3022 = vpack.c.b16 %v2993, %v2992
        %v3023 = vpack.c.b16 %v2995, %v2994
        %v3024 = vpack.c.b16 %v2997, %v2996
        %v3025 = vpack.c.b16 %v2999, %v2998
        %v3026 = vpack.c.b16 %v3001, %v3000
        %v3027 = vpack.c.b16 %v3003, %v3002
        %v3028 = vpack.c.b16 %v3005, %v3004
        %v3029 = vpack.c.b16 %v3007, %v3006
        %v3030 = vpack.c.b16 %v3009, %v3008
        %v3031 = vpack.c.b16 %v3011, %v3010
        %v3032 = vpack.c.b16 %v3013, %v3012
        %v3033 = vpack.c.b16 %v3015, %v3014
        %v3034 = vpack.c.b16 %v3017, %v3016
        %v3035 = vpack.c.b16 %v3019, %v3018
        %v3068 = vunpack.c.l.b16 %v2972
        %v3069 = vunpack.c.l.b16 %v2973
        %v3070 = vunpack.c.l.b16 %v2974
        %v3071 = vunpack.c.l.b16 %v2975
        %v3072 = vunpack.c.l.b16 %v2976
        %v3073 = vunpack.c.l.b16 %v2977
        %v3074 = vunpack.c.l.b16 %v2978
        %v3075 = vunpack.c.l.b16 %v2979
        %v3076 = vunpack.c.l.b16 %v2980
        %v3077 = vunpack.c.l.b16 %v2981
        %v3078 = vunpack.c.l.b16 %v2982
        %v3079 = vunpack.c.l.b16 %v2983
        %v3080 = vunpack.c.l.b16 %v2984
        %v3081 = vunpack.c.l.b16 %v2985
        %v3082 = vunpack.c.l.b16 %v2986
        %v3083 = vunpack.c.l.b16 %v2987
        %v3084 = vpack.c.b16 %v3069, %v3068
        %v3085 = vpack.c.b16 %v3071, %v3070
        %v3086 = vpack.c.b16 %v3073, %v3072
        %v3087 = vpack.c.b16 %v3075, %v3074
        %v3088 = vpack.c.b16 %v3077, %v3076
        %v3089 = vpack.c.b16 %v3079, %v3078
        %v3090 = vpack.c.b16 %v3081, %v3080
        %v3091 = vpack.c.b16 %v3083, %v3082
        %3100 = vmatpush.bf16.msra.mxu0 %v3091
        %3101 = vmatpush.bf16.msra.mxu0 %v3090
        %3102 = vmatpush.bf16.msra.mxu0 %v3089
        %3103 = vmatpush.bf16.msra.mxu0 %v3088
        %3104 = vmatpush.bf16.msra.mxu0 %v3087
        %3105 = vmatpush.bf16.msra.mxu0 %v3086
        %3106 = vmatpush.bf16.msra.mxu0 %v3085
        %3107 = vmatpush.bf16.msra.mxu0 %v3084
        %3108 = vmatmul.bf16.gmra.mxu0 %v3020
        %v3109 = vpop.f32.mrf.mxu0
        %v3110 = vadd.f32 0.0, %v3109
        %v3111 = vpop.f32.mrf.mxu0
        %v3112 = vadd.f32 0.0, %v3111
        %3113 = vmatmul.bf16.gmra.mxu0 %v3021
        %v3114 = vpop.f32.mrf.mxu0
        %v3115 = vadd.f32 0.0, %v3114
        %v3116 = vpop.f32.mrf.mxu0
        %v3117 = vadd.f32 0.0, %v3116
        %3118 = vmatmul.bf16.gmra.mxu0 %v3022
        %v3119 = vpop.f32.mrf.mxu0
        %v3120 = vadd.f32 0.0, %v3119
        %v3121 = vpop.f32.mrf.mxu0
        %v3122 = vadd.f32 0.0, %v3121
        %3123 = vmatmul.bf16.gmra.mxu0 %v3023
        %v3124 = vpop.f32.mrf.mxu0
        %v3125 = vadd.f32 0.0, %v3124
        %v3126 = vpop.f32.mrf.mxu0
        %v3127 = vadd.f32 0.0, %v3126
        %3128 = vmatmul.bf16.gmra.mxu0 %v3024
        %v3129 = vpop.f32.mrf.mxu0
        %v3130 = vadd.f32 0.0, %v3129
        %v3131 = vpop.f32.mrf.mxu0
        %v3132 = vadd.f32 0.0, %v3131
        %3133 = vmatmul.bf16.gmra.mxu0 %v3025
        %v3134 = vpop.f32.mrf.mxu0
        %v3135 = vadd.f32 0.0, %v3134
        %v3136 = vpop.f32.mrf.mxu0
        %v3137 = vadd.f32 0.0, %v3136
        %3138 = vmatmul.bf16.gmra.mxu0 %v3026
        %v3139 = vpop.f32.mrf.mxu0
        %v3140 = vadd.f32 0.0, %v3139
        %v3141 = vpop.f32.mrf.mxu0
        %v3142 = vadd.f32 0.0, %v3141
        %3143 = vmatmul.bf16.gmra.mxu0 %v3027
        %v3144 = vpop.f32.mrf.mxu0
        %v3145 = vadd.f32 0.0, %v3144
        %v3146 = vpop.f32.mrf.mxu0
        %v3147 = vadd.f32 0.0, %v3146
        %3148 = vmatmul.bf16.gmra.mxu0 %v3028
        %v3149 = vpop.f32.mrf.mxu0
        %v3150 = vadd.f32 0.0, %v3149
        %v3151 = vpop.f32.mrf.mxu0
        %v3152 = vadd.f32 0.0, %v3151
        %3153 = vmatmul.bf16.gmra.mxu0 %v3029
        %v3154 = vpop.f32.mrf.mxu0
        %v3155 = vadd.f32 0.0, %v3154
        %v3156 = vpop.f32.mrf.mxu0
        %v3157 = vadd.f32 0.0, %v3156
        %3158 = vmatmul.bf16.gmra.mxu0 %v3030
        %v3159 = vpop.f32.mrf.mxu0
        %v3160 = vadd.f32 0.0, %v3159
        %v3161 = vpop.f32.mrf.mxu0
        %v3162 = vadd.f32 0.0, %v3161
        %3163 = vmatmul.bf16.gmra.mxu0 %v3031
        %v3164 = vpop.f32.mrf.mxu0
        %v3165 = vadd.f32 0.0, %v3164
        %v3166 = vpop.f32.mrf.mxu0
        %v3167 = vadd.f32 0.0, %v3166
        %3168 = vmatmul.bf16.gmra.mxu0 %v3032
        %v3169 = vpop.f32.mrf.mxu0
        %v3170 = vadd.f32 0.0, %v3169
        %v3171 = vpop.f32.mrf.mxu0
        %v3172 = vadd.f32 0.0, %v3171
        %3173 = vmatmul.bf16.gmra.mxu0 %v3033
        %v3174 = vpop.f32.mrf.mxu0
        %v3175 = vadd.f32 0.0, %v3174
        %v3176 = vpop.f32.mrf.mxu0
        %v3177 = vadd.f32 0.0, %v3176
        %3178 = vmatmul.bf16.gmra.mxu0 %v3034
        %v3179 = vpop.f32.mrf.mxu0
        %v3180 = vadd.f32 0.0, %v3179
        %v3181 = vpop.f32.mrf.mxu0
        %v3182 = vadd.f32 0.0, %v3181
        %3183 = vmatmul.bf16.gmra.mxu0 %v3035
        %v3184 = vpop.f32.mrf.mxu0
        %v3185 = vadd.f32 0.0, %v3184
        %v3186 = vpop.f32.mrf.mxu0
        %v3187 = vadd.f32 0.0, %v3186
        %3188 = vdwg.mxu0
        %v3189 = vadd.f32 %v2763, %v3110
        %v3190 = vadd.f32 %v2764, %v3112
        %v3191 = vadd.f32 %v2765, %v3115
        %v3192 = vadd.f32 %v2766, %v3117
        %v3193 = vadd.f32 %v2767, %v3120
        %v3194 = vadd.f32 %v2768, %v3122
        %v3195 = vadd.f32 %v2769, %v3125
        %v3196 = vadd.f32 %v2770, %v3127
        %v3197 = vadd.f32 %v2771, %v3130
        %v3198 = vadd.f32 %v2772, %v3132
        %v3199 = vadd.f32 %v2773, %v3135
        %v3200 = vadd.f32 %v2774, %v3137
        %v3201 = vadd.f32 %v2775, %v3140
        %v3202 = vadd.f32 %v2776, %v3142
        %v3203 = vadd.f32 %v2777, %v3145
        %v3204 = vadd.f32 %v2778, %v3147
        %v3205 = vadd.f32 %v2779, %v3150
        %v3206 = vadd.f32 %v2780, %v3152
        %v3207 = vadd.f32 %v2781, %v3155
        %v3208 = vadd.f32 %v2782, %v3157
        %v3209 = vadd.f32 %v2783, %v3160
        %v3210 = vadd.f32 %v2784, %v3162
        %v3211 = vadd.f32 %v2785, %v3165
        %v3212 = vadd.f32 %v2786, %v3167
        %v3213 = vadd.f32 %v2787, %v3170
        %v3214 = vadd.f32 %v2788, %v3172
        %v3215 = vadd.f32 %v2789, %v3175
        %v3216 = vadd.f32 %v2790, %v3177
        %v3217 = vadd.f32 %v2791, %v3180
        %v3218 = vadd.f32 %v2792, %v3182
        %v3219 = vadd.f32 %v2793, %v3185
        %v3220 = vadd.f32 %v2794, %v3187
        %s3221 = scalar_lea.vmem %s417, 24 [#allocation3]
        %v3222 = vld [vmem:[%s3221] sm:$0xf]
        %v3223 = vld [vmem:[%s3221 + $0x4] sm:$0xf]
        %v3224 = vld [vmem:[%s3221 + $0xc] sm:$0xf]
        %v3225 = vld [vmem:[%s3221 + $0x10] sm:$0xf]
        %v3226 = vld [vmem:[%s3221 + $0x18] sm:$0xf]
        %v3227 = vld [vmem:[%s3221 + $0x1c] sm:$0xf]
        %v3228 = vld [vmem:[%s3221 + $0x24] sm:$0xf]
        %v3229 = vld [vmem:[%s3221 + $0x28] sm:$0xf]
        %v3230 = vld [vmem:[%s3221 + $0x30] sm:$0xf]
        %v3231 = vld [vmem:[%s3221 + $0x34] sm:$0xf]
        %v3232 = vld [vmem:[%s3221 + $0x3c] sm:$0xf]
        %v3233 = vld [vmem:[%s3221 + $0x40] sm:$0xf]
        %v3234 = vld [vmem:[%s3221 + $0x48] sm:$0xf]
        %v3235 = vld [vmem:[%s3221 + $0x4c] sm:$0xf]
        %v3236 = vld [vmem:[%s3221 + $0x54] sm:$0xf]
        %v3237 = vld [vmem:[%s3221 + $0x58] sm:$0xf]
        %v3238 = vld [vmem:[%s3221 + $0x60] sm:$0xf]
        %v3239 = vld [vmem:[%s3221 + $0x64] sm:$0xf]
        %v3240 = vld [vmem:[%s3221 + $0x6c] sm:$0xf]
        %v3241 = vld [vmem:[%s3221 + $0x70] sm:$0xf]
        %v3242 = vld [vmem:[%s3221 + $0x78] sm:$0xf]
        %v3243 = vld [vmem:[%s3221 + $0x7c] sm:$0xf]
        %v3244 = vld [vmem:[%s3221 + $0x84] sm:$0xf]
        %v3245 = vld [vmem:[%s3221 + $0x88] sm:$0xf]
        %v3246 = vld [vmem:[%s3221 + $0x90] sm:$0xf]
        %v3247 = vld [vmem:[%s3221 + $0x94] sm:$0xf]
        %v3248 = vld [vmem:[%s3221 + $0x9c] sm:$0xf]
        %v3249 = vld [vmem:[%s3221 + $0xa0] sm:$0xf]
        %v3250 = vld [vmem:[%s3221 + $0xa8] sm:$0xf]
        %v3251 = vld [vmem:[%s3221 + $0xac] sm:$0xf]
        %v3252 = vld [vmem:[%s3221 + $0xb4] sm:$0xf]
        %v3253 = vld [vmem:[%s3221 + $0xb8] sm:$0xf]
        %s3254 = scalar_lea.vmem [#allocation8], 384
        %v3255 = vld [vmem:[%s3254] sm:$0xf]
        %v3256 = vld [vmem:[%s3254 + $0x4] sm:$0xf]
        %v3257 = vld [vmem:[%s3254 + $0x8] sm:$0xf]
        %v3258 = vld [vmem:[%s3254 + $0xc] sm:$0xf]
        %v3259 = vld [vmem:[%s3254 + $0x10] sm:$0xf]
        %v3260 = vld [vmem:[%s3254 + $0x14] sm:$0xf]
        %v3261 = vld [vmem:[%s3254 + $0x18] sm:$0xf]
        %v3262 = vld [vmem:[%s3254 + $0x1c] sm:$0xf]
        %v3263 = vld [vmem:[%s3254 + $0x20] sm:$0xf]
        %v3264 = vld [vmem:[%s3254 + $0x24] sm:$0xf]
        %v3265 = vld [vmem:[%s3254 + $0x28] sm:$0xf]
        %v3266 = vld [vmem:[%s3254 + $0x2c] sm:$0xf]
        %v3267 = vld [vmem:[%s3254 + $0x30] sm:$0xf]
        %v3268 = vld [vmem:[%s3254 + $0x34] sm:$0xf]
        %v3269 = vld [vmem:[%s3254 + $0x38] sm:$0xf]
        %v3270 = vld [vmem:[%s3254 + $0x3c] sm:$0xf]
        %v3303 = vunpack.c.l.b16 %v3222
        %v3304 = vunpack.c.l.b16 %v3223
        %v3305 = vunpack.c.l.b16 %v3224
        %v3306 = vunpack.c.l.b16 %v3225
        %v3307 = vunpack.c.l.b16 %v3226
        %v3308 = vunpack.c.l.b16 %v3227
        %v3309 = vunpack.c.l.b16 %v3228
        %v3310 = vunpack.c.l.b16 %v3229
        %v3311 = vunpack.c.l.b16 %v3230
        %v3312 = vunpack.c.l.b16 %v3231
        %v3313 = vunpack.c.l.b16 %v3232
        %v3314 = vunpack.c.l.b16 %v3233
        %v3315 = vunpack.c.l.b16 %v3234
        %v3316 = vunpack.c.l.b16 %v3235
        %v3317 = vunpack.c.l.b16 %v3236
        %v3318 = vunpack.c.l.b16 %v3237
        %v3319 = vunpack.c.l.b16 %v3238
        %v3320 = vunpack.c.l.b16 %v3239
        %v3321 = vunpack.c.l.b16 %v3240
        %v3322 = vunpack.c.l.b16 %v3241
        %v3323 = vunpack.c.l.b16 %v3242
        %v3324 = vunpack.c.l.b16 %v3243
        %v3325 = vunpack.c.l.b16 %v3244
        %v3326 = vunpack.c.l.b16 %v3245
        %v3327 = vunpack.c.l.b16 %v3246
        %v3328 = vunpack.c.l.b16 %v3247
        %v3329 = vunpack.c.l.b16 %v3248
        %v3330 = vunpack.c.l.b16 %v3249
        %v3331 = vunpack.c.l.b16 %v3250
        %v3332 = vunpack.c.l.b16 %v3251
        %v3333 = vunpack.c.l.b16 %v3252
        %v3334 = vunpack.c.l.b16 %v3253
        %v3335 = vpack.c.b16 %v3304, %v3303
        %v3336 = vpack.c.b16 %v3306, %v3305
        %v3337 = vpack.c.b16 %v3308, %v3307
        %v3338 = vpack.c.b16 %v3310, %v3309
        %v3339 = vpack.c.b16 %v3312, %v3311
        %v3340 = vpack.c.b16 %v3314, %v3313
        %v3341 = vpack.c.b16 %v3316, %v3315
        %v3342 = vpack.c.b16 %v3318, %v3317
        %v3343 = vpack.c.b16 %v3320, %v3319
        %v3344 = vpack.c.b16 %v3322, %v3321
        %v3345 = vpack.c.b16 %v3324, %v3323
        %v3346 = vpack.c.b16 %v3326, %v3325
        %v3347 = vpack.c.b16 %v3328, %v3327
        %v3348 = vpack.c.b16 %v3330, %v3329
        %v3349 = vpack.c.b16 %v3332, %v3331
        %v3350 = vpack.c.b16 %v3334, %v3333
        %v3383 = vunpack.c.l.b16 %v3255
        %v3384 = vunpack.c.l.b16 %v3256
        %v3385 = vunpack.c.l.b16 %v3257
        %v3386 = vunpack.c.l.b16 %v3258
        %v3387 = vunpack.c.l.b16 %v3259
        %v3388 = vunpack.c.l.b16 %v3260
        %v3389 = vunpack.c.l.b16 %v3261
        %v3390 = vunpack.c.l.b16 %v3262
        %v3391 = vunpack.c.l.b16 %v3263
        %v3392 = vunpack.c.l.b16 %v3264
        %v3393 = vunpack.c.l.b16 %v3265
        %v3394 = vunpack.c.l.b16 %v3266
        %v3395 = vunpack.c.l.b16 %v3267
        %v3396 = vunpack.c.l.b16 %v3268
        %v3397 = vunpack.c.l.b16 %v3269
        %v3398 = vunpack.c.l.b16 %v3270
        %v3399 = vpack.c.b16 %v3384, %v3383
        %v3400 = vpack.c.b16 %v3386, %v3385
        %v3401 = vpack.c.b16 %v3388, %v3387
        %v3402 = vpack.c.b16 %v3390, %v3389
        %v3403 = vpack.c.b16 %v3392, %v3391
        %v3404 = vpack.c.b16 %v3394, %v3393
        %v3405 = vpack.c.b16 %v3396, %v3395
        %v3406 = vpack.c.b16 %v3398, %v3397
        %3415 = vmatpush.bf16.msra.mxu0 %v3406
        %3416 = vmatpush.bf16.msra.mxu0 %v3405
        %3417 = vmatpush.bf16.msra.mxu0 %v3404
        %3418 = vmatpush.bf16.msra.mxu0 %v3403
        %3419 = vmatpush.bf16.msra.mxu0 %v3402
        %3420 = vmatpush.bf16.msra.mxu0 %v3401
        %3421 = vmatpush.bf16.msra.mxu0 %v3400
        %3422 = vmatpush.bf16.msra.mxu0 %v3399
        %3423 = vmatmul.bf16.gmra.mxu0 %v3335
        %v3424 = vpop.f32.mrf.mxu0
        %v3425 = vadd.f32 0.0, %v3424
        %v3426 = vpop.f32.mrf.mxu0
        %v3427 = vadd.f32 0.0, %v3426
        %3428 = vmatmul.bf16.gmra.mxu0 %v3336
        %v3429 = vpop.f32.mrf.mxu0
        %v3430 = vadd.f32 0.0, %v3429
        %v3431 = vpop.f32.mrf.mxu0
        %v3432 = vadd.f32 0.0, %v3431
        %3433 = vmatmul.bf16.gmra.mxu0 %v3337
        %v3434 = vpop.f32.mrf.mxu0
        %v3435 = vadd.f32 0.0, %v3434
        %v3436 = vpop.f32.mrf.mxu0
        %v3437 = vadd.f32 0.0, %v3436
        %3438 = vmatmul.bf16.gmra.mxu0 %v3338
        %v3439 = vpop.f32.mrf.mxu0
        %v3440 = vadd.f32 0.0, %v3439
        %v3441 = vpop.f32.mrf.mxu0
        %v3442 = vadd.f32 0.0, %v3441
        %3443 = vmatmul.bf16.gmra.mxu0 %v3339
        %v3444 = vpop.f32.mrf.mxu0
        %v3445 = vadd.f32 0.0, %v3444
        %v3446 = vpop.f32.mrf.mxu0
        %v3447 = vadd.f32 0.0, %v3446
        %3448 = vmatmul.bf16.gmra.mxu0 %v3340
        %v3449 = vpop.f32.mrf.mxu0
        %v3450 = vadd.f32 0.0, %v3449
        %v3451 = vpop.f32.mrf.mxu0
        %v3452 = vadd.f32 0.0, %v3451
        %3453 = vmatmul.bf16.gmra.mxu0 %v3341
        %v3454 = vpop.f32.mrf.mxu0
        %v3455 = vadd.f32 0.0, %v3454
        %v3456 = vpop.f32.mrf.mxu0
        %v3457 = vadd.f32 0.0, %v3456
        %3458 = vmatmul.bf16.gmra.mxu0 %v3342
        %v3459 = vpop.f32.mrf.mxu0
        %v3460 = vadd.f32 0.0, %v3459
        %v3461 = vpop.f32.mrf.mxu0
        %v3462 = vadd.f32 0.0, %v3461
        %3463 = vmatmul.bf16.gmra.mxu0 %v3343
        %v3464 = vpop.f32.mrf.mxu0
        %v3465 = vadd.f32 0.0, %v3464
        %v3466 = vpop.f32.mrf.mxu0
        %v3467 = vadd.f32 0.0, %v3466
        %3468 = vmatmul.bf16.gmra.mxu0 %v3344
        %v3469 = vpop.f32.mrf.mxu0
        %v3470 = vadd.f32 0.0, %v3469
        %v3471 = vpop.f32.mrf.mxu0
        %v3472 = vadd.f32 0.0, %v3471
        %3473 = vmatmul.bf16.gmra.mxu0 %v3345
        %v3474 = vpop.f32.mrf.mxu0
        %v3475 = vadd.f32 0.0, %v3474
        %v3476 = vpop.f32.mrf.mxu0
        %v3477 = vadd.f32 0.0, %v3476
        %3478 = vmatmul.bf16.gmra.mxu0 %v3346
        %v3479 = vpop.f32.mrf.mxu0
        %v3480 = vadd.f32 0.0, %v3479
        %v3481 = vpop.f32.mrf.mxu0
        %v3482 = vadd.f32 0.0, %v3481
        %3483 = vmatmul.bf16.gmra.mxu0 %v3347
        %v3484 = vpop.f32.mrf.mxu0
        %v3485 = vadd.f32 0.0, %v3484
        %v3486 = vpop.f32.mrf.mxu0
        %v3487 = vadd.f32 0.0, %v3486
        %3488 = vmatmul.bf16.gmra.mxu0 %v3348
        %v3489 = vpop.f32.mrf.mxu0
        %v3490 = vadd.f32 0.0, %v3489
        %v3491 = vpop.f32.mrf.mxu0
        %v3492 = vadd.f32 0.0, %v3491
        %3493 = vmatmul.bf16.gmra.mxu0 %v3349
        %v3494 = vpop.f32.mrf.mxu0
        %v3495 = vadd.f32 0.0, %v3494
        %v3496 = vpop.f32.mrf.mxu0
        %v3497 = vadd.f32 0.0, %v3496
        %3498 = vmatmul.bf16.gmra.mxu0 %v3350
        %v3499 = vpop.f32.mrf.mxu0
        %v3500 = vadd.f32 0.0, %v3499
        %v3501 = vpop.f32.mrf.mxu0
        %v3502 = vadd.f32 0.0, %v3501
        %3503 = vdwg.mxu0
        %v3504 = vadd.f32 %v3189, %v3425
        %v3505 = vadd.f32 %v3190, %v3427
        %v3506 = vadd.f32 %v3191, %v3430
        %v3507 = vadd.f32 %v3192, %v3432
        %v3508 = vadd.f32 %v3193, %v3435
        %v3509 = vadd.f32 %v3194, %v3437
        %v3510 = vadd.f32 %v3195, %v3440
        %v3511 = vadd.f32 %v3196, %v3442
        %v3512 = vadd.f32 %v3197, %v3445
        %v3513 = vadd.f32 %v3198, %v3447
        %v3514 = vadd.f32 %v3199, %v3450
        %v3515 = vadd.f32 %v3200, %v3452
        %v3516 = vadd.f32 %v3201, %v3455
        %v3517 = vadd.f32 %v3202, %v3457
        %v3518 = vadd.f32 %v3203, %v3460
        %v3519 = vadd.f32 %v3204, %v3462
        %v3520 = vadd.f32 %v3205, %v3465
        %v3521 = vadd.f32 %v3206, %v3467
        %v3522 = vadd.f32 %v3207, %v3470
        %v3523 = vadd.f32 %v3208, %v3472
        %v3524 = vadd.f32 %v3209, %v3475
        %v3525 = vadd.f32 %v3210, %v3477
        %v3526 = vadd.f32 %v3211, %v3480
        %v3527 = vadd.f32 %v3212, %v3482
        %v3528 = vadd.f32 %v3213, %v3485
        %v3529 = vadd.f32 %v3214, %v3487
        %v3530 = vadd.f32 %v3215, %v3490
        %v3531 = vadd.f32 %v3216, %v3492
        %v3532 = vadd.f32 %v3217, %v3495
        %v3533 = vadd.f32 %v3218, %v3497
        %v3534 = vadd.f32 %v3219, %v3500
        %v3535 = vadd.f32 %v3220, %v3502
        %v3536 = vld [vmem:[%s3221] sm:$0xf]
        %v3537 = vld [vmem:[%s3221 + $0x4] sm:$0xf]
        %v3538 = vld [vmem:[%s3221 + $0x8] sm:$0x1]
        %v3539 = vld [vmem:[%s3221 + $0xc] sm:$0xf]
        %v3540 = vld [vmem:[%s3221 + $0x10] sm:$0xf]
        %v3541 = vld [vmem:[%s3221 + $0x14] sm:$0x1]
        %v3542 = vld [vmem:[%s3221 + $0x18] sm:$0xf]
        %v3543 = vld [vmem:[%s3221 + $0x1c] sm:$0xf]
        %v3544 = vld [vmem:[%s3221 + $0x20] sm:$0x1]
        %v3545 = vld [vmem:[%s3221 + $0x24] sm:$0xf]
        %v3546 = vld [vmem:[%s3221 + $0x28] sm:$0xf]
        %v3547 = vld [vmem:[%s3221 + $0x2c] sm:$0x1]
        %v3548 = vld [vmem:[%s3221 + $0x30] sm:$0xf]
        %v3549 = vld [vmem:[%s3221 + $0x34] sm:$0xf]
        %v3550 = vld [vmem:[%s3221 + $0x38] sm:$0x1]
        %v3551 = vld [vmem:[%s3221 + $0x3c] sm:$0xf]
        %v3552 = vld [vmem:[%s3221 + $0x40] sm:$0xf]
        %v3553 = vld [vmem:[%s3221 + $0x44] sm:$0x1]
        %v3554 = vld [vmem:[%s3221 + $0x48] sm:$0xf]
        %v3555 = vld [vmem:[%s3221 + $0x4c] sm:$0xf]
        %v3556 = vld [vmem:[%s3221 + $0x50] sm:$0x1]
        %v3557 = vld [vmem:[%s3221 + $0x54] sm:$0xf]
        %v3558 = vld [vmem:[%s3221 + $0x58] sm:$0xf]
        %v3559 = vld [vmem:[%s3221 + $0x5c] sm:$0x1]
        %v3560 = vld [vmem:[%s3221 + $0x60] sm:$0xf]
        %v3561 = vld [vmem:[%s3221 + $0x64] sm:$0xf]
        %v3562 = vld [vmem:[%s3221 + $0x68] sm:$0x1]
        %v3563 = vld [vmem:[%s3221 + $0x6c] sm:$0xf]
        %v3564 = vld [vmem:[%s3221 + $0x70] sm:$0xf]
        %v3565 = vld [vmem:[%s3221 + $0x74] sm:$0x1]
        %v3566 = vld [vmem:[%s3221 + $0x78] sm:$0xf]
        %v3567 = vld [vmem:[%s3221 + $0x7c] sm:$0xf]
        %v3568 = vld [vmem:[%s3221 + $0x80] sm:$0x1]
        %v3569 = vld [vmem:[%s3221 + $0x84] sm:$0xf]
        %v3570 = vld [vmem:[%s3221 + $0x88] sm:$0xf]
        %v3571 = vld [vmem:[%s3221 + $0x8c] sm:$0x1]
        %v3572 = vld [vmem:[%s3221 + $0x90] sm:$0xf]
        %v3573 = vld [vmem:[%s3221 + $0x94] sm:$0xf]
        %v3574 = vld [vmem:[%s3221 + $0x98] sm:$0x1]
        %v3575 = vld [vmem:[%s3221 + $0x9c] sm:$0xf]
        %v3576 = vld [vmem:[%s3221 + $0xa0] sm:$0xf]
        %v3577 = vld [vmem:[%s3221 + $0xa4] sm:$0x1]
        %v3578 = vld [vmem:[%s3221 + $0xa8] sm:$0xf]
        %v3579 = vld [vmem:[%s3221 + $0xac] sm:$0xf]
        %v3580 = vld [vmem:[%s3221 + $0xb0] sm:$0x1]
        %v3581 = vld [vmem:[%s3221 + $0xb4] sm:$0xf]
        %v3582 = vld [vmem:[%s3221 + $0xb8] sm:$0xf]
        %v3583 = vld [vmem:[%s3221 + $0xbc] sm:$0x1]
        %v3585 = vshrl.u32 %v3536, 16
        %v3587 = vrot.slane %v3585, 4
        %v3588 = vshll.u32 %v3536, 16
        %v3590 = vrot.slane %v3588, 5
        %v3591 = vor.u32 %v3587, %v3590
        %v3592 = vrot.slane %v3591, 4
        %v3594 = vshll.u32 %v3537, 16
        %v3596 = vrot.slane %v3594, 5
        %v3597 = vsel %vm549, %v3592, %v3596
        %v3598 = vshrl.u32 %v3537, 16
        %v3600 = vrot.slane %v3598, 4
        %v3601 = vor.u32 %v3600, %v3596
        %v3602 = vrot.slane %v3601, 4
        %v3604 = vshll.u32 %v3538, 16
        %v3606 = vrot.slane %v3604, 5
        %v3607 = vsel %vm549, %v3602, %v3606
        %v3609 = vshrl.u32 %v3539, 16
        %v3611 = vrot.slane %v3609, 4
        %v3612 = vshll.u32 %v3539, 16
        %v3614 = vrot.slane %v3612, 5
        %v3615 = vor.u32 %v3611, %v3614
        %v3616 = vrot.slane %v3615, 4
        %v3618 = vshll.u32 %v3540, 16
        %v3620 = vrot.slane %v3618, 5
        %v3621 = vsel %vm549, %v3616, %v3620
        %v3622 = vshrl.u32 %v3540, 16
        %v3624 = vrot.slane %v3622, 4
        %v3625 = vor.u32 %v3624, %v3620
        %v3626 = vrot.slane %v3625, 4
        %v3628 = vshll.u32 %v3541, 16
        %v3630 = vrot.slane %v3628, 5
        %v3631 = vsel %vm549, %v3626, %v3630
        %v3633 = vshrl.u32 %v3542, 16
        %v3635 = vrot.slane %v3633, 4
        %v3636 = vshll.u32 %v3542, 16
        %v3638 = vrot.slane %v3636, 5
        %v3639 = vor.u32 %v3635, %v3638
        %v3640 = vrot.slane %v3639, 4
        %v3642 = vshll.u32 %v3543, 16
        %v3644 = vrot.slane %v3642, 5
        %v3645 = vsel %vm549, %v3640, %v3644
        %v3646 = vshrl.u32 %v3543, 16
        %v3648 = vrot.slane %v3646, 4
        %v3649 = vor.u32 %v3648, %v3644
        %v3650 = vrot.slane %v3649, 4
        %v3652 = vshll.u32 %v3544, 16
        %v3654 = vrot.slane %v3652, 5
        %v3655 = vsel %vm549, %v3650, %v3654
        %v3657 = vshrl.u32 %v3545, 16
        %v3659 = vrot.slane %v3657, 4
        %v3660 = vshll.u32 %v3545, 16
        %v3662 = vrot.slane %v3660, 5
        %v3663 = vor.u32 %v3659, %v3662
        %v3664 = vrot.slane %v3663, 4
        %v3666 = vshll.u32 %v3546, 16
        %v3668 = vrot.slane %v3666, 5
        %v3669 = vsel %vm549, %v3664, %v3668
        %v3670 = vshrl.u32 %v3546, 16
        %v3672 = vrot.slane %v3670, 4
        %v3673 = vor.u32 %v3672, %v3668
        %v3674 = vrot.slane %v3673, 4
        %v3676 = vshll.u32 %v3547, 16
        %v3678 = vrot.slane %v3676, 5
        %v3679 = vsel %vm549, %v3674, %v3678
        %v3681 = vshrl.u32 %v3548, 16
        %v3683 = vrot.slane %v3681, 4
        %v3684 = vshll.u32 %v3548, 16
        %v3686 = vrot.slane %v3684, 5
        %v3687 = vor.u32 %v3683, %v3686
        %v3688 = vrot.slane %v3687, 4
        %v3690 = vshll.u32 %v3549, 16
        %v3692 = vrot.slane %v3690, 5
        %v3693 = vsel %vm549, %v3688, %v3692
        %v3694 = vshrl.u32 %v3549, 16
        %v3696 = vrot.slane %v3694, 4
        %v3697 = vor.u32 %v3696, %v3692
        %v3698 = vrot.slane %v3697, 4
        %v3700 = vshll.u32 %v3550, 16
        %v3702 = vrot.slane %v3700, 5
        %v3703 = vsel %vm549, %v3698, %v3702
        %v3705 = vshrl.u32 %v3551, 16
        %v3707 = vrot.slane %v3705, 4
        %v3708 = vshll.u32 %v3551, 16
        %v3710 = vrot.slane %v3708, 5
        %v3711 = vor.u32 %v3707, %v3710
        %v3712 = vrot.slane %v3711, 4
        %v3714 = vshll.u32 %v3552, 16
        %v3716 = vrot.slane %v3714, 5
        %v3717 = vsel %vm549, %v3712, %v3716
        %v3718 = vshrl.u32 %v3552, 16
        %v3720 = vrot.slane %v3718, 4
        %v3721 = vor.u32 %v3720, %v3716
        %v3722 = vrot.slane %v3721, 4
        %v3724 = vshll.u32 %v3553, 16
        %v3726 = vrot.slane %v3724, 5
        %v3727 = vsel %vm549, %v3722, %v3726
        %v3729 = vshrl.u32 %v3554, 16
        %v3731 = vrot.slane %v3729, 4
        %v3732 = vshll.u32 %v3554, 16
        %v3734 = vrot.slane %v3732, 5
        %v3735 = vor.u32 %v3731, %v3734
        %v3736 = vrot.slane %v3735, 4
        %v3738 = vshll.u32 %v3555, 16
        %v3740 = vrot.slane %v3738, 5
        %v3741 = vsel %vm549, %v3736, %v3740
        %v3742 = vshrl.u32 %v3555, 16
        %v3744 = vrot.slane %v3742, 4
        %v3745 = vor.u32 %v3744, %v3740
        %v3746 = vrot.slane %v3745, 4
        %v3748 = vshll.u32 %v3556, 16
        %v3750 = vrot.slane %v3748, 5
        %v3751 = vsel %vm549, %v3746, %v3750
        %v3753 = vshrl.u32 %v3557, 16
        %v3755 = vrot.slane %v3753, 4
        %v3756 = vshll.u32 %v3557, 16
        %v3758 = vrot.slane %v3756, 5
        %v3759 = vor.u32 %v3755, %v3758
        %v3760 = vrot.slane %v3759, 4
        %v3762 = vshll.u32 %v3558, 16
        %v3764 = vrot.slane %v3762, 5
        %v3765 = vsel %vm549, %v3760, %v3764
        %v3766 = vshrl.u32 %v3558, 16
        %v3768 = vrot.slane %v3766, 4
        %v3769 = vor.u32 %v3768, %v3764
        %v3770 = vrot.slane %v3769, 4
        %v3772 = vshll.u32 %v3559, 16
        %v3774 = vrot.slane %v3772, 5
        %v3775 = vsel %vm549, %v3770, %v3774
        %v3777 = vshrl.u32 %v3560, 16
        %v3779 = vrot.slane %v3777, 4
        %v3780 = vshll.u32 %v3560, 16
        %v3782 = vrot.slane %v3780, 5
        %v3783 = vor.u32 %v3779, %v3782
        %v3784 = vrot.slane %v3783, 4
        %v3786 = vshll.u32 %v3561, 16
        %v3788 = vrot.slane %v3786, 5
        %v3789 = vsel %vm549, %v3784, %v3788
        %v3790 = vshrl.u32 %v3561, 16
        %v3792 = vrot.slane %v3790, 4
        %v3793 = vor.u32 %v3792, %v3788
        %v3794 = vrot.slane %v3793, 4
        %v3796 = vshll.u32 %v3562, 16
        %v3798 = vrot.slane %v3796, 5
        %v3799 = vsel %vm549, %v3794, %v3798
        %v3801 = vshrl.u32 %v3563, 16
        %v3803 = vrot.slane %v3801, 4
        %v3804 = vshll.u32 %v3563, 16
        %v3806 = vrot.slane %v3804, 5
        %v3807 = vor.u32 %v3803, %v3806
        %v3808 = vrot.slane %v3807, 4
        %v3810 = vshll.u32 %v3564, 16
        %v3812 = vrot.slane %v3810, 5
        %v3813 = vsel %vm549, %v3808, %v3812
        %v3814 = vshrl.u32 %v3564, 16
        %v3816 = vrot.slane %v3814, 4
        %v3817 = vor.u32 %v3816, %v3812
        %v3818 = vrot.slane %v3817, 4
        %v3820 = vshll.u32 %v3565, 16
        %v3822 = vrot.slane %v3820, 5
        %v3823 = vsel %vm549, %v3818, %v3822
        %v3825 = vshrl.u32 %v3566, 16
        %v3827 = vrot.slane %v3825, 4
        %v3828 = vshll.u32 %v3566, 16
        %v3830 = vrot.slane %v3828, 5
        %v3831 = vor.u32 %v3827, %v3830
        %v3832 = vrot.slane %v3831, 4
        %v3834 = vshll.u32 %v3567, 16
        %v3836 = vrot.slane %v3834, 5
        %v3837 = vsel %vm549, %v3832, %v3836
        %v3838 = vshrl.u32 %v3567, 16
        %v3840 = vrot.slane %v3838, 4
        %v3841 = vor.u32 %v3840, %v3836
        %v3842 = vrot.slane %v3841, 4
        %v3844 = vshll.u32 %v3568, 16
        %v3846 = vrot.slane %v3844, 5
        %v3847 = vsel %vm549, %v3842, %v3846
        %v3849 = vshrl.u32 %v3569, 16
        %v3851 = vrot.slane %v3849, 4
        %v3852 = vshll.u32 %v3569, 16
        %v3854 = vrot.slane %v3852, 5
        %v3855 = vor.u32 %v3851, %v3854
        %v3856 = vrot.slane %v3855, 4
        %v3858 = vshll.u32 %v3570, 16
        %v3860 = vrot.slane %v3858, 5
        %v3861 = vsel %vm549, %v3856, %v3860
        %v3862 = vshrl.u32 %v3570, 16
        %v3864 = vrot.slane %v3862, 4
        %v3865 = vor.u32 %v3864, %v3860
        %v3866 = vrot.slane %v3865, 4
        %v3868 = vshll.u32 %v3571, 16
        %v3870 = vrot.slane %v3868, 5
        %v3871 = vsel %vm549, %v3866, %v3870
        %v3873 = vshrl.u32 %v3572, 16
        %v3875 = vrot.slane %v3873, 4
        %v3876 = vshll.u32 %v3572, 16
        %v3878 = vrot.slane %v3876, 5
        %v3879 = vor.u32 %v3875, %v3878
        %v3880 = vrot.slane %v3879, 4
        %v3882 = vshll.u32 %v3573, 16
        %v3884 = vrot.slane %v3882, 5
        %v3885 = vsel %vm549, %v3880, %v3884
        %v3886 = vshrl.u32 %v3573, 16
        %v3888 = vrot.slane %v3886, 4
        %v3889 = vor.u32 %v3888, %v3884
        %v3890 = vrot.slane %v3889, 4
        %v3892 = vshll.u32 %v3574, 16
        %v3894 = vrot.slane %v3892, 5
        %v3895 = vsel %vm549, %v3890, %v3894
        %v3897 = vshrl.u32 %v3575, 16
        %v3899 = vrot.slane %v3897, 4
        %v3900 = vshll.u32 %v3575, 16
        %v3902 = vrot.slane %v3900, 5
        %v3903 = vor.u32 %v3899, %v3902
        %v3904 = vrot.slane %v3903, 4
        %v3906 = vshll.u32 %v3576, 16
        %v3908 = vrot.slane %v3906, 5
        %v3909 = vsel %vm549, %v3904, %v3908
        %v3910 = vshrl.u32 %v3576, 16
        %v3912 = vrot.slane %v3910, 4
        %v3913 = vor.u32 %v3912, %v3908
        %v3914 = vrot.slane %v3913, 4
        %v3916 = vshll.u32 %v3577, 16
        %v3918 = vrot.slane %v3916, 5
        %v3919 = vsel %vm549, %v3914, %v3918
        %v3921 = vshrl.u32 %v3578, 16
        %v3923 = vrot.slane %v3921, 4
        %v3924 = vshll.u32 %v3578, 16
        %v3926 = vrot.slane %v3924, 5
        %v3927 = vor.u32 %v3923, %v3926
        %v3928 = vrot.slane %v3927, 4
        %v3930 = vshll.u32 %v3579, 16
        %v3932 = vrot.slane %v3930, 5
        %v3933 = vsel %vm549, %v3928, %v3932
        %v3934 = vshrl.u32 %v3579, 16
        %v3936 = vrot.slane %v3934, 4
        %v3937 = vor.u32 %v3936, %v3932
        %v3938 = vrot.slane %v3937, 4
        %v3940 = vshll.u32 %v3580, 16
        %v3942 = vrot.slane %v3940, 5
        %v3943 = vsel %vm549, %v3938, %v3942
        %v3945 = vshrl.u32 %v3581, 16
        %v3947 = vrot.slane %v3945, 4
        %v3948 = vshll.u32 %v3581, 16
        %v3950 = vrot.slane %v3948, 5
        %v3951 = vor.u32 %v3947, %v3950
        %v3952 = vrot.slane %v3951, 4
        %v3954 = vshll.u32 %v3582, 16
        %v3956 = vrot.slane %v3954, 5
        %v3957 = vsel %vm549, %v3952, %v3956
        %v3958 = vshrl.u32 %v3582, 16
        %v3960 = vrot.slane %v3958, 4
        %v3961 = vor.u32 %v3960, %v3956
        %v3962 = vrot.slane %v3961, 4
        %v3964 = vshll.u32 %v3583, 16
        %v3966 = vrot.slane %v3964, 5
        %v3967 = vsel %vm549, %v3962, %v3966
        %s3968 = scalar_lea.vmem [#allocation8], 448
        %v3969 = vld [vmem:[%s3968] sm:$0xf]
        %v3970 = vld [vmem:[%s3968 + $0x4] sm:$0xf]
        %v3971 = vld [vmem:[%s3968 + $0x8] sm:$0xf]
        %v3972 = vld [vmem:[%s3968 + $0xc] sm:$0xf]
        %v3973 = vld [vmem:[%s3968 + $0x10] sm:$0xf]
        %v3974 = vld [vmem:[%s3968 + $0x14] sm:$0xf]
        %v3975 = vld [vmem:[%s3968 + $0x18] sm:$0xf]
        %v3976 = vld [vmem:[%s3968 + $0x1c] sm:$0xf]
        %v3977 = vld [vmem:[%s3968 + $0x20] sm:$0xf]
        %v3978 = vld [vmem:[%s3968 + $0x24] sm:$0xf]
        %v3979 = vld [vmem:[%s3968 + $0x28] sm:$0xf]
        %v3980 = vld [vmem:[%s3968 + $0x2c] sm:$0xf]
        %v3981 = vld [vmem:[%s3968 + $0x30] sm:$0xf]
        %v3982 = vld [vmem:[%s3968 + $0x34] sm:$0xf]
        %v3983 = vld [vmem:[%s3968 + $0x38] sm:$0xf]
        %v3984 = vld [vmem:[%s3968 + $0x3c] sm:$0xf]
        %v3985 = vunpack.c.l.b16 %v3597
        %v3986 = vunpack.c.l.b16 %v3607
        %v3987 = vunpack.c.l.b16 %v3621
        %v3988 = vunpack.c.l.b16 %v3631
        %v3989 = vunpack.c.l.b16 %v3645
        %v3990 = vunpack.c.l.b16 %v3655
        %v3991 = vunpack.c.l.b16 %v3669
        %v3992 = vunpack.c.l.b16 %v3679
        %v3993 = vunpack.c.l.b16 %v3693
        %v3994 = vunpack.c.l.b16 %v3703
        %v3995 = vunpack.c.l.b16 %v3717
        %v3996 = vunpack.c.l.b16 %v3727
        %v3997 = vunpack.c.l.b16 %v3741
        %v3998 = vunpack.c.l.b16 %v3751
        %v3999 = vunpack.c.l.b16 %v3765
        %v4000 = vunpack.c.l.b16 %v3775
        %v4001 = vunpack.c.l.b16 %v3789
        %v4002 = vunpack.c.l.b16 %v3799
        %v4003 = vunpack.c.l.b16 %v3813
        %v4004 = vunpack.c.l.b16 %v3823
        %v4005 = vunpack.c.l.b16 %v3837
        %v4006 = vunpack.c.l.b16 %v3847
        %v4007 = vunpack.c.l.b16 %v3861
        %v4008 = vunpack.c.l.b16 %v3871
        %v4009 = vunpack.c.l.b16 %v3885
        %v4010 = vunpack.c.l.b16 %v3895
        %v4011 = vunpack.c.l.b16 %v3909
        %v4012 = vunpack.c.l.b16 %v3919
        %v4013 = vunpack.c.l.b16 %v3933
        %v4014 = vunpack.c.l.b16 %v3943
        %v4015 = vunpack.c.l.b16 %v3957
        %v4016 = vunpack.c.l.b16 %v3967
        %v4017 = vpack.c.b16 %v3986, %v3985
        %v4018 = vpack.c.b16 %v3988, %v3987
        %v4019 = vpack.c.b16 %v3990, %v3989
        %v4020 = vpack.c.b16 %v3992, %v3991
        %v4021 = vpack.c.b16 %v3994, %v3993
        %v4022 = vpack.c.b16 %v3996, %v3995
        %v4023 = vpack.c.b16 %v3998, %v3997
        %v4024 = vpack.c.b16 %v4000, %v3999
        %v4025 = vpack.c.b16 %v4002, %v4001
        %v4026 = vpack.c.b16 %v4004, %v4003
        %v4027 = vpack.c.b16 %v4006, %v4005
        %v4028 = vpack.c.b16 %v4008, %v4007
        %v4029 = vpack.c.b16 %v4010, %v4009
        %v4030 = vpack.c.b16 %v4012, %v4011
        %v4031 = vpack.c.b16 %v4014, %v4013
        %v4032 = vpack.c.b16 %v4016, %v4015
        %v4065 = vunpack.c.l.b16 %v3969
        %v4066 = vunpack.c.l.b16 %v3970
        %v4067 = vunpack.c.l.b16 %v3971
        %v4068 = vunpack.c.l.b16 %v3972
        %v4069 = vunpack.c.l.b16 %v3973
        %v4070 = vunpack.c.l.b16 %v3974
        %v4071 = vunpack.c.l.b16 %v3975
        %v4072 = vunpack.c.l.b16 %v3976
        %v4073 = vunpack.c.l.b16 %v3977
        %v4074 = vunpack.c.l.b16 %v3978
        %v4075 = vunpack.c.l.b16 %v3979
        %v4076 = vunpack.c.l.b16 %v3980
        %v4077 = vunpack.c.l.b16 %v3981
        %v4078 = vunpack.c.l.b16 %v3982
        %v4079 = vunpack.c.l.b16 %v3983
        %v4080 = vunpack.c.l.b16 %v3984
        %v4081 = vpack.c.b16 %v4066, %v4065
        %v4082 = vpack.c.b16 %v4068, %v4067
        %v4083 = vpack.c.b16 %v4070, %v4069
        %v4084 = vpack.c.b16 %v4072, %v4071
        %v4085 = vpack.c.b16 %v4074, %v4073
        %v4086 = vpack.c.b16 %v4076, %v4075
        %v4087 = vpack.c.b16 %v4078, %v4077
        %v4088 = vpack.c.b16 %v4080, %v4079
        %4097 = vmatpush.bf16.msra.mxu0 %v4088
        %4098 = vmatpush.bf16.msra.mxu0 %v4087
        %4099 = vmatpush.bf16.msra.mxu0 %v4086
        %4100 = vmatpush.bf16.msra.mxu0 %v4085
        %4101 = vmatpush.bf16.msra.mxu0 %v4084
        %4102 = vmatpush.bf16.msra.mxu0 %v4083
        %4103 = vmatpush.bf16.msra.mxu0 %v4082
        %4104 = vmatpush.bf16.msra.mxu0 %v4081
        %4105 = vmatmul.bf16.gmra.mxu0 %v4017
        %v4106 = vpop.f32.mrf.mxu0
        %v4107 = vadd.f32 0.0, %v4106
        %v4108 = vpop.f32.mrf.mxu0
        %v4109 = vadd.f32 0.0, %v4108
        %4110 = vmatmul.bf16.gmra.mxu0 %v4018
        %v4111 = vpop.f32.mrf.mxu0
        %v4112 = vadd.f32 0.0, %v4111
        %v4113 = vpop.f32.mrf.mxu0
        %v4114 = vadd.f32 0.0, %v4113
        %4115 = vmatmul.bf16.gmra.mxu0 %v4019
        %v4116 = vpop.f32.mrf.mxu0
        %v4117 = vadd.f32 0.0, %v4116
        %v4118 = vpop.f32.mrf.mxu0
        %v4119 = vadd.f32 0.0, %v4118
        %4120 = vmatmul.bf16.gmra.mxu0 %v4020
        %v4121 = vpop.f32.mrf.mxu0
        %v4122 = vadd.f32 0.0, %v4121
        %v4123 = vpop.f32.mrf.mxu0
        %v4124 = vadd.f32 0.0, %v4123
        %4125 = vmatmul.bf16.gmra.mxu0 %v4021
        %v4126 = vpop.f32.mrf.mxu0
        %v4127 = vadd.f32 0.0, %v4126
        %v4128 = vpop.f32.mrf.mxu0
        %v4129 = vadd.f32 0.0, %v4128
        %4130 = vmatmul.bf16.gmra.mxu0 %v4022
        %v4131 = vpop.f32.mrf.mxu0
        %v4132 = vadd.f32 0.0, %v4131
        %v4133 = vpop.f32.mrf.mxu0
        %v4134 = vadd.f32 0.0, %v4133
        %4135 = vmatmul.bf16.gmra.mxu0 %v4023
        %v4136 = vpop.f32.mrf.mxu0
        %v4137 = vadd.f32 0.0, %v4136
        %v4138 = vpop.f32.mrf.mxu0
        %v4139 = vadd.f32 0.0, %v4138
        %4140 = vmatmul.bf16.gmra.mxu0 %v4024
        %v4141 = vpop.f32.mrf.mxu0
        %v4142 = vadd.f32 0.0, %v4141
        %v4143 = vpop.f32.mrf.mxu0
        %v4144 = vadd.f32 0.0, %v4143
        %4145 = vmatmul.bf16.gmra.mxu0 %v4025
        %v4146 = vpop.f32.mrf.mxu0
        %v4147 = vadd.f32 0.0, %v4146
        %v4148 = vpop.f32.mrf.mxu0
        %v4149 = vadd.f32 0.0, %v4148
        %4150 = vmatmul.bf16.gmra.mxu0 %v4026
        %v4151 = vpop.f32.mrf.mxu0
        %v4152 = vadd.f32 0.0, %v4151
        %v4153 = vpop.f32.mrf.mxu0
        %v4154 = vadd.f32 0.0, %v4153
        %4155 = vmatmul.bf16.gmra.mxu0 %v4027
        %v4156 = vpop.f32.mrf.mxu0
        %v4157 = vadd.f32 0.0, %v4156
        %v4158 = vpop.f32.mrf.mxu0
        %v4159 = vadd.f32 0.0, %v4158
        %4160 = vmatmul.bf16.gmra.mxu0 %v4028
        %v4161 = vpop.f32.mrf.mxu0
        %v4162 = vadd.f32 0.0, %v4161
        %v4163 = vpop.f32.mrf.mxu0
        %v4164 = vadd.f32 0.0, %v4163
        %4165 = vmatmul.bf16.gmra.mxu0 %v4029
        %v4166 = vpop.f32.mrf.mxu0
        %v4167 = vadd.f32 0.0, %v4166
        %v4168 = vpop.f32.mrf.mxu0
        %v4169 = vadd.f32 0.0, %v4168
        %4170 = vmatmul.bf16.gmra.mxu0 %v4030
        %v4171 = vpop.f32.mrf.mxu0
        %v4172 = vadd.f32 0.0, %v4171
        %v4173 = vpop.f32.mrf.mxu0
        %v4174 = vadd.f32 0.0, %v4173
        %4175 = vmatmul.bf16.gmra.mxu0 %v4031
        %v4176 = vpop.f32.mrf.mxu0
        %v4177 = vadd.f32 0.0, %v4176
        %v4178 = vpop.f32.mrf.mxu0
        %v4179 = vadd.f32 0.0, %v4178
        %4180 = vmatmul.bf16.gmra.mxu0 %v4032
        %v4181 = vpop.f32.mrf.mxu0
        %v4182 = vadd.f32 0.0, %v4181
        %v4183 = vpop.f32.mrf.mxu0
        %v4184 = vadd.f32 0.0, %v4183
        %4185 = vdwg.mxu0
        %v4186 = vadd.f32 %v3504, %v4107
        %v4187 = vadd.f32 %v3505, %v4109
        %v4188 = vadd.f32 %v3506, %v4112
        %v4189 = vadd.f32 %v3507, %v4114
        %v4190 = vadd.f32 %v3508, %v4117
        %v4191 = vadd.f32 %v3509, %v4119
        %v4192 = vadd.f32 %v3510, %v4122
        %v4193 = vadd.f32 %v3511, %v4124
        %v4194 = vadd.f32 %v3512, %v4127
        %v4195 = vadd.f32 %v3513, %v4129
        %v4196 = vadd.f32 %v3514, %v4132
        %v4197 = vadd.f32 %v3515, %v4134
        %v4198 = vadd.f32 %v3516, %v4137
        %v4199 = vadd.f32 %v3517, %v4139
        %v4200 = vadd.f32 %v3518, %v4142
        %v4201 = vadd.f32 %v3519, %v4144
        %v4202 = vadd.f32 %v3520, %v4147
        %v4203 = vadd.f32 %v3521, %v4149
        %v4204 = vadd.f32 %v3522, %v4152
        %v4205 = vadd.f32 %v3523, %v4154
        %v4206 = vadd.f32 %v3524, %v4157
        %v4207 = vadd.f32 %v3525, %v4159
        %v4208 = vadd.f32 %v3526, %v4162
        %v4209 = vadd.f32 %v3527, %v4164
        %v4210 = vadd.f32 %v3528, %v4167
        %v4211 = vadd.f32 %v3529, %v4169
        %v4212 = vadd.f32 %v3530, %v4172
        %v4213 = vadd.f32 %v3531, %v4174
        %v4214 = vadd.f32 %v3532, %v4177
        %v4215 = vadd.f32 %v3533, %v4179
        %v4216 = vadd.f32 %v3534, %v4182
        %v4217 = vadd.f32 %v3535, %v4184
        %v4218 = vld [vmem:[%s3221] sm:$0xe]
        %v4219 = vld [vmem:[%s3221 + $0xc] sm:$0xe]
        %v4220 = vld [vmem:[%s3221 + $0x18] sm:$0xe]
        %v4221 = vld [vmem:[%s3221 + $0x24] sm:$0xe]
        %v4222 = vld [vmem:[%s3221 + $0x30] sm:$0xe]
        %v4223 = vld [vmem:[%s3221 + $0x3c] sm:$0xe]
        %v4224 = vld [vmem:[%s3221 + $0x48] sm:$0xe]
        %v4225 = vld [vmem:[%s3221 + $0x54] sm:$0xe]
        %v4226 = vld [vmem:[%s3221 + $0x60] sm:$0xe]
        %v4227 = vld [vmem:[%s3221 + $0x6c] sm:$0xe]
        %v4228 = vld [vmem:[%s3221 + $0x78] sm:$0xe]
        %v4229 = vld [vmem:[%s3221 + $0x84] sm:$0xe]
        %v4230 = vld [vmem:[%s3221 + $0x90] sm:$0xe]
        %v4231 = vld [vmem:[%s3221 + $0x9c] sm:$0xe]
        %v4232 = vld [vmem:[%s3221 + $0xa8] sm:$0xe]
        %v4233 = vld [vmem:[%s3221 + $0xb4] sm:$0xe]
        %v4282 = vrot.slane %v4218, 5
        %v4283 = vrot.slane %v4282, 4
        %v4284 = vrot.slane %v3537, 5
        %v4285 = vsel %vm1435, %v4283, %v4284
        %v4286 = vrot.slane %v4284, 4
        %v4287 = vrot.slane %v3538, 5
        %v4288 = vsel %vm1435, %v4286, %v4287
        %v4289 = vrot.slane %v4219, 5
        %v4290 = vrot.slane %v4289, 4
        %v4291 = vrot.slane %v3540, 5
        %v4292 = vsel %vm1435, %v4290, %v4291
        %v4293 = vrot.slane %v4291, 4
        %v4294 = vrot.slane %v3541, 5
        %v4295 = vsel %vm1435, %v4293, %v4294
        %v4296 = vrot.slane %v4220, 5
        %v4297 = vrot.slane %v4296, 4
        %v4298 = vrot.slane %v3543, 5
        %v4299 = vsel %vm1435, %v4297, %v4298
        %v4300 = vrot.slane %v4298, 4
        %v4301 = vrot.slane %v3544, 5
        %v4302 = vsel %vm1435, %v4300, %v4301
        %v4303 = vrot.slane %v4221, 5
        %v4304 = vrot.slane %v4303, 4
        %v4305 = vrot.slane %v3546, 5
        %v4306 = vsel %vm1435, %v4304, %v4305
        %v4307 = vrot.slane %v4305, 4
        %v4308 = vrot.slane %v3547, 5
        %v4309 = vsel %vm1435, %v4307, %v4308
        %v4310 = vrot.slane %v4222, 5
        %v4311 = vrot.slane %v4310, 4
        %v4312 = vrot.slane %v3549, 5
        %v4313 = vsel %vm1435, %v4311, %v4312
        %v4314 = vrot.slane %v4312, 4
        %v4315 = vrot.slane %v3550, 5
        %v4316 = vsel %vm1435, %v4314, %v4315
        %v4317 = vrot.slane %v4223, 5
        %v4318 = vrot.slane %v4317, 4
        %v4319 = vrot.slane %v3552, 5
        %v4320 = vsel %vm1435, %v4318, %v4319
        %v4321 = vrot.slane %v4319, 4
        %v4322 = vrot.slane %v3553, 5
        %v4323 = vsel %vm1435, %v4321, %v4322
        %v4324 = vrot.slane %v4224, 5
        %v4325 = vrot.slane %v4324, 4
        %v4326 = vrot.slane %v3555, 5
        %v4327 = vsel %vm1435, %v4325, %v4326
        %v4328 = vrot.slane %v4326, 4
        %v4329 = vrot.slane %v3556, 5
        %v4330 = vsel %vm1435, %v4328, %v4329
        %v4331 = vrot.slane %v4225, 5
        %v4332 = vrot.slane %v4331, 4
        %v4333 = vrot.slane %v3558, 5
        %v4334 = vsel %vm1435, %v4332, %v4333
        %v4335 = vrot.slane %v4333, 4
        %v4336 = vrot.slane %v3559, 5
        %v4337 = vsel %vm1435, %v4335, %v4336
        %v4338 = vrot.slane %v4226, 5
        %v4339 = vrot.slane %v4338, 4
        %v4340 = vrot.slane %v3561, 5
        %v4341 = vsel %vm1435, %v4339, %v4340
        %v4342 = vrot.slane %v4340, 4
        %v4343 = vrot.slane %v3562, 5
        %v4344 = vsel %vm1435, %v4342, %v4343
        %v4345 = vrot.slane %v4227, 5
        %v4346 = vrot.slane %v4345, 4
        %v4347 = vrot.slane %v3564, 5
        %v4348 = vsel %vm1435, %v4346, %v4347
        %v4349 = vrot.slane %v4347, 4
        %v4350 = vrot.slane %v3565, 5
        %v4351 = vsel %vm1435, %v4349, %v4350
        %v4352 = vrot.slane %v4228, 5
        %v4353 = vrot.slane %v4352, 4
        %v4354 = vrot.slane %v3567, 5
        %v4355 = vsel %vm1435, %v4353, %v4354
        %v4356 = vrot.slane %v4354, 4
        %v4357 = vrot.slane %v3568, 5
        %v4358 = vsel %vm1435, %v4356, %v4357
        %v4359 = vrot.slane %v4229, 5
        %v4360 = vrot.slane %v4359, 4
        %v4361 = vrot.slane %v3570, 5
        %v4362 = vsel %vm1435, %v4360, %v4361
        %v4363 = vrot.slane %v4361, 4
        %v4364 = vrot.slane %v3571, 5
        %v4365 = vsel %vm1435, %v4363, %v4364
        %v4366 = vrot.slane %v4230, 5
        %v4367 = vrot.slane %v4366, 4
        %v4368 = vrot.slane %v3573, 5
        %v4369 = vsel %vm1435, %v4367, %v4368
        %v4370 = vrot.slane %v4368, 4
        %v4371 = vrot.slane %v3574, 5
        %v4372 = vsel %vm1435, %v4370, %v4371
        %v4373 = vrot.slane %v4231, 5
        %v4374 = vrot.slane %v4373, 4
        %v4375 = vrot.slane %v3576, 5
        %v4376 = vsel %vm1435, %v4374, %v4375
        %v4377 = vrot.slane %v4375, 4
        %v4378 = vrot.slane %v3577, 5
        %v4379 = vsel %vm1435, %v4377, %v4378
        %v4380 = vrot.slane %v4232, 5
        %v4381 = vrot.slane %v4380, 4
        %v4382 = vrot.slane %v3579, 5
        %v4383 = vsel %vm1435, %v4381, %v4382
        %v4384 = vrot.slane %v4382, 4
        %v4385 = vrot.slane %v3580, 5
        %v4386 = vsel %vm1435, %v4384, %v4385
        %v4387 = vrot.slane %v4233, 5
        %v4388 = vrot.slane %v4387, 4
        %v4389 = vrot.slane %v3582, 5
        %v4390 = vsel %vm1435, %v4388, %v4389
        %v4391 = vrot.slane %v4389, 4
        %v4392 = vrot.slane %v3583, 5
        %v4393 = vsel %vm1435, %v4391, %v4392
        %s4394 = scalar_lea.vmem [#allocation8], 512
        %v4395 = vld [vmem:[%s4394] sm:$0xf]
        %v4396 = vld [vmem:[%s4394 + $0x4] sm:$0xf]
        %v4397 = vld [vmem:[%s4394 + $0x8] sm:$0xf]
        %v4398 = vld [vmem:[%s4394 + $0xc] sm:$0xf]
        %v4399 = vld [vmem:[%s4394 + $0x10] sm:$0xf]
        %v4400 = vld [vmem:[%s4394 + $0x14] sm:$0xf]
        %v4401 = vld [vmem:[%s4394 + $0x18] sm:$0xf]
        %v4402 = vld [vmem:[%s4394 + $0x1c] sm:$0xf]
        %v4403 = vld [vmem:[%s4394 + $0x20] sm:$0xf]
        %v4404 = vld [vmem:[%s4394 + $0x24] sm:$0xf]
        %v4405 = vld [vmem:[%s4394 + $0x28] sm:$0xf]
        %v4406 = vld [vmem:[%s4394 + $0x2c] sm:$0xf]
        %v4407 = vld [vmem:[%s4394 + $0x30] sm:$0xf]
        %v4408 = vld [vmem:[%s4394 + $0x34] sm:$0xf]
        %v4409 = vld [vmem:[%s4394 + $0x38] sm:$0xf]
        %v4410 = vld [vmem:[%s4394 + $0x3c] sm:$0xf]
        %v4411 = vunpack.c.l.b16 %v4285
        %v4412 = vunpack.c.l.b16 %v4288
        %v4413 = vunpack.c.l.b16 %v4292
        %v4414 = vunpack.c.l.b16 %v4295
        %v4415 = vunpack.c.l.b16 %v4299
        %v4416 = vunpack.c.l.b16 %v4302
        %v4417 = vunpack.c.l.b16 %v4306
        %v4418 = vunpack.c.l.b16 %v4309
        %v4419 = vunpack.c.l.b16 %v4313
        %v4420 = vunpack.c.l.b16 %v4316
        %v4421 = vunpack.c.l.b16 %v4320
        %v4422 = vunpack.c.l.b16 %v4323
        %v4423 = vunpack.c.l.b16 %v4327
        %v4424 = vunpack.c.l.b16 %v4330
        %v4425 = vunpack.c.l.b16 %v4334
        %v4426 = vunpack.c.l.b16 %v4337
        %v4427 = vunpack.c.l.b16 %v4341
        %v4428 = vunpack.c.l.b16 %v4344
        %v4429 = vunpack.c.l.b16 %v4348
        %v4430 = vunpack.c.l.b16 %v4351
        %v4431 = vunpack.c.l.b16 %v4355
        %v4432 = vunpack.c.l.b16 %v4358
        %v4433 = vunpack.c.l.b16 %v4362
        %v4434 = vunpack.c.l.b16 %v4365
        %v4435 = vunpack.c.l.b16 %v4369
        %v4436 = vunpack.c.l.b16 %v4372
        %v4437 = vunpack.c.l.b16 %v4376
        %v4438 = vunpack.c.l.b16 %v4379
        %v4439 = vunpack.c.l.b16 %v4383
        %v4440 = vunpack.c.l.b16 %v4386
        %v4441 = vunpack.c.l.b16 %v4390
        %v4442 = vunpack.c.l.b16 %v4393
        %v4443 = vpack.c.b16 %v4412, %v4411
        %v4444 = vpack.c.b16 %v4414, %v4413
        %v4445 = vpack.c.b16 %v4416, %v4415
        %v4446 = vpack.c.b16 %v4418, %v4417
        %v4447 = vpack.c.b16 %v4420, %v4419
        %v4448 = vpack.c.b16 %v4422, %v4421
        %v4449 = vpack.c.b16 %v4424, %v4423
        %v4450 = vpack.c.b16 %v4426, %v4425
        %v4451 = vpack.c.b16 %v4428, %v4427
        %v4452 = vpack.c.b16 %v4430, %v4429
        %v4453 = vpack.c.b16 %v4432, %v4431
        %v4454 = vpack.c.b16 %v4434, %v4433
        %v4455 = vpack.c.b16 %v4436, %v4435
        %v4456 = vpack.c.b16 %v4438, %v4437
        %v4457 = vpack.c.b16 %v4440, %v4439
        %v4458 = vpack.c.b16 %v4442, %v4441
        %v4491 = vunpack.c.l.b16 %v4395
        %v4492 = vunpack.c.l.b16 %v4396
        %v4493 = vunpack.c.l.b16 %v4397
        %v4494 = vunpack.c.l.b16 %v4398
        %v4495 = vunpack.c.l.b16 %v4399
        %v4496 = vunpack.c.l.b16 %v4400
        %v4497 = vunpack.c.l.b16 %v4401
        %v4498 = vunpack.c.l.b16 %v4402
        %v4499 = vunpack.c.l.b16 %v4403
        %v4500 = vunpack.c.l.b16 %v4404
        %v4501 = vunpack.c.l.b16 %v4405
        %v4502 = vunpack.c.l.b16 %v4406
        %v4503 = vunpack.c.l.b16 %v4407
        %v4504 = vunpack.c.l.b16 %v4408
        %v4505 = vunpack.c.l.b16 %v4409
        %v4506 = vunpack.c.l.b16 %v4410
        %v4507 = vpack.c.b16 %v4492, %v4491
        %v4508 = vpack.c.b16 %v4494, %v4493
        %v4509 = vpack.c.b16 %v4496, %v4495
        %v4510 = vpack.c.b16 %v4498, %v4497
        %v4511 = vpack.c.b16 %v4500, %v4499
        %v4512 = vpack.c.b16 %v4502, %v4501
        %v4513 = vpack.c.b16 %v4504, %v4503
        %v4514 = vpack.c.b16 %v4506, %v4505
        %4523 = vmatpush.bf16.msra.mxu0 %v4514
        %4524 = vmatpush.bf16.msra.mxu0 %v4513
        %4525 = vmatpush.bf16.msra.mxu0 %v4512
        %4526 = vmatpush.bf16.msra.mxu0 %v4511
        %4527 = vmatpush.bf16.msra.mxu0 %v4510
        %4528 = vmatpush.bf16.msra.mxu0 %v4509
        %4529 = vmatpush.bf16.msra.mxu0 %v4508
        %4530 = vmatpush.bf16.msra.mxu0 %v4507
        %4531 = vmatmul.bf16.gmra.mxu0 %v4443
        %v4532 = vpop.f32.mrf.mxu0
        %v4533 = vadd.f32 0.0, %v4532
        %v4534 = vpop.f32.mrf.mxu0
        %v4535 = vadd.f32 0.0, %v4534
        %4536 = vmatmul.bf16.gmra.mxu0 %v4444
        %v4537 = vpop.f32.mrf.mxu0
        %v4538 = vadd.f32 0.0, %v4537
        %v4539 = vpop.f32.mrf.mxu0
        %v4540 = vadd.f32 0.0, %v4539
        %4541 = vmatmul.bf16.gmra.mxu0 %v4445
        %v4542 = vpop.f32.mrf.mxu0
        %v4543 = vadd.f32 0.0, %v4542
        %v4544 = vpop.f32.mrf.mxu0
        %v4545 = vadd.f32 0.0, %v4544
        %4546 = vmatmul.bf16.gmra.mxu0 %v4446
        %v4547 = vpop.f32.mrf.mxu0
        %v4548 = vadd.f32 0.0, %v4547
        %v4549 = vpop.f32.mrf.mxu0
        %v4550 = vadd.f32 0.0, %v4549
        %4551 = vmatmul.bf16.gmra.mxu0 %v4447
        %v4552 = vpop.f32.mrf.mxu0
        %v4553 = vadd.f32 0.0, %v4552
        %v4554 = vpop.f32.mrf.mxu0
        %v4555 = vadd.f32 0.0, %v4554
        %4556 = vmatmul.bf16.gmra.mxu0 %v4448
        %v4557 = vpop.f32.mrf.mxu0
        %v4558 = vadd.f32 0.0, %v4557
        %v4559 = vpop.f32.mrf.mxu0
        %v4560 = vadd.f32 0.0, %v4559
        %4561 = vmatmul.bf16.gmra.mxu0 %v4449
        %v4562 = vpop.f32.mrf.mxu0
        %v4563 = vadd.f32 0.0, %v4562
        %v4564 = vpop.f32.mrf.mxu0
        %v4565 = vadd.f32 0.0, %v4564
        %4566 = vmatmul.bf16.gmra.mxu0 %v4450
        %v4567 = vpop.f32.mrf.mxu0
        %v4568 = vadd.f32 0.0, %v4567
        %v4569 = vpop.f32.mrf.mxu0
        %v4570 = vadd.f32 0.0, %v4569
        %4571 = vmatmul.bf16.gmra.mxu0 %v4451
        %v4572 = vpop.f32.mrf.mxu0
        %v4573 = vadd.f32 0.0, %v4572
        %v4574 = vpop.f32.mrf.mxu0
        %v4575 = vadd.f32 0.0, %v4574
        %4576 = vmatmul.bf16.gmra.mxu0 %v4452
        %v4577 = vpop.f32.mrf.mxu0
        %v4578 = vadd.f32 0.0, %v4577
        %v4579 = vpop.f32.mrf.mxu0
        %v4580 = vadd.f32 0.0, %v4579
        %4581 = vmatmul.bf16.gmra.mxu0 %v4453
        %v4582 = vpop.f32.mrf.mxu0
        %v4583 = vadd.f32 0.0, %v4582
        %v4584 = vpop.f32.mrf.mxu0
        %v4585 = vadd.f32 0.0, %v4584
        %4586 = vmatmul.bf16.gmra.mxu0 %v4454
        %v4587 = vpop.f32.mrf.mxu0
        %v4588 = vadd.f32 0.0, %v4587
        %v4589 = vpop.f32.mrf.mxu0
        %v4590 = vadd.f32 0.0, %v4589
        %4591 = vmatmul.bf16.gmra.mxu0 %v4455
        %v4592 = vpop.f32.mrf.mxu0
        %v4593 = vadd.f32 0.0, %v4592
        %v4594 = vpop.f32.mrf.mxu0
        %v4595 = vadd.f32 0.0, %v4594
        %4596 = vmatmul.bf16.gmra.mxu0 %v4456
        %v4597 = vpop.f32.mrf.mxu0
        %v4598 = vadd.f32 0.0, %v4597
        %v4599 = vpop.f32.mrf.mxu0
        %v4600 = vadd.f32 0.0, %v4599
        %4601 = vmatmul.bf16.gmra.mxu0 %v4457
        %v4602 = vpop.f32.mrf.mxu0
        %v4603 = vadd.f32 0.0, %v4602
        %v4604 = vpop.f32.mrf.mxu0
        %v4605 = vadd.f32 0.0, %v4604
        %4606 = vmatmul.bf16.gmra.mxu0 %v4458
        %v4607 = vpop.f32.mrf.mxu0
        %v4608 = vadd.f32 0.0, %v4607
        %v4609 = vpop.f32.mrf.mxu0
        %v4610 = vadd.f32 0.0, %v4609
        %4611 = vdwg.mxu0
        %v4612 = vadd.f32 %v4186, %v4533
        %v4613 = vadd.f32 %v4187, %v4535
        %v4614 = vadd.f32 %v4188, %v4538
        %v4615 = vadd.f32 %v4189, %v4540
        %v4616 = vadd.f32 %v4190, %v4543
        %v4617 = vadd.f32 %v4191, %v4545
        %v4618 = vadd.f32 %v4192, %v4548
        %v4619 = vadd.f32 %v4193, %v4550
        %v4620 = vadd.f32 %v4194, %v4553
        %v4621 = vadd.f32 %v4195, %v4555
        %v4622 = vadd.f32 %v4196, %v4558
        %v4623 = vadd.f32 %v4197, %v4560
        %v4624 = vadd.f32 %v4198, %v4563
        %v4625 = vadd.f32 %v4199, %v4565
        %v4626 = vadd.f32 %v4200, %v4568
        %v4627 = vadd.f32 %v4201, %v4570
        %v4628 = vadd.f32 %v4202, %v4573
        %v4629 = vadd.f32 %v4203, %v4575
        %v4630 = vadd.f32 %v4204, %v4578
        %v4631 = vadd.f32 %v4205, %v4580
        %v4632 = vadd.f32 %v4206, %v4583
        %v4633 = vadd.f32 %v4207, %v4585
        %v4634 = vadd.f32 %v4208, %v4588
        %v4635 = vadd.f32 %v4209, %v4590
        %v4636 = vadd.f32 %v4210, %v4593
        %v4637 = vadd.f32 %v4211, %v4595
        %v4638 = vadd.f32 %v4212, %v4598
        %v4639 = vadd.f32 %v4213, %v4600
        %v4640 = vadd.f32 %v4214, %v4603
        %v4641 = vadd.f32 %v4215, %v4605
        %v4642 = vadd.f32 %v4216, %v4608
        %v4643 = vadd.f32 %v4217, %v4610
        %v4644 = vld [vmem:[%s7] sm:$0x1]
        %v4646 = vperm.slane %v4644, 0
        %v4648 = vadd.f32 %v4612, %v4646
        %v4649 = vadd.f32 %v4613, %v4646
        %v4650 = vadd.f32 %v4614, %v4646
        %v4651 = vadd.f32 %v4615, %v4646
        %v4652 = vadd.f32 %v4616, %v4646
        %v4653 = vadd.f32 %v4617, %v4646
        %v4654 = vadd.f32 %v4618, %v4646
        %v4655 = vadd.f32 %v4619, %v4646
        %v4656 = vadd.f32 %v4620, %v4646
        %v4657 = vadd.f32 %v4621, %v4646
        %v4658 = vadd.f32 %v4622, %v4646
        %v4659 = vadd.f32 %v4623, %v4646
        %v4660 = vadd.f32 %v4624, %v4646
        %v4661 = vadd.f32 %v4625, %v4646
        %v4662 = vadd.f32 %v4626, %v4646
        %v4663 = vadd.f32 %v4627, %v4646
        %v4664 = vadd.f32 %v4628, %v4646
        %v4665 = vadd.f32 %v4629, %v4646
        %v4666 = vadd.f32 %v4630, %v4646
        %v4667 = vadd.f32 %v4631, %v4646
        %v4668 = vadd.f32 %v4632, %v4646
        %v4669 = vadd.f32 %v4633, %v4646
        %v4670 = vadd.f32 %v4634, %v4646
        %v4671 = vadd.f32 %v4635, %v4646
        %v4672 = vadd.f32 %v4636, %v4646
        %v4673 = vadd.f32 %v4637, %v4646
        %v4674 = vadd.f32 %v4638, %v4646
        %v4675 = vadd.f32 %v4639, %v4646
        %v4676 = vadd.f32 %v4640, %v4646
        %v4677 = vadd.f32 %v4641, %v4646
        %v4678 = vadd.f32 %v4642, %v4646
        %v4679 = vadd.f32 %v4643, %v4646
        %vm4680 = vcmp.gt.f32.partialorder %v4648, 0.0
        %vm4681 = vcmp.gt.f32.partialorder %v4649, 0.0
        %vm4682 = vcmp.gt.f32.partialorder %v4650, 0.0
        %vm4683 = vcmp.gt.f32.partialorder %v4651, 0.0
        %vm4684 = vcmp.gt.f32.partialorder %v4652, 0.0
        %vm4685 = vcmp.gt.f32.partialorder %v4653, 0.0
        %vm4686 = vcmp.gt.f32.partialorder %v4654, 0.0
        %vm4687 = vcmp.gt.f32.partialorder %v4655, 0.0
        %vm4688 = vcmp.gt.f32.partialorder %v4656, 0.0
        %vm4689 = vcmp.gt.f32.partialorder %v4657, 0.0
        %vm4690 = vcmp.gt.f32.partialorder %v4658, 0.0
        %vm4691 = vcmp.gt.f32.partialorder %v4659, 0.0
        %vm4692 = vcmp.gt.f32.partialorder %v4660, 0.0
        %vm4693 = vcmp.gt.f32.partialorder %v4661, 0.0
        %vm4694 = vcmp.gt.f32.partialorder %v4662, 0.0
        %vm4695 = vcmp.gt.f32.partialorder %v4663, 0.0
        %vm4696 = vcmp.gt.f32.partialorder %v4664, 0.0
        %vm4697 = vcmp.gt.f32.partialorder %v4665, 0.0
        %vm4698 = vcmp.gt.f32.partialorder %v4666, 0.0
        %vm4699 = vcmp.gt.f32.partialorder %v4667, 0.0
        %vm4700 = vcmp.gt.f32.partialorder %v4668, 0.0
        %vm4701 = vcmp.gt.f32.partialorder %v4669, 0.0
        %vm4702 = vcmp.gt.f32.partialorder %v4670, 0.0
        %vm4703 = vcmp.gt.f32.partialorder %v4671, 0.0
        %vm4704 = vcmp.gt.f32.partialorder %v4672, 0.0
        %vm4705 = vcmp.gt.f32.partialorder %v4673, 0.0
        %vm4706 = vcmp.gt.f32.partialorder %v4674, 0.0
        %vm4707 = vcmp.gt.f32.partialorder %v4675, 0.0
        %vm4708 = vcmp.gt.f32.partialorder %v4676, 0.0
        %vm4709 = vcmp.gt.f32.partialorder %v4677, 0.0
        %vm4710 = vcmp.gt.f32.partialorder %v4678, 0.0
        %vm4711 = vcmp.gt.f32.partialorder %v4679, 0.0
        %v4712 = vld [vmem:[%s8] sm:$0x1]
        %v4714 = vperm.slane %v4712, 0
        %v4716 = vmul.f32 %v4714, %v4648
        %v4717 = vmul.f32 %v4714, %v4649
        %v4718 = vmul.f32 %v4714, %v4650
        %v4719 = vmul.f32 %v4714, %v4651
        %v4720 = vmul.f32 %v4714, %v4652
        %v4721 = vmul.f32 %v4714, %v4653
        %v4722 = vmul.f32 %v4714, %v4654
        %v4723 = vmul.f32 %v4714, %v4655
        %v4724 = vmul.f32 %v4714, %v4656
        %v4725 = vmul.f32 %v4714, %v4657
        %v4726 = vmul.f32 %v4714, %v4658
        %v4727 = vmul.f32 %v4714, %v4659
        %v4728 = vmul.f32 %v4714, %v4660
        %v4729 = vmul.f32 %v4714, %v4661
        %v4730 = vmul.f32 %v4714, %v4662
        %v4731 = vmul.f32 %v4714, %v4663
        %v4732 = vmul.f32 %v4714, %v4664
        %v4733 = vmul.f32 %v4714, %v4665
        %v4734 = vmul.f32 %v4714, %v4666
        %v4735 = vmul.f32 %v4714, %v4667
        %v4736 = vmul.f32 %v4714, %v4668
        %v4737 = vmul.f32 %v4714, %v4669
        %v4738 = vmul.f32 %v4714, %v4670
        %v4739 = vmul.f32 %v4714, %v4671
        %v4740 = vmul.f32 %v4714, %v4672
        %v4741 = vmul.f32 %v4714, %v4673
        %v4742 = vmul.f32 %v4714, %v4674
        %v4743 = vmul.f32 %v4714, %v4675
        %v4744 = vmul.f32 %v4714, %v4676
        %v4745 = vmul.f32 %v4714, %v4677
        %v4746 = vmul.f32 %v4714, %v4678
        %v4747 = vmul.f32 %v4714, %v4679
        %v4748 = vsel %vm4680, %v4648, %v4716
        %v4749 = vsel %vm4681, %v4649, %v4717
        %v4750 = vsel %vm4682, %v4650, %v4718
        %v4751 = vsel %vm4683, %v4651, %v4719
        %v4752 = vsel %vm4684, %v4652, %v4720
        %v4753 = vsel %vm4685, %v4653, %v4721
        %v4754 = vsel %vm4686, %v4654, %v4722
        %v4755 = vsel %vm4687, %v4655, %v4723
        %v4756 = vsel %vm4688, %v4656, %v4724
        %v4757 = vsel %vm4689, %v4657, %v4725
        %v4758 = vsel %vm4690, %v4658, %v4726
        %v4759 = vsel %vm4691, %v4659, %v4727
        %v4760 = vsel %vm4692, %v4660, %v4728
        %v4761 = vsel %vm4693, %v4661, %v4729
        %v4762 = vsel %vm4694, %v4662, %v4730
        %v4763 = vsel %vm4695, %v4663, %v4731
        %v4764 = vsel %vm4696, %v4664, %v4732
        %v4765 = vsel %vm4697, %v4665, %v4733
        %v4766 = vsel %vm4698, %v4666, %v4734
        %v4767 = vsel %vm4699, %v4667, %v4735
        %v4768 = vsel %vm4700, %v4668, %v4736
        %v4769 = vsel %vm4701, %v4669, %v4737
        %v4770 = vsel %vm4702, %v4670, %v4738
        %v4771 = vsel %vm4703, %v4671, %v4739
        %v4772 = vsel %vm4704, %v4672, %v4740
        %v4773 = vsel %vm4705, %v4673, %v4741
        %v4774 = vsel %vm4706, %v4674, %v4742
        %v4775 = vsel %vm4707, %v4675, %v4743
        %v4776 = vsel %vm4708, %v4676, %v4744
        %v4777 = vsel %vm4709, %v4677, %v4745
        %v4778 = vsel %vm4710, %v4678, %v4746
        %v4779 = vsel %vm4711, %v4679, %v4747
        %4780 = vst [vmem:[#allocation2] sm:$0xf] 0
        %4781 = vst [vmem:[#allocation2 + $0x4] sm:$0xf] 0
        %4782 = vst [vmem:[#allocation2 + $0x8] sm:$0xf] 0
        %s4783 = scalar_lea.vmem [#allocation2], 204
        %4784 = vst [vmem:[%s4783] sm:$0xf] 0
        %4785 = vst [vmem:[%s4783 + $0x4] sm:$0xf] 0
        %4786 = vst [vmem:[%s4783 + $0x8] sm:$0xf] 0
        %vm4787 = vcmask 1040384
        %vm4788 = vsmask.f32 256
        %vm4789 = vmand %vm4787, %vm4788
        %v4790 = vld [vmem:[#allocation2] sm:$0x1]
        %v4791 = vsel %vm4789, 0, %v4790
        %4792 = vst [vmem:[#allocation2] sm:$0x1] %v4791
        %v4793 = vld [vmem:[#allocation2 + $0xc] sm:$0x1]
        %v4794 = vsel %vm4789, 0, %v4793
        %4795 = vst [vmem:[#allocation2 + $0xc] sm:$0x1] %v4794
        %v4796 = vld [vmem:[#allocation2 + $0x18] sm:$0x1]
        %v4797 = vsel %vm4789, 0, %v4796
        %4798 = vst [vmem:[#allocation2 + $0x18] sm:$0x1] %v4797
        %v4799 = vld [vmem:[#allocation2 + $0x24] sm:$0x1]
        %v4800 = vsel %vm4789, 0, %v4799
        %4801 = vst [vmem:[#allocation2 + $0x24] sm:$0x1] %v4800
        %v4802 = vld [vmem:[#allocation2 + $0x30] sm:$0x1]
        %v4803 = vsel %vm4789, 0, %v4802
        %4804 = vst [vmem:[#allocation2 + $0x30] sm:$0x1] %v4803
        %v4805 = vld [vmem:[#allocation2 + $0x3c] sm:$0x1]
        %v4806 = vsel %vm4789, 0, %v4805
        %4807 = vst [vmem:[#allocation2 + $0x3c] sm:$0x1] %v4806
        %v4808 = vld [vmem:[#allocation2 + $0x48] sm:$0x1]
        %v4809 = vsel %vm4789, 0, %v4808
        %4810 = vst [vmem:[#allocation2 + $0x48] sm:$0x1] %v4809
        %v4811 = vld [vmem:[#allocation2 + $0x54] sm:$0x1]
        %v4812 = vsel %vm4789, 0, %v4811
        %4813 = vst [vmem:[#allocation2 + $0x54] sm:$0x1] %v4812
        %v4814 = vld [vmem:[#allocation2 + $0x60] sm:$0x1]
        %v4815 = vsel %vm4789, 0, %v4814
        %4816 = vst [vmem:[#allocation2 + $0x60] sm:$0x1] %v4815
        %v4817 = vld [vmem:[#allocation2 + $0x6c] sm:$0x1]
        %v4818 = vsel %vm4789, 0, %v4817
        %4819 = vst [vmem:[#allocation2 + $0x6c] sm:$0x1] %v4818
        %v4820 = vld [vmem:[#allocation2 + $0x78] sm:$0x1]
        %v4821 = vsel %vm4789, 0, %v4820
        %4822 = vst [vmem:[#allocation2 + $0x78] sm:$0x1] %v4821
        %v4823 = vld [vmem:[#allocation2 + $0x84] sm:$0x1]
        %v4824 = vsel %vm4789, 0, %v4823
        %4825 = vst [vmem:[#allocation2 + $0x84] sm:$0x1] %v4824
        %v4826 = vld [vmem:[#allocation2 + $0x90] sm:$0x1]
        %v4827 = vsel %vm4789, 0, %v4826
        %4828 = vst [vmem:[#allocation2 + $0x90] sm:$0x1] %v4827
        %v4829 = vld [vmem:[#allocation2 + $0x9c] sm:$0x1]
        %v4830 = vsel %vm4789, 0, %v4829
        %4831 = vst [vmem:[#allocation2 + $0x9c] sm:$0x1] %v4830
        %v4832 = vld [vmem:[#allocation2 + $0xa8] sm:$0x1]
        %v4833 = vsel %vm4789, 0, %v4832
        %4834 = vst [vmem:[#allocation2 + $0xa8] sm:$0x1] %v4833
        %v4835 = vld [vmem:[#allocation2 + $0xb4] sm:$0x1]
        %v4836 = vsel %vm4789, 0, %v4835
        %4837 = vst [vmem:[#allocation2 + $0xb4] sm:$0x1] %v4836
        %v4838 = vld [vmem:[#allocation2 + $0xc0] sm:$0x1]
        %v4839 = vsel %vm4789, 0, %v4838
        %4840 = vst [vmem:[#allocation2 + $0xc0] sm:$0x1] %v4839
        %v4841 = vld [vmem:[#allocation2 + $0xcc] sm:$0x1]
        %v4842 = vsel %vm4789, 0, %v4841
        %4843 = vst [vmem:[#allocation2 + $0xcc] sm:$0x1] %v4842
        %vm4844 = vsmask.f32 7938
        %vm4845 = vmand %vm4787, %vm4844
        %v4846 = vld [vmem:[#allocation2 + $0x8] sm:$0x1]
        %v4847 = vsel %vm4845, 0, %v4846
        %4848 = vst [vmem:[#allocation2 + $0x8] sm:$0x1] %v4847
        %v4849 = vld [vmem:[#allocation2 + $0x14] sm:$0x1]
        %v4850 = vsel %vm4845, 0, %v4849
        %4851 = vst [vmem:[#allocation2 + $0x14] sm:$0x1] %v4850
        %v4852 = vld [vmem:[#allocation2 + $0x20] sm:$0x1]
        %v4853 = vsel %vm4845, 0, %v4852
        %4854 = vst [vmem:[#allocation2 + $0x20] sm:$0x1] %v4853
        %v4855 = vld [vmem:[#allocation2 + $0x2c] sm:$0x1]
        %v4856 = vsel %vm4845, 0, %v4855
        %4857 = vst [vmem:[#allocation2 + $0x2c] sm:$0x1] %v4856
        %v4858 = vld [vmem:[#allocation2 + $0x38] sm:$0x1]
        %v4859 = vsel %vm4845, 0, %v4858
        %4860 = vst [vmem:[#allocation2 + $0x38] sm:$0x1] %v4859
        %v4861 = vld [vmem:[#allocation2 + $0x44] sm:$0x1]
        %v4862 = vsel %vm4845, 0, %v4861
        %4863 = vst [vmem:[#allocation2 + $0x44] sm:$0x1] %v4862
        %v4864 = vld [vmem:[#allocation2 + $0x50] sm:$0x1]
        %v4865 = vsel %vm4845, 0, %v4864
        %4866 = vst [vmem:[#allocation2 + $0x50] sm:$0x1] %v4865
        %v4867 = vld [vmem:[#allocation2 + $0x5c] sm:$0x1]
        %v4868 = vsel %vm4845, 0, %v4867
        %4869 = vst [vmem:[#allocation2 + $0x5c] sm:$0x1] %v4868
        %v4870 = vld [vmem:[#allocation2 + $0x68] sm:$0x1]
        %v4871 = vsel %vm4845, 0, %v4870
        %4872 = vst [vmem:[#allocation2 + $0x68] sm:$0x1] %v4871
        %v4873 = vld [vmem:[#allocation2 + $0x74] sm:$0x1]
        %v4874 = vsel %vm4845, 0, %v4873
        %4875 = vst [vmem:[#allocation2 + $0x74] sm:$0x1] %v4874
        %v4876 = vld [vmem:[#allocation2 + $0x80] sm:$0x1]
        %v4877 = vsel %vm4845, 0, %v4876
        %4878 = vst [vmem:[#allocation2 + $0x80] sm:$0x1] %v4877
        %v4879 = vld [vmem:[#allocation2 + $0x8c] sm:$0x1]
        %v4880 = vsel %vm4845, 0, %v4879
        %4881 = vst [vmem:[#allocation2 + $0x8c] sm:$0x1] %v4880
        %v4882 = vld [vmem:[#allocation2 + $0x98] sm:$0x1]
        %v4883 = vsel %vm4845, 0, %v4882
        %4884 = vst [vmem:[#allocation2 + $0x98] sm:$0x1] %v4883
        %v4885 = vld [vmem:[#allocation2 + $0xa4] sm:$0x1]
        %v4886 = vsel %vm4845, 0, %v4885
        %4887 = vst [vmem:[#allocation2 + $0xa4] sm:$0x1] %v4886
        %v4888 = vld [vmem:[#allocation2 + $0xb0] sm:$0x1]
        %v4889 = vsel %vm4845, 0, %v4888
        %4890 = vst [vmem:[#allocation2 + $0xb0] sm:$0x1] %v4889
        %v4891 = vld [vmem:[#allocation2 + $0xbc] sm:$0x1]
        %v4892 = vsel %vm4845, 0, %v4891
        %4893 = vst [vmem:[#allocation2 + $0xbc] sm:$0x1] %v4892
        %v4894 = vld [vmem:[#allocation2 + $0xc8] sm:$0x1]
        %v4895 = vsel %vm4845, 0, %v4894
        %4896 = vst [vmem:[#allocation2 + $0xc8] sm:$0x1] %v4895
        %v4897 = vld [vmem:[#allocation2 + $0xd4] sm:$0x1]
        %v4898 = vsel %vm4845, 0, %v4897
        %4899 = vst [vmem:[#allocation2 + $0xd4] sm:$0x1] %v4898
        %v4900 = vpack.c.bf16 %v4748, %v4748
        %v4901 = vpack.c.bf16 %v4749, %v4749
        %v4902 = vpack.c.bf16 %v4750, %v4750
        %v4903 = vpack.c.bf16 %v4751, %v4751
        %v4904 = vpack.c.bf16 %v4752, %v4752
        %v4905 = vpack.c.bf16 %v4753, %v4753
        %v4906 = vpack.c.bf16 %v4754, %v4754
        %v4907 = vpack.c.bf16 %v4755, %v4755
        %v4908 = vpack.c.bf16 %v4756, %v4756
        %v4909 = vpack.c.bf16 %v4757, %v4757
        %v4910 = vpack.c.bf16 %v4758, %v4758
        %v4911 = vpack.c.bf16 %v4759, %v4759
        %v4912 = vpack.c.bf16 %v4760, %v4760
        %v4913 = vpack.c.bf16 %v4761, %v4761
        %v4914 = vpack.c.bf16 %v4762, %v4762
        %v4915 = vpack.c.bf16 %v4763, %v4763
        %v4916 = vpack.c.bf16 %v4764, %v4764
        %v4917 = vpack.c.bf16 %v4765, %v4765
        %v4918 = vpack.c.bf16 %v4766, %v4766
        %v4919 = vpack.c.bf16 %v4767, %v4767
        %v4920 = vpack.c.bf16 %v4768, %v4768
        %v4921 = vpack.c.bf16 %v4769, %v4769
        %v4922 = vpack.c.bf16 %v4770, %v4770
        %v4923 = vpack.c.bf16 %v4771, %v4771
        %v4924 = vpack.c.bf16 %v4772, %v4772
        %v4925 = vpack.c.bf16 %v4773, %v4773
        %v4926 = vpack.c.bf16 %v4774, %v4774
        %v4927 = vpack.c.bf16 %v4775, %v4775
        %v4928 = vpack.c.bf16 %v4776, %v4776
        %v4929 = vpack.c.bf16 %v4777, %v4777
        %v4930 = vpack.c.bf16 %v4778, %v4778
        %v4931 = vpack.c.bf16 %v4779, %v4779
        %vm4932 = vsmask.f32 4368
        %vm4933 = vmor %vm4788, %vm4932
        %v4935 = vshrl.u32 %v4900, 16
        %v4937 = vrot.slane %v4935, 7
        %v4938 = vshll.u32 %v4900, 16
        %v4940 = vor.u32 %v4937, %v4938
        %v4941 = vrot.slane %v4937, 4
        %v4943 = vshrl.u32 %v4901, 16
        %v4945 = vrot.slane %v4943, 7
        %v4946 = vshll.u32 %v4901, 16
        %v4948 = vor.u32 %v4945, %v4946
        %v4949 = vsel %vm4933, %v4941, %v4948
        %v4950 = vrot.slane %v4945, 4
        %v4952 = vshrl.u32 %v4902, 16
        %v4954 = vrot.slane %v4952, 7
        %v4955 = vshll.u32 %v4902, 16
        %v4957 = vor.u32 %v4954, %v4955
        %v4958 = vrot.slane %v4954, 4
        %v4960 = vshrl.u32 %v4903, 16
        %v4962 = vrot.slane %v4960, 7
        %v4963 = vshll.u32 %v4903, 16
        %v4965 = vor.u32 %v4962, %v4963
        %v4966 = vsel %vm4933, %v4958, %v4965
        %v4967 = vrot.slane %v4962, 4
        %v4969 = vshrl.u32 %v4904, 16
        %v4971 = vrot.slane %v4969, 7
        %v4972 = vshll.u32 %v4904, 16
        %v4974 = vor.u32 %v4971, %v4972
        %v4975 = vrot.slane %v4971, 4
        %v4977 = vshrl.u32 %v4905, 16
        %v4979 = vrot.slane %v4977, 7
        %v4980 = vshll.u32 %v4905, 16
        %v4982 = vor.u32 %v4979, %v4980
        %v4983 = vsel %vm4933, %v4975, %v4982
        %v4984 = vrot.slane %v4979, 4
        %v4986 = vshrl.u32 %v4906, 16
        %v4988 = vrot.slane %v4986, 7
        %v4989 = vshll.u32 %v4906, 16
        %v4991 = vor.u32 %v4988, %v4989
        %v4992 = vrot.slane %v4988, 4
        %v4994 = vshrl.u32 %v4907, 16
        %v4996 = vrot.slane %v4994, 7
        %v4997 = vshll.u32 %v4907, 16
        %v4999 = vor.u32 %v4996, %v4997
        %v5000 = vsel %vm4933, %v4992, %v4999
        %v5001 = vrot.slane %v4996, 4
        %v5003 = vshrl.u32 %v4908, 16
        %v5005 = vrot.slane %v5003, 7
        %v5006 = vshll.u32 %v4908, 16
        %v5008 = vor.u32 %v5005, %v5006
        %v5009 = vrot.slane %v5005, 4
        %v5011 = vshrl.u32 %v4909, 16
        %v5013 = vrot.slane %v5011, 7
        %v5014 = vshll.u32 %v4909, 16
        %v5016 = vor.u32 %v5013, %v5014
        %v5017 = vsel %vm4933, %v5009, %v5016
        %v5018 = vrot.slane %v5013, 4
        %v5020 = vshrl.u32 %v4910, 16
        %v5022 = vrot.slane %v5020, 7
        %v5023 = vshll.u32 %v4910, 16
        %v5025 = vor.u32 %v5022, %v5023
        %v5026 = vrot.slane %v5022, 4
        %v5028 = vshrl.u32 %v4911, 16
        %v5030 = vrot.slane %v5028, 7
        %v5031 = vshll.u32 %v4911, 16
        %v5033 = vor.u32 %v5030, %v5031
        %v5034 = vsel %vm4933, %v5026, %v5033
        %v5035 = vrot.slane %v5030, 4
        %v5037 = vshrl.u32 %v4912, 16
        %v5039 = vrot.slane %v5037, 7
        %v5040 = vshll.u32 %v4912, 16
        %v5042 = vor.u32 %v5039, %v5040
        %v5043 = vrot.slane %v5039, 4
        %v5045 = vshrl.u32 %v4913, 16
        %v5047 = vrot.slane %v5045, 7
        %v5048 = vshll.u32 %v4913, 16
        %v5050 = vor.u32 %v5047, %v5048
        %v5051 = vsel %vm4933, %v5043, %v5050
        %v5052 = vrot.slane %v5047, 4
        %v5054 = vshrl.u32 %v4914, 16
        %v5056 = vrot.slane %v5054, 7
        %v5057 = vshll.u32 %v4914, 16
        %v5059 = vor.u32 %v5056, %v5057
        %v5060 = vrot.slane %v5056, 4
        %v5062 = vshrl.u32 %v4915, 16
        %v5064 = vrot.slane %v5062, 7
        %v5065 = vshll.u32 %v4915, 16
        %v5067 = vor.u32 %v5064, %v5065
        %v5068 = vsel %vm4933, %v5060, %v5067
        %v5069 = vrot.slane %v5064, 4
        %v5071 = vshrl.u32 %v4916, 16
        %v5073 = vrot.slane %v5071, 7
        %v5074 = vshll.u32 %v4916, 16
        %v5076 = vor.u32 %v5073, %v5074
        %v5077 = vrot.slane %v5073, 4
        %v5079 = vshrl.u32 %v4917, 16
        %v5081 = vrot.slane %v5079, 7
        %v5082 = vshll.u32 %v4917, 16
        %v5084 = vor.u32 %v5081, %v5082
        %v5085 = vsel %vm4933, %v5077, %v5084
        %v5086 = vrot.slane %v5081, 4
        %v5088 = vshrl.u32 %v4918, 16
        %v5090 = vrot.slane %v5088, 7
        %v5091 = vshll.u32 %v4918, 16
        %v5093 = vor.u32 %v5090, %v5091
        %v5094 = vrot.slane %v5090, 4
        %v5096 = vshrl.u32 %v4919, 16
        %v5098 = vrot.slane %v5096, 7
        %v5099 = vshll.u32 %v4919, 16
        %v5101 = vor.u32 %v5098, %v5099
        %v5102 = vsel %vm4933, %v5094, %v5101
        %v5103 = vrot.slane %v5098, 4
        %v5105 = vshrl.u32 %v4920, 16
        %v5107 = vrot.slane %v5105, 7
        %v5108 = vshll.u32 %v4920, 16
        %v5110 = vor.u32 %v5107, %v5108
        %v5111 = vrot.slane %v5107, 4
        %v5113 = vshrl.u32 %v4921, 16
        %v5115 = vrot.slane %v5113, 7
        %v5116 = vshll.u32 %v4921, 16
        %v5118 = vor.u32 %v5115, %v5116
        %v5119 = vsel %vm4933, %v5111, %v5118
        %v5120 = vrot.slane %v5115, 4
        %v5122 = vshrl.u32 %v4922, 16
        %v5124 = vrot.slane %v5122, 7
        %v5125 = vshll.u32 %v4922, 16
        %v5127 = vor.u32 %v5124, %v5125
        %v5128 = vrot.slane %v5124, 4
        %v5130 = vshrl.u32 %v4923, 16
        %v5132 = vrot.slane %v5130, 7
        %v5133 = vshll.u32 %v4923, 16
        %v5135 = vor.u32 %v5132, %v5133
        %v5136 = vsel %vm4933, %v5128, %v5135
        %v5137 = vrot.slane %v5132, 4
        %v5139 = vshrl.u32 %v4924, 16
        %v5141 = vrot.slane %v5139, 7
        %v5142 = vshll.u32 %v4924, 16
        %v5144 = vor.u32 %v5141, %v5142
        %v5145 = vrot.slane %v5141, 4
        %v5147 = vshrl.u32 %v4925, 16
        %v5149 = vrot.slane %v5147, 7
        %v5150 = vshll.u32 %v4925, 16
        %v5152 = vor.u32 %v5149, %v5150
        %v5153 = vsel %vm4933, %v5145, %v5152
        %v5154 = vrot.slane %v5149, 4
        %v5156 = vshrl.u32 %v4926, 16
        %v5158 = vrot.slane %v5156, 7
        %v5159 = vshll.u32 %v4926, 16
        %v5161 = vor.u32 %v5158, %v5159
        %v5162 = vrot.slane %v5158, 4
        %v5164 = vshrl.u32 %v4927, 16
        %v5166 = vrot.slane %v5164, 7
        %v5167 = vshll.u32 %v4927, 16
        %v5169 = vor.u32 %v5166, %v5167
        %v5170 = vsel %vm4933, %v5162, %v5169
        %v5171 = vrot.slane %v5166, 4
        %v5173 = vshrl.u32 %v4928, 16
        %v5175 = vrot.slane %v5173, 7
        %v5176 = vshll.u32 %v4928, 16
        %v5178 = vor.u32 %v5175, %v5176
        %v5179 = vrot.slane %v5175, 4
        %v5181 = vshrl.u32 %v4929, 16
        %v5183 = vrot.slane %v5181, 7
        %v5184 = vshll.u32 %v4929, 16
        %v5186 = vor.u32 %v5183, %v5184
        %v5187 = vsel %vm4933, %v5179, %v5186
        %v5188 = vrot.slane %v5183, 4
        %v5190 = vshrl.u32 %v4930, 16
        %v5192 = vrot.slane %v5190, 7
        %v5193 = vshll.u32 %v4930, 16
        %v5195 = vor.u32 %v5192, %v5193
        %v5196 = vrot.slane %v5192, 4
        %v5198 = vshrl.u32 %v4931, 16
        %v5200 = vrot.slane %v5198, 7
        %v5201 = vshll.u32 %v4931, 16
        %v5203 = vor.u32 %v5200, %v5201
        %v5204 = vsel %vm4933, %v5196, %v5203
        %v5205 = vrot.slane %v5200, 4
        %s5254 = scalar_lea.vmem [#allocation2], 12
        %vm5255 = vcmask 1043456
        %vm5256 = vmand %vm5255, %vm4844
        %v5257 = vld [vmem:[%s5254] sm:$0xf]
        %v5258 = vsel %vm5256, %v4940, %v5257
        %5259 = vst [vmem:[%s5254] sm:$0xf] %v5258
        %5260 = vst [vmem:[%s5254 + $0x4] sm:$0xf] %v4949
        %v5261 = vld [vmem:[%s5254 + $0x8] sm:$0x1]
        %v5262 = vsel %vm4789, %v4950, %v5261
        %5263 = vst [vmem:[%s5254 + $0x8] sm:$0x1] %v5262
        %v5264 = vld [vmem:[%s5254 + $0xc] sm:$0xf]
        %v5265 = vsel %vm5256, %v4957, %v5264
        %5266 = vst [vmem:[%s5254 + $0xc] sm:$0xf] %v5265
        %5267 = vst [vmem:[%s5254 + $0x10] sm:$0xf] %v4966
        %v5268 = vld [vmem:[%s5254 + $0x14] sm:$0x1]
        %v5269 = vsel %vm4789, %v4967, %v5268
        %5270 = vst [vmem:[%s5254 + $0x14] sm:$0x1] %v5269
        %v5271 = vld [vmem:[%s5254 + $0x18] sm:$0xf]
        %v5272 = vsel %vm5256, %v4974, %v5271
        %5273 = vst [vmem:[%s5254 + $0x18] sm:$0xf] %v5272
        %5274 = vst [vmem:[%s5254 + $0x1c] sm:$0xf] %v4983
        %v5275 = vld [vmem:[%s5254 + $0x20] sm:$0x1]
        %v5276 = vsel %vm4789, %v4984, %v5275
        %5277 = vst [vmem:[%s5254 + $0x20] sm:$0x1] %v5276
        %v5278 = vld [vmem:[%s5254 + $0x24] sm:$0xf]
        %v5279 = vsel %vm5256, %v4991, %v5278
        %5280 = vst [vmem:[%s5254 + $0x24] sm:$0xf] %v5279
        %5281 = vst [vmem:[%s5254 + $0x28] sm:$0xf] %v5000
        %v5282 = vld [vmem:[%s5254 + $0x2c] sm:$0x1]
        %v5283 = vsel %vm4789, %v5001, %v5282
        %5284 = vst [vmem:[%s5254 + $0x2c] sm:$0x1] %v5283
        %v5285 = vld [vmem:[%s5254 + $0x30] sm:$0xf]
        %v5286 = vsel %vm5256, %v5008, %v5285
        %5287 = vst [vmem:[%s5254 + $0x30] sm:$0xf] %v5286
        %5288 = vst [vmem:[%s5254 + $0x34] sm:$0xf] %v5017
        %v5289 = vld [vmem:[%s5254 + $0x38] sm:$0x1]
        %v5290 = vsel %vm4789, %v5018, %v5289
        %5291 = vst [vmem:[%s5254 + $0x38] sm:$0x1] %v5290
        %v5292 = vld [vmem:[%s5254 + $0x3c] sm:$0xf]
        %v5293 = vsel %vm5256, %v5025, %v5292
        %5294 = vst [vmem:[%s5254 + $0x3c] sm:$0xf] %v5293
        %5295 = vst [vmem:[%s5254 + $0x40] sm:$0xf] %v5034
        %v5296 = vld [vmem:[%s5254 + $0x44] sm:$0x1]
        %v5297 = vsel %vm4789, %v5035, %v5296
        %5298 = vst [vmem:[%s5254 + $0x44] sm:$0x1] %v5297
        %v5299 = vld [vmem:[%s5254 + $0x48] sm:$0xf]
        %v5300 = vsel %vm5256, %v5042, %v5299
        %5301 = vst [vmem:[%s5254 + $0x48] sm:$0xf] %v5300
        %5302 = vst [vmem:[%s5254 + $0x4c] sm:$0xf] %v5051
        %v5303 = vld [vmem:[%s5254 + $0x50] sm:$0x1]
        %v5304 = vsel %vm4789, %v5052, %v5303
        %5305 = vst [vmem:[%s5254 + $0x50] sm:$0x1] %v5304
        %v5306 = vld [vmem:[%s5254 + $0x54] sm:$0xf]
        %v5307 = vsel %vm5256, %v5059, %v5306
        %5308 = vst [vmem:[%s5254 + $0x54] sm:$0xf] %v5307
        %5309 = vst [vmem:[%s5254 + $0x58] sm:$0xf] %v5068
        %v5310 = vld [vmem:[%s5254 + $0x5c] sm:$0x1]
        %v5311 = vsel %vm4789, %v5069, %v5310
        %5312 = vst [vmem:[%s5254 + $0x5c] sm:$0x1] %v5311
        %v5313 = vld [vmem:[%s5254 + $0x60] sm:$0xf]
        %v5314 = vsel %vm5256, %v5076, %v5313
        %5315 = vst [vmem:[%s5254 + $0x60] sm:$0xf] %v5314
        %5316 = vst [vmem:[%s5254 + $0x64] sm:$0xf] %v5085
        %v5317 = vld [vmem:[%s5254 + $0x68] sm:$0x1]
        %v5318 = vsel %vm4789, %v5086, %v5317
        %5319 = vst [vmem:[%s5254 + $0x68] sm:$0x1] %v5318
        %v5320 = vld [vmem:[%s5254 + $0x6c] sm:$0xf]
        %v5321 = vsel %vm5256, %v5093, %v5320
        %5322 = vst [vmem:[%s5254 + $0x6c] sm:$0xf] %v5321
        %5323 = vst [vmem:[%s5254 + $0x70] sm:$0xf] %v5102
        %v5324 = vld [vmem:[%s5254 + $0x74] sm:$0x1]
        %v5325 = vsel %vm4789, %v5103, %v5324
        %5326 = vst [vmem:[%s5254 + $0x74] sm:$0x1] %v5325
        %v5327 = vld [vmem:[%s5254 + $0x78] sm:$0xf]
        %v5328 = vsel %vm5256, %v5110, %v5327
        %5329 = vst [vmem:[%s5254 + $0x78] sm:$0xf] %v5328
        %5330 = vst [vmem:[%s5254 + $0x7c] sm:$0xf] %v5119
        %v5331 = vld [vmem:[%s5254 + $0x80] sm:$0x1]
        %v5332 = vsel %vm4789, %v5120, %v5331
        %5333 = vst [vmem:[%s5254 + $0x80] sm:$0x1] %v5332
        %v5334 = vld [vmem:[%s5254 + $0x84] sm:$0xf]
        %v5335 = vsel %vm5256, %v5127, %v5334
        %5336 = vst [vmem:[%s5254 + $0x84] sm:$0xf] %v5335
        %5337 = vst [vmem:[%s5254 + $0x88] sm:$0xf] %v5136
        %v5338 = vld [vmem:[%s5254 + $0x8c] sm:$0x1]
        %v5339 = vsel %vm4789, %v5137, %v5338
        %5340 = vst [vmem:[%s5254 + $0x8c] sm:$0x1] %v5339
        %v5341 = vld [vmem:[%s5254 + $0x90] sm:$0xf]
        %v5342 = vsel %vm5256, %v5144, %v5341
        %5343 = vst [vmem:[%s5254 + $0x90] sm:$0xf] %v5342
        %5344 = vst [vmem:[%s5254 + $0x94] sm:$0xf] %v5153
        %v5345 = vld [vmem:[%s5254 + $0x98] sm:$0x1]
        %v5346 = vsel %vm4789, %v5154, %v5345
        %5347 = vst [vmem:[%s5254 + $0x98] sm:$0x1] %v5346
        %v5348 = vld [vmem:[%s5254 + $0x9c] sm:$0xf]
        %v5349 = vsel %vm5256, %v5161, %v5348
        %5350 = vst [vmem:[%s5254 + $0x9c] sm:$0xf] %v5349
        %5351 = vst [vmem:[%s5254 + $0xa0] sm:$0xf] %v5170
        %v5352 = vld [vmem:[%s5254 + $0xa4] sm:$0x1]
        %v5353 = vsel %vm4789, %v5171, %v5352
        %5354 = vst [vmem:[%s5254 + $0xa4] sm:$0x1] %v5353
        %v5355 = vld [vmem:[%s5254 + $0xa8] sm:$0xf]
        %v5356 = vsel %vm5256, %v5178, %v5355
        %5357 = vst [vmem:[%s5254 + $0xa8] sm:$0xf] %v5356
        %5358 = vst [vmem:[%s5254 + $0xac] sm:$0xf] %v5187
        %v5359 = vld [vmem:[%s5254 + $0xb0] sm:$0x1]
        %v5360 = vsel %vm4789, %v5188, %v5359
        %5361 = vst [vmem:[%s5254 + $0xb0] sm:$0x1] %v5360
        %v5362 = vld [vmem:[%s5254 + $0xb4] sm:$0xf]
        %v5363 = vsel %vm5256, %v5195, %v5362
        %5364 = vst [vmem:[%s5254 + $0xb4] sm:$0xf] %v5363
        %5365 = vst [vmem:[%s5254 + $0xb8] sm:$0xf] %v5204
        %v5366 = vld [vmem:[%s5254 + $0xbc] sm:$0x1]
        %v5367 = vsel %vm4789, %v5205, %v5366
        %5368 = vst [vmem:[%s5254 + $0xbc] sm:$0x1] %v5367
        %v5369 = vld [vmem:[#allocation2] sm:$0xf]
        %v5370 = vld [vmem:[#allocation2 + $0x4] sm:$0xf]
        %v5371 = vld [vmem:[#allocation2 + $0xc] sm:$0xf]
        %v5372 = vld [vmem:[#allocation2 + $0x10] sm:$0xf]
        %v5373 = vld [vmem:[#allocation2 + $0x18] sm:$0xf]
        %v5374 = vld [vmem:[#allocation2 + $0x1c] sm:$0xf]
        %v5375 = vld [vmem:[#allocation2 + $0x24] sm:$0xf]
        %v5376 = vld [vmem:[#allocation2 + $0x28] sm:$0xf]
        %v5377 = vld [vmem:[#allocation2 + $0x30] sm:$0xf]
        %v5378 = vld [vmem:[#allocation2 + $0x34] sm:$0xf]
        %v5379 = vld [vmem:[#allocation2 + $0x3c] sm:$0xf]
        %v5380 = vld [vmem:[#allocation2 + $0x40] sm:$0xf]
        %v5381 = vld [vmem:[#allocation2 + $0x48] sm:$0xf]
        %v5382 = vld [vmem:[#allocation2 + $0x4c] sm:$0xf]
        %v5383 = vld [vmem:[#allocation2 + $0x54] sm:$0xf]
        %v5384 = vld [vmem:[#allocation2 + $0x58] sm:$0xf]
        %v5385 = vld [vmem:[#allocation2 + $0x60] sm:$0xf]
        %v5386 = vld [vmem:[#allocation2 + $0x64] sm:$0xf]
        %v5387 = vld [vmem:[#allocation2 + $0x6c] sm:$0xf]
        %v5388 = vld [vmem:[#allocation2 + $0x70] sm:$0xf]
        %v5389 = vld [vmem:[#allocation2 + $0x78] sm:$0xf]
        %v5390 = vld [vmem:[#allocation2 + $0x7c] sm:$0xf]
        %v5391 = vld [vmem:[#allocation2 + $0x84] sm:$0xf]
        %v5392 = vld [vmem:[#allocation2 + $0x88] sm:$0xf]
        %v5393 = vld [vmem:[#allocation2 + $0x90] sm:$0xf]
        %v5394 = vld [vmem:[#allocation2 + $0x94] sm:$0xf]
        %v5395 = vld [vmem:[#allocation2 + $0x9c] sm:$0xf]
        %v5396 = vld [vmem:[#allocation2 + $0xa0] sm:$0xf]
        %v5397 = vld [vmem:[#allocation2 + $0xa8] sm:$0xf]
        %v5398 = vld [vmem:[#allocation2 + $0xac] sm:$0xf]
        %v5399 = vld [vmem:[#allocation2 + $0xb4] sm:$0xf]
        %v5400 = vld [vmem:[#allocation2 + $0xb8] sm:$0xf]
        %v5401 = vld [vmem:[#allocation9] sm:$0xf]
        %v5402 = vld [vmem:[#allocation9 + $0x4] sm:$0xf]
        %v5403 = vld [vmem:[#allocation9 + $0x8] sm:$0xf]
        %v5404 = vld [vmem:[#allocation9 + $0xc] sm:$0xf]
        %v5405 = vld [vmem:[#allocation9 + $0x10] sm:$0xf]
        %v5406 = vld [vmem:[#allocation9 + $0x14] sm:$0xf]
        %v5407 = vld [vmem:[#allocation9 + $0x18] sm:$0xf]
        %v5408 = vld [vmem:[#allocation9 + $0x1c] sm:$0xf]
        %v5409 = vld [vmem:[#allocation9 + $0x20] sm:$0xf]
        %v5410 = vld [vmem:[#allocation9 + $0x24] sm:$0xf]
        %v5411 = vld [vmem:[#allocation9 + $0x28] sm:$0xf]
        %v5412 = vld [vmem:[#allocation9 + $0x2c] sm:$0xf]
        %v5413 = vld [vmem:[#allocation9 + $0x30] sm:$0xf]
        %v5414 = vld [vmem:[#allocation9 + $0x34] sm:$0xf]
        %v5415 = vld [vmem:[#allocation9 + $0x38] sm:$0xf]
        %v5416 = vld [vmem:[#allocation9 + $0x3c] sm:$0xf]
        %v5417 = vld [vmem:[#allocation2 + $0x8] sm:$0x1]
        %v5418 = vld [vmem:[#allocation2 + $0x14] sm:$0x1]
        %v5419 = vld [vmem:[#allocation2 + $0x20] sm:$0x1]
        %v5420 = vld [vmem:[#allocation2 + $0x2c] sm:$0x1]
        %v5421 = vld [vmem:[#allocation2 + $0x38] sm:$0x1]
        %v5422 = vld [vmem:[#allocation2 + $0x44] sm:$0x1]
        %v5423 = vld [vmem:[#allocation2 + $0x50] sm:$0x1]
        %v5424 = vld [vmem:[#allocation2 + $0x5c] sm:$0x1]
        %v5425 = vld [vmem:[#allocation2 + $0x68] sm:$0x1]
        %v5426 = vld [vmem:[#allocation2 + $0x74] sm:$0x1]
        %v5427 = vld [vmem:[#allocation2 + $0x80] sm:$0x1]
        %v5428 = vld [vmem:[#allocation2 + $0x8c] sm:$0x1]
        %v5429 = vld [vmem:[#allocation2 + $0x98] sm:$0x1]
        %v5430 = vld [vmem:[#allocation2 + $0xa4] sm:$0x1]
        %v5431 = vld [vmem:[#allocation2 + $0xb0] sm:$0x1]
        %v5432 = vld [vmem:[#allocation2 + $0xbc] sm:$0x1]
        %v5434 = vshrl.u32 %v5369, 16
        %v5436 = vrot.slane %v5434, 4
        %v5437 = vshll.u32 %v5369, 16
        %v5439 = vrot.slane %v5437, 5
        %v5440 = vor.u32 %v5436, %v5439
        %v5441 = vrot.slane %v5440, 4
        %v5443 = vshll.u32 %v5370, 16
        %v5445 = vrot.slane %v5443, 5
        %v5446 = vsel %vm549, %v5441, %v5445
        %v5447 = vshrl.u32 %v5370, 16
        %v5449 = vrot.slane %v5447, 4
        %v5450 = vor.u32 %v5449, %v5445
        %v5451 = vrot.slane %v5450, 4
        %v5453 = vshll.u32 %v5417, 16
        %v5455 = vrot.slane %v5453, 5
        %v5456 = vsel %vm549, %v5451, %v5455
        %v5458 = vshrl.u32 %v5371, 16
        %v5460 = vrot.slane %v5458, 4
        %v5461 = vshll.u32 %v5371, 16
        %v5463 = vrot.slane %v5461, 5
        %v5464 = vor.u32 %v5460, %v5463
        %v5465 = vrot.slane %v5464, 4
        %v5467 = vshll.u32 %v5372, 16
        %v5469 = vrot.slane %v5467, 5
        %v5470 = vsel %vm549, %v5465, %v5469
        %v5471 = vshrl.u32 %v5372, 16
        %v5473 = vrot.slane %v5471, 4
        %v5474 = vor.u32 %v5473, %v5469
        %v5475 = vrot.slane %v5474, 4
        %v5477 = vshll.u32 %v5418, 16
        %v5479 = vrot.slane %v5477, 5
        %v5480 = vsel %vm549, %v5475, %v5479
        %v5482 = vshrl.u32 %v5373, 16
        %v5484 = vrot.slane %v5482, 4
        %v5485 = vshll.u32 %v5373, 16
        %v5487 = vrot.slane %v5485, 5
        %v5488 = vor.u32 %v5484, %v5487
        %v5489 = vrot.slane %v5488, 4
        %v5491 = vshll.u32 %v5374, 16
        %v5493 = vrot.slane %v5491, 5
        %v5494 = vsel %vm549, %v5489, %v5493
        %v5495 = vshrl.u32 %v5374, 16
        %v5497 = vrot.slane %v5495, 4
        %v5498 = vor.u32 %v5497, %v5493
        %v5499 = vrot.slane %v5498, 4
        %v5501 = vshll.u32 %v5419, 16
        %v5503 = vrot.slane %v5501, 5
        %v5504 = vsel %vm549, %v5499, %v5503
        %v5506 = vshrl.u32 %v5375, 16
        %v5508 = vrot.slane %v5506, 4
        %v5509 = vshll.u32 %v5375, 16
        %v5511 = vrot.slane %v5509, 5
        %v5512 = vor.u32 %v5508, %v5511
        %v5513 = vrot.slane %v5512, 4
        %v5515 = vshll.u32 %v5376, 16
        %v5517 = vrot.slane %v5515, 5
        %v5518 = vsel %vm549, %v5513, %v5517
        %v5519 = vshrl.u32 %v5376, 16
        %v5521 = vrot.slane %v5519, 4
        %v5522 = vor.u32 %v5521, %v5517
        %v5523 = vrot.slane %v5522, 4
        %v5525 = vshll.u32 %v5420, 16
        %v5527 = vrot.slane %v5525, 5
        %v5528 = vsel %vm549, %v5523, %v5527
        %v5530 = vshrl.u32 %v5377, 16
        %v5532 = vrot.slane %v5530, 4
        %v5533 = vshll.u32 %v5377, 16
        %v5535 = vrot.slane %v5533, 5
        %v5536 = vor.u32 %v5532, %v5535
        %v5537 = vrot.slane %v5536, 4
        %v5539 = vshll.u32 %v5378, 16
        %v5541 = vrot.slane %v5539, 5
        %v5542 = vsel %vm549, %v5537, %v5541
        %v5543 = vshrl.u32 %v5378, 16
        %v5545 = vrot.slane %v5543, 4
        %v5546 = vor.u32 %v5545, %v5541
        %v5547 = vrot.slane %v5546, 4
        %v5549 = vshll.u32 %v5421, 16
        %v5551 = vrot.slane %v5549, 5
        %v5552 = vsel %vm549, %v5547, %v5551
        %v5554 = vshrl.u32 %v5379, 16
        %v5556 = vrot.slane %v5554, 4
        %v5557 = vshll.u32 %v5379, 16
        %v5559 = vrot.slane %v5557, 5
        %v5560 = vor.u32 %v5556, %v5559
        %v5561 = vrot.slane %v5560, 4
        %v5563 = vshll.u32 %v5380, 16
        %v5565 = vrot.slane %v5563, 5
        %v5566 = vsel %vm549, %v5561, %v5565
        %v5567 = vshrl.u32 %v5380, 16
        %v5569 = vrot.slane %v5567, 4
        %v5570 = vor.u32 %v5569, %v5565
        %v5571 = vrot.slane %v5570, 4
        %v5573 = vshll.u32 %v5422, 16
        %v5575 = vrot.slane %v5573, 5
        %v5576 = vsel %vm549, %v5571, %v5575
        %v5578 = vshrl.u32 %v5381, 16
        %v5580 = vrot.slane %v5578, 4
        %v5581 = vshll.u32 %v5381, 16
        %v5583 = vrot.slane %v5581, 5
        %v5584 = vor.u32 %v5580, %v5583
        %v5585 = vrot.slane %v5584, 4
        %v5587 = vshll.u32 %v5382, 16
        %v5589 = vrot.slane %v5587, 5
        %v5590 = vsel %vm549, %v5585, %v5589
        %v5591 = vshrl.u32 %v5382, 16
        %v5593 = vrot.slane %v5591, 4
        %v5594 = vor.u32 %v5593, %v5589
        %v5595 = vrot.slane %v5594, 4
        %v5597 = vshll.u32 %v5423, 16
        %v5599 = vrot.slane %v5597, 5
        %v5600 = vsel %vm549, %v5595, %v5599
        %v5602 = vshrl.u32 %v5383, 16
        %v5604 = vrot.slane %v5602, 4
        %v5605 = vshll.u32 %v5383, 16
        %v5607 = vrot.slane %v5605, 5
        %v5608 = vor.u32 %v5604, %v5607
        %v5609 = vrot.slane %v5608, 4
        %v5611 = vshll.u32 %v5384, 16
        %v5613 = vrot.slane %v5611, 5
        %v5614 = vsel %vm549, %v5609, %v5613
        %v5615 = vshrl.u32 %v5384, 16
        %v5617 = vrot.slane %v5615, 4
        %v5618 = vor.u32 %v5617, %v5613
        %v5619 = vrot.slane %v5618, 4
        %v5621 = vshll.u32 %v5424, 16
        %v5623 = vrot.slane %v5621, 5
        %v5624 = vsel %vm549, %v5619, %v5623
        %v5626 = vshrl.u32 %v5385, 16
        %v5628 = vrot.slane %v5626, 4
        %v5629 = vshll.u32 %v5385, 16
        %v5631 = vrot.slane %v5629, 5
        %v5632 = vor.u32 %v5628, %v5631
        %v5633 = vrot.slane %v5632, 4
        %v5635 = vshll.u32 %v5386, 16
        %v5637 = vrot.slane %v5635, 5
        %v5638 = vsel %vm549, %v5633, %v5637
        %v5639 = vshrl.u32 %v5386, 16
        %v5641 = vrot.slane %v5639, 4
        %v5642 = vor.u32 %v5641, %v5637
        %v5643 = vrot.slane %v5642, 4
        %v5645 = vshll.u32 %v5425, 16
        %v5647 = vrot.slane %v5645, 5
        %v5648 = vsel %vm549, %v5643, %v5647
        %v5650 = vshrl.u32 %v5387, 16
        %v5652 = vrot.slane %v5650, 4
        %v5653 = vshll.u32 %v5387, 16
        %v5655 = vrot.slane %v5653, 5
        %v5656 = vor.u32 %v5652, %v5655
        %v5657 = vrot.slane %v5656, 4
        %v5659 = vshll.u32 %v5388, 16
        %v5661 = vrot.slane %v5659, 5
        %v5662 = vsel %vm549, %v5657, %v5661
        %v5663 = vshrl.u32 %v5388, 16
        %v5665 = vrot.slane %v5663, 4
        %v5666 = vor.u32 %v5665, %v5661
        %v5667 = vrot.slane %v5666, 4
        %v5669 = vshll.u32 %v5426, 16
        %v5671 = vrot.slane %v5669, 5
        %v5672 = vsel %vm549, %v5667, %v5671
        %v5674 = vshrl.u32 %v5389, 16
        %v5676 = vrot.slane %v5674, 4
        %v5677 = vshll.u32 %v5389, 16
        %v5679 = vrot.slane %v5677, 5
        %v5680 = vor.u32 %v5676, %v5679
        %v5681 = vrot.slane %v5680, 4
        %v5683 = vshll.u32 %v5390, 16
        %v5685 = vrot.slane %v5683, 5
        %v5686 = vsel %vm549, %v5681, %v5685
        %v5687 = vshrl.u32 %v5390, 16
        %v5689 = vrot.slane %v5687, 4
        %v5690 = vor.u32 %v5689, %v5685
        %v5691 = vrot.slane %v5690, 4
        %v5693 = vshll.u32 %v5427, 16
        %v5695 = vrot.slane %v5693, 5
        %v5696 = vsel %vm549, %v5691, %v5695
        %v5698 = vshrl.u32 %v5391, 16
        %v5700 = vrot.slane %v5698, 4
        %v5701 = vshll.u32 %v5391, 16
        %v5703 = vrot.slane %v5701, 5
        %v5704 = vor.u32 %v5700, %v5703
        %v5705 = vrot.slane %v5704, 4
        %v5707 = vshll.u32 %v5392, 16
        %v5709 = vrot.slane %v5707, 5
        %v5710 = vsel %vm549, %v5705, %v5709
        %v5711 = vshrl.u32 %v5392, 16
        %v5713 = vrot.slane %v5711, 4
        %v5714 = vor.u32 %v5713, %v5709
        %v5715 = vrot.slane %v5714, 4
        %v5717 = vshll.u32 %v5428, 16
        %v5719 = vrot.slane %v5717, 5
        %v5720 = vsel %vm549, %v5715, %v5719
        %v5722 = vshrl.u32 %v5393, 16
        %v5724 = vrot.slane %v5722, 4
        %v5725 = vshll.u32 %v5393, 16
        %v5727 = vrot.slane %v5725, 5
        %v5728 = vor.u32 %v5724, %v5727
        %v5729 = vrot.slane %v5728, 4
        %v5731 = vshll.u32 %v5394, 16
        %v5733 = vrot.slane %v5731, 5
        %v5734 = vsel %vm549, %v5729, %v5733
        %v5735 = vshrl.u32 %v5394, 16
        %v5737 = vrot.slane %v5735, 4
        %v5738 = vor.u32 %v5737, %v5733
        %v5739 = vrot.slane %v5738, 4
        %v5741 = vshll.u32 %v5429, 16
        %v5743 = vrot.slane %v5741, 5
        %v5744 = vsel %vm549, %v5739, %v5743
        %v5746 = vshrl.u32 %v5395, 16
        %v5748 = vrot.slane %v5746, 4
        %v5749 = vshll.u32 %v5395, 16
        %v5751 = vrot.slane %v5749, 5
        %v5752 = vor.u32 %v5748, %v5751
        %v5753 = vrot.slane %v5752, 4
        %v5755 = vshll.u32 %v5396, 16
        %v5757 = vrot.slane %v5755, 5
        %v5758 = vsel %vm549, %v5753, %v5757
        %v5759 = vshrl.u32 %v5396, 16
        %v5761 = vrot.slane %v5759, 4
        %v5762 = vor.u32 %v5761, %v5757
        %v5763 = vrot.slane %v5762, 4
        %v5765 = vshll.u32 %v5430, 16
        %v5767 = vrot.slane %v5765, 5
        %v5768 = vsel %vm549, %v5763, %v5767
        %v5770 = vshrl.u32 %v5397, 16
        %v5772 = vrot.slane %v5770, 4
        %v5773 = vshll.u32 %v5397, 16
        %v5775 = vrot.slane %v5773, 5
        %v5776 = vor.u32 %v5772, %v5775
        %v5777 = vrot.slane %v5776, 4
        %v5779 = vshll.u32 %v5398, 16
        %v5781 = vrot.slane %v5779, 5
        %v5782 = vsel %vm549, %v5777, %v5781
        %v5783 = vshrl.u32 %v5398, 16
        %v5785 = vrot.slane %v5783, 4
        %v5786 = vor.u32 %v5785, %v5781
        %v5787 = vrot.slane %v5786, 4
        %v5789 = vshll.u32 %v5431, 16
        %v5791 = vrot.slane %v5789, 5
        %v5792 = vsel %vm549, %v5787, %v5791
        %v5794 = vshrl.u32 %v5399, 16
        %v5796 = vrot.slane %v5794, 4
        %v5797 = vshll.u32 %v5399, 16
        %v5799 = vrot.slane %v5797, 5
        %v5800 = vor.u32 %v5796, %v5799
        %v5801 = vrot.slane %v5800, 4
        %v5803 = vshll.u32 %v5400, 16
        %v5805 = vrot.slane %v5803, 5
        %v5806 = vsel %vm549, %v5801, %v5805
        %v5807 = vshrl.u32 %v5400, 16
        %v5809 = vrot.slane %v5807, 4
        %v5810 = vor.u32 %v5809, %v5805
        %v5811 = vrot.slane %v5810, 4
        %v5813 = vshll.u32 %v5432, 16
        %v5815 = vrot.slane %v5813, 5
        %v5816 = vsel %vm549, %v5811, %v5815
        %s5817 = scalar_lea.vmem [#allocation9], 64
        %v5818 = vld [vmem:[%s5817] sm:$0xf]
        %v5819 = vld [vmem:[%s5817 + $0x4] sm:$0xf]
        %v5820 = vld [vmem:[%s5817 + $0x8] sm:$0xf]
        %v5821 = vld [vmem:[%s5817 + $0xc] sm:$0xf]
        %v5822 = vld [vmem:[%s5817 + $0x10] sm:$0xf]
        %v5823 = vld [vmem:[%s5817 + $0x14] sm:$0xf]
        %v5824 = vld [vmem:[%s5817 + $0x18] sm:$0xf]
        %v5825 = vld [vmem:[%s5817 + $0x1c] sm:$0xf]
        %v5826 = vld [vmem:[%s5817 + $0x20] sm:$0xf]
        %v5827 = vld [vmem:[%s5817 + $0x24] sm:$0xf]
        %v5828 = vld [vmem:[%s5817 + $0x28] sm:$0xf]
        %v5829 = vld [vmem:[%s5817 + $0x2c] sm:$0xf]
        %v5830 = vld [vmem:[%s5817 + $0x30] sm:$0xf]
        %v5831 = vld [vmem:[%s5817 + $0x34] sm:$0xf]
        %v5832 = vld [vmem:[%s5817 + $0x38] sm:$0xf]
        %v5833 = vld [vmem:[%s5817 + $0x3c] sm:$0xf]
        %v5834 = vunpack.c.l.b16 %v5446
        %v5835 = vunpack.c.l.b16 %v5456
        %v5836 = vunpack.c.l.b16 %v5470
        %v5837 = vunpack.c.l.b16 %v5480
        %v5838 = vunpack.c.l.b16 %v5494
        %v5839 = vunpack.c.l.b16 %v5504
        %v5840 = vunpack.c.l.b16 %v5518
        %v5841 = vunpack.c.l.b16 %v5528
        %v5842 = vunpack.c.l.b16 %v5542
        %v5843 = vunpack.c.l.b16 %v5552
        %v5844 = vunpack.c.l.b16 %v5566
        %v5845 = vunpack.c.l.b16 %v5576
        %v5846 = vunpack.c.l.b16 %v5590
        %v5847 = vunpack.c.l.b16 %v5600
        %v5848 = vunpack.c.l.b16 %v5614
        %v5849 = vunpack.c.l.b16 %v5624
        %v5850 = vunpack.c.l.b16 %v5638
        %v5851 = vunpack.c.l.b16 %v5648
        %v5852 = vunpack.c.l.b16 %v5662
        %v5853 = vunpack.c.l.b16 %v5672
        %v5854 = vunpack.c.l.b16 %v5686
        %v5855 = vunpack.c.l.b16 %v5696
        %v5856 = vunpack.c.l.b16 %v5710
        %v5857 = vunpack.c.l.b16 %v5720
        %v5858 = vunpack.c.l.b16 %v5734
        %v5859 = vunpack.c.l.b16 %v5744
        %v5860 = vunpack.c.l.b16 %v5758
        %v5861 = vunpack.c.l.b16 %v5768
        %v5862 = vunpack.c.l.b16 %v5782
        %v5863 = vunpack.c.l.b16 %v5792
        %v5864 = vunpack.c.l.b16 %v5806
        %v5865 = vunpack.c.l.b16 %v5816
        %v5866 = vpack.c.b16 %v5835, %v5834
        %v5867 = vpack.c.b16 %v5837, %v5836
        %v5868 = vpack.c.b16 %v5839, %v5838
        %v5869 = vpack.c.b16 %v5841, %v5840
        %v5870 = vpack.c.b16 %v5843, %v5842
        %v5871 = vpack.c.b16 %v5845, %v5844
        %v5872 = vpack.c.b16 %v5847, %v5846
        %v5873 = vpack.c.b16 %v5849, %v5848
        %v5874 = vpack.c.b16 %v5851, %v5850
        %v5875 = vpack.c.b16 %v5853, %v5852
        %v5876 = vpack.c.b16 %v5855, %v5854
        %v5877 = vpack.c.b16 %v5857, %v5856
        %v5878 = vpack.c.b16 %v5859, %v5858
        %v5879 = vpack.c.b16 %v5861, %v5860
        %v5880 = vpack.c.b16 %v5863, %v5862
        %v5881 = vpack.c.b16 %v5865, %v5864
        %v5914 = vunpack.c.l.b16 %v5818
        %v5915 = vunpack.c.l.b16 %v5819
        %v5916 = vunpack.c.l.b16 %v5820
        %v5917 = vunpack.c.l.b16 %v5821
        %v5918 = vunpack.c.l.b16 %v5822
        %v5919 = vunpack.c.l.b16 %v5823
        %v5920 = vunpack.c.l.b16 %v5824
        %v5921 = vunpack.c.l.b16 %v5825
        %v5922 = vunpack.c.l.b16 %v5826
        %v5923 = vunpack.c.l.b16 %v5827
        %v5924 = vunpack.c.l.b16 %v5828
        %v5925 = vunpack.c.l.b16 %v5829
        %v5926 = vunpack.c.l.b16 %v5830
        %v5927 = vunpack.c.l.b16 %v5831
        %v5928 = vunpack.c.l.b16 %v5832
        %v5929 = vunpack.c.l.b16 %v5833
        %v5930 = vpack.c.b16 %v5915, %v5914
        %v5931 = vpack.c.b16 %v5917, %v5916
        %v5932 = vpack.c.b16 %v5919, %v5918
        %v5933 = vpack.c.b16 %v5921, %v5920
        %v5934 = vpack.c.b16 %v5923, %v5922
        %v5935 = vpack.c.b16 %v5925, %v5924
        %v5936 = vpack.c.b16 %v5927, %v5926
        %v5937 = vpack.c.b16 %v5929, %v5928
        %5946 = vmatpush.bf16.msra.mxu0 %v5937
        %5947 = vmatpush.bf16.msra.mxu0 %v5936
        %5948 = vmatpush.bf16.msra.mxu0 %v5935
        %5949 = vmatpush.bf16.msra.mxu0 %v5934
        %5950 = vmatpush.bf16.msra.mxu0 %v5933
        %5951 = vmatpush.bf16.msra.mxu0 %v5932
        %5952 = vmatpush.bf16.msra.mxu0 %v5931
        %5953 = vmatpush.bf16.msra.mxu0 %v5930
        %5954 = vmatmul.bf16.gmra.mxu0 %v5866
        %v5955 = vpop.f32.mrf.mxu0
        %v5956 = vadd.f32 0.0, %v5955
        %v5957 = vpop.f32.mrf.mxu0
        %v5958 = vadd.f32 0.0, %v5957
        %5959 = vmatmul.bf16.gmra.mxu0 %v5867
        %v5960 = vpop.f32.mrf.mxu0
        %v5961 = vadd.f32 0.0, %v5960
        %v5962 = vpop.f32.mrf.mxu0
        %v5963 = vadd.f32 0.0, %v5962
        %5964 = vmatmul.bf16.gmra.mxu0 %v5868
        %v5965 = vpop.f32.mrf.mxu0
        %v5966 = vadd.f32 0.0, %v5965
        %v5967 = vpop.f32.mrf.mxu0
        %v5968 = vadd.f32 0.0, %v5967
        %5969 = vmatmul.bf16.gmra.mxu0 %v5869
        %v5970 = vpop.f32.mrf.mxu0
        %v5971 = vadd.f32 0.0, %v5970
        %v5972 = vpop.f32.mrf.mxu0
        %v5973 = vadd.f32 0.0, %v5972
        %5974 = vmatmul.bf16.gmra.mxu0 %v5870
        %v5975 = vpop.f32.mrf.mxu0
        %v5976 = vadd.f32 0.0, %v5975
        %v5977 = vpop.f32.mrf.mxu0
        %v5978 = vadd.f32 0.0, %v5977
        %5979 = vmatmul.bf16.gmra.mxu0 %v5871
        %v5980 = vpop.f32.mrf.mxu0
        %v5981 = vadd.f32 0.0, %v5980
        %v5982 = vpop.f32.mrf.mxu0
        %v5983 = vadd.f32 0.0, %v5982
        %5984 = vmatmul.bf16.gmra.mxu0 %v5872
        %v5985 = vpop.f32.mrf.mxu0
        %v5986 = vadd.f32 0.0, %v5985
        %v5987 = vpop.f32.mrf.mxu0
        %v5988 = vadd.f32 0.0, %v5987
        %5989 = vmatmul.bf16.gmra.mxu0 %v5873
        %v5990 = vpop.f32.mrf.mxu0
        %v5991 = vadd.f32 0.0, %v5990
        %v5992 = vpop.f32.mrf.mxu0
        %v5993 = vadd.f32 0.0, %v5992
        %5994 = vmatmul.bf16.gmra.mxu0 %v5874
        %v5995 = vpop.f32.mrf.mxu0
        %v5996 = vadd.f32 0.0, %v5995
        %v5997 = vpop.f32.mrf.mxu0
        %v5998 = vadd.f32 0.0, %v5997
        %5999 = vmatmul.bf16.gmra.mxu0 %v5875
        %v6000 = vpop.f32.mrf.mxu0
        %v6001 = vadd.f32 0.0, %v6000
        %v6002 = vpop.f32.mrf.mxu0
        %v6003 = vadd.f32 0.0, %v6002
        %6004 = vmatmul.bf16.gmra.mxu0 %v5876
        %v6005 = vpop.f32.mrf.mxu0
        %v6006 = vadd.f32 0.0, %v6005
        %v6007 = vpop.f32.mrf.mxu0
        %v6008 = vadd.f32 0.0, %v6007
        %6009 = vmatmul.bf16.gmra.mxu0 %v5877
        %v6010 = vpop.f32.mrf.mxu0
        %v6011 = vadd.f32 0.0, %v6010
        %v6012 = vpop.f32.mrf.mxu0
        %v6013 = vadd.f32 0.0, %v6012
        %6014 = vmatmul.bf16.gmra.mxu0 %v5878
        %v6015 = vpop.f32.mrf.mxu0
        %v6016 = vadd.f32 0.0, %v6015
        %v6017 = vpop.f32.mrf.mxu0
        %v6018 = vadd.f32 0.0, %v6017
        %6019 = vmatmul.bf16.gmra.mxu0 %v5879
        %v6020 = vpop.f32.mrf.mxu0
        %v6021 = vadd.f32 0.0, %v6020
        %v6022 = vpop.f32.mrf.mxu0
        %v6023 = vadd.f32 0.0, %v6022
        %6024 = vmatmul.bf16.gmra.mxu0 %v5880
        %v6025 = vpop.f32.mrf.mxu0
        %v6026 = vadd.f32 0.0, %v6025
        %v6027 = vpop.f32.mrf.mxu0
        %v6028 = vadd.f32 0.0, %v6027
        %6029 = vmatmul.bf16.gmra.mxu0 %v5881
        %v6030 = vpop.f32.mrf.mxu0
        %v6031 = vadd.f32 0.0, %v6030
        %v6032 = vpop.f32.mrf.mxu0
        %v6033 = vadd.f32 0.0, %v6032
        %6034 = vdwg.mxu0
        %v6067 = vunpack.c.l.b16 %v5369
        %v6068 = vunpack.c.l.b16 %v5370
        %v6069 = vunpack.c.l.b16 %v5371
        %v6070 = vunpack.c.l.b16 %v5372
        %v6071 = vunpack.c.l.b16 %v5373
        %v6072 = vunpack.c.l.b16 %v5374
        %v6073 = vunpack.c.l.b16 %v5375
        %v6074 = vunpack.c.l.b16 %v5376
        %v6075 = vunpack.c.l.b16 %v5377
        %v6076 = vunpack.c.l.b16 %v5378
        %v6077 = vunpack.c.l.b16 %v5379
        %v6078 = vunpack.c.l.b16 %v5380
        %v6079 = vunpack.c.l.b16 %v5381
        %v6080 = vunpack.c.l.b16 %v5382
        %v6081 = vunpack.c.l.b16 %v5383
        %v6082 = vunpack.c.l.b16 %v5384
        %v6083 = vunpack.c.l.b16 %v5385
        %v6084 = vunpack.c.l.b16 %v5386
        %v6085 = vunpack.c.l.b16 %v5387
        %v6086 = vunpack.c.l.b16 %v5388
        %v6087 = vunpack.c.l.b16 %v5389
        %v6088 = vunpack.c.l.b16 %v5390
        %v6089 = vunpack.c.l.b16 %v5391
        %v6090 = vunpack.c.l.b16 %v5392
        %v6091 = vunpack.c.l.b16 %v5393
        %v6092 = vunpack.c.l.b16 %v5394
        %v6093 = vunpack.c.l.b16 %v5395
        %v6094 = vunpack.c.l.b16 %v5396
        %v6095 = vunpack.c.l.b16 %v5397
        %v6096 = vunpack.c.l.b16 %v5398
        %v6097 = vunpack.c.l.b16 %v5399
        %v6098 = vunpack.c.l.b16 %v5400
        %v6099 = vpack.c.b16 %v6068, %v6067
        %v6100 = vpack.c.b16 %v6070, %v6069
        %v6101 = vpack.c.b16 %v6072, %v6071
        %v6102 = vpack.c.b16 %v6074, %v6073
        %v6103 = vpack.c.b16 %v6076, %v6075
        %v6104 = vpack.c.b16 %v6078, %v6077
        %v6105 = vpack.c.b16 %v6080, %v6079
        %v6106 = vpack.c.b16 %v6082, %v6081
        %v6107 = vpack.c.b16 %v6084, %v6083
        %v6108 = vpack.c.b16 %v6086, %v6085
        %v6109 = vpack.c.b16 %v6088, %v6087
        %v6110 = vpack.c.b16 %v6090, %v6089
        %v6111 = vpack.c.b16 %v6092, %v6091
        %v6112 = vpack.c.b16 %v6094, %v6093
        %v6113 = vpack.c.b16 %v6096, %v6095
        %v6114 = vpack.c.b16 %v6098, %v6097
        %v6147 = vunpack.c.l.b16 %v5401
        %v6148 = vunpack.c.l.b16 %v5402
        %v6149 = vunpack.c.l.b16 %v5403
        %v6150 = vunpack.c.l.b16 %v5404
        %v6151 = vunpack.c.l.b16 %v5405
        %v6152 = vunpack.c.l.b16 %v5406
        %v6153 = vunpack.c.l.b16 %v5407
        %v6154 = vunpack.c.l.b16 %v5408
        %v6155 = vunpack.c.l.b16 %v5409
        %v6156 = vunpack.c.l.b16 %v5410
        %v6157 = vunpack.c.l.b16 %v5411
        %v6158 = vunpack.c.l.b16 %v5412
        %v6159 = vunpack.c.l.b16 %v5413
        %v6160 = vunpack.c.l.b16 %v5414
        %v6161 = vunpack.c.l.b16 %v5415
        %v6162 = vunpack.c.l.b16 %v5416
        %v6163 = vpack.c.b16 %v6148, %v6147
        %v6164 = vpack.c.b16 %v6150, %v6149
        %v6165 = vpack.c.b16 %v6152, %v6151
        %v6166 = vpack.c.b16 %v6154, %v6153
        %v6167 = vpack.c.b16 %v6156, %v6155
        %v6168 = vpack.c.b16 %v6158, %v6157
        %v6169 = vpack.c.b16 %v6160, %v6159
        %v6170 = vpack.c.b16 %v6162, %v6161
        %6179 = vmatpush.bf16.msra.mxu0 %v6170
        %6180 = vmatpush.bf16.msra.mxu0 %v6169
        %6181 = vmatpush.bf16.msra.mxu0 %v6168
        %6182 = vmatpush.bf16.msra.mxu0 %v6167
        %6183 = vmatpush.bf16.msra.mxu0 %v6166
        %6184 = vmatpush.bf16.msra.mxu0 %v6165
        %6185 = vmatpush.bf16.msra.mxu0 %v6164
        %6186 = vmatpush.bf16.msra.mxu0 %v6163
        %6187 = vmatmul.bf16.gmra.mxu0 %v6099
        %v6188 = vpop.f32.mrf.mxu0
        %v6189 = vadd.f32 %v5956, %v6188
        %v6190 = vpop.f32.mrf.mxu0
        %v6191 = vadd.f32 %v5958, %v6190
        %6192 = vmatmul.bf16.gmra.mxu0 %v6100
        %v6193 = vpop.f32.mrf.mxu0
        %v6194 = vadd.f32 %v5961, %v6193
        %v6195 = vpop.f32.mrf.mxu0
        %v6196 = vadd.f32 %v5963, %v6195
        %6197 = vmatmul.bf16.gmra.mxu0 %v6101
        %v6198 = vpop.f32.mrf.mxu0
        %v6199 = vadd.f32 %v5966, %v6198
        %v6200 = vpop.f32.mrf.mxu0
        %v6201 = vadd.f32 %v5968, %v6200
        %6202 = vmatmul.bf16.gmra.mxu0 %v6102
        %v6203 = vpop.f32.mrf.mxu0
        %v6204 = vadd.f32 %v5971, %v6203
        %v6205 = vpop.f32.mrf.mxu0
        %v6206 = vadd.f32 %v5973, %v6205
        %6207 = vmatmul.bf16.gmra.mxu0 %v6103
        %v6208 = vpop.f32.mrf.mxu0
        %v6209 = vadd.f32 %v5976, %v6208
        %v6210 = vpop.f32.mrf.mxu0
        %v6211 = vadd.f32 %v5978, %v6210
        %6212 = vmatmul.bf16.gmra.mxu0 %v6104
        %v6213 = vpop.f32.mrf.mxu0
        %v6214 = vadd.f32 %v5981, %v6213
        %v6215 = vpop.f32.mrf.mxu0
        %v6216 = vadd.f32 %v5983, %v6215
        %6217 = vmatmul.bf16.gmra.mxu0 %v6105
        %v6218 = vpop.f32.mrf.mxu0
        %v6219 = vadd.f32 %v5986, %v6218
        %v6220 = vpop.f32.mrf.mxu0
        %v6221 = vadd.f32 %v5988, %v6220
        %6222 = vmatmul.bf16.gmra.mxu0 %v6106
        %v6223 = vpop.f32.mrf.mxu0
        %v6224 = vadd.f32 %v5991, %v6223
        %v6225 = vpop.f32.mrf.mxu0
        %v6226 = vadd.f32 %v5993, %v6225
        %6227 = vmatmul.bf16.gmra.mxu0 %v6107
        %v6228 = vpop.f32.mrf.mxu0
        %v6229 = vadd.f32 %v5996, %v6228
        %v6230 = vpop.f32.mrf.mxu0
        %v6231 = vadd.f32 %v5998, %v6230
        %6232 = vmatmul.bf16.gmra.mxu0 %v6108
        %v6233 = vpop.f32.mrf.mxu0
        %v6234 = vadd.f32 %v6001, %v6233
        %v6235 = vpop.f32.mrf.mxu0
        %v6236 = vadd.f32 %v6003, %v6235
        %6237 = vmatmul.bf16.gmra.mxu0 %v6109
        %v6238 = vpop.f32.mrf.mxu0
        %v6239 = vadd.f32 %v6006, %v6238
        %v6240 = vpop.f32.mrf.mxu0
        %v6241 = vadd.f32 %v6008, %v6240
        %6242 = vmatmul.bf16.gmra.mxu0 %v6110
        %v6243 = vpop.f32.mrf.mxu0
        %v6244 = vadd.f32 %v6011, %v6243
        %v6245 = vpop.f32.mrf.mxu0
        %v6246 = vadd.f32 %v6013, %v6245
        %6247 = vmatmul.bf16.gmra.mxu0 %v6111
        %v6248 = vpop.f32.mrf.mxu0
        %v6249 = vadd.f32 %v6016, %v6248
        %v6250 = vpop.f32.mrf.mxu0
        %v6251 = vadd.f32 %v6018, %v6250
        %6252 = vmatmul.bf16.gmra.mxu0 %v6112
        %v6253 = vpop.f32.mrf.mxu0
        %v6254 = vadd.f32 %v6021, %v6253
        %v6255 = vpop.f32.mrf.mxu0
        %v6256 = vadd.f32 %v6023, %v6255
        %6257 = vmatmul.bf16.gmra.mxu0 %v6113
        %v6258 = vpop.f32.mrf.mxu0
        %v6259 = vadd.f32 %v6026, %v6258
        %v6260 = vpop.f32.mrf.mxu0
        %v6261 = vadd.f32 %v6028, %v6260
        %6262 = vmatmul.bf16.gmra.mxu0 %v6114
        %v6263 = vpop.f32.mrf.mxu0
        %v6264 = vadd.f32 %v6031, %v6263
        %v6265 = vpop.f32.mrf.mxu0
        %v6266 = vadd.f32 %v6033, %v6265
        %6267 = vdwg.mxu0
        %v6268 = vld [vmem:[#allocation2] sm:$0xe]
        %v6269 = vld [vmem:[#allocation2 + $0xc] sm:$0xe]
        %v6270 = vld [vmem:[#allocation2 + $0x18] sm:$0xe]
        %v6271 = vld [vmem:[#allocation2 + $0x24] sm:$0xe]
        %v6272 = vld [vmem:[#allocation2 + $0x30] sm:$0xe]
        %v6273 = vld [vmem:[#allocation2 + $0x3c] sm:$0xe]
        %v6274 = vld [vmem:[#allocation2 + $0x48] sm:$0xe]
        %v6275 = vld [vmem:[#allocation2 + $0x54] sm:$0xe]
        %v6276 = vld [vmem:[#allocation2 + $0x60] sm:$0xe]
        %v6277 = vld [vmem:[#allocation2 + $0x6c] sm:$0xe]
        %v6278 = vld [vmem:[#allocation2 + $0x78] sm:$0xe]
        %v6279 = vld [vmem:[#allocation2 + $0x84] sm:$0xe]
        %v6280 = vld [vmem:[#allocation2 + $0x90] sm:$0xe]
        %v6281 = vld [vmem:[#allocation2 + $0x9c] sm:$0xe]
        %v6282 = vld [vmem:[#allocation2 + $0xa8] sm:$0xe]
        %v6283 = vld [vmem:[#allocation2 + $0xb4] sm:$0xe]
        %v6316 = vrot.slane %v6268, 5
        %v6317 = vrot.slane %v6316, 4
        %v6318 = vrot.slane %v5370, 5
        %v6319 = vsel %vm1435, %v6317, %v6318
        %v6320 = vrot.slane %v6318, 4
        %v6321 = vrot.slane %v5417, 5
        %v6322 = vsel %vm1435, %v6320, %v6321
        %v6323 = vrot.slane %v6269, 5
        %v6324 = vrot.slane %v6323, 4
        %v6325 = vrot.slane %v5372, 5
        %v6326 = vsel %vm1435, %v6324, %v6325
        %v6327 = vrot.slane %v6325, 4
        %v6328 = vrot.slane %v5418, 5
        %v6329 = vsel %vm1435, %v6327, %v6328
        %v6330 = vrot.slane %v6270, 5
        %v6331 = vrot.slane %v6330, 4
        %v6332 = vrot.slane %v5374, 5
        %v6333 = vsel %vm1435, %v6331, %v6332
        %v6334 = vrot.slane %v6332, 4
        %v6335 = vrot.slane %v5419, 5
        %v6336 = vsel %vm1435, %v6334, %v6335
        %v6337 = vrot.slane %v6271, 5
        %v6338 = vrot.slane %v6337, 4
        %v6339 = vrot.slane %v5376, 5
        %v6340 = vsel %vm1435, %v6338, %v6339
        %v6341 = vrot.slane %v6339, 4
        %v6342 = vrot.slane %v5420, 5
        %v6343 = vsel %vm1435, %v6341, %v6342
        %v6344 = vrot.slane %v6272, 5
        %v6345 = vrot.slane %v6344, 4
        %v6346 = vrot.slane %v5378, 5
        %v6347 = vsel %vm1435, %v6345, %v6346
        %v6348 = vrot.slane %v6346, 4
        %v6349 = vrot.slane %v5421, 5
        %v6350 = vsel %vm1435, %v6348, %v6349
        %v6351 = vrot.slane %v6273, 5
        %v6352 = vrot.slane %v6351, 4
        %v6353 = vrot.slane %v5380, 5
        %v6354 = vsel %vm1435, %v6352, %v6353
        %v6355 = vrot.slane %v6353, 4
        %v6356 = vrot.slane %v5422, 5
        %v6357 = vsel %vm1435, %v6355, %v6356
        %v6358 = vrot.slane %v6274, 5
        %v6359 = vrot.slane %v6358, 4
        %v6360 = vrot.slane %v5382, 5
        %v6361 = vsel %vm1435, %v6359, %v6360
        %v6362 = vrot.slane %v6360, 4
        %v6363 = vrot.slane %v5423, 5
        %v6364 = vsel %vm1435, %v6362, %v6363
        %v6365 = vrot.slane %v6275, 5
        %v6366 = vrot.slane %v6365, 4
        %v6367 = vrot.slane %v5384, 5
        %v6368 = vsel %vm1435, %v6366, %v6367
        %v6369 = vrot.slane %v6367, 4
        %v6370 = vrot.slane %v5424, 5
        %v6371 = vsel %vm1435, %v6369, %v6370
        %v6372 = vrot.slane %v6276, 5
        %v6373 = vrot.slane %v6372, 4
        %v6374 = vrot.slane %v5386, 5
        %v6375 = vsel %vm1435, %v6373, %v6374
        %v6376 = vrot.slane %v6374, 4
        %v6377 = vrot.slane %v5425, 5
        %v6378 = vsel %vm1435, %v6376, %v6377
        %v6379 = vrot.slane %v6277, 5
        %v6380 = vrot.slane %v6379, 4
        %v6381 = vrot.slane %v5388, 5
        %v6382 = vsel %vm1435, %v6380, %v6381
        %v6383 = vrot.slane %v6381, 4
        %v6384 = vrot.slane %v5426, 5
        %v6385 = vsel %vm1435, %v6383, %v6384
        %v6386 = vrot.slane %v6278, 5
        %v6387 = vrot.slane %v6386, 4
        %v6388 = vrot.slane %v5390, 5
        %v6389 = vsel %vm1435, %v6387, %v6388
        %v6390 = vrot.slane %v6388, 4
        %v6391 = vrot.slane %v5427, 5
        %v6392 = vsel %vm1435, %v6390, %v6391
        %v6393 = vrot.slane %v6279, 5
        %v6394 = vrot.slane %v6393, 4
        %v6395 = vrot.slane %v5392, 5
        %v6396 = vsel %vm1435, %v6394, %v6395
        %v6397 = vrot.slane %v6395, 4
        %v6398 = vrot.slane %v5428, 5
        %v6399 = vsel %vm1435, %v6397, %v6398
        %v6400 = vrot.slane %v6280, 5
        %v6401 = vrot.slane %v6400, 4
        %v6402 = vrot.slane %v5394, 5
        %v6403 = vsel %vm1435, %v6401, %v6402
        %v6404 = vrot.slane %v6402, 4
        %v6405 = vrot.slane %v5429, 5
        %v6406 = vsel %vm1435, %v6404, %v6405
        %v6407 = vrot.slane %v6281, 5
        %v6408 = vrot.slane %v6407, 4
        %v6409 = vrot.slane %v5396, 5
        %v6410 = vsel %vm1435, %v6408, %v6409
        %v6411 = vrot.slane %v6409, 4
        %v6412 = vrot.slane %v5430, 5
        %v6413 = vsel %vm1435, %v6411, %v6412
        %v6414 = vrot.slane %v6282, 5
        %v6415 = vrot.slane %v6414, 4
        %v6416 = vrot.slane %v5398, 5
        %v6417 = vsel %vm1435, %v6415, %v6416
        %v6418 = vrot.slane %v6416, 4
        %v6419 = vrot.slane %v5431, 5
        %v6420 = vsel %vm1435, %v6418, %v6419
        %v6421 = vrot.slane %v6283, 5
        %v6422 = vrot.slane %v6421, 4
        %v6423 = vrot.slane %v5400, 5
        %v6424 = vsel %vm1435, %v6422, %v6423
        %v6425 = vrot.slane %v6423, 4
        %v6426 = vrot.slane %v5432, 5
        %v6427 = vsel %vm1435, %v6425, %v6426
        %s6428 = scalar_lea.vmem [#allocation9], 128
        %v6429 = vld [vmem:[%s6428] sm:$0xf]
        %v6430 = vld [vmem:[%s6428 + $0x4] sm:$0xf]
        %v6431 = vld [vmem:[%s6428 + $0x8] sm:$0xf]
        %v6432 = vld [vmem:[%s6428 + $0xc] sm:$0xf]
        %v6433 = vld [vmem:[%s6428 + $0x10] sm:$0xf]
        %v6434 = vld [vmem:[%s6428 + $0x14] sm:$0xf]
        %v6435 = vld [vmem:[%s6428 + $0x18] sm:$0xf]
        %v6436 = vld [vmem:[%s6428 + $0x1c] sm:$0xf]
        %v6437 = vld [vmem:[%s6428 + $0x20] sm:$0xf]
        %v6438 = vld [vmem:[%s6428 + $0x24] sm:$0xf]
        %v6439 = vld [vmem:[%s6428 + $0x28] sm:$0xf]
        %v6440 = vld [vmem:[%s6428 + $0x2c] sm:$0xf]
        %v6441 = vld [vmem:[%s6428 + $0x30] sm:$0xf]
        %v6442 = vld [vmem:[%s6428 + $0x34] sm:$0xf]
        %v6443 = vld [vmem:[%s6428 + $0x38] sm:$0xf]
        %v6444 = vld [vmem:[%s6428 + $0x3c] sm:$0xf]
        %v6445 = vunpack.c.l.b16 %v6319
        %v6446 = vunpack.c.l.b16 %v6322
        %v6447 = vunpack.c.l.b16 %v6326
        %v6448 = vunpack.c.l.b16 %v6329
        %v6449 = vunpack.c.l.b16 %v6333
        %v6450 = vunpack.c.l.b16 %v6336
        %v6451 = vunpack.c.l.b16 %v6340
        %v6452 = vunpack.c.l.b16 %v6343
        %v6453 = vunpack.c.l.b16 %v6347
        %v6454 = vunpack.c.l.b16 %v6350
        %v6455 = vunpack.c.l.b16 %v6354
        %v6456 = vunpack.c.l.b16 %v6357
        %v6457 = vunpack.c.l.b16 %v6361
        %v6458 = vunpack.c.l.b16 %v6364
        %v6459 = vunpack.c.l.b16 %v6368
        %v6460 = vunpack.c.l.b16 %v6371
        %v6461 = vunpack.c.l.b16 %v6375
        %v6462 = vunpack.c.l.b16 %v6378
        %v6463 = vunpack.c.l.b16 %v6382
        %v6464 = vunpack.c.l.b16 %v6385
        %v6465 = vunpack.c.l.b16 %v6389
        %v6466 = vunpack.c.l.b16 %v6392
        %v6467 = vunpack.c.l.b16 %v6396
        %v6468 = vunpack.c.l.b16 %v6399
        %v6469 = vunpack.c.l.b16 %v6403
        %v6470 = vunpack.c.l.b16 %v6406
        %v6471 = vunpack.c.l.b16 %v6410
        %v6472 = vunpack.c.l.b16 %v6413
        %v6473 = vunpack.c.l.b16 %v6417
        %v6474 = vunpack.c.l.b16 %v6420
        %v6475 = vunpack.c.l.b16 %v6424
        %v6476 = vunpack.c.l.b16 %v6427
        %v6477 = vpack.c.b16 %v6446, %v6445
        %v6478 = vpack.c.b16 %v6448, %v6447
        %v6479 = vpack.c.b16 %v6450, %v6449
        %v6480 = vpack.c.b16 %v6452, %v6451
        %v6481 = vpack.c.b16 %v6454, %v6453
        %v6482 = vpack.c.b16 %v6456, %v6455
        %v6483 = vpack.c.b16 %v6458, %v6457
        %v6484 = vpack.c.b16 %v6460, %v6459
        %v6485 = vpack.c.b16 %v6462, %v6461
        %v6486 = vpack.c.b16 %v6464, %v6463
        %v6487 = vpack.c.b16 %v6466, %v6465
        %v6488 = vpack.c.b16 %v6468, %v6467
        %v6489 = vpack.c.b16 %v6470, %v6469
        %v6490 = vpack.c.b16 %v6472, %v6471
        %v6491 = vpack.c.b16 %v6474, %v6473
        %v6492 = vpack.c.b16 %v6476, %v6475
        %v6525 = vunpack.c.l.b16 %v6429
        %v6526 = vunpack.c.l.b16 %v6430
        %v6527 = vunpack.c.l.b16 %v6431
        %v6528 = vunpack.c.l.b16 %v6432
        %v6529 = vunpack.c.l.b16 %v6433
        %v6530 = vunpack.c.l.b16 %v6434
        %v6531 = vunpack.c.l.b16 %v6435
        %v6532 = vunpack.c.l.b16 %v6436
        %v6533 = vunpack.c.l.b16 %v6437
        %v6534 = vunpack.c.l.b16 %v6438
        %v6535 = vunpack.c.l.b16 %v6439
        %v6536 = vunpack.c.l.b16 %v6440
        %v6537 = vunpack.c.l.b16 %v6441
        %v6538 = vunpack.c.l.b16 %v6442
        %v6539 = vunpack.c.l.b16 %v6443
        %v6540 = vunpack.c.l.b16 %v6444
        %v6541 = vpack.c.b16 %v6526, %v6525
        %v6542 = vpack.c.b16 %v6528, %v6527
        %v6543 = vpack.c.b16 %v6530, %v6529
        %v6544 = vpack.c.b16 %v6532, %v6531
        %v6545 = vpack.c.b16 %v6534, %v6533
        %v6546 = vpack.c.b16 %v6536, %v6535
        %v6547 = vpack.c.b16 %v6538, %v6537
        %v6548 = vpack.c.b16 %v6540, %v6539
        %6557 = vmatpush.bf16.msra.mxu0 %v6548
        %6558 = vmatpush.bf16.msra.mxu0 %v6547
        %6559 = vmatpush.bf16.msra.mxu0 %v6546
        %6560 = vmatpush.bf16.msra.mxu0 %v6545
        %6561 = vmatpush.bf16.msra.mxu0 %v6544
        %6562 = vmatpush.bf16.msra.mxu0 %v6543
        %6563 = vmatpush.bf16.msra.mxu0 %v6542
        %6564 = vmatpush.bf16.msra.mxu0 %v6541
        %6565 = vmatmul.bf16.gmra.mxu0 %v6477
        %v6566 = vpop.f32.mrf.mxu0
        %v6567 = vadd.f32 0.0, %v6566
        %v6568 = vpop.f32.mrf.mxu0
        %v6569 = vadd.f32 0.0, %v6568
        %6570 = vmatmul.bf16.gmra.mxu0 %v6478
        %v6571 = vpop.f32.mrf.mxu0
        %v6572 = vadd.f32 0.0, %v6571
        %v6573 = vpop.f32.mrf.mxu0
        %v6574 = vadd.f32 0.0, %v6573
        %6575 = vmatmul.bf16.gmra.mxu0 %v6479
        %v6576 = vpop.f32.mrf.mxu0
        %v6577 = vadd.f32 0.0, %v6576
        %v6578 = vpop.f32.mrf.mxu0
        %v6579 = vadd.f32 0.0, %v6578
        %6580 = vmatmul.bf16.gmra.mxu0 %v6480
        %v6581 = vpop.f32.mrf.mxu0
        %v6582 = vadd.f32 0.0, %v6581
        %v6583 = vpop.f32.mrf.mxu0
        %v6584 = vadd.f32 0.0, %v6583
        %6585 = vmatmul.bf16.gmra.mxu0 %v6481
        %v6586 = vpop.f32.mrf.mxu0
        %v6587 = vadd.f32 0.0, %v6586
        %v6588 = vpop.f32.mrf.mxu0
        %v6589 = vadd.f32 0.0, %v6588
        %6590 = vmatmul.bf16.gmra.mxu0 %v6482
        %v6591 = vpop.f32.mrf.mxu0
        %v6592 = vadd.f32 0.0, %v6591
        %v6593 = vpop.f32.mrf.mxu0
        %v6594 = vadd.f32 0.0, %v6593
        %6595 = vmatmul.bf16.gmra.mxu0 %v6483
        %v6596 = vpop.f32.mrf.mxu0
        %v6597 = vadd.f32 0.0, %v6596
        %v6598 = vpop.f32.mrf.mxu0
        %v6599 = vadd.f32 0.0, %v6598
        %6600 = vmatmul.bf16.gmra.mxu0 %v6484
        %v6601 = vpop.f32.mrf.mxu0
        %v6602 = vadd.f32 0.0, %v6601
        %v6603 = vpop.f32.mrf.mxu0
        %v6604 = vadd.f32 0.0, %v6603
        %6605 = vmatmul.bf16.gmra.mxu0 %v6485
        %v6606 = vpop.f32.mrf.mxu0
        %v6607 = vadd.f32 0.0, %v6606
        %v6608 = vpop.f32.mrf.mxu0
        %v6609 = vadd.f32 0.0, %v6608
        %6610 = vmatmul.bf16.gmra.mxu0 %v6486
        %v6611 = vpop.f32.mrf.mxu0
        %v6612 = vadd.f32 0.0, %v6611
        %v6613 = vpop.f32.mrf.mxu0
        %v6614 = vadd.f32 0.0, %v6613
        %6615 = vmatmul.bf16.gmra.mxu0 %v6487
        %v6616 = vpop.f32.mrf.mxu0
        %v6617 = vadd.f32 0.0, %v6616
        %v6618 = vpop.f32.mrf.mxu0
        %v6619 = vadd.f32 0.0, %v6618
        %6620 = vmatmul.bf16.gmra.mxu0 %v6488
        %v6621 = vpop.f32.mrf.mxu0
        %v6622 = vadd.f32 0.0, %v6621
        %v6623 = vpop.f32.mrf.mxu0
        %v6624 = vadd.f32 0.0, %v6623
        %6625 = vmatmul.bf16.gmra.mxu0 %v6489
        %v6626 = vpop.f32.mrf.mxu0
        %v6627 = vadd.f32 0.0, %v6626
        %v6628 = vpop.f32.mrf.mxu0
        %v6629 = vadd.f32 0.0, %v6628
        %6630 = vmatmul.bf16.gmra.mxu0 %v6490
        %v6631 = vpop.f32.mrf.mxu0
        %v6632 = vadd.f32 0.0, %v6631
        %v6633 = vpop.f32.mrf.mxu0
        %v6634 = vadd.f32 0.0, %v6633
        %6635 = vmatmul.bf16.gmra.mxu0 %v6491
        %v6636 = vpop.f32.mrf.mxu0
        %v6637 = vadd.f32 0.0, %v6636
        %v6638 = vpop.f32.mrf.mxu0
        %v6639 = vadd.f32 0.0, %v6638
        %6640 = vmatmul.bf16.gmra.mxu0 %v6492
        %v6641 = vpop.f32.mrf.mxu0
        %v6642 = vadd.f32 0.0, %v6641
        %v6643 = vpop.f32.mrf.mxu0
        %v6644 = vadd.f32 0.0, %v6643
        %6645 = vdwg.mxu0
        %v6646 = vadd.f32 %v6189, %v6567
        %v6647 = vadd.f32 %v6191, %v6569
        %v6648 = vadd.f32 %v6194, %v6572
        %v6649 = vadd.f32 %v6196, %v6574
        %v6650 = vadd.f32 %v6199, %v6577
        %v6651 = vadd.f32 %v6201, %v6579
        %v6652 = vadd.f32 %v6204, %v6582
        %v6653 = vadd.f32 %v6206, %v6584
        %v6654 = vadd.f32 %v6209, %v6587
        %v6655 = vadd.f32 %v6211, %v6589
        %v6656 = vadd.f32 %v6214, %v6592
        %v6657 = vadd.f32 %v6216, %v6594
        %v6658 = vadd.f32 %v6219, %v6597
        %v6659 = vadd.f32 %v6221, %v6599
        %v6660 = vadd.f32 %v6224, %v6602
        %v6661 = vadd.f32 %v6226, %v6604
        %v6662 = vadd.f32 %v6229, %v6607
        %v6663 = vadd.f32 %v6231, %v6609
        %v6664 = vadd.f32 %v6234, %v6612
        %v6665 = vadd.f32 %v6236, %v6614
        %v6666 = vadd.f32 %v6239, %v6617
        %v6667 = vadd.f32 %v6241, %v6619
        %v6668 = vadd.f32 %v6244, %v6622
        %v6669 = vadd.f32 %v6246, %v6624
        %v6670 = vadd.f32 %v6249, %v6627
        %v6671 = vadd.f32 %v6251, %v6629
        %v6672 = vadd.f32 %v6254, %v6632
        %v6673 = vadd.f32 %v6256, %v6634
        %v6674 = vadd.f32 %v6259, %v6637
        %v6675 = vadd.f32 %v6261, %v6639
        %v6676 = vadd.f32 %v6264, %v6642
        %v6677 = vadd.f32 %v6266, %v6644
        %v6678 = vld [vmem:[%s5254] sm:$0xf]
        %v6679 = vld [vmem:[%s5254 + $0x4] sm:$0xf]
        %v6680 = vld [vmem:[%s5254 + $0xc] sm:$0xf]
        %v6681 = vld [vmem:[%s5254 + $0x10] sm:$0xf]
        %v6682 = vld [vmem:[%s5254 + $0x18] sm:$0xf]
        %v6683 = vld [vmem:[%s5254 + $0x1c] sm:$0xf]
        %v6684 = vld [vmem:[%s5254 + $0x24] sm:$0xf]
        %v6685 = vld [vmem:[%s5254 + $0x28] sm:$0xf]
        %v6686 = vld [vmem:[%s5254 + $0x30] sm:$0xf]
        %v6687 = vld [vmem:[%s5254 + $0x34] sm:$0xf]
        %v6688 = vld [vmem:[%s5254 + $0x3c] sm:$0xf]
        %v6689 = vld [vmem:[%s5254 + $0x40] sm:$0xf]
        %v6690 = vld [vmem:[%s5254 + $0x48] sm:$0xf]
        %v6691 = vld [vmem:[%s5254 + $0x4c] sm:$0xf]
        %v6692 = vld [vmem:[%s5254 + $0x54] sm:$0xf]
        %v6693 = vld [vmem:[%s5254 + $0x58] sm:$0xf]
        %v6694 = vld [vmem:[%s5254 + $0x60] sm:$0xf]
        %v6695 = vld [vmem:[%s5254 + $0x64] sm:$0xf]
        %v6696 = vld [vmem:[%s5254 + $0x6c] sm:$0xf]
        %v6697 = vld [vmem:[%s5254 + $0x70] sm:$0xf]
        %v6698 = vld [vmem:[%s5254 + $0x78] sm:$0xf]
        %v6699 = vld [vmem:[%s5254 + $0x7c] sm:$0xf]
        %v6700 = vld [vmem:[%s5254 + $0x84] sm:$0xf]
        %v6701 = vld [vmem:[%s5254 + $0x88] sm:$0xf]
        %v6702 = vld [vmem:[%s5254 + $0x90] sm:$0xf]
        %v6703 = vld [vmem:[%s5254 + $0x94] sm:$0xf]
        %v6704 = vld [vmem:[%s5254 + $0x9c] sm:$0xf]
        %v6705 = vld [vmem:[%s5254 + $0xa0] sm:$0xf]
        %v6706 = vld [vmem:[%s5254 + $0xa8] sm:$0xf]
        %v6707 = vld [vmem:[%s5254 + $0xac] sm:$0xf]
        %v6708 = vld [vmem:[%s5254 + $0xb4] sm:$0xf]
        %v6709 = vld [vmem:[%s5254 + $0xb8] sm:$0xf]
        %s6710 = scalar_lea.vmem [#allocation9], 192
        %v6711 = vld [vmem:[%s6710] sm:$0xf]
        %v6712 = vld [vmem:[%s6710 + $0x4] sm:$0xf]
        %v6713 = vld [vmem:[%s6710 + $0x8] sm:$0xf]
        %v6714 = vld [vmem:[%s6710 + $0xc] sm:$0xf]
        %v6715 = vld [vmem:[%s6710 + $0x10] sm:$0xf]
        %v6716 = vld [vmem:[%s6710 + $0x14] sm:$0xf]
        %v6717 = vld [vmem:[%s6710 + $0x18] sm:$0xf]
        %v6718 = vld [vmem:[%s6710 + $0x1c] sm:$0xf]
        %v6719 = vld [vmem:[%s6710 + $0x20] sm:$0xf]
        %v6720 = vld [vmem:[%s6710 + $0x24] sm:$0xf]
        %v6721 = vld [vmem:[%s6710 + $0x28] sm:$0xf]
        %v6722 = vld [vmem:[%s6710 + $0x2c] sm:$0xf]
        %v6723 = vld [vmem:[%s6710 + $0x30] sm:$0xf]
        %v6724 = vld [vmem:[%s6710 + $0x34] sm:$0xf]
        %v6725 = vld [vmem:[%s6710 + $0x38] sm:$0xf]
        %v6726 = vld [vmem:[%s6710 + $0x3c] sm:$0xf]
        %v6759 = vunpack.c.l.b16 %v6678
        %v6760 = vunpack.c.l.b16 %v6679
        %v6761 = vunpack.c.l.b16 %v6680
        %v6762 = vunpack.c.l.b16 %v6681
        %v6763 = vunpack.c.l.b16 %v6682
        %v6764 = vunpack.c.l.b16 %v6683
        %v6765 = vunpack.c.l.b16 %v6684
        %v6766 = vunpack.c.l.b16 %v6685
        %v6767 = vunpack.c.l.b16 %v6686
        %v6768 = vunpack.c.l.b16 %v6687
        %v6769 = vunpack.c.l.b16 %v6688
        %v6770 = vunpack.c.l.b16 %v6689
        %v6771 = vunpack.c.l.b16 %v6690
        %v6772 = vunpack.c.l.b16 %v6691
        %v6773 = vunpack.c.l.b16 %v6692
        %v6774 = vunpack.c.l.b16 %v6693
        %v6775 = vunpack.c.l.b16 %v6694
        %v6776 = vunpack.c.l.b16 %v6695
        %v6777 = vunpack.c.l.b16 %v6696
        %v6778 = vunpack.c.l.b16 %v6697
        %v6779 = vunpack.c.l.b16 %v6698
        %v6780 = vunpack.c.l.b16 %v6699
        %v6781 = vunpack.c.l.b16 %v6700
        %v6782 = vunpack.c.l.b16 %v6701
        %v6783 = vunpack.c.l.b16 %v6702
        %v6784 = vunpack.c.l.b16 %v6703
        %v6785 = vunpack.c.l.b16 %v6704
        %v6786 = vunpack.c.l.b16 %v6705
        %v6787 = vunpack.c.l.b16 %v6706
        %v6788 = vunpack.c.l.b16 %v6707
        %v6789 = vunpack.c.l.b16 %v6708
        %v6790 = vunpack.c.l.b16 %v6709
        %v6791 = vpack.c.b16 %v6760, %v6759
        %v6792 = vpack.c.b16 %v6762, %v6761
        %v6793 = vpack.c.b16 %v6764, %v6763
        %v6794 = vpack.c.b16 %v6766, %v6765
        %v6795 = vpack.c.b16 %v6768, %v6767
        %v6796 = vpack.c.b16 %v6770, %v6769
        %v6797 = vpack.c.b16 %v6772, %v6771
        %v6798 = vpack.c.b16 %v6774, %v6773
        %v6799 = vpack.c.b16 %v6776, %v6775
        %v6800 = vpack.c.b16 %v6778, %v6777
        %v6801 = vpack.c.b16 %v6780, %v6779
        %v6802 = vpack.c.b16 %v6782, %v6781
        %v6803 = vpack.c.b16 %v6784, %v6783
        %v6804 = vpack.c.b16 %v6786, %v6785
        %v6805 = vpack.c.b16 %v6788, %v6787
        %v6806 = vpack.c.b16 %v6790, %v6789
        %v6839 = vunpack.c.l.b16 %v6711
        %v6840 = vunpack.c.l.b16 %v6712
        %v6841 = vunpack.c.l.b16 %v6713
        %v6842 = vunpack.c.l.b16 %v6714
        %v6843 = vunpack.c.l.b16 %v6715
        %v6844 = vunpack.c.l.b16 %v6716
        %v6845 = vunpack.c.l.b16 %v6717
        %v6846 = vunpack.c.l.b16 %v6718
        %v6847 = vunpack.c.l.b16 %v6719
        %v6848 = vunpack.c.l.b16 %v6720
        %v6849 = vunpack.c.l.b16 %v6721
        %v6850 = vunpack.c.l.b16 %v6722
        %v6851 = vunpack.c.l.b16 %v6723
        %v6852 = vunpack.c.l.b16 %v6724
        %v6853 = vunpack.c.l.b16 %v6725
        %v6854 = vunpack.c.l.b16 %v6726
        %v6855 = vpack.c.b16 %v6840, %v6839
        %v6856 = vpack.c.b16 %v6842, %v6841
        %v6857 = vpack.c.b16 %v6844, %v6843
        %v6858 = vpack.c.b16 %v6846, %v6845
        %v6859 = vpack.c.b16 %v6848, %v6847
        %v6860 = vpack.c.b16 %v6850, %v6849
        %v6861 = vpack.c.b16 %v6852, %v6851
        %v6862 = vpack.c.b16 %v6854, %v6853
        %6871 = vmatpush.bf16.msra.mxu0 %v6862
        %6872 = vmatpush.bf16.msra.mxu0 %v6861
        %6873 = vmatpush.bf16.msra.mxu0 %v6860
        %6874 = vmatpush.bf16.msra.mxu0 %v6859
        %6875 = vmatpush.bf16.msra.mxu0 %v6858
        %6876 = vmatpush.bf16.msra.mxu0 %v6857
        %6877 = vmatpush.bf16.msra.mxu0 %v6856
        %6878 = vmatpush.bf16.msra.mxu0 %v6855
        %6879 = vmatmul.bf16.gmra.mxu0 %v6791
        %v6880 = vpop.f32.mrf.mxu0
        %v6881 = vadd.f32 0.0, %v6880
        %v6882 = vpop.f32.mrf.mxu0
        %v6883 = vadd.f32 0.0, %v6882
        %6884 = vmatmul.bf16.gmra.mxu0 %v6792
        %v6885 = vpop.f32.mrf.mxu0
        %v6886 = vadd.f32 0.0, %v6885
        %v6887 = vpop.f32.mrf.mxu0
        %v6888 = vadd.f32 0.0, %v6887
        %6889 = vmatmul.bf16.gmra.mxu0 %v6793
        %v6890 = vpop.f32.mrf.mxu0
        %v6891 = vadd.f32 0.0, %v6890
        %v6892 = vpop.f32.mrf.mxu0
        %v6893 = vadd.f32 0.0, %v6892
        %6894 = vmatmul.bf16.gmra.mxu0 %v6794
        %v6895 = vpop.f32.mrf.mxu0
        %v6896 = vadd.f32 0.0, %v6895
        %v6897 = vpop.f32.mrf.mxu0
        %v6898 = vadd.f32 0.0, %v6897
        %6899 = vmatmul.bf16.gmra.mxu0 %v6795
        %v6900 = vpop.f32.mrf.mxu0
        %v6901 = vadd.f32 0.0, %v6900
        %v6902 = vpop.f32.mrf.mxu0
        %v6903 = vadd.f32 0.0, %v6902
        %6904 = vmatmul.bf16.gmra.mxu0 %v6796
        %v6905 = vpop.f32.mrf.mxu0
        %v6906 = vadd.f32 0.0, %v6905
        %v6907 = vpop.f32.mrf.mxu0
        %v6908 = vadd.f32 0.0, %v6907
        %6909 = vmatmul.bf16.gmra.mxu0 %v6797
        %v6910 = vpop.f32.mrf.mxu0
        %v6911 = vadd.f32 0.0, %v6910
        %v6912 = vpop.f32.mrf.mxu0
        %v6913 = vadd.f32 0.0, %v6912
        %6914 = vmatmul.bf16.gmra.mxu0 %v6798
        %v6915 = vpop.f32.mrf.mxu0
        %v6916 = vadd.f32 0.0, %v6915
        %v6917 = vpop.f32.mrf.mxu0
        %v6918 = vadd.f32 0.0, %v6917
        %6919 = vmatmul.bf16.gmra.mxu0 %v6799
        %v6920 = vpop.f32.mrf.mxu0
        %v6921 = vadd.f32 0.0, %v6920
        %v6922 = vpop.f32.mrf.mxu0
        %v6923 = vadd.f32 0.0, %v6922
        %6924 = vmatmul.bf16.gmra.mxu0 %v6800
        %v6925 = vpop.f32.mrf.mxu0
        %v6926 = vadd.f32 0.0, %v6925
        %v6927 = vpop.f32.mrf.mxu0
        %v6928 = vadd.f32 0.0, %v6927
        %6929 = vmatmul.bf16.gmra.mxu0 %v6801
        %v6930 = vpop.f32.mrf.mxu0
        %v6931 = vadd.f32 0.0, %v6930
        %v6932 = vpop.f32.mrf.mxu0
        %v6933 = vadd.f32 0.0, %v6932
        %6934 = vmatmul.bf16.gmra.mxu0 %v6802
        %v6935 = vpop.f32.mrf.mxu0
        %v6936 = vadd.f32 0.0, %v6935
        %v6937 = vpop.f32.mrf.mxu0
        %v6938 = vadd.f32 0.0, %v6937
        %6939 = vmatmul.bf16.gmra.mxu0 %v6803
        %v6940 = vpop.f32.mrf.mxu0
        %v6941 = vadd.f32 0.0, %v6940
        %v6942 = vpop.f32.mrf.mxu0
        %v6943 = vadd.f32 0.0, %v6942
        %6944 = vmatmul.bf16.gmra.mxu0 %v6804
        %v6945 = vpop.f32.mrf.mxu0
        %v6946 = vadd.f32 0.0, %v6945
        %v6947 = vpop.f32.mrf.mxu0
        %v6948 = vadd.f32 0.0, %v6947
        %6949 = vmatmul.bf16.gmra.mxu0 %v6805
        %v6950 = vpop.f32.mrf.mxu0
        %v6951 = vadd.f32 0.0, %v6950
        %v6952 = vpop.f32.mrf.mxu0
        %v6953 = vadd.f32 0.0, %v6952
        %6954 = vmatmul.bf16.gmra.mxu0 %v6806
        %v6955 = vpop.f32.mrf.mxu0
        %v6956 = vadd.f32 0.0, %v6955
        %v6957 = vpop.f32.mrf.mxu0
        %v6958 = vadd.f32 0.0, %v6957
        %6959 = vdwg.mxu0
        %v6960 = vadd.f32 %v6646, %v6881
        %v6961 = vadd.f32 %v6647, %v6883
        %v6962 = vadd.f32 %v6648, %v6886
        %v6963 = vadd.f32 %v6649, %v6888
        %v6964 = vadd.f32 %v6650, %v6891
        %v6965 = vadd.f32 %v6651, %v6893
        %v6966 = vadd.f32 %v6652, %v6896
        %v6967 = vadd.f32 %v6653, %v6898
        %v6968 = vadd.f32 %v6654, %v6901
        %v6969 = vadd.f32 %v6655, %v6903
        %v6970 = vadd.f32 %v6656, %v6906
        %v6971 = vadd.f32 %v6657, %v6908
        %v6972 = vadd.f32 %v6658, %v6911
        %v6973 = vadd.f32 %v6659, %v6913
        %v6974 = vadd.f32 %v6660, %v6916
        %v6975 = vadd.f32 %v6661, %v6918
        %v6976 = vadd.f32 %v6662, %v6921
        %v6977 = vadd.f32 %v6663, %v6923
        %v6978 = vadd.f32 %v6664, %v6926
        %v6979 = vadd.f32 %v6665, %v6928
        %v6980 = vadd.f32 %v6666, %v6931
        %v6981 = vadd.f32 %v6667, %v6933
        %v6982 = vadd.f32 %v6668, %v6936
        %v6983 = vadd.f32 %v6669, %v6938
        %v6984 = vadd.f32 %v6670, %v6941
        %v6985 = vadd.f32 %v6671, %v6943
        %v6986 = vadd.f32 %v6672, %v6946
        %v6987 = vadd.f32 %v6673, %v6948
        %v6988 = vadd.f32 %v6674, %v6951
        %v6989 = vadd.f32 %v6675, %v6953
        %v6990 = vadd.f32 %v6676, %v6956
        %v6991 = vadd.f32 %v6677, %v6958
        %v6992 = vld [vmem:[%s5254] sm:$0xf]
        %v6993 = vld [vmem:[%s5254 + $0x4] sm:$0xf]
        %v6994 = vld [vmem:[%s5254 + $0x8] sm:$0x1]
        %v6995 = vld [vmem:[%s5254 + $0xc] sm:$0xf]
        %v6996 = vld [vmem:[%s5254 + $0x10] sm:$0xf]
        %v6997 = vld [vmem:[%s5254 + $0x14] sm:$0x1]
        %v6998 = vld [vmem:[%s5254 + $0x18] sm:$0xf]
        %v6999 = vld [vmem:[%s5254 + $0x1c] sm:$0xf]
        %v7000 = vld [vmem:[%s5254 + $0x20] sm:$0x1]
        %v7001 = vld [vmem:[%s5254 + $0x24] sm:$0xf]
        %v7002 = vld [vmem:[%s5254 + $0x28] sm:$0xf]
        %v7003 = vld [vmem:[%s5254 + $0x2c] sm:$0x1]
        %v7004 = vld [vmem:[%s5254 + $0x30] sm:$0xf]
        %v7005 = vld [vmem:[%s5254 + $0x34] sm:$0xf]
        %v7006 = vld [vmem:[%s5254 + $0x38] sm:$0x1]
        %v7007 = vld [vmem:[%s5254 + $0x3c] sm:$0xf]
        %v7008 = vld [vmem:[%s5254 + $0x40] sm:$0xf]
        %v7009 = vld [vmem:[%s5254 + $0x44] sm:$0x1]
        %v7010 = vld [vmem:[%s5254 + $0x48] sm:$0xf]
        %v7011 = vld [vmem:[%s5254 + $0x4c] sm:$0xf]
        %v7012 = vld [vmem:[%s5254 + $0x50] sm:$0x1]
        %v7013 = vld [vmem:[%s5254 + $0x54] sm:$0xf]
        %v7014 = vld [vmem:[%s5254 + $0x58] sm:$0xf]
        %v7015 = vld [vmem:[%s5254 + $0x5c] sm:$0x1]
        %v7016 = vld [vmem:[%s5254 + $0x60] sm:$0xf]
        %v7017 = vld [vmem:[%s5254 + $0x64] sm:$0xf]
        %v7018 = vld [vmem:[%s5254 + $0x68] sm:$0x1]
        %v7019 = vld [vmem:[%s5254 + $0x6c] sm:$0xf]
        %v7020 = vld [vmem:[%s5254 + $0x70] sm:$0xf]
        %v7021 = vld [vmem:[%s5254 + $0x74] sm:$0x1]
        %v7022 = vld [vmem:[%s5254 + $0x78] sm:$0xf]
        %v7023 = vld [vmem:[%s5254 + $0x7c] sm:$0xf]
        %v7024 = vld [vmem:[%s5254 + $0x80] sm:$0x1]
        %v7025 = vld [vmem:[%s5254 + $0x84] sm:$0xf]
        %v7026 = vld [vmem:[%s5254 + $0x88] sm:$0xf]
        %v7027 = vld [vmem:[%s5254 + $0x8c] sm:$0x1]
        %v7028 = vld [vmem:[%s5254 + $0x90] sm:$0xf]
        %v7029 = vld [vmem:[%s5254 + $0x94] sm:$0xf]
        %v7030 = vld [vmem:[%s5254 + $0x98] sm:$0x1]
        %v7031 = vld [vmem:[%s5254 + $0x9c] sm:$0xf]
        %v7032 = vld [vmem:[%s5254 + $0xa0] sm:$0xf]
        %v7033 = vld [vmem:[%s5254 + $0xa4] sm:$0x1]
        %v7034 = vld [vmem:[%s5254 + $0xa8] sm:$0xf]
        %v7035 = vld [vmem:[%s5254 + $0xac] sm:$0xf]
        %v7036 = vld [vmem:[%s5254 + $0xb0] sm:$0x1]
        %v7037 = vld [vmem:[%s5254 + $0xb4] sm:$0xf]
        %v7038 = vld [vmem:[%s5254 + $0xb8] sm:$0xf]
        %v7039 = vld [vmem:[%s5254 + $0xbc] sm:$0x1]
        %v7041 = vshrl.u32 %v6992, 16
        %v7043 = vrot.slane %v7041, 4
        %v7044 = vshll.u32 %v6992, 16
        %v7046 = vrot.slane %v7044, 5
        %v7047 = vor.u32 %v7043, %v7046
        %v7048 = vrot.slane %v7047, 4
        %v7050 = vshll.u32 %v6993, 16
        %v7052 = vrot.slane %v7050, 5
        %v7053 = vsel %vm549, %v7048, %v7052
        %v7054 = vshrl.u32 %v6993, 16
        %v7056 = vrot.slane %v7054, 4
        %v7057 = vor.u32 %v7056, %v7052
        %v7058 = vrot.slane %v7057, 4
        %v7060 = vshll.u32 %v6994, 16
        %v7062 = vrot.slane %v7060, 5
        %v7063 = vsel %vm549, %v7058, %v7062
        %v7065 = vshrl.u32 %v6995, 16
        %v7067 = vrot.slane %v7065, 4
        %v7068 = vshll.u32 %v6995, 16
        %v7070 = vrot.slane %v7068, 5
        %v7071 = vor.u32 %v7067, %v7070
        %v7072 = vrot.slane %v7071, 4
        %v7074 = vshll.u32 %v6996, 16
        %v7076 = vrot.slane %v7074, 5
        %v7077 = vsel %vm549, %v7072, %v7076
        %v7078 = vshrl.u32 %v6996, 16
        %v7080 = vrot.slane %v7078, 4
        %v7081 = vor.u32 %v7080, %v7076
        %v7082 = vrot.slane %v7081, 4
        %v7084 = vshll.u32 %v6997, 16
        %v7086 = vrot.slane %v7084, 5
        %v7087 = vsel %vm549, %v7082, %v7086
        %v7089 = vshrl.u32 %v6998, 16
        %v7091 = vrot.slane %v7089, 4
        %v7092 = vshll.u32 %v6998, 16
        %v7094 = vrot.slane %v7092, 5
        %v7095 = vor.u32 %v7091, %v7094
        %v7096 = vrot.slane %v7095, 4
        %v7098 = vshll.u32 %v6999, 16
        %v7100 = vrot.slane %v7098, 5
        %v7101 = vsel %vm549, %v7096, %v7100
        %v7102 = vshrl.u32 %v6999, 16
        %v7104 = vrot.slane %v7102, 4
        %v7105 = vor.u32 %v7104, %v7100
        %v7106 = vrot.slane %v7105, 4
        %v7108 = vshll.u32 %v7000, 16
        %v7110 = vrot.slane %v7108, 5
        %v7111 = vsel %vm549, %v7106, %v7110
        %v7113 = vshrl.u32 %v7001, 16
        %v7115 = vrot.slane %v7113, 4
        %v7116 = vshll.u32 %v7001, 16
        %v7118 = vrot.slane %v7116, 5
        %v7119 = vor.u32 %v7115, %v7118
        %v7120 = vrot.slane %v7119, 4
        %v7122 = vshll.u32 %v7002, 16
        %v7124 = vrot.slane %v7122, 5
        %v7125 = vsel %vm549, %v7120, %v7124
        %v7126 = vshrl.u32 %v7002, 16
        %v7128 = vrot.slane %v7126, 4
        %v7129 = vor.u32 %v7128, %v7124
        %v7130 = vrot.slane %v7129, 4
        %v7132 = vshll.u32 %v7003, 16
        %v7134 = vrot.slane %v7132, 5
        %v7135 = vsel %vm549, %v7130, %v7134
        %v7137 = vshrl.u32 %v7004, 16
        %v7139 = vrot.slane %v7137, 4
        %v7140 = vshll.u32 %v7004, 16
        %v7142 = vrot.slane %v7140, 5
        %v7143 = vor.u32 %v7139, %v7142
        %v7144 = vrot.slane %v7143, 4
        %v7146 = vshll.u32 %v7005, 16
        %v7148 = vrot.slane %v7146, 5
        %v7149 = vsel %vm549, %v7144, %v7148
        %v7150 = vshrl.u32 %v7005, 16
        %v7152 = vrot.slane %v7150, 4
        %v7153 = vor.u32 %v7152, %v7148
        %v7154 = vrot.slane %v7153, 4
        %v7156 = vshll.u32 %v7006, 16
        %v7158 = vrot.slane %v7156, 5
        %v7159 = vsel %vm549, %v7154, %v7158
        %v7161 = vshrl.u32 %v7007, 16
        %v7163 = vrot.slane %v7161, 4
        %v7164 = vshll.u32 %v7007, 16
        %v7166 = vrot.slane %v7164, 5
        %v7167 = vor.u32 %v7163, %v7166
        %v7168 = vrot.slane %v7167, 4
        %v7170 = vshll.u32 %v7008, 16
        %v7172 = vrot.slane %v7170, 5
        %v7173 = vsel %vm549, %v7168, %v7172
        %v7174 = vshrl.u32 %v7008, 16
        %v7176 = vrot.slane %v7174, 4
        %v7177 = vor.u32 %v7176, %v7172
        %v7178 = vrot.slane %v7177, 4
        %v7180 = vshll.u32 %v7009, 16
        %v7182 = vrot.slane %v7180, 5
        %v7183 = vsel %vm549, %v7178, %v7182
        %v7185 = vshrl.u32 %v7010, 16
        %v7187 = vrot.slane %v7185, 4
        %v7188 = vshll.u32 %v7010, 16
        %v7190 = vrot.slane %v7188, 5
        %v7191 = vor.u32 %v7187, %v7190
        %v7192 = vrot.slane %v7191, 4
        %v7194 = vshll.u32 %v7011, 16
        %v7196 = vrot.slane %v7194, 5
        %v7197 = vsel %vm549, %v7192, %v7196
        %v7198 = vshrl.u32 %v7011, 16
        %v7200 = vrot.slane %v7198, 4
        %v7201 = vor.u32 %v7200, %v7196
        %v7202 = vrot.slane %v7201, 4
        %v7204 = vshll.u32 %v7012, 16
        %v7206 = vrot.slane %v7204, 5
        %v7207 = vsel %vm549, %v7202, %v7206
        %v7209 = vshrl.u32 %v7013, 16
        %v7211 = vrot.slane %v7209, 4
        %v7212 = vshll.u32 %v7013, 16
        %v7214 = vrot.slane %v7212, 5
        %v7215 = vor.u32 %v7211, %v7214
        %v7216 = vrot.slane %v7215, 4
        %v7218 = vshll.u32 %v7014, 16
        %v7220 = vrot.slane %v7218, 5
        %v7221 = vsel %vm549, %v7216, %v7220
        %v7222 = vshrl.u32 %v7014, 16
        %v7224 = vrot.slane %v7222, 4
        %v7225 = vor.u32 %v7224, %v7220
        %v7226 = vrot.slane %v7225, 4
        %v7228 = vshll.u32 %v7015, 16
        %v7230 = vrot.slane %v7228, 5
        %v7231 = vsel %vm549, %v7226, %v7230
        %v7233 = vshrl.u32 %v7016, 16
        %v7235 = vrot.slane %v7233, 4
        %v7236 = vshll.u32 %v7016, 16
        %v7238 = vrot.slane %v7236, 5
        %v7239 = vor.u32 %v7235, %v7238
        %v7240 = vrot.slane %v7239, 4
        %v7242 = vshll.u32 %v7017, 16
        %v7244 = vrot.slane %v7242, 5
        %v7245 = vsel %vm549, %v7240, %v7244
        %v7246 = vshrl.u32 %v7017, 16
        %v7248 = vrot.slane %v7246, 4
        %v7249 = vor.u32 %v7248, %v7244
        %v7250 = vrot.slane %v7249, 4
        %v7252 = vshll.u32 %v7018, 16
        %v7254 = vrot.slane %v7252, 5
        %v7255 = vsel %vm549, %v7250, %v7254
        %v7257 = vshrl.u32 %v7019, 16
        %v7259 = vrot.slane %v7257, 4
        %v7260 = vshll.u32 %v7019, 16
        %v7262 = vrot.slane %v7260, 5
        %v7263 = vor.u32 %v7259, %v7262
        %v7264 = vrot.slane %v7263, 4
        %v7266 = vshll.u32 %v7020, 16
        %v7268 = vrot.slane %v7266, 5
        %v7269 = vsel %vm549, %v7264, %v7268
        %v7270 = vshrl.u32 %v7020, 16
        %v7272 = vrot.slane %v7270, 4
        %v7273 = vor.u32 %v7272, %v7268
        %v7274 = vrot.slane %v7273, 4
        %v7276 = vshll.u32 %v7021, 16
        %v7278 = vrot.slane %v7276, 5
        %v7279 = vsel %vm549, %v7274, %v7278
        %v7281 = vshrl.u32 %v7022, 16
        %v7283 = vrot.slane %v7281, 4
        %v7284 = vshll.u32 %v7022, 16
        %v7286 = vrot.slane %v7284, 5
        %v7287 = vor.u32 %v7283, %v7286
        %v7288 = vrot.slane %v7287, 4
        %v7290 = vshll.u32 %v7023, 16
        %v7292 = vrot.slane %v7290, 5
        %v7293 = vsel %vm549, %v7288, %v7292
        %v7294 = vshrl.u32 %v7023, 16
        %v7296 = vrot.slane %v7294, 4
        %v7297 = vor.u32 %v7296, %v7292
        %v7298 = vrot.slane %v7297, 4
        %v7300 = vshll.u32 %v7024, 16
        %v7302 = vrot.slane %v7300, 5
        %v7303 = vsel %vm549, %v7298, %v7302
        %v7305 = vshrl.u32 %v7025, 16
        %v7307 = vrot.slane %v7305, 4
        %v7308 = vshll.u32 %v7025, 16
        %v7310 = vrot.slane %v7308, 5
        %v7311 = vor.u32 %v7307, %v7310
        %v7312 = vrot.slane %v7311, 4
        %v7314 = vshll.u32 %v7026, 16
        %v7316 = vrot.slane %v7314, 5
        %v7317 = vsel %vm549, %v7312, %v7316
        %v7318 = vshrl.u32 %v7026, 16
        %v7320 = vrot.slane %v7318, 4
        %v7321 = vor.u32 %v7320, %v7316
        %v7322 = vrot.slane %v7321, 4
        %v7324 = vshll.u32 %v7027, 16
        %v7326 = vrot.slane %v7324, 5
        %v7327 = vsel %vm549, %v7322, %v7326
        %v7329 = vshrl.u32 %v7028, 16
        %v7331 = vrot.slane %v7329, 4
        %v7332 = vshll.u32 %v7028, 16
        %v7334 = vrot.slane %v7332, 5
        %v7335 = vor.u32 %v7331, %v7334
        %v7336 = vrot.slane %v7335, 4
        %v7338 = vshll.u32 %v7029, 16
        %v7340 = vrot.slane %v7338, 5
        %v7341 = vsel %vm549, %v7336, %v7340
        %v7342 = vshrl.u32 %v7029, 16
        %v7344 = vrot.slane %v7342, 4
        %v7345 = vor.u32 %v7344, %v7340
        %v7346 = vrot.slane %v7345, 4
        %v7348 = vshll.u32 %v7030, 16
        %v7350 = vrot.slane %v7348, 5
        %v7351 = vsel %vm549, %v7346, %v7350
        %v7353 = vshrl.u32 %v7031, 16
        %v7355 = vrot.slane %v7353, 4
        %v7356 = vshll.u32 %v7031, 16
        %v7358 = vrot.slane %v7356, 5
        %v7359 = vor.u32 %v7355, %v7358
        %v7360 = vrot.slane %v7359, 4
        %v7362 = vshll.u32 %v7032, 16
        %v7364 = vrot.slane %v7362, 5
        %v7365 = vsel %vm549, %v7360, %v7364
        %v7366 = vshrl.u32 %v7032, 16
        %v7368 = vrot.slane %v7366, 4
        %v7369 = vor.u32 %v7368, %v7364
        %v7370 = vrot.slane %v7369, 4
        %v7372 = vshll.u32 %v7033, 16
        %v7374 = vrot.slane %v7372, 5
        %v7375 = vsel %vm549, %v7370, %v7374
        %v7377 = vshrl.u32 %v7034, 16
        %v7379 = vrot.slane %v7377, 4
        %v7380 = vshll.u32 %v7034, 16
        %v7382 = vrot.slane %v7380, 5
        %v7383 = vor.u32 %v7379, %v7382
        %v7384 = vrot.slane %v7383, 4
        %v7386 = vshll.u32 %v7035, 16
        %v7388 = vrot.slane %v7386, 5
        %v7389 = vsel %vm549, %v7384, %v7388
        %v7390 = vshrl.u32 %v7035, 16
        %v7392 = vrot.slane %v7390, 4
        %v7393 = vor.u32 %v7392, %v7388
        %v7394 = vrot.slane %v7393, 4
        %v7396 = vshll.u32 %v7036, 16
        %v7398 = vrot.slane %v7396, 5
        %v7399 = vsel %vm549, %v7394, %v7398
        %v7401 = vshrl.u32 %v7037, 16
        %v7403 = vrot.slane %v7401, 4
        %v7404 = vshll.u32 %v7037, 16
        %v7406 = vrot.slane %v7404, 5
        %v7407 = vor.u32 %v7403, %v7406
        %v7408 = vrot.slane %v7407, 4
        %v7410 = vshll.u32 %v7038, 16
        %v7412 = vrot.slane %v7410, 5
        %v7413 = vsel %vm549, %v7408, %v7412
        %v7414 = vshrl.u32 %v7038, 16
        %v7416 = vrot.slane %v7414, 4
        %v7417 = vor.u32 %v7416, %v7412
        %v7418 = vrot.slane %v7417, 4
        %v7420 = vshll.u32 %v7039, 16
        %v7422 = vrot.slane %v7420, 5
        %v7423 = vsel %vm549, %v7418, %v7422
        %s7424 = scalar_lea.vmem [#allocation9], 256
        %v7425 = vld [vmem:[%s7424] sm:$0xf]
        %v7426 = vld [vmem:[%s7424 + $0x4] sm:$0xf]
        %v7427 = vld [vmem:[%s7424 + $0x8] sm:$0xf]
        %v7428 = vld [vmem:[%s7424 + $0xc] sm:$0xf]
        %v7429 = vld [vmem:[%s7424 + $0x10] sm:$0xf]
        %v7430 = vld [vmem:[%s7424 + $0x14] sm:$0xf]
        %v7431 = vld [vmem:[%s7424 + $0x18] sm:$0xf]
        %v7432 = vld [vmem:[%s7424 + $0x1c] sm:$0xf]
        %v7433 = vld [vmem:[%s7424 + $0x20] sm:$0xf]
        %v7434 = vld [vmem:[%s7424 + $0x24] sm:$0xf]
        %v7435 = vld [vmem:[%s7424 + $0x28] sm:$0xf]
        %v7436 = vld [vmem:[%s7424 + $0x2c] sm:$0xf]
        %v7437 = vld [vmem:[%s7424 + $0x30] sm:$0xf]
        %v7438 = vld [vmem:[%s7424 + $0x34] sm:$0xf]
        %v7439 = vld [vmem:[%s7424 + $0x38] sm:$0xf]
        %v7440 = vld [vmem:[%s7424 + $0x3c] sm:$0xf]
        %v7441 = vunpack.c.l.b16 %v7053
        %v7442 = vunpack.c.l.b16 %v7063
        %v7443 = vunpack.c.l.b16 %v7077
        %v7444 = vunpack.c.l.b16 %v7087
        %v7445 = vunpack.c.l.b16 %v7101
        %v7446 = vunpack.c.l.b16 %v7111
        %v7447 = vunpack.c.l.b16 %v7125
        %v7448 = vunpack.c.l.b16 %v7135
        %v7449 = vunpack.c.l.b16 %v7149
        %v7450 = vunpack.c.l.b16 %v7159
        %v7451 = vunpack.c.l.b16 %v7173
        %v7452 = vunpack.c.l.b16 %v7183
        %v7453 = vunpack.c.l.b16 %v7197
        %v7454 = vunpack.c.l.b16 %v7207
        %v7455 = vunpack.c.l.b16 %v7221
        %v7456 = vunpack.c.l.b16 %v7231
        %v7457 = vunpack.c.l.b16 %v7245
        %v7458 = vunpack.c.l.b16 %v7255
        %v7459 = vunpack.c.l.b16 %v7269
        %v7460 = vunpack.c.l.b16 %v7279
        %v7461 = vunpack.c.l.b16 %v7293
        %v7462 = vunpack.c.l.b16 %v7303
        %v7463 = vunpack.c.l.b16 %v7317
        %v7464 = vunpack.c.l.b16 %v7327
        %v7465 = vunpack.c.l.b16 %v7341
        %v7466 = vunpack.c.l.b16 %v7351
        %v7467 = vunpack.c.l.b16 %v7365
        %v7468 = vunpack.c.l.b16 %v7375
        %v7469 = vunpack.c.l.b16 %v7389
        %v7470 = vunpack.c.l.b16 %v7399
        %v7471 = vunpack.c.l.b16 %v7413
        %v7472 = vunpack.c.l.b16 %v7423
        %v7473 = vpack.c.b16 %v7442, %v7441
        %v7474 = vpack.c.b16 %v7444, %v7443
        %v7475 = vpack.c.b16 %v7446, %v7445
        %v7476 = vpack.c.b16 %v7448, %v7447
        %v7477 = vpack.c.b16 %v7450, %v7449
        %v7478 = vpack.c.b16 %v7452, %v7451
        %v7479 = vpack.c.b16 %v7454, %v7453
        %v7480 = vpack.c.b16 %v7456, %v7455
        %v7481 = vpack.c.b16 %v7458, %v7457
        %v7482 = vpack.c.b16 %v7460, %v7459
        %v7483 = vpack.c.b16 %v7462, %v7461
        %v7484 = vpack.c.b16 %v7464, %v7463
        %v7485 = vpack.c.b16 %v7466, %v7465
        %v7486 = vpack.c.b16 %v7468, %v7467
        %v7487 = vpack.c.b16 %v7470, %v7469
        %v7488 = vpack.c.b16 %v7472, %v7471
        %v7521 = vunpack.c.l.b16 %v7425
        %v7522 = vunpack.c.l.b16 %v7426
        %v7523 = vunpack.c.l.b16 %v7427
        %v7524 = vunpack.c.l.b16 %v7428
        %v7525 = vunpack.c.l.b16 %v7429
        %v7526 = vunpack.c.l.b16 %v7430
        %v7527 = vunpack.c.l.b16 %v7431
        %v7528 = vunpack.c.l.b16 %v7432
        %v7529 = vunpack.c.l.b16 %v7433
        %v7530 = vunpack.c.l.b16 %v7434
        %v7531 = vunpack.c.l.b16 %v7435
        %v7532 = vunpack.c.l.b16 %v7436
        %v7533 = vunpack.c.l.b16 %v7437
        %v7534 = vunpack.c.l.b16 %v7438
        %v7535 = vunpack.c.l.b16 %v7439
        %v7536 = vunpack.c.l.b16 %v7440
        %v7537 = vpack.c.b16 %v7522, %v7521
        %v7538 = vpack.c.b16 %v7524, %v7523
        %v7539 = vpack.c.b16 %v7526, %v7525
        %v7540 = vpack.c.b16 %v7528, %v7527
        %v7541 = vpack.c.b16 %v7530, %v7529
        %v7542 = vpack.c.b16 %v7532, %v7531
        %v7543 = vpack.c.b16 %v7534, %v7533
        %v7544 = vpack.c.b16 %v7536, %v7535
        %7553 = vmatpush.bf16.msra.mxu0 %v7544
        %7554 = vmatpush.bf16.msra.mxu0 %v7543
        %7555 = vmatpush.bf16.msra.mxu0 %v7542
        %7556 = vmatpush.bf16.msra.mxu0 %v7541
        %7557 = vmatpush.bf16.msra.mxu0 %v7540
        %7558 = vmatpush.bf16.msra.mxu0 %v7539
        %7559 = vmatpush.bf16.msra.mxu0 %v7538
        %7560 = vmatpush.bf16.msra.mxu0 %v7537
        %7561 = vmatmul.bf16.gmra.mxu0 %v7473
        %v7562 = vpop.f32.mrf.mxu0
        %v7563 = vadd.f32 0.0, %v7562
        %v7564 = vpop.f32.mrf.mxu0
        %v7565 = vadd.f32 0.0, %v7564
        %7566 = vmatmul.bf16.gmra.mxu0 %v7474
        %v7567 = vpop.f32.mrf.mxu0
        %v7568 = vadd.f32 0.0, %v7567
        %v7569 = vpop.f32.mrf.mxu0
        %v7570 = vadd.f32 0.0, %v7569
        %7571 = vmatmul.bf16.gmra.mxu0 %v7475
        %v7572 = vpop.f32.mrf.mxu0
        %v7573 = vadd.f32 0.0, %v7572
        %v7574 = vpop.f32.mrf.mxu0
        %v7575 = vadd.f32 0.0, %v7574
        %7576 = vmatmul.bf16.gmra.mxu0 %v7476
        %v7577 = vpop.f32.mrf.mxu0
        %v7578 = vadd.f32 0.0, %v7577
        %v7579 = vpop.f32.mrf.mxu0
        %v7580 = vadd.f32 0.0, %v7579
        %7581 = vmatmul.bf16.gmra.mxu0 %v7477
        %v7582 = vpop.f32.mrf.mxu0
        %v7583 = vadd.f32 0.0, %v7582
        %v7584 = vpop.f32.mrf.mxu0
        %v7585 = vadd.f32 0.0, %v7584
        %7586 = vmatmul.bf16.gmra.mxu0 %v7478
        %v7587 = vpop.f32.mrf.mxu0
        %v7588 = vadd.f32 0.0, %v7587
        %v7589 = vpop.f32.mrf.mxu0
        %v7590 = vadd.f32 0.0, %v7589
        %7591 = vmatmul.bf16.gmra.mxu0 %v7479
        %v7592 = vpop.f32.mrf.mxu0
        %v7593 = vadd.f32 0.0, %v7592
        %v7594 = vpop.f32.mrf.mxu0
        %v7595 = vadd.f32 0.0, %v7594
        %7596 = vmatmul.bf16.gmra.mxu0 %v7480
        %v7597 = vpop.f32.mrf.mxu0
        %v7598 = vadd.f32 0.0, %v7597
        %v7599 = vpop.f32.mrf.mxu0
        %v7600 = vadd.f32 0.0, %v7599
        %7601 = vmatmul.bf16.gmra.mxu0 %v7481
        %v7602 = vpop.f32.mrf.mxu0
        %v7603 = vadd.f32 0.0, %v7602
        %v7604 = vpop.f32.mrf.mxu0
        %v7605 = vadd.f32 0.0, %v7604
        %7606 = vmatmul.bf16.gmra.mxu0 %v7482
        %v7607 = vpop.f32.mrf.mxu0
        %v7608 = vadd.f32 0.0, %v7607
        %v7609 = vpop.f32.mrf.mxu0
        %v7610 = vadd.f32 0.0, %v7609
        %7611 = vmatmul.bf16.gmra.mxu0 %v7483
        %v7612 = vpop.f32.mrf.mxu0
        %v7613 = vadd.f32 0.0, %v7612
        %v7614 = vpop.f32.mrf.mxu0
        %v7615 = vadd.f32 0.0, %v7614
        %7616 = vmatmul.bf16.gmra.mxu0 %v7484
        %v7617 = vpop.f32.mrf.mxu0
        %v7618 = vadd.f32 0.0, %v7617
        %v7619 = vpop.f32.mrf.mxu0
        %v7620 = vadd.f32 0.0, %v7619
        %7621 = vmatmul.bf16.gmra.mxu0 %v7485
        %v7622 = vpop.f32.mrf.mxu0
        %v7623 = vadd.f32 0.0, %v7622
        %v7624 = vpop.f32.mrf.mxu0
        %v7625 = vadd.f32 0.0, %v7624
        %7626 = vmatmul.bf16.gmra.mxu0 %v7486
        %v7627 = vpop.f32.mrf.mxu0
        %v7628 = vadd.f32 0.0, %v7627
        %v7629 = vpop.f32.mrf.mxu0
        %v7630 = vadd.f32 0.0, %v7629
        %7631 = vmatmul.bf16.gmra.mxu0 %v7487
        %v7632 = vpop.f32.mrf.mxu0
        %v7633 = vadd.f32 0.0, %v7632
        %v7634 = vpop.f32.mrf.mxu0
        %v7635 = vadd.f32 0.0, %v7634
        %7636 = vmatmul.bf16.gmra.mxu0 %v7488
        %v7637 = vpop.f32.mrf.mxu0
        %v7638 = vadd.f32 0.0, %v7637
        %v7639 = vpop.f32.mrf.mxu0
        %v7640 = vadd.f32 0.0, %v7639
        %7641 = vdwg.mxu0
        %v7642 = vadd.f32 %v6960, %v7563
        %v7643 = vadd.f32 %v6961, %v7565
        %v7644 = vadd.f32 %v6962, %v7568
        %v7645 = vadd.f32 %v6963, %v7570
        %v7646 = vadd.f32 %v6964, %v7573
        %v7647 = vadd.f32 %v6965, %v7575
        %v7648 = vadd.f32 %v6966, %v7578
        %v7649 = vadd.f32 %v6967, %v7580
        %v7650 = vadd.f32 %v6968, %v7583
        %v7651 = vadd.f32 %v6969, %v7585
        %v7652 = vadd.f32 %v6970, %v7588
        %v7653 = vadd.f32 %v6971, %v7590
        %v7654 = vadd.f32 %v6972, %v7593
        %v7655 = vadd.f32 %v6973, %v7595
        %v7656 = vadd.f32 %v6974, %v7598
        %v7657 = vadd.f32 %v6975, %v7600
        %v7658 = vadd.f32 %v6976, %v7603
        %v7659 = vadd.f32 %v6977, %v7605
        %v7660 = vadd.f32 %v6978, %v7608
        %v7661 = vadd.f32 %v6979, %v7610
        %v7662 = vadd.f32 %v6980, %v7613
        %v7663 = vadd.f32 %v6981, %v7615
        %v7664 = vadd.f32 %v6982, %v7618
        %v7665 = vadd.f32 %v6983, %v7620
        %v7666 = vadd.f32 %v6984, %v7623
        %v7667 = vadd.f32 %v6985, %v7625
        %v7668 = vadd.f32 %v6986, %v7628
        %v7669 = vadd.f32 %v6987, %v7630
        %v7670 = vadd.f32 %v6988, %v7633
        %v7671 = vadd.f32 %v6989, %v7635
        %v7672 = vadd.f32 %v6990, %v7638
        %v7673 = vadd.f32 %v6991, %v7640
        %v7674 = vld [vmem:[%s5254] sm:$0xe]
        %v7675 = vld [vmem:[%s5254 + $0xc] sm:$0xe]
        %v7676 = vld [vmem:[%s5254 + $0x18] sm:$0xe]
        %v7677 = vld [vmem:[%s5254 + $0x24] sm:$0xe]
        %v7678 = vld [vmem:[%s5254 + $0x30] sm:$0xe]
        %v7679 = vld [vmem:[%s5254 + $0x3c] sm:$0xe]
        %v7680 = vld [vmem:[%s5254 + $0x48] sm:$0xe]
        %v7681 = vld [vmem:[%s5254 + $0x54] sm:$0xe]
        %v7682 = vld [vmem:[%s5254 + $0x60] sm:$0xe]
        %v7683 = vld [vmem:[%s5254 + $0x6c] sm:$0xe]
        %v7684 = vld [vmem:[%s5254 + $0x78] sm:$0xe]
        %v7685 = vld [vmem:[%s5254 + $0x84] sm:$0xe]
        %v7686 = vld [vmem:[%s5254 + $0x90] sm:$0xe]
        %v7687 = vld [vmem:[%s5254 + $0x9c] sm:$0xe]
        %v7688 = vld [vmem:[%s5254 + $0xa8] sm:$0xe]
        %v7689 = vld [vmem:[%s5254 + $0xb4] sm:$0xe]
        %v7738 = vrot.slane %v7674, 5
        %v7739 = vrot.slane %v7738, 4
        %v7740 = vrot.slane %v6993, 5
        %v7741 = vsel %vm1435, %v7739, %v7740
        %v7742 = vrot.slane %v7740, 4
        %v7743 = vrot.slane %v6994, 5
        %v7744 = vsel %vm1435, %v7742, %v7743
        %v7745 = vrot.slane %v7675, 5
        %v7746 = vrot.slane %v7745, 4
        %v7747 = vrot.slane %v6996, 5
        %v7748 = vsel %vm1435, %v7746, %v7747
        %v7749 = vrot.slane %v7747, 4
        %v7750 = vrot.slane %v6997, 5
        %v7751 = vsel %vm1435, %v7749, %v7750
        %v7752 = vrot.slane %v7676, 5
        %v7753 = vrot.slane %v7752, 4
        %v7754 = vrot.slane %v6999, 5
        %v7755 = vsel %vm1435, %v7753, %v7754
        %v7756 = vrot.slane %v7754, 4
        %v7757 = vrot.slane %v7000, 5
        %v7758 = vsel %vm1435, %v7756, %v7757
        %v7759 = vrot.slane %v7677, 5
        %v7760 = vrot.slane %v7759, 4
        %v7761 = vrot.slane %v7002, 5
        %v7762 = vsel %vm1435, %v7760, %v7761
        %v7763 = vrot.slane %v7761, 4
        %v7764 = vrot.slane %v7003, 5
        %v7765 = vsel %vm1435, %v7763, %v7764
        %v7766 = vrot.slane %v7678, 5
        %v7767 = vrot.slane %v7766, 4
        %v7768 = vrot.slane %v7005, 5
        %v7769 = vsel %vm1435, %v7767, %v7768
        %v7770 = vrot.slane %v7768, 4
        %v7771 = vrot.slane %v7006, 5
        %v7772 = vsel %vm1435, %v7770, %v7771
        %v7773 = vrot.slane %v7679, 5
        %v7774 = vrot.slane %v7773, 4
        %v7775 = vrot.slane %v7008, 5
        %v7776 = vsel %vm1435, %v7774, %v7775
        %v7777 = vrot.slane %v7775, 4
        %v7778 = vrot.slane %v7009, 5
        %v7779 = vsel %vm1435, %v7777, %v7778
        %v7780 = vrot.slane %v7680, 5
        %v7781 = vrot.slane %v7780, 4
        %v7782 = vrot.slane %v7011, 5
        %v7783 = vsel %vm1435, %v7781, %v7782
        %v7784 = vrot.slane %v7782, 4
        %v7785 = vrot.slane %v7012, 5
        %v7786 = vsel %vm1435, %v7784, %v7785
        %v7787 = vrot.slane %v7681, 5
        %v7788 = vrot.slane %v7787, 4
        %v7789 = vrot.slane %v7014, 5
        %v7790 = vsel %vm1435, %v7788, %v7789
        %v7791 = vrot.slane %v7789, 4
        %v7792 = vrot.slane %v7015, 5
        %v7793 = vsel %vm1435, %v7791, %v7792
        %v7794 = vrot.slane %v7682, 5
        %v7795 = vrot.slane %v7794, 4
        %v7796 = vrot.slane %v7017, 5
        %v7797 = vsel %vm1435, %v7795, %v7796
        %v7798 = vrot.slane %v7796, 4
        %v7799 = vrot.slane %v7018, 5
        %v7800 = vsel %vm1435, %v7798, %v7799
        %v7801 = vrot.slane %v7683, 5
        %v7802 = vrot.slane %v7801, 4
        %v7803 = vrot.slane %v7020, 5
        %v7804 = vsel %vm1435, %v7802, %v7803
        %v7805 = vrot.slane %v7803, 4
        %v7806 = vrot.slane %v7021, 5
        %v7807 = vsel %vm1435, %v7805, %v7806
        %v7808 = vrot.slane %v7684, 5
        %v7809 = vrot.slane %v7808, 4
        %v7810 = vrot.slane %v7023, 5
        %v7811 = vsel %vm1435, %v7809, %v7810
        %v7812 = vrot.slane %v7810, 4
        %v7813 = vrot.slane %v7024, 5
        %v7814 = vsel %vm1435, %v7812, %v7813
        %v7815 = vrot.slane %v7685, 5
        %v7816 = vrot.slane %v7815, 4
        %v7817 = vrot.slane %v7026, 5
        %v7818 = vsel %vm1435, %v7816, %v7817
        %v7819 = vrot.slane %v7817, 4
        %v7820 = vrot.slane %v7027, 5
        %v7821 = vsel %vm1435, %v7819, %v7820
        %v7822 = vrot.slane %v7686, 5
        %v7823 = vrot.slane %v7822, 4
        %v7824 = vrot.slane %v7029, 5
        %v7825 = vsel %vm1435, %v7823, %v7824
        %v7826 = vrot.slane %v7824, 4
        %v7827 = vrot.slane %v7030, 5
        %v7828 = vsel %vm1435, %v7826, %v7827
        %v7829 = vrot.slane %v7687, 5
        %v7830 = vrot.slane %v7829, 4
        %v7831 = vrot.slane %v7032, 5
        %v7832 = vsel %vm1435, %v7830, %v7831
        %v7833 = vrot.slane %v7831, 4
        %v7834 = vrot.slane %v7033, 5
        %v7835 = vsel %vm1435, %v7833, %v7834
        %v7836 = vrot.slane %v7688, 5
        %v7837 = vrot.slane %v7836, 4
        %v7838 = vrot.slane %v7035, 5
        %v7839 = vsel %vm1435, %v7837, %v7838
        %v7840 = vrot.slane %v7838, 4
        %v7841 = vrot.slane %v7036, 5
        %v7842 = vsel %vm1435, %v7840, %v7841
        %v7843 = vrot.slane %v7689, 5
        %v7844 = vrot.slane %v7843, 4
        %v7845 = vrot.slane %v7038, 5
        %v7846 = vsel %vm1435, %v7844, %v7845
        %v7847 = vrot.slane %v7845, 4
        %v7848 = vrot.slane %v7039, 5
        %v7849 = vsel %vm1435, %v7847, %v7848
        %s7850 = scalar_lea.vmem [#allocation9], 320
        %v7851 = vld [vmem:[%s7850] sm:$0xf]
        %v7852 = vld [vmem:[%s7850 + $0x4] sm:$0xf]
        %v7853 = vld [vmem:[%s7850 + $0x8] sm:$0xf]
        %v7854 = vld [vmem:[%s7850 + $0xc] sm:$0xf]
        %v7855 = vld [vmem:[%s7850 + $0x10] sm:$0xf]
        %v7856 = vld [vmem:[%s7850 + $0x14] sm:$0xf]
        %v7857 = vld [vmem:[%s7850 + $0x18] sm:$0xf]
        %v7858 = vld [vmem:[%s7850 + $0x1c] sm:$0xf]
        %v7859 = vld [vmem:[%s7850 + $0x20] sm:$0xf]
        %v7860 = vld [vmem:[%s7850 + $0x24] sm:$0xf]
        %v7861 = vld [vmem:[%s7850 + $0x28] sm:$0xf]
        %v7862 = vld [vmem:[%s7850 + $0x2c] sm:$0xf]
        %v7863 = vld [vmem:[%s7850 + $0x30] sm:$0xf]
        %v7864 = vld [vmem:[%s7850 + $0x34] sm:$0xf]
        %v7865 = vld [vmem:[%s7850 + $0x38] sm:$0xf]
        %v7866 = vld [vmem:[%s7850 + $0x3c] sm:$0xf]
        %v7867 = vunpack.c.l.b16 %v7741
        %v7868 = vunpack.c.l.b16 %v7744
        %v7869 = vunpack.c.l.b16 %v7748
        %v7870 = vunpack.c.l.b16 %v7751
        %v7871 = vunpack.c.l.b16 %v7755
        %v7872 = vunpack.c.l.b16 %v7758
        %v7873 = vunpack.c.l.b16 %v7762
        %v7874 = vunpack.c.l.b16 %v7765
        %v7875 = vunpack.c.l.b16 %v7769
        %v7876 = vunpack.c.l.b16 %v7772
        %v7877 = vunpack.c.l.b16 %v7776
        %v7878 = vunpack.c.l.b16 %v7779
        %v7879 = vunpack.c.l.b16 %v7783
        %v7880 = vunpack.c.l.b16 %v7786
        %v7881 = vunpack.c.l.b16 %v7790
        %v7882 = vunpack.c.l.b16 %v7793
        %v7883 = vunpack.c.l.b16 %v7797
        %v7884 = vunpack.c.l.b16 %v7800
        %v7885 = vunpack.c.l.b16 %v7804
        %v7886 = vunpack.c.l.b16 %v7807
        %v7887 = vunpack.c.l.b16 %v7811
        %v7888 = vunpack.c.l.b16 %v7814
        %v7889 = vunpack.c.l.b16 %v7818
        %v7890 = vunpack.c.l.b16 %v7821
        %v7891 = vunpack.c.l.b16 %v7825
        %v7892 = vunpack.c.l.b16 %v7828
        %v7893 = vunpack.c.l.b16 %v7832
        %v7894 = vunpack.c.l.b16 %v7835
        %v7895 = vunpack.c.l.b16 %v7839
        %v7896 = vunpack.c.l.b16 %v7842
        %v7897 = vunpack.c.l.b16 %v7846
        %v7898 = vunpack.c.l.b16 %v7849
        %v7899 = vpack.c.b16 %v7868, %v7867
        %v7900 = vpack.c.b16 %v7870, %v7869
        %v7901 = vpack.c.b16 %v7872, %v7871
        %v7902 = vpack.c.b16 %v7874, %v7873
        %v7903 = vpack.c.b16 %v7876, %v7875
        %v7904 = vpack.c.b16 %v7878, %v7877
        %v7905 = vpack.c.b16 %v7880, %v7879
        %v7906 = vpack.c.b16 %v7882, %v7881
        %v7907 = vpack.c.b16 %v7884, %v7883
        %v7908 = vpack.c.b16 %v7886, %v7885
        %v7909 = vpack.c.b16 %v7888, %v7887
        %v7910 = vpack.c.b16 %v7890, %v7889
        %v7911 = vpack.c.b16 %v7892, %v7891
        %v7912 = vpack.c.b16 %v7894, %v7893
        %v7913 = vpack.c.b16 %v7896, %v7895
        %v7914 = vpack.c.b16 %v7898, %v7897
        %v7947 = vunpack.c.l.b16 %v7851
        %v7948 = vunpack.c.l.b16 %v7852
        %v7949 = vunpack.c.l.b16 %v7853
        %v7950 = vunpack.c.l.b16 %v7854
        %v7951 = vunpack.c.l.b16 %v7855
        %v7952 = vunpack.c.l.b16 %v7856
        %v7953 = vunpack.c.l.b16 %v7857
        %v7954 = vunpack.c.l.b16 %v7858
        %v7955 = vunpack.c.l.b16 %v7859
        %v7956 = vunpack.c.l.b16 %v7860
        %v7957 = vunpack.c.l.b16 %v7861
        %v7958 = vunpack.c.l.b16 %v7862
        %v7959 = vunpack.c.l.b16 %v7863
        %v7960 = vunpack.c.l.b16 %v7864
        %v7961 = vunpack.c.l.b16 %v7865
        %v7962 = vunpack.c.l.b16 %v7866
        %v7963 = vpack.c.b16 %v7948, %v7947
        %v7964 = vpack.c.b16 %v7950, %v7949
        %v7965 = vpack.c.b16 %v7952, %v7951
        %v7966 = vpack.c.b16 %v7954, %v7953
        %v7967 = vpack.c.b16 %v7956, %v7955
        %v7968 = vpack.c.b16 %v7958, %v7957
        %v7969 = vpack.c.b16 %v7960, %v7959
        %v7970 = vpack.c.b16 %v7962, %v7961
        %7979 = vmatpush.bf16.msra.mxu0 %v7970
        %7980 = vmatpush.bf16.msra.mxu0 %v7969
        %7981 = vmatpush.bf16.msra.mxu0 %v7968
        %7982 = vmatpush.bf16.msra.mxu0 %v7967
        %7983 = vmatpush.bf16.msra.mxu0 %v7966
        %7984 = vmatpush.bf16.msra.mxu0 %v7965
        %7985 = vmatpush.bf16.msra.mxu0 %v7964
        %7986 = vmatpush.bf16.msra.mxu0 %v7963
        %7987 = vmatmul.bf16.gmra.mxu0 %v7899
        %v7988 = vpop.f32.mrf.mxu0
        %v7989 = vadd.f32 0.0, %v7988
        %v7990 = vpop.f32.mrf.mxu0
        %v7991 = vadd.f32 0.0, %v7990
        %7992 = vmatmul.bf16.gmra.mxu0 %v7900
        %v7993 = vpop.f32.mrf.mxu0
        %v7994 = vadd.f32 0.0, %v7993
        %v7995 = vpop.f32.mrf.mxu0
        %v7996 = vadd.f32 0.0, %v7995
        %7997 = vmatmul.bf16.gmra.mxu0 %v7901
        %v7998 = vpop.f32.mrf.mxu0
        %v7999 = vadd.f32 0.0, %v7998
        %v8000 = vpop.f32.mrf.mxu0
        %v8001 = vadd.f32 0.0, %v8000
        %8002 = vmatmul.bf16.gmra.mxu0 %v7902
        %v8003 = vpop.f32.mrf.mxu0
        %v8004 = vadd.f32 0.0, %v8003
        %v8005 = vpop.f32.mrf.mxu0
        %v8006 = vadd.f32 0.0, %v8005
        %8007 = vmatmul.bf16.gmra.mxu0 %v7903
        %v8008 = vpop.f32.mrf.mxu0
        %v8009 = vadd.f32 0.0, %v8008
        %v8010 = vpop.f32.mrf.mxu0
        %v8011 = vadd.f32 0.0, %v8010
        %8012 = vmatmul.bf16.gmra.mxu0 %v7904
        %v8013 = vpop.f32.mrf.mxu0
        %v8014 = vadd.f32 0.0, %v8013
        %v8015 = vpop.f32.mrf.mxu0
        %v8016 = vadd.f32 0.0, %v8015
        %8017 = vmatmul.bf16.gmra.mxu0 %v7905
        %v8018 = vpop.f32.mrf.mxu0
        %v8019 = vadd.f32 0.0, %v8018
        %v8020 = vpop.f32.mrf.mxu0
        %v8021 = vadd.f32 0.0, %v8020
        %8022 = vmatmul.bf16.gmra.mxu0 %v7906
        %v8023 = vpop.f32.mrf.mxu0
        %v8024 = vadd.f32 0.0, %v8023
        %v8025 = vpop.f32.mrf.mxu0
        %v8026 = vadd.f32 0.0, %v8025
        %8027 = vmatmul.bf16.gmra.mxu0 %v7907
        %v8028 = vpop.f32.mrf.mxu0
        %v8029 = vadd.f32 0.0, %v8028
        %v8030 = vpop.f32.mrf.mxu0
        %v8031 = vadd.f32 0.0, %v8030
        %8032 = vmatmul.bf16.gmra.mxu0 %v7908
        %v8033 = vpop.f32.mrf.mxu0
        %v8034 = vadd.f32 0.0, %v8033
        %v8035 = vpop.f32.mrf.mxu0
        %v8036 = vadd.f32 0.0, %v8035
        %8037 = vmatmul.bf16.gmra.mxu0 %v7909
        %v8038 = vpop.f32.mrf.mxu0
        %v8039 = vadd.f32 0.0, %v8038
        %v8040 = vpop.f32.mrf.mxu0
        %v8041 = vadd.f32 0.0, %v8040
        %8042 = vmatmul.bf16.gmra.mxu0 %v7910
        %v8043 = vpop.f32.mrf.mxu0
        %v8044 = vadd.f32 0.0, %v8043
        %v8045 = vpop.f32.mrf.mxu0
        %v8046 = vadd.f32 0.0, %v8045
        %8047 = vmatmul.bf16.gmra.mxu0 %v7911
        %v8048 = vpop.f32.mrf.mxu0
        %v8049 = vadd.f32 0.0, %v8048
        %v8050 = vpop.f32.mrf.mxu0
        %v8051 = vadd.f32 0.0, %v8050
        %8052 = vmatmul.bf16.gmra.mxu0 %v7912
        %v8053 = vpop.f32.mrf.mxu0
        %v8054 = vadd.f32 0.0, %v8053
        %v8055 = vpop.f32.mrf.mxu0
        %v8056 = vadd.f32 0.0, %v8055
        %8057 = vmatmul.bf16.gmra.mxu0 %v7913
        %v8058 = vpop.f32.mrf.mxu0
        %v8059 = vadd.f32 0.0, %v8058
        %v8060 = vpop.f32.mrf.mxu0
        %v8061 = vadd.f32 0.0, %v8060
        %8062 = vmatmul.bf16.gmra.mxu0 %v7914
        %v8063 = vpop.f32.mrf.mxu0
        %v8064 = vadd.f32 0.0, %v8063
        %v8065 = vpop.f32.mrf.mxu0
        %v8066 = vadd.f32 0.0, %v8065
        %8067 = vdwg.mxu0
        %v8068 = vadd.f32 %v7642, %v7989
        %v8069 = vadd.f32 %v7643, %v7991
        %v8070 = vadd.f32 %v7644, %v7994
        %v8071 = vadd.f32 %v7645, %v7996
        %v8072 = vadd.f32 %v7646, %v7999
        %v8073 = vadd.f32 %v7647, %v8001
        %v8074 = vadd.f32 %v7648, %v8004
        %v8075 = vadd.f32 %v7649, %v8006
        %v8076 = vadd.f32 %v7650, %v8009
        %v8077 = vadd.f32 %v7651, %v8011
        %v8078 = vadd.f32 %v7652, %v8014
        %v8079 = vadd.f32 %v7653, %v8016
        %v8080 = vadd.f32 %v7654, %v8019
        %v8081 = vadd.f32 %v7655, %v8021
        %v8082 = vadd.f32 %v7656, %v8024
        %v8083 = vadd.f32 %v7657, %v8026
        %v8084 = vadd.f32 %v7658, %v8029
        %v8085 = vadd.f32 %v7659, %v8031
        %v8086 = vadd.f32 %v7660, %v8034
        %v8087 = vadd.f32 %v7661, %v8036
        %v8088 = vadd.f32 %v7662, %v8039
        %v8089 = vadd.f32 %v7663, %v8041
        %v8090 = vadd.f32 %v7664, %v8044
        %v8091 = vadd.f32 %v7665, %v8046
        %v8092 = vadd.f32 %v7666, %v8049
        %v8093 = vadd.f32 %v7667, %v8051
        %v8094 = vadd.f32 %v7668, %v8054
        %v8095 = vadd.f32 %v7669, %v8056
        %v8096 = vadd.f32 %v7670, %v8059
        %v8097 = vadd.f32 %v7671, %v8061
        %v8098 = vadd.f32 %v7672, %v8064
        %v8099 = vadd.f32 %v7673, %v8066
        %s8100 = scalar_lea.vmem [#allocation2], 24
        %v8101 = vld [vmem:[%s8100] sm:$0xf]
        %v8102 = vld [vmem:[%s8100 + $0x4] sm:$0xf]
        %v8103 = vld [vmem:[%s8100 + $0xc] sm:$0xf]
        %v8104 = vld [vmem:[%s8100 + $0x10] sm:$0xf]
        %v8105 = vld [vmem:[%s8100 + $0x18] sm:$0xf]
        %v8106 = vld [vmem:[%s8100 + $0x1c] sm:$0xf]
        %v8107 = vld [vmem:[%s8100 + $0x24] sm:$0xf]
        %v8108 = vld [vmem:[%s8100 + $0x28] sm:$0xf]
        %v8109 = vld [vmem:[%s8100 + $0x30] sm:$0xf]
        %v8110 = vld [vmem:[%s8100 + $0x34] sm:$0xf]
        %v8111 = vld [vmem:[%s8100 + $0x3c] sm:$0xf]
        %v8112 = vld [vmem:[%s8100 + $0x40] sm:$0xf]
        %v8113 = vld [vmem:[%s8100 + $0x48] sm:$0xf]
        %v8114 = vld [vmem:[%s8100 + $0x4c] sm:$0xf]
        %v8115 = vld [vmem:[%s8100 + $0x54] sm:$0xf]
        %v8116 = vld [vmem:[%s8100 + $0x58] sm:$0xf]
        %v8117 = vld [vmem:[%s8100 + $0x60] sm:$0xf]
        %v8118 = vld [vmem:[%s8100 + $0x64] sm:$0xf]
        %v8119 = vld [vmem:[%s8100 + $0x6c] sm:$0xf]
        %v8120 = vld [vmem:[%s8100 + $0x70] sm:$0xf]
        %v8121 = vld [vmem:[%s8100 + $0x78] sm:$0xf]
        %v8122 = vld [vmem:[%s8100 + $0x7c] sm:$0xf]
        %v8123 = vld [vmem:[%s8100 + $0x84] sm:$0xf]
        %v8124 = vld [vmem:[%s8100 + $0x88] sm:$0xf]
        %v8125 = vld [vmem:[%s8100 + $0x90] sm:$0xf]
        %v8126 = vld [vmem:[%s8100 + $0x94] sm:$0xf]
        %v8127 = vld [vmem:[%s8100 + $0x9c] sm:$0xf]
        %v8128 = vld [vmem:[%s8100 + $0xa0] sm:$0xf]
        %v8129 = vld [vmem:[%s8100 + $0xa8] sm:$0xf]
        %v8130 = vld [vmem:[%s8100 + $0xac] sm:$0xf]
        %v8131 = vld [vmem:[%s8100 + $0xb4] sm:$0xf]
        %v8132 = vld [vmem:[%s8100 + $0xb8] sm:$0xf]
        %s8133 = scalar_lea.vmem [#allocation9], 384
        %v8134 = vld [vmem:[%s8133] sm:$0xf]
        %v8135 = vld [vmem:[%s8133 + $0x4] sm:$0xf]
        %v8136 = vld [vmem:[%s8133 + $0x8] sm:$0xf]
        %v8137 = vld [vmem:[%s8133 + $0xc] sm:$0xf]
        %v8138 = vld [vmem:[%s8133 + $0x10] sm:$0xf]
        %v8139 = vld [vmem:[%s8133 + $0x14] sm:$0xf]
        %v8140 = vld [vmem:[%s8133 + $0x18] sm:$0xf]
        %v8141 = vld [vmem:[%s8133 + $0x1c] sm:$0xf]
        %v8142 = vld [vmem:[%s8133 + $0x20] sm:$0xf]
        %v8143 = vld [vmem:[%s8133 + $0x24] sm:$0xf]
        %v8144 = vld [vmem:[%s8133 + $0x28] sm:$0xf]
        %v8145 = vld [vmem:[%s8133 + $0x2c] sm:$0xf]
        %v8146 = vld [vmem:[%s8133 + $0x30] sm:$0xf]
        %v8147 = vld [vmem:[%s8133 + $0x34] sm:$0xf]
        %v8148 = vld [vmem:[%s8133 + $0x38] sm:$0xf]
        %v8149 = vld [vmem:[%s8133 + $0x3c] sm:$0xf]
        %v8182 = vunpack.c.l.b16 %v8101
        %v8183 = vunpack.c.l.b16 %v8102
        %v8184 = vunpack.c.l.b16 %v8103
        %v8185 = vunpack.c.l.b16 %v8104
        %v8186 = vunpack.c.l.b16 %v8105
        %v8187 = vunpack.c.l.b16 %v8106
        %v8188 = vunpack.c.l.b16 %v8107
        %v8189 = vunpack.c.l.b16 %v8108
        %v8190 = vunpack.c.l.b16 %v8109
        %v8191 = vunpack.c.l.b16 %v8110
        %v8192 = vunpack.c.l.b16 %v8111
        %v8193 = vunpack.c.l.b16 %v8112
        %v8194 = vunpack.c.l.b16 %v8113
        %v8195 = vunpack.c.l.b16 %v8114
        %v8196 = vunpack.c.l.b16 %v8115
        %v8197 = vunpack.c.l.b16 %v8116
        %v8198 = vunpack.c.l.b16 %v8117
        %v8199 = vunpack.c.l.b16 %v8118
        %v8200 = vunpack.c.l.b16 %v8119
        %v8201 = vunpack.c.l.b16 %v8120
        %v8202 = vunpack.c.l.b16 %v8121
        %v8203 = vunpack.c.l.b16 %v8122
        %v8204 = vunpack.c.l.b16 %v8123
        %v8205 = vunpack.c.l.b16 %v8124
        %v8206 = vunpack.c.l.b16 %v8125
        %v8207 = vunpack.c.l.b16 %v8126
        %v8208 = vunpack.c.l.b16 %v8127
        %v8209 = vunpack.c.l.b16 %v8128
        %v8210 = vunpack.c.l.b16 %v8129
        %v8211 = vunpack.c.l.b16 %v8130
        %v8212 = vunpack.c.l.b16 %v8131
        %v8213 = vunpack.c.l.b16 %v8132
        %v8214 = vpack.c.b16 %v8183, %v8182
        %v8215 = vpack.c.b16 %v8185, %v8184
        %v8216 = vpack.c.b16 %v8187, %v8186
        %v8217 = vpack.c.b16 %v8189, %v8188
        %v8218 = vpack.c.b16 %v8191, %v8190
        %v8219 = vpack.c.b16 %v8193, %v8192
        %v8220 = vpack.c.b16 %v8195, %v8194
        %v8221 = vpack.c.b16 %v8197, %v8196
        %v8222 = vpack.c.b16 %v8199, %v8198
        %v8223 = vpack.c.b16 %v8201, %v8200
        %v8224 = vpack.c.b16 %v8203, %v8202
        %v8225 = vpack.c.b16 %v8205, %v8204
        %v8226 = vpack.c.b16 %v8207, %v8206
        %v8227 = vpack.c.b16 %v8209, %v8208
        %v8228 = vpack.c.b16 %v8211, %v8210
        %v8229 = vpack.c.b16 %v8213, %v8212
        %v8262 = vunpack.c.l.b16 %v8134
        %v8263 = vunpack.c.l.b16 %v8135
        %v8264 = vunpack.c.l.b16 %v8136
        %v8265 = vunpack.c.l.b16 %v8137
        %v8266 = vunpack.c.l.b16 %v8138
        %v8267 = vunpack.c.l.b16 %v8139
        %v8268 = vunpack.c.l.b16 %v8140
        %v8269 = vunpack.c.l.b16 %v8141
        %v8270 = vunpack.c.l.b16 %v8142
        %v8271 = vunpack.c.l.b16 %v8143
        %v8272 = vunpack.c.l.b16 %v8144
        %v8273 = vunpack.c.l.b16 %v8145
        %v8274 = vunpack.c.l.b16 %v8146
        %v8275 = vunpack.c.l.b16 %v8147
        %v8276 = vunpack.c.l.b16 %v8148
        %v8277 = vunpack.c.l.b16 %v8149
        %v8278 = vpack.c.b16 %v8263, %v8262
        %v8279 = vpack.c.b16 %v8265, %v8264
        %v8280 = vpack.c.b16 %v8267, %v8266
        %v8281 = vpack.c.b16 %v8269, %v8268
        %v8282 = vpack.c.b16 %v8271, %v8270
        %v8283 = vpack.c.b16 %v8273, %v8272
        %v8284 = vpack.c.b16 %v8275, %v8274
        %v8285 = vpack.c.b16 %v8277, %v8276
        %8294 = vmatpush.bf16.msra.mxu0 %v8285
        %8295 = vmatpush.bf16.msra.mxu0 %v8284
        %8296 = vmatpush.bf16.msra.mxu0 %v8283
        %8297 = vmatpush.bf16.msra.mxu0 %v8282
        %8298 = vmatpush.bf16.msra.mxu0 %v8281
        %8299 = vmatpush.bf16.msra.mxu0 %v8280
        %8300 = vmatpush.bf16.msra.mxu0 %v8279
        %8301 = vmatpush.bf16.msra.mxu0 %v8278
        %8302 = vmatmul.bf16.gmra.mxu0 %v8214
        %v8303 = vpop.f32.mrf.mxu0
        %v8304 = vadd.f32 0.0, %v8303
        %v8305 = vpop.f32.mrf.mxu0
        %v8306 = vadd.f32 0.0, %v8305
        %8307 = vmatmul.bf16.gmra.mxu0 %v8215
        %v8308 = vpop.f32.mrf.mxu0
        %v8309 = vadd.f32 0.0, %v8308
        %v8310 = vpop.f32.mrf.mxu0
        %v8311 = vadd.f32 0.0, %v8310
        %8312 = vmatmul.bf16.gmra.mxu0 %v8216
        %v8313 = vpop.f32.mrf.mxu0
        %v8314 = vadd.f32 0.0, %v8313
        %v8315 = vpop.f32.mrf.mxu0
        %v8316 = vadd.f32 0.0, %v8315
        %8317 = vmatmul.bf16.gmra.mxu0 %v8217
        %v8318 = vpop.f32.mrf.mxu0
        %v8319 = vadd.f32 0.0, %v8318
        %v8320 = vpop.f32.mrf.mxu0
        %v8321 = vadd.f32 0.0, %v8320
        %8322 = vmatmul.bf16.gmra.mxu0 %v8218
        %v8323 = vpop.f32.mrf.mxu0
        %v8324 = vadd.f32 0.0, %v8323
        %v8325 = vpop.f32.mrf.mxu0
        %v8326 = vadd.f32 0.0, %v8325
        %8327 = vmatmul.bf16.gmra.mxu0 %v8219
        %v8328 = vpop.f32.mrf.mxu0
        %v8329 = vadd.f32 0.0, %v8328
        %v8330 = vpop.f32.mrf.mxu0
        %v8331 = vadd.f32 0.0, %v8330
        %8332 = vmatmul.bf16.gmra.mxu0 %v8220
        %v8333 = vpop.f32.mrf.mxu0
        %v8334 = vadd.f32 0.0, %v8333
        %v8335 = vpop.f32.mrf.mxu0
        %v8336 = vadd.f32 0.0, %v8335
        %8337 = vmatmul.bf16.gmra.mxu0 %v8221
        %v8338 = vpop.f32.mrf.mxu0
        %v8339 = vadd.f32 0.0, %v8338
        %v8340 = vpop.f32.mrf.mxu0
        %v8341 = vadd.f32 0.0, %v8340
        %8342 = vmatmul.bf16.gmra.mxu0 %v8222
        %v8343 = vpop.f32.mrf.mxu0
        %v8344 = vadd.f32 0.0, %v8343
        %v8345 = vpop.f32.mrf.mxu0
        %v8346 = vadd.f32 0.0, %v8345
        %8347 = vmatmul.bf16.gmra.mxu0 %v8223
        %v8348 = vpop.f32.mrf.mxu0
        %v8349 = vadd.f32 0.0, %v8348
        %v8350 = vpop.f32.mrf.mxu0
        %v8351 = vadd.f32 0.0, %v8350
        %8352 = vmatmul.bf16.gmra.mxu0 %v8224
        %v8353 = vpop.f32.mrf.mxu0
        %v8354 = vadd.f32 0.0, %v8353
        %v8355 = vpop.f32.mrf.mxu0
        %v8356 = vadd.f32 0.0, %v8355
        %8357 = vmatmul.bf16.gmra.mxu0 %v8225
        %v8358 = vpop.f32.mrf.mxu0
        %v8359 = vadd.f32 0.0, %v8358
        %v8360 = vpop.f32.mrf.mxu0
        %v8361 = vadd.f32 0.0, %v8360
        %8362 = vmatmul.bf16.gmra.mxu0 %v8226
        %v8363 = vpop.f32.mrf.mxu0
        %v8364 = vadd.f32 0.0, %v8363
        %v8365 = vpop.f32.mrf.mxu0
        %v8366 = vadd.f32 0.0, %v8365
        %8367 = vmatmul.bf16.gmra.mxu0 %v8227
        %v8368 = vpop.f32.mrf.mxu0
        %v8369 = vadd.f32 0.0, %v8368
        %v8370 = vpop.f32.mrf.mxu0
        %v8371 = vadd.f32 0.0, %v8370
        %8372 = vmatmul.bf16.gmra.mxu0 %v8228
        %v8373 = vpop.f32.mrf.mxu0
        %v8374 = vadd.f32 0.0, %v8373
        %v8375 = vpop.f32.mrf.mxu0
        %v8376 = vadd.f32 0.0, %v8375
        %8377 = vmatmul.bf16.gmra.mxu0 %v8229
        %v8378 = vpop.f32.mrf.mxu0
        %v8379 = vadd.f32 0.0, %v8378
        %v8380 = vpop.f32.mrf.mxu0
        %v8381 = vadd.f32 0.0, %v8380
        %8382 = vdwg.mxu0
        %v8383 = vadd.f32 %v8068, %v8304
        %v8384 = vadd.f32 %v8069, %v8306
        %v8385 = vadd.f32 %v8070, %v8309
        %v8386 = vadd.f32 %v8071, %v8311
        %v8387 = vadd.f32 %v8072, %v8314
        %v8388 = vadd.f32 %v8073, %v8316
        %v8389 = vadd.f32 %v8074, %v8319
        %v8390 = vadd.f32 %v8075, %v8321
        %v8391 = vadd.f32 %v8076, %v8324
        %v8392 = vadd.f32 %v8077, %v8326
        %v8393 = vadd.f32 %v8078, %v8329
        %v8394 = vadd.f32 %v8079, %v8331
        %v8395 = vadd.f32 %v8080, %v8334
        %v8396 = vadd.f32 %v8081, %v8336
        %v8397 = vadd.f32 %v8082, %v8339
        %v8398 = vadd.f32 %v8083, %v8341
        %v8399 = vadd.f32 %v8084, %v8344
        %v8400 = vadd.f32 %v8085, %v8346
        %v8401 = vadd.f32 %v8086, %v8349
        %v8402 = vadd.f32 %v8087, %v8351
        %v8403 = vadd.f32 %v8088, %v8354
        %v8404 = vadd.f32 %v8089, %v8356
        %v8405 = vadd.f32 %v8090, %v8359
        %v8406 = vadd.f32 %v8091, %v8361
        %v8407 = vadd.f32 %v8092, %v8364
        %v8408 = vadd.f32 %v8093, %v8366
        %v8409 = vadd.f32 %v8094, %v8369
        %v8410 = vadd.f32 %v8095, %v8371
        %v8411 = vadd.f32 %v8096, %v8374
        %v8412 = vadd.f32 %v8097, %v8376
        %v8413 = vadd.f32 %v8098, %v8379
        %v8414 = vadd.f32 %v8099, %v8381
        %v8415 = vld [vmem:[%s8100] sm:$0xf]
        %v8416 = vld [vmem:[%s8100 + $0x4] sm:$0xf]
        %v8417 = vld [vmem:[%s8100 + $0x8] sm:$0x1]
        %v8418 = vld [vmem:[%s8100 + $0xc] sm:$0xf]
        %v8419 = vld [vmem:[%s8100 + $0x10] sm:$0xf]
        %v8420 = vld [vmem:[%s8100 + $0x14] sm:$0x1]
        %v8421 = vld [vmem:[%s8100 + $0x18] sm:$0xf]
        %v8422 = vld [vmem:[%s8100 + $0x1c] sm:$0xf]
        %v8423 = vld [vmem:[%s8100 + $0x20] sm:$0x1]
        %v8424 = vld [vmem:[%s8100 + $0x24] sm:$0xf]
        %v8425 = vld [vmem:[%s8100 + $0x28] sm:$0xf]
        %v8426 = vld [vmem:[%s8100 + $0x2c] sm:$0x1]
        %v8427 = vld [vmem:[%s8100 + $0x30] sm:$0xf]
        %v8428 = vld [vmem:[%s8100 + $0x34] sm:$0xf]
        %v8429 = vld [vmem:[%s8100 + $0x38] sm:$0x1]
        %v8430 = vld [vmem:[%s8100 + $0x3c] sm:$0xf]
        %v8431 = vld [vmem:[%s8100 + $0x40] sm:$0xf]
        %v8432 = vld [vmem:[%s8100 + $0x44] sm:$0x1]
        %v8433 = vld [vmem:[%s8100 + $0x48] sm:$0xf]
        %v8434 = vld [vmem:[%s8100 + $0x4c] sm:$0xf]
        %v8435 = vld [vmem:[%s8100 + $0x50] sm:$0x1]
        %v8436 = vld [vmem:[%s8100 + $0x54] sm:$0xf]
        %v8437 = vld [vmem:[%s8100 + $0x58] sm:$0xf]
        %v8438 = vld [vmem:[%s8100 + $0x5c] sm:$0x1]
        %v8439 = vld [vmem:[%s8100 + $0x60] sm:$0xf]
        %v8440 = vld [vmem:[%s8100 + $0x64] sm:$0xf]
        %v8441 = vld [vmem:[%s8100 + $0x68] sm:$0x1]
        %v8442 = vld [vmem:[%s8100 + $0x6c] sm:$0xf]
        %v8443 = vld [vmem:[%s8100 + $0x70] sm:$0xf]
        %v8444 = vld [vmem:[%s8100 + $0x74] sm:$0x1]
        %v8445 = vld [vmem:[%s8100 + $0x78] sm:$0xf]
        %v8446 = vld [vmem:[%s8100 + $0x7c] sm:$0xf]
        %v8447 = vld [vmem:[%s8100 + $0x80] sm:$0x1]
        %v8448 = vld [vmem:[%s8100 + $0x84] sm:$0xf]
        %v8449 = vld [vmem:[%s8100 + $0x88] sm:$0xf]
        %v8450 = vld [vmem:[%s8100 + $0x8c] sm:$0x1]
        %v8451 = vld [vmem:[%s8100 + $0x90] sm:$0xf]
        %v8452 = vld [vmem:[%s8100 + $0x94] sm:$0xf]
        %v8453 = vld [vmem:[%s8100 + $0x98] sm:$0x1]
        %v8454 = vld [vmem:[%s8100 + $0x9c] sm:$0xf]
        %v8455 = vld [vmem:[%s8100 + $0xa0] sm:$0xf]
        %v8456 = vld [vmem:[%s8100 + $0xa4] sm:$0x1]
        %v8457 = vld [vmem:[%s8100 + $0xa8] sm:$0xf]
        %v8458 = vld [vmem:[%s8100 + $0xac] sm:$0xf]
        %v8459 = vld [vmem:[%s8100 + $0xb0] sm:$0x1]
        %v8460 = vld [vmem:[%s8100 + $0xb4] sm:$0xf]
        %v8461 = vld [vmem:[%s8100 + $0xb8] sm:$0xf]
        %v8462 = vld [vmem:[%s8100 + $0xbc] sm:$0x1]
        %v8464 = vshrl.u32 %v8415, 16
        %v8466 = vrot.slane %v8464, 4
        %v8467 = vshll.u32 %v8415, 16
        %v8469 = vrot.slane %v8467, 5
        %v8470 = vor.u32 %v8466, %v8469
        %v8471 = vrot.slane %v8470, 4
        %v8473 = vshll.u32 %v8416, 16
        %v8475 = vrot.slane %v8473, 5
        %v8476 = vsel %vm549, %v8471, %v8475
        %v8477 = vshrl.u32 %v8416, 16
        %v8479 = vrot.slane %v8477, 4
        %v8480 = vor.u32 %v8479, %v8475
        %v8481 = vrot.slane %v8480, 4
        %v8483 = vshll.u32 %v8417, 16
        %v8485 = vrot.slane %v8483, 5
        %v8486 = vsel %vm549, %v8481, %v8485
        %v8488 = vshrl.u32 %v8418, 16
        %v8490 = vrot.slane %v8488, 4
        %v8491 = vshll.u32 %v8418, 16
        %v8493 = vrot.slane %v8491, 5
        %v8494 = vor.u32 %v8490, %v8493
        %v8495 = vrot.slane %v8494, 4
        %v8497 = vshll.u32 %v8419, 16
        %v8499 = vrot.slane %v8497, 5
        %v8500 = vsel %vm549, %v8495, %v8499
        %v8501 = vshrl.u32 %v8419, 16
        %v8503 = vrot.slane %v8501, 4
        %v8504 = vor.u32 %v8503, %v8499
        %v8505 = vrot.slane %v8504, 4
        %v8507 = vshll.u32 %v8420, 16
        %v8509 = vrot.slane %v8507, 5
        %v8510 = vsel %vm549, %v8505, %v8509
        %v8512 = vshrl.u32 %v8421, 16
        %v8514 = vrot.slane %v8512, 4
        %v8515 = vshll.u32 %v8421, 16
        %v8517 = vrot.slane %v8515, 5
        %v8518 = vor.u32 %v8514, %v8517
        %v8519 = vrot.slane %v8518, 4
        %v8521 = vshll.u32 %v8422, 16
        %v8523 = vrot.slane %v8521, 5
        %v8524 = vsel %vm549, %v8519, %v8523
        %v8525 = vshrl.u32 %v8422, 16
        %v8527 = vrot.slane %v8525, 4
        %v8528 = vor.u32 %v8527, %v8523
        %v8529 = vrot.slane %v8528, 4
        %v8531 = vshll.u32 %v8423, 16
        %v8533 = vrot.slane %v8531, 5
        %v8534 = vsel %vm549, %v8529, %v8533
        %v8536 = vshrl.u32 %v8424, 16
        %v8538 = vrot.slane %v8536, 4
        %v8539 = vshll.u32 %v8424, 16
        %v8541 = vrot.slane %v8539, 5
        %v8542 = vor.u32 %v8538, %v8541
        %v8543 = vrot.slane %v8542, 4
        %v8545 = vshll.u32 %v8425, 16
        %v8547 = vrot.slane %v8545, 5
        %v8548 = vsel %vm549, %v8543, %v8547
        %v8549 = vshrl.u32 %v8425, 16
        %v8551 = vrot.slane %v8549, 4
        %v8552 = vor.u32 %v8551, %v8547
        %v8553 = vrot.slane %v8552, 4
        %v8555 = vshll.u32 %v8426, 16
        %v8557 = vrot.slane %v8555, 5
        %v8558 = vsel %vm549, %v8553, %v8557
        %v8560 = vshrl.u32 %v8427, 16
        %v8562 = vrot.slane %v8560, 4
        %v8563 = vshll.u32 %v8427, 16
        %v8565 = vrot.slane %v8563, 5
        %v8566 = vor.u32 %v8562, %v8565
        %v8567 = vrot.slane %v8566, 4
        %v8569 = vshll.u32 %v8428, 16
        %v8571 = vrot.slane %v8569, 5
        %v8572 = vsel %vm549, %v8567, %v8571
        %v8573 = vshrl.u32 %v8428, 16
        %v8575 = vrot.slane %v8573, 4
        %v8576 = vor.u32 %v8575, %v8571
        %v8577 = vrot.slane %v8576, 4
        %v8579 = vshll.u32 %v8429, 16
        %v8581 = vrot.slane %v8579, 5
        %v8582 = vsel %vm549, %v8577, %v8581
        %v8584 = vshrl.u32 %v8430, 16
        %v8586 = vrot.slane %v8584, 4
        %v8587 = vshll.u32 %v8430, 16
        %v8589 = vrot.slane %v8587, 5
        %v8590 = vor.u32 %v8586, %v8589
        %v8591 = vrot.slane %v8590, 4
        %v8593 = vshll.u32 %v8431, 16
        %v8595 = vrot.slane %v8593, 5
        %v8596 = vsel %vm549, %v8591, %v8595
        %v8597 = vshrl.u32 %v8431, 16
        %v8599 = vrot.slane %v8597, 4
        %v8600 = vor.u32 %v8599, %v8595
        %v8601 = vrot.slane %v8600, 4
        %v8603 = vshll.u32 %v8432, 16
        %v8605 = vrot.slane %v8603, 5
        %v8606 = vsel %vm549, %v8601, %v8605
        %v8608 = vshrl.u32 %v8433, 16
        %v8610 = vrot.slane %v8608, 4
        %v8611 = vshll.u32 %v8433, 16
        %v8613 = vrot.slane %v8611, 5
        %v8614 = vor.u32 %v8610, %v8613
        %v8615 = vrot.slane %v8614, 4
        %v8617 = vshll.u32 %v8434, 16
        %v8619 = vrot.slane %v8617, 5
        %v8620 = vsel %vm549, %v8615, %v8619
        %v8621 = vshrl.u32 %v8434, 16
        %v8623 = vrot.slane %v8621, 4
        %v8624 = vor.u32 %v8623, %v8619
        %v8625 = vrot.slane %v8624, 4
        %v8627 = vshll.u32 %v8435, 16
        %v8629 = vrot.slane %v8627, 5
        %v8630 = vsel %vm549, %v8625, %v8629
        %v8632 = vshrl.u32 %v8436, 16
        %v8634 = vrot.slane %v8632, 4
        %v8635 = vshll.u32 %v8436, 16
        %v8637 = vrot.slane %v8635, 5
        %v8638 = vor.u32 %v8634, %v8637
        %v8639 = vrot.slane %v8638, 4
        %v8641 = vshll.u32 %v8437, 16
        %v8643 = vrot.slane %v8641, 5
        %v8644 = vsel %vm549, %v8639, %v8643
        %v8645 = vshrl.u32 %v8437, 16
        %v8647 = vrot.slane %v8645, 4
        %v8648 = vor.u32 %v8647, %v8643
        %v8649 = vrot.slane %v8648, 4
        %v8651 = vshll.u32 %v8438, 16
        %v8653 = vrot.slane %v8651, 5
        %v8654 = vsel %vm549, %v8649, %v8653
        %v8656 = vshrl.u32 %v8439, 16
        %v8658 = vrot.slane %v8656, 4
        %v8659 = vshll.u32 %v8439, 16
        %v8661 = vrot.slane %v8659, 5
        %v8662 = vor.u32 %v8658, %v8661
        %v8663 = vrot.slane %v8662, 4
        %v8665 = vshll.u32 %v8440, 16
        %v8667 = vrot.slane %v8665, 5
        %v8668 = vsel %vm549, %v8663, %v8667
        %v8669 = vshrl.u32 %v8440, 16
        %v8671 = vrot.slane %v8669, 4
        %v8672 = vor.u32 %v8671, %v8667
        %v8673 = vrot.slane %v8672, 4
        %v8675 = vshll.u32 %v8441, 16
        %v8677 = vrot.slane %v8675, 5
        %v8678 = vsel %vm549, %v8673, %v8677
        %v8680 = vshrl.u32 %v8442, 16
        %v8682 = vrot.slane %v8680, 4
        %v8683 = vshll.u32 %v8442, 16
        %v8685 = vrot.slane %v8683, 5
        %v8686 = vor.u32 %v8682, %v8685
        %v8687 = vrot.slane %v8686, 4
        %v8689 = vshll.u32 %v8443, 16
        %v8691 = vrot.slane %v8689, 5
        %v8692 = vsel %vm549, %v8687, %v8691
        %v8693 = vshrl.u32 %v8443, 16
        %v8695 = vrot.slane %v8693, 4
        %v8696 = vor.u32 %v8695, %v8691
        %v8697 = vrot.slane %v8696, 4
        %v8699 = vshll.u32 %v8444, 16
        %v8701 = vrot.slane %v8699, 5
        %v8702 = vsel %vm549, %v8697, %v8701
        %v8704 = vshrl.u32 %v8445, 16
        %v8706 = vrot.slane %v8704, 4
        %v8707 = vshll.u32 %v8445, 16
        %v8709 = vrot.slane %v8707, 5
        %v8710 = vor.u32 %v8706, %v8709
        %v8711 = vrot.slane %v8710, 4
        %v8713 = vshll.u32 %v8446, 16
        %v8715 = vrot.slane %v8713, 5
        %v8716 = vsel %vm549, %v8711, %v8715
        %v8717 = vshrl.u32 %v8446, 16
        %v8719 = vrot.slane %v8717, 4
        %v8720 = vor.u32 %v8719, %v8715
        %v8721 = vrot.slane %v8720, 4
        %v8723 = vshll.u32 %v8447, 16
        %v8725 = vrot.slane %v8723, 5
        %v8726 = vsel %vm549, %v8721, %v8725
        %v8728 = vshrl.u32 %v8448, 16
        %v8730 = vrot.slane %v8728, 4
        %v8731 = vshll.u32 %v8448, 16
        %v8733 = vrot.slane %v8731, 5
        %v8734 = vor.u32 %v8730, %v8733
        %v8735 = vrot.slane %v8734, 4
        %v8737 = vshll.u32 %v8449, 16
        %v8739 = vrot.slane %v8737, 5
        %v8740 = vsel %vm549, %v8735, %v8739
        %v8741 = vshrl.u32 %v8449, 16
        %v8743 = vrot.slane %v8741, 4
        %v8744 = vor.u32 %v8743, %v8739
        %v8745 = vrot.slane %v8744, 4
        %v8747 = vshll.u32 %v8450, 16
        %v8749 = vrot.slane %v8747, 5
        %v8750 = vsel %vm549, %v8745, %v8749
        %v8752 = vshrl.u32 %v8451, 16
        %v8754 = vrot.slane %v8752, 4
        %v8755 = vshll.u32 %v8451, 16
        %v8757 = vrot.slane %v8755, 5
        %v8758 = vor.u32 %v8754, %v8757
        %v8759 = vrot.slane %v8758, 4
        %v8761 = vshll.u32 %v8452, 16
        %v8763 = vrot.slane %v8761, 5
        %v8764 = vsel %vm549, %v8759, %v8763
        %v8765 = vshrl.u32 %v8452, 16
        %v8767 = vrot.slane %v8765, 4
        %v8768 = vor.u32 %v8767, %v8763
        %v8769 = vrot.slane %v8768, 4
        %v8771 = vshll.u32 %v8453, 16
        %v8773 = vrot.slane %v8771, 5
        %v8774 = vsel %vm549, %v8769, %v8773
        %v8776 = vshrl.u32 %v8454, 16
        %v8778 = vrot.slane %v8776, 4
        %v8779 = vshll.u32 %v8454, 16
        %v8781 = vrot.slane %v8779, 5
        %v8782 = vor.u32 %v8778, %v8781
        %v8783 = vrot.slane %v8782, 4
        %v8785 = vshll.u32 %v8455, 16
        %v8787 = vrot.slane %v8785, 5
        %v8788 = vsel %vm549, %v8783, %v8787
        %v8789 = vshrl.u32 %v8455, 16
        %v8791 = vrot.slane %v8789, 4
        %v8792 = vor.u32 %v8791, %v8787
        %v8793 = vrot.slane %v8792, 4
        %v8795 = vshll.u32 %v8456, 16
        %v8797 = vrot.slane %v8795, 5
        %v8798 = vsel %vm549, %v8793, %v8797
        %v8800 = vshrl.u32 %v8457, 16
        %v8802 = vrot.slane %v8800, 4
        %v8803 = vshll.u32 %v8457, 16
        %v8805 = vrot.slane %v8803, 5
        %v8806 = vor.u32 %v8802, %v8805
        %v8807 = vrot.slane %v8806, 4
        %v8809 = vshll.u32 %v8458, 16
        %v8811 = vrot.slane %v8809, 5
        %v8812 = vsel %vm549, %v8807, %v8811
        %v8813 = vshrl.u32 %v8458, 16
        %v8815 = vrot.slane %v8813, 4
        %v8816 = vor.u32 %v8815, %v8811
        %v8817 = vrot.slane %v8816, 4
        %v8819 = vshll.u32 %v8459, 16
        %v8821 = vrot.slane %v8819, 5
        %v8822 = vsel %vm549, %v8817, %v8821
        %v8824 = vshrl.u32 %v8460, 16
        %v8826 = vrot.slane %v8824, 4
        %v8827 = vshll.u32 %v8460, 16
        %v8829 = vrot.slane %v8827, 5
        %v8830 = vor.u32 %v8826, %v8829
        %v8831 = vrot.slane %v8830, 4
        %v8833 = vshll.u32 %v8461, 16
        %v8835 = vrot.slane %v8833, 5
        %v8836 = vsel %vm549, %v8831, %v8835
        %v8837 = vshrl.u32 %v8461, 16
        %v8839 = vrot.slane %v8837, 4
        %v8840 = vor.u32 %v8839, %v8835
        %v8841 = vrot.slane %v8840, 4
        %v8843 = vshll.u32 %v8462, 16
        %v8845 = vrot.slane %v8843, 5
        %v8846 = vsel %vm549, %v8841, %v8845
        %s8847 = scalar_lea.vmem [#allocation9], 448
        %v8848 = vld [vmem:[%s8847] sm:$0xf]
        %v8849 = vld [vmem:[%s8847 + $0x4] sm:$0xf]
        %v8850 = vld [vmem:[%s8847 + $0x8] sm:$0xf]
        %v8851 = vld [vmem:[%s8847 + $0xc] sm:$0xf]
        %v8852 = vld [vmem:[%s8847 + $0x10] sm:$0xf]
        %v8853 = vld [vmem:[%s8847 + $0x14] sm:$0xf]
        %v8854 = vld [vmem:[%s8847 + $0x18] sm:$0xf]
        %v8855 = vld [vmem:[%s8847 + $0x1c] sm:$0xf]
        %v8856 = vld [vmem:[%s8847 + $0x20] sm:$0xf]
        %v8857 = vld [vmem:[%s8847 + $0x24] sm:$0xf]
        %v8858 = vld [vmem:[%s8847 + $0x28] sm:$0xf]
        %v8859 = vld [vmem:[%s8847 + $0x2c] sm:$0xf]
        %v8860 = vld [vmem:[%s8847 + $0x30] sm:$0xf]
        %v8861 = vld [vmem:[%s8847 + $0x34] sm:$0xf]
        %v8862 = vld [vmem:[%s8847 + $0x38] sm:$0xf]
        %v8863 = vld [vmem:[%s8847 + $0x3c] sm:$0xf]
        %v8864 = vunpack.c.l.b16 %v8476
        %v8865 = vunpack.c.l.b16 %v8486
        %v8866 = vunpack.c.l.b16 %v8500
        %v8867 = vunpack.c.l.b16 %v8510
        %v8868 = vunpack.c.l.b16 %v8524
        %v8869 = vunpack.c.l.b16 %v8534
        %v8870 = vunpack.c.l.b16 %v8548
        %v8871 = vunpack.c.l.b16 %v8558
        %v8872 = vunpack.c.l.b16 %v8572
        %v8873 = vunpack.c.l.b16 %v8582
        %v8874 = vunpack.c.l.b16 %v8596
        %v8875 = vunpack.c.l.b16 %v8606
        %v8876 = vunpack.c.l.b16 %v8620
        %v8877 = vunpack.c.l.b16 %v8630
        %v8878 = vunpack.c.l.b16 %v8644
        %v8879 = vunpack.c.l.b16 %v8654
        %v8880 = vunpack.c.l.b16 %v8668
        %v8881 = vunpack.c.l.b16 %v8678
        %v8882 = vunpack.c.l.b16 %v8692
        %v8883 = vunpack.c.l.b16 %v8702
        %v8884 = vunpack.c.l.b16 %v8716
        %v8885 = vunpack.c.l.b16 %v8726
        %v8886 = vunpack.c.l.b16 %v8740
        %v8887 = vunpack.c.l.b16 %v8750
        %v8888 = vunpack.c.l.b16 %v8764
        %v8889 = vunpack.c.l.b16 %v8774
        %v8890 = vunpack.c.l.b16 %v8788
        %v8891 = vunpack.c.l.b16 %v8798
        %v8892 = vunpack.c.l.b16 %v8812
        %v8893 = vunpack.c.l.b16 %v8822
        %v8894 = vunpack.c.l.b16 %v8836
        %v8895 = vunpack.c.l.b16 %v8846
        %v8896 = vpack.c.b16 %v8865, %v8864
        %v8897 = vpack.c.b16 %v8867, %v8866
        %v8898 = vpack.c.b16 %v8869, %v8868
        %v8899 = vpack.c.b16 %v8871, %v8870
        %v8900 = vpack.c.b16 %v8873, %v8872
        %v8901 = vpack.c.b16 %v8875, %v8874
        %v8902 = vpack.c.b16 %v8877, %v8876
        %v8903 = vpack.c.b16 %v8879, %v8878
        %v8904 = vpack.c.b16 %v8881, %v8880
        %v8905 = vpack.c.b16 %v8883, %v8882
        %v8906 = vpack.c.b16 %v8885, %v8884
        %v8907 = vpack.c.b16 %v8887, %v8886
        %v8908 = vpack.c.b16 %v8889, %v8888
        %v8909 = vpack.c.b16 %v8891, %v8890
        %v8910 = vpack.c.b16 %v8893, %v8892
        %v8911 = vpack.c.b16 %v8895, %v8894
        %v8944 = vunpack.c.l.b16 %v8848
        %v8945 = vunpack.c.l.b16 %v8849
        %v8946 = vunpack.c.l.b16 %v8850
        %v8947 = vunpack.c.l.b16 %v8851
        %v8948 = vunpack.c.l.b16 %v8852
        %v8949 = vunpack.c.l.b16 %v8853
        %v8950 = vunpack.c.l.b16 %v8854
        %v8951 = vunpack.c.l.b16 %v8855
        %v8952 = vunpack.c.l.b16 %v8856
        %v8953 = vunpack.c.l.b16 %v8857
        %v8954 = vunpack.c.l.b16 %v8858
        %v8955 = vunpack.c.l.b16 %v8859
        %v8956 = vunpack.c.l.b16 %v8860
        %v8957 = vunpack.c.l.b16 %v8861
        %v8958 = vunpack.c.l.b16 %v8862
        %v8959 = vunpack.c.l.b16 %v8863
        %v8960 = vpack.c.b16 %v8945, %v8944
        %v8961 = vpack.c.b16 %v8947, %v8946
        %v8962 = vpack.c.b16 %v8949, %v8948
        %v8963 = vpack.c.b16 %v8951, %v8950
        %v8964 = vpack.c.b16 %v8953, %v8952
        %v8965 = vpack.c.b16 %v8955, %v8954
        %v8966 = vpack.c.b16 %v8957, %v8956
        %v8967 = vpack.c.b16 %v8959, %v8958
        %8976 = vmatpush.bf16.msra.mxu0 %v8967
        %8977 = vmatpush.bf16.msra.mxu0 %v8966
        %8978 = vmatpush.bf16.msra.mxu0 %v8965
        %8979 = vmatpush.bf16.msra.mxu0 %v8964
        %8980 = vmatpush.bf16.msra.mxu0 %v8963
        %8981 = vmatpush.bf16.msra.mxu0 %v8962
        %8982 = vmatpush.bf16.msra.mxu0 %v8961
        %8983 = vmatpush.bf16.msra.mxu0 %v8960
        %8984 = vmatmul.bf16.gmra.mxu0 %v8896
        %v8985 = vpop.f32.mrf.mxu0
        %v8986 = vadd.f32 0.0, %v8985
        %v8987 = vpop.f32.mrf.mxu0
        %v8988 = vadd.f32 0.0, %v8987
        %8989 = vmatmul.bf16.gmra.mxu0 %v8897
        %v8990 = vpop.f32.mrf.mxu0
        %v8991 = vadd.f32 0.0, %v8990
        %v8992 = vpop.f32.mrf.mxu0
        %v8993 = vadd.f32 0.0, %v8992
        %8994 = vmatmul.bf16.gmra.mxu0 %v8898
        %v8995 = vpop.f32.mrf.mxu0
        %v8996 = vadd.f32 0.0, %v8995
        %v8997 = vpop.f32.mrf.mxu0
        %v8998 = vadd.f32 0.0, %v8997
        %8999 = vmatmul.bf16.gmra.mxu0 %v8899
        %v9000 = vpop.f32.mrf.mxu0
        %v9001 = vadd.f32 0.0, %v9000
        %v9002 = vpop.f32.mrf.mxu0
        %v9003 = vadd.f32 0.0, %v9002
        %9004 = vmatmul.bf16.gmra.mxu0 %v8900
        %v9005 = vpop.f32.mrf.mxu0
        %v9006 = vadd.f32 0.0, %v9005
        %v9007 = vpop.f32.mrf.mxu0
        %v9008 = vadd.f32 0.0, %v9007
        %9009 = vmatmul.bf16.gmra.mxu0 %v8901
        %v9010 = vpop.f32.mrf.mxu0
        %v9011 = vadd.f32 0.0, %v9010
        %v9012 = vpop.f32.mrf.mxu0
        %v9013 = vadd.f32 0.0, %v9012
        %9014 = vmatmul.bf16.gmra.mxu0 %v8902
        %v9015 = vpop.f32.mrf.mxu0
        %v9016 = vadd.f32 0.0, %v9015
        %v9017 = vpop.f32.mrf.mxu0
        %v9018 = vadd.f32 0.0, %v9017
        %9019 = vmatmul.bf16.gmra.mxu0 %v8903
        %v9020 = vpop.f32.mrf.mxu0
        %v9021 = vadd.f32 0.0, %v9020
        %v9022 = vpop.f32.mrf.mxu0
        %v9023 = vadd.f32 0.0, %v9022
        %9024 = vmatmul.bf16.gmra.mxu0 %v8904
        %v9025 = vpop.f32.mrf.mxu0
        %v9026 = vadd.f32 0.0, %v9025
        %v9027 = vpop.f32.mrf.mxu0
        %v9028 = vadd.f32 0.0, %v9027
        %9029 = vmatmul.bf16.gmra.mxu0 %v8905
        %v9030 = vpop.f32.mrf.mxu0
        %v9031 = vadd.f32 0.0, %v9030
        %v9032 = vpop.f32.mrf.mxu0
        %v9033 = vadd.f32 0.0, %v9032
        %9034 = vmatmul.bf16.gmra.mxu0 %v8906
        %v9035 = vpop.f32.mrf.mxu0
        %v9036 = vadd.f32 0.0, %v9035
        %v9037 = vpop.f32.mrf.mxu0
        %v9038 = vadd.f32 0.0, %v9037
        %9039 = vmatmul.bf16.gmra.mxu0 %v8907
        %v9040 = vpop.f32.mrf.mxu0
        %v9041 = vadd.f32 0.0, %v9040
        %v9042 = vpop.f32.mrf.mxu0
        %v9043 = vadd.f32 0.0, %v9042
        %9044 = vmatmul.bf16.gmra.mxu0 %v8908
        %v9045 = vpop.f32.mrf.mxu0
        %v9046 = vadd.f32 0.0, %v9045
        %v9047 = vpop.f32.mrf.mxu0
        %v9048 = vadd.f32 0.0, %v9047
        %9049 = vmatmul.bf16.gmra.mxu0 %v8909
        %v9050 = vpop.f32.mrf.mxu0
        %v9051 = vadd.f32 0.0, %v9050
        %v9052 = vpop.f32.mrf.mxu0
        %v9053 = vadd.f32 0.0, %v9052
        %9054 = vmatmul.bf16.gmra.mxu0 %v8910
        %v9055 = vpop.f32.mrf.mxu0
        %v9056 = vadd.f32 0.0, %v9055
        %v9057 = vpop.f32.mrf.mxu0
        %v9058 = vadd.f32 0.0, %v9057
        %9059 = vmatmul.bf16.gmra.mxu0 %v8911
        %v9060 = vpop.f32.mrf.mxu0
        %v9061 = vadd.f32 0.0, %v9060
        %v9062 = vpop.f32.mrf.mxu0
        %v9063 = vadd.f32 0.0, %v9062
        %9064 = vdwg.mxu0
        %v9065 = vadd.f32 %v8383, %v8986
        %v9066 = vadd.f32 %v8384, %v8988
        %v9067 = vadd.f32 %v8385, %v8991
        %v9068 = vadd.f32 %v8386, %v8993
        %v9069 = vadd.f32 %v8387, %v8996
        %v9070 = vadd.f32 %v8388, %v8998
        %v9071 = vadd.f32 %v8389, %v9001
        %v9072 = vadd.f32 %v8390, %v9003
        %v9073 = vadd.f32 %v8391, %v9006
        %v9074 = vadd.f32 %v8392, %v9008
        %v9075 = vadd.f32 %v8393, %v9011
        %v9076 = vadd.f32 %v8394, %v9013
        %v9077 = vadd.f32 %v8395, %v9016
        %v9078 = vadd.f32 %v8396, %v9018
        %v9079 = vadd.f32 %v8397, %v9021
        %v9080 = vadd.f32 %v8398, %v9023
        %v9081 = vadd.f32 %v8399, %v9026
        %v9082 = vadd.f32 %v8400, %v9028
        %v9083 = vadd.f32 %v8401, %v9031
        %v9084 = vadd.f32 %v8402, %v9033
        %v9085 = vadd.f32 %v8403, %v9036
        %v9086 = vadd.f32 %v8404, %v9038
        %v9087 = vadd.f32 %v8405, %v9041
        %v9088 = vadd.f32 %v8406, %v9043
        %v9089 = vadd.f32 %v8407, %v9046
        %v9090 = vadd.f32 %v8408, %v9048
        %v9091 = vadd.f32 %v8409, %v9051
        %v9092 = vadd.f32 %v8410, %v9053
        %v9093 = vadd.f32 %v8411, %v9056
        %v9094 = vadd.f32 %v8412, %v9058
        %v9095 = vadd.f32 %v8413, %v9061
        %v9096 = vadd.f32 %v8414, %v9063
        %v9097 = vld [vmem:[%s8100] sm:$0xe]
        %v9098 = vld [vmem:[%s8100 + $0xc] sm:$0xe]
        %v9099 = vld [vmem:[%s8100 + $0x18] sm:$0xe]
        %v9100 = vld [vmem:[%s8100 + $0x24] sm:$0xe]
        %v9101 = vld [vmem:[%s8100 + $0x30] sm:$0xe]
        %v9102 = vld [vmem:[%s8100 + $0x3c] sm:$0xe]
        %v9103 = vld [vmem:[%s8100 + $0x48] sm:$0xe]
        %v9104 = vld [vmem:[%s8100 + $0x54] sm:$0xe]
        %v9105 = vld [vmem:[%s8100 + $0x60] sm:$0xe]
        %v9106 = vld [vmem:[%s8100 + $0x6c] sm:$0xe]
        %v9107 = vld [vmem:[%s8100 + $0x78] sm:$0xe]
        %v9108 = vld [vmem:[%s8100 + $0x84] sm:$0xe]
        %v9109 = vld [vmem:[%s8100 + $0x90] sm:$0xe]
        %v9110 = vld [vmem:[%s8100 + $0x9c] sm:$0xe]
        %v9111 = vld [vmem:[%s8100 + $0xa8] sm:$0xe]
        %v9112 = vld [vmem:[%s8100 + $0xb4] sm:$0xe]
        %v9161 = vrot.slane %v9097, 5
        %v9162 = vrot.slane %v9161, 4
        %v9163 = vrot.slane %v8416, 5
        %v9164 = vsel %vm1435, %v9162, %v9163
        %v9165 = vrot.slane %v9163, 4
        %v9166 = vrot.slane %v8417, 5
        %v9167 = vsel %vm1435, %v9165, %v9166
        %v9168 = vrot.slane %v9098, 5
        %v9169 = vrot.slane %v9168, 4
        %v9170 = vrot.slane %v8419, 5
        %v9171 = vsel %vm1435, %v9169, %v9170
        %v9172 = vrot.slane %v9170, 4
        %v9173 = vrot.slane %v8420, 5
        %v9174 = vsel %vm1435, %v9172, %v9173
        %v9175 = vrot.slane %v9099, 5
        %v9176 = vrot.slane %v9175, 4
        %v9177 = vrot.slane %v8422, 5
        %v9178 = vsel %vm1435, %v9176, %v9177
        %v9179 = vrot.slane %v9177, 4
        %v9180 = vrot.slane %v8423, 5
        %v9181 = vsel %vm1435, %v9179, %v9180
        %v9182 = vrot.slane %v9100, 5
        %v9183 = vrot.slane %v9182, 4
        %v9184 = vrot.slane %v8425, 5
        %v9185 = vsel %vm1435, %v9183, %v9184
        %v9186 = vrot.slane %v9184, 4
        %v9187 = vrot.slane %v8426, 5
        %v9188 = vsel %vm1435, %v9186, %v9187
        %v9189 = vrot.slane %v9101, 5
        %v9190 = vrot.slane %v9189, 4
        %v9191 = vrot.slane %v8428, 5
        %v9192 = vsel %vm1435, %v9190, %v9191
        %v9193 = vrot.slane %v9191, 4
        %v9194 = vrot.slane %v8429, 5
        %v9195 = vsel %vm1435, %v9193, %v9194
        %v9196 = vrot.slane %v9102, 5
        %v9197 = vrot.slane %v9196, 4
        %v9198 = vrot.slane %v8431, 5
        %v9199 = vsel %vm1435, %v9197, %v9198
        %v9200 = vrot.slane %v9198, 4
        %v9201 = vrot.slane %v8432, 5
        %v9202 = vsel %vm1435, %v9200, %v9201
        %v9203 = vrot.slane %v9103, 5
        %v9204 = vrot.slane %v9203, 4
        %v9205 = vrot.slane %v8434, 5
        %v9206 = vsel %vm1435, %v9204, %v9205
        %v9207 = vrot.slane %v9205, 4
        %v9208 = vrot.slane %v8435, 5
        %v9209 = vsel %vm1435, %v9207, %v9208
        %v9210 = vrot.slane %v9104, 5
        %v9211 = vrot.slane %v9210, 4
        %v9212 = vrot.slane %v8437, 5
        %v9213 = vsel %vm1435, %v9211, %v9212
        %v9214 = vrot.slane %v9212, 4
        %v9215 = vrot.slane %v8438, 5
        %v9216 = vsel %vm1435, %v9214, %v9215
        %v9217 = vrot.slane %v9105, 5
        %v9218 = vrot.slane %v9217, 4
        %v9219 = vrot.slane %v8440, 5
        %v9220 = vsel %vm1435, %v9218, %v9219
        %v9221 = vrot.slane %v9219, 4
        %v9222 = vrot.slane %v8441, 5
        %v9223 = vsel %vm1435, %v9221, %v9222
        %v9224 = vrot.slane %v9106, 5
        %v9225 = vrot.slane %v9224, 4
        %v9226 = vrot.slane %v8443, 5
        %v9227 = vsel %vm1435, %v9225, %v9226
        %v9228 = vrot.slane %v9226, 4
        %v9229 = vrot.slane %v8444, 5
        %v9230 = vsel %vm1435, %v9228, %v9229
        %v9231 = vrot.slane %v9107, 5
        %v9232 = vrot.slane %v9231, 4
        %v9233 = vrot.slane %v8446, 5
        %v9234 = vsel %vm1435, %v9232, %v9233
        %v9235 = vrot.slane %v9233, 4
        %v9236 = vrot.slane %v8447, 5
        %v9237 = vsel %vm1435, %v9235, %v9236
        %v9238 = vrot.slane %v9108, 5
        %v9239 = vrot.slane %v9238, 4
        %v9240 = vrot.slane %v8449, 5
        %v9241 = vsel %vm1435, %v9239, %v9240
        %v9242 = vrot.slane %v9240, 4
        %v9243 = vrot.slane %v8450, 5
        %v9244 = vsel %vm1435, %v9242, %v9243
        %v9245 = vrot.slane %v9109, 5
        %v9246 = vrot.slane %v9245, 4
        %v9247 = vrot.slane %v8452, 5
        %v9248 = vsel %vm1435, %v9246, %v9247
        %v9249 = vrot.slane %v9247, 4
        %v9250 = vrot.slane %v8453, 5
        %v9251 = vsel %vm1435, %v9249, %v9250
        %v9252 = vrot.slane %v9110, 5
        %v9253 = vrot.slane %v9252, 4
        %v9254 = vrot.slane %v8455, 5
        %v9255 = vsel %vm1435, %v9253, %v9254
        %v9256 = vrot.slane %v9254, 4
        %v9257 = vrot.slane %v8456, 5
        %v9258 = vsel %vm1435, %v9256, %v9257
        %v9259 = vrot.slane %v9111, 5
        %v9260 = vrot.slane %v9259, 4
        %v9261 = vrot.slane %v8458, 5
        %v9262 = vsel %vm1435, %v9260, %v9261
        %v9263 = vrot.slane %v9261, 4
        %v9264 = vrot.slane %v8459, 5
        %v9265 = vsel %vm1435, %v9263, %v9264
        %v9266 = vrot.slane %v9112, 5
        %v9267 = vrot.slane %v9266, 4
        %v9268 = vrot.slane %v8461, 5
        %v9269 = vsel %vm1435, %v9267, %v9268
        %v9270 = vrot.slane %v9268, 4
        %v9271 = vrot.slane %v8462, 5
        %v9272 = vsel %vm1435, %v9270, %v9271
        %s9273 = scalar_lea.vmem [#allocation9], 512
        %v9274 = vld [vmem:[%s9273] sm:$0xf]
        %v9275 = vld [vmem:[%s9273 + $0x4] sm:$0xf]
        %v9276 = vld [vmem:[%s9273 + $0x8] sm:$0xf]
        %v9277 = vld [vmem:[%s9273 + $0xc] sm:$0xf]
        %v9278 = vld [vmem:[%s9273 + $0x10] sm:$0xf]
        %v9279 = vld [vmem:[%s9273 + $0x14] sm:$0xf]
        %v9280 = vld [vmem:[%s9273 + $0x18] sm:$0xf]
        %v9281 = vld [vmem:[%s9273 + $0x1c] sm:$0xf]
        %v9282 = vld [vmem:[%s9273 + $0x20] sm:$0xf]
        %v9283 = vld [vmem:[%s9273 + $0x24] sm:$0xf]
        %v9284 = vld [vmem:[%s9273 + $0x28] sm:$0xf]
        %v9285 = vld [vmem:[%s9273 + $0x2c] sm:$0xf]
        %v9286 = vld [vmem:[%s9273 + $0x30] sm:$0xf]
        %v9287 = vld [vmem:[%s9273 + $0x34] sm:$0xf]
        %v9288 = vld [vmem:[%s9273 + $0x38] sm:$0xf]
        %v9289 = vld [vmem:[%s9273 + $0x3c] sm:$0xf]
        %v9290 = vunpack.c.l.b16 %v9164
        %v9291 = vunpack.c.l.b16 %v9167
        %v9292 = vunpack.c.l.b16 %v9171
        %v9293 = vunpack.c.l.b16 %v9174
        %v9294 = vunpack.c.l.b16 %v9178
        %v9295 = vunpack.c.l.b16 %v9181
        %v9296 = vunpack.c.l.b16 %v9185
        %v9297 = vunpack.c.l.b16 %v9188
        %v9298 = vunpack.c.l.b16 %v9192
        %v9299 = vunpack.c.l.b16 %v9195
        %v9300 = vunpack.c.l.b16 %v9199
        %v9301 = vunpack.c.l.b16 %v9202
        %v9302 = vunpack.c.l.b16 %v9206
        %v9303 = vunpack.c.l.b16 %v9209
        %v9304 = vunpack.c.l.b16 %v9213
        %v9305 = vunpack.c.l.b16 %v9216
        %v9306 = vunpack.c.l.b16 %v9220
        %v9307 = vunpack.c.l.b16 %v9223
        %v9308 = vunpack.c.l.b16 %v9227
        %v9309 = vunpack.c.l.b16 %v9230
        %v9310 = vunpack.c.l.b16 %v9234
        %v9311 = vunpack.c.l.b16 %v9237
        %v9312 = vunpack.c.l.b16 %v9241
        %v9313 = vunpack.c.l.b16 %v9244
        %v9314 = vunpack.c.l.b16 %v9248
        %v9315 = vunpack.c.l.b16 %v9251
        %v9316 = vunpack.c.l.b16 %v9255
        %v9317 = vunpack.c.l.b16 %v9258
        %v9318 = vunpack.c.l.b16 %v9262
        %v9319 = vunpack.c.l.b16 %v9265
        %v9320 = vunpack.c.l.b16 %v9269
        %v9321 = vunpack.c.l.b16 %v9272
        %v9322 = vpack.c.b16 %v9291, %v9290
        %v9323 = vpack.c.b16 %v9293, %v9292
        %v9324 = vpack.c.b16 %v9295, %v9294
        %v9325 = vpack.c.b16 %v9297, %v9296
        %v9326 = vpack.c.b16 %v9299, %v9298
        %v9327 = vpack.c.b16 %v9301, %v9300
        %v9328 = vpack.c.b16 %v9303, %v9302
        %v9329 = vpack.c.b16 %v9305, %v9304
        %v9330 = vpack.c.b16 %v9307, %v9306
        %v9331 = vpack.c.b16 %v9309, %v9308
        %v9332 = vpack.c.b16 %v9311, %v9310
        %v9333 = vpack.c.b16 %v9313, %v9312
        %v9334 = vpack.c.b16 %v9315, %v9314
        %v9335 = vpack.c.b16 %v9317, %v9316
        %v9336 = vpack.c.b16 %v9319, %v9318
        %v9337 = vpack.c.b16 %v9321, %v9320
        %v9370 = vunpack.c.l.b16 %v9274
        %v9371 = vunpack.c.l.b16 %v9275
        %v9372 = vunpack.c.l.b16 %v9276
        %v9373 = vunpack.c.l.b16 %v9277
        %v9374 = vunpack.c.l.b16 %v9278
        %v9375 = vunpack.c.l.b16 %v9279
        %v9376 = vunpack.c.l.b16 %v9280
        %v9377 = vunpack.c.l.b16 %v9281
        %v9378 = vunpack.c.l.b16 %v9282
        %v9379 = vunpack.c.l.b16 %v9283
        %v9380 = vunpack.c.l.b16 %v9284
        %v9381 = vunpack.c.l.b16 %v9285
        %v9382 = vunpack.c.l.b16 %v9286
        %v9383 = vunpack.c.l.b16 %v9287
        %v9384 = vunpack.c.l.b16 %v9288
        %v9385 = vunpack.c.l.b16 %v9289
        %v9386 = vpack.c.b16 %v9371, %v9370
        %v9387 = vpack.c.b16 %v9373, %v9372
        %v9388 = vpack.c.b16 %v9375, %v9374
        %v9389 = vpack.c.b16 %v9377, %v9376
        %v9390 = vpack.c.b16 %v9379, %v9378
        %v9391 = vpack.c.b16 %v9381, %v9380
        %v9392 = vpack.c.b16 %v9383, %v9382
        %v9393 = vpack.c.b16 %v9385, %v9384
        %9402 = vmatpush.bf16.msra.mxu0 %v9393
        %9403 = vmatpush.bf16.msra.mxu0 %v9392
        %9404 = vmatpush.bf16.msra.mxu0 %v9391
        %9405 = vmatpush.bf16.msra.mxu0 %v9390
        %9406 = vmatpush.bf16.msra.mxu0 %v9389
        %9407 = vmatpush.bf16.msra.mxu0 %v9388
        %9408 = vmatpush.bf16.msra.mxu0 %v9387
        %9409 = vmatpush.bf16.msra.mxu0 %v9386
        %9410 = vmatmul.bf16.gmra.mxu0 %v9322
        %v9411 = vpop.f32.mrf.mxu0
        %v9412 = vadd.f32 0.0, %v9411
        %v9413 = vpop.f32.mrf.mxu0
        %v9414 = vadd.f32 0.0, %v9413
        %9415 = vmatmul.bf16.gmra.mxu0 %v9323
        %v9416 = vpop.f32.mrf.mxu0
        %v9417 = vadd.f32 0.0, %v9416
        %v9418 = vpop.f32.mrf.mxu0
        %v9419 = vadd.f32 0.0, %v9418
        %9420 = vmatmul.bf16.gmra.mxu0 %v9324
        %v9421 = vpop.f32.mrf.mxu0
        %v9422 = vadd.f32 0.0, %v9421
        %v9423 = vpop.f32.mrf.mxu0
        %v9424 = vadd.f32 0.0, %v9423
        %9425 = vmatmul.bf16.gmra.mxu0 %v9325
        %v9426 = vpop.f32.mrf.mxu0
        %v9427 = vadd.f32 0.0, %v9426
        %v9428 = vpop.f32.mrf.mxu0
        %v9429 = vadd.f32 0.0, %v9428
        %9430 = vmatmul.bf16.gmra.mxu0 %v9326
        %v9431 = vpop.f32.mrf.mxu0
        %v9432 = vadd.f32 0.0, %v9431
        %v9433 = vpop.f32.mrf.mxu0
        %v9434 = vadd.f32 0.0, %v9433
        %9435 = vmatmul.bf16.gmra.mxu0 %v9327
        %v9436 = vpop.f32.mrf.mxu0
        %v9437 = vadd.f32 0.0, %v9436
        %v9438 = vpop.f32.mrf.mxu0
        %v9439 = vadd.f32 0.0, %v9438
        %9440 = vmatmul.bf16.gmra.mxu0 %v9328
        %v9441 = vpop.f32.mrf.mxu0
        %v9442 = vadd.f32 0.0, %v9441
        %v9443 = vpop.f32.mrf.mxu0
        %v9444 = vadd.f32 0.0, %v9443
        %9445 = vmatmul.bf16.gmra.mxu0 %v9329
        %v9446 = vpop.f32.mrf.mxu0
        %v9447 = vadd.f32 0.0, %v9446
        %v9448 = vpop.f32.mrf.mxu0
        %v9449 = vadd.f32 0.0, %v9448
        %9450 = vmatmul.bf16.gmra.mxu0 %v9330
        %v9451 = vpop.f32.mrf.mxu0
        %v9452 = vadd.f32 0.0, %v9451
        %v9453 = vpop.f32.mrf.mxu0
        %v9454 = vadd.f32 0.0, %v9453
        %9455 = vmatmul.bf16.gmra.mxu0 %v9331
        %v9456 = vpop.f32.mrf.mxu0
        %v9457 = vadd.f32 0.0, %v9456
        %v9458 = vpop.f32.mrf.mxu0
        %v9459 = vadd.f32 0.0, %v9458
        %9460 = vmatmul.bf16.gmra.mxu0 %v9332
        %v9461 = vpop.f32.mrf.mxu0
        %v9462 = vadd.f32 0.0, %v9461
        %v9463 = vpop.f32.mrf.mxu0
        %v9464 = vadd.f32 0.0, %v9463
        %9465 = vmatmul.bf16.gmra.mxu0 %v9333
        %v9466 = vpop.f32.mrf.mxu0
        %v9467 = vadd.f32 0.0, %v9466
        %v9468 = vpop.f32.mrf.mxu0
        %v9469 = vadd.f32 0.0, %v9468
        %9470 = vmatmul.bf16.gmra.mxu0 %v9334
        %v9471 = vpop.f32.mrf.mxu0
        %v9472 = vadd.f32 0.0, %v9471
        %v9473 = vpop.f32.mrf.mxu0
        %v9474 = vadd.f32 0.0, %v9473
        %9475 = vmatmul.bf16.gmra.mxu0 %v9335
        %v9476 = vpop.f32.mrf.mxu0
        %v9477 = vadd.f32 0.0, %v9476
        %v9478 = vpop.f32.mrf.mxu0
        %v9479 = vadd.f32 0.0, %v9478
        %9480 = vmatmul.bf16.gmra.mxu0 %v9336
        %v9481 = vpop.f32.mrf.mxu0
        %v9482 = vadd.f32 0.0, %v9481
        %v9483 = vpop.f32.mrf.mxu0
        %v9484 = vadd.f32 0.0, %v9483
        %9485 = vmatmul.bf16.gmra.mxu0 %v9337
        %v9486 = vpop.f32.mrf.mxu0
        %v9487 = vadd.f32 0.0, %v9486
        %v9488 = vpop.f32.mrf.mxu0
        %v9489 = vadd.f32 0.0, %v9488
        %9490 = vdwg.mxu0
        %v9491 = vadd.f32 %v9065, %v9412
        %v9492 = vadd.f32 %v9066, %v9414
        %v9493 = vadd.f32 %v9067, %v9417
        %v9494 = vadd.f32 %v9068, %v9419
        %v9495 = vadd.f32 %v9069, %v9422
        %v9496 = vadd.f32 %v9070, %v9424
        %v9497 = vadd.f32 %v9071, %v9427
        %v9498 = vadd.f32 %v9072, %v9429
        %v9499 = vadd.f32 %v9073, %v9432
        %v9500 = vadd.f32 %v9074, %v9434
        %v9501 = vadd.f32 %v9075, %v9437
        %v9502 = vadd.f32 %v9076, %v9439
        %v9503 = vadd.f32 %v9077, %v9442
        %v9504 = vadd.f32 %v9078, %v9444
        %v9505 = vadd.f32 %v9079, %v9447
        %v9506 = vadd.f32 %v9080, %v9449
        %v9507 = vadd.f32 %v9081, %v9452
        %v9508 = vadd.f32 %v9082, %v9454
        %v9509 = vadd.f32 %v9083, %v9457
        %v9510 = vadd.f32 %v9084, %v9459
        %v9511 = vadd.f32 %v9085, %v9462
        %v9512 = vadd.f32 %v9086, %v9464
        %v9513 = vadd.f32 %v9087, %v9467
        %v9514 = vadd.f32 %v9088, %v9469
        %v9515 = vadd.f32 %v9089, %v9472
        %v9516 = vadd.f32 %v9090, %v9474
        %v9517 = vadd.f32 %v9091, %v9477
        %v9518 = vadd.f32 %v9092, %v9479
        %v9519 = vadd.f32 %v9093, %v9482
        %v9520 = vadd.f32 %v9094, %v9484
        %v9521 = vadd.f32 %v9095, %v9487
        %v9522 = vadd.f32 %v9096, %v9489
        %v9523 = vld [vmem:[%s9] sm:$0x1]
        %v9525 = vperm.slane %v9523, 0
        %v9527 = vadd.f32 %v9491, %v9525
        %v9528 = vadd.f32 %v9492, %v9525
        %v9529 = vadd.f32 %v9493, %v9525
        %v9530 = vadd.f32 %v9494, %v9525
        %v9531 = vadd.f32 %v9495, %v9525
        %v9532 = vadd.f32 %v9496, %v9525
        %v9533 = vadd.f32 %v9497, %v9525
        %v9534 = vadd.f32 %v9498, %v9525
        %v9535 = vadd.f32 %v9499, %v9525
        %v9536 = vadd.f32 %v9500, %v9525
        %v9537 = vadd.f32 %v9501, %v9525
        %v9538 = vadd.f32 %v9502, %v9525
        %v9539 = vadd.f32 %v9503, %v9525
        %v9540 = vadd.f32 %v9504, %v9525
        %v9541 = vadd.f32 %v9505, %v9525
        %v9542 = vadd.f32 %v9506, %v9525
        %v9543 = vadd.f32 %v9507, %v9525
        %v9544 = vadd.f32 %v9508, %v9525
        %v9545 = vadd.f32 %v9509, %v9525
        %v9546 = vadd.f32 %v9510, %v9525
        %v9547 = vadd.f32 %v9511, %v9525
        %v9548 = vadd.f32 %v9512, %v9525
        %v9549 = vadd.f32 %v9513, %v9525
        %v9550 = vadd.f32 %v9514, %v9525
        %v9551 = vadd.f32 %v9515, %v9525
        %v9552 = vadd.f32 %v9516, %v9525
        %v9553 = vadd.f32 %v9517, %v9525
        %v9554 = vadd.f32 %v9518, %v9525
        %v9555 = vadd.f32 %v9519, %v9525
        %v9556 = vadd.f32 %v9520, %v9525
        %v9557 = vadd.f32 %v9521, %v9525
        %v9558 = vadd.f32 %v9522, %v9525
        %v9559 = vadd.f32 %v9527, %v9528
        %v9560 = vadd.f32 %v9559, %v9529
        %v9561 = vadd.f32 %v9560, %v9530
        %v9562 = vadd.f32 %v9561, %v9531
        %v9563 = vadd.f32 %v9562, %v9532
        %v9564 = vadd.f32 %v9563, %v9533
        %v9565 = vadd.f32 %v9564, %v9534
        %v9566 = vadd.f32 %v9565, %v9535
        %v9567 = vadd.f32 %v9566, %v9536
        %v9568 = vadd.f32 %v9567, %v9537
        %v9569 = vadd.f32 %v9568, %v9538
        %v9570 = vadd.f32 %v9569, %v9539
        %v9571 = vadd.f32 %v9570, %v9540
        %v9572 = vadd.f32 %v9571, %v9541
        %v9573 = vadd.f32 %v9572, %v9542
        %v9574 = vadd.f32 %v9573, %v9543
        %v9575 = vadd.f32 %v9574, %v9544
        %v9576 = vadd.f32 %v9575, %v9545
        %v9577 = vadd.f32 %v9576, %v9546
        %v9578 = vadd.f32 %v9577, %v9547
        %v9579 = vadd.f32 %v9578, %v9548
        %v9580 = vadd.f32 %v9579, %v9549
        %v9581 = vadd.f32 %v9580, %v9550
        %v9582 = vadd.f32 %v9581, %v9551
        %v9583 = vadd.f32 %v9582, %v9552
        %v9584 = vadd.f32 %v9583, %v9553
        %v9585 = vadd.f32 %v9584, %v9554
        %v9586 = vadd.f32 %v9585, %v9555
        %v9587 = vadd.f32 %v9586, %v9556
        %v9588 = vadd.f32 %v9587, %v9557
        %v9589 = vadd.f32 %v9588, %v9558
        %v9590 = vrot.slane %v9589, 4
        %v9591 = vadd.f32 %v9589, %v9590
        %v9592 = vrot.slane %v9591, 2
        %v9593 = vadd.f32 %v9591, %v9592
        %v9594 = vrot.slane %v9593, 1
        %v9595 = vadd.f32 %v9593, %v9594
        %v9596 = vrcp.pop 256.0
        %v9597 = vmul.f32 256.0, %v9596
        %v9598 = vsub.f32 1.0, %v9597
        %v9599 = vmul.f32 %v9596, %v9598
        %v9600 = vadd.f32 %v9596, %v9599
        %vm9601 = vweird.f32 %v9596
        %v9602 = vsel %vm9601, %v9596, %v9600
        %v9603 = vmul.f32 %v9595, %v9602
        %v9604 = vpack.c.bf16 %v9603, %v9603
        %v9605 = vld [vmem:[%s5] sm:$0xf]
        %v9606 = vld [vmem:[%s5 + $0x4] sm:$0xf]
        %v9607 = vld [vmem:[%s5 + $0x8] sm:$0xf]
        %v9608 = vld [vmem:[%s5 + $0xc] sm:$0xf]
        %v9609 = vld [vmem:[%s5 + $0x10] sm:$0xf]
        %v9610 = vld [vmem:[%s5 + $0x14] sm:$0xf]
        %v9611 = vld [vmem:[%s5 + $0x18] sm:$0xf]
        %v9612 = vld [vmem:[%s5 + $0x1c] sm:$0xf]
        %v9613 = vld [vmem:[%s5 + $0x20] sm:$0xf]
        %v9614 = vld [vmem:[%s5 + $0x24] sm:$0xf]
        %v9615 = vld [vmem:[%s5 + $0x28] sm:$0xf]
        %v9616 = vld [vmem:[%s5 + $0x2c] sm:$0xf]
        %v9617 = vld [vmem:[%s5 + $0x30] sm:$0xf]
        %v9618 = vld [vmem:[%s5 + $0x34] sm:$0xf]
        %v9619 = vld [vmem:[%s5 + $0x38] sm:$0xf]
        %v9620 = vld [vmem:[%s5 + $0x3c] sm:$0xf]
        %v9637 = vunpack.c.l.b16 %v9605
        %v9638 = vunpack.c.l.b16 %v9606
        %v9639 = vunpack.c.l.b16 %v9607
        %v9640 = vunpack.c.l.b16 %v9608
        %v9641 = vunpack.c.l.b16 %v9609
        %v9642 = vunpack.c.l.b16 %v9610
        %v9643 = vunpack.c.l.b16 %v9611
        %v9644 = vunpack.c.l.b16 %v9612
        %v9645 = vunpack.c.l.b16 %v9613
        %v9646 = vunpack.c.l.b16 %v9614
        %v9647 = vunpack.c.l.b16 %v9615
        %v9648 = vunpack.c.l.b16 %v9616
        %v9649 = vunpack.c.l.b16 %v9617
        %v9650 = vunpack.c.l.b16 %v9618
        %v9651 = vunpack.c.l.b16 %v9619
        %v9652 = vunpack.c.l.b16 %v9620
        %v9653 = vpack.c.b16 %v9638, %v9637
        %v9654 = vpack.c.b16 %v9640, %v9639
        %v9655 = vpack.c.b16 %v9642, %v9641
        %v9656 = vpack.c.b16 %v9644, %v9643
        %v9657 = vpack.c.b16 %v9646, %v9645
        %v9658 = vpack.c.b16 %v9648, %v9647
        %v9659 = vpack.c.b16 %v9650, %v9649
        %v9660 = vpack.c.b16 %v9652, %v9651
        %9669 = vmatpush.bf16.msra.mxu0 %v9660
        %9670 = vmatpush.bf16.msra.mxu0 %v9659
        %9671 = vmatpush.bf16.msra.mxu0 %v9658
        %9672 = vmatpush.bf16.msra.mxu0 %v9657
        %9673 = vmatpush.bf16.msra.mxu0 %v9656
        %9674 = vmatpush.bf16.msra.mxu0 %v9655
        %9675 = vmatpush.bf16.msra.mxu0 %v9654
        %9676 = vmatpush.bf16.msra.mxu0 %v9653
        %9677 = vmatmul.bf16.gmra.mxu0 %v9604
        %v9678 = vpop.f32.mrf.mxu0
        %v9679 = vadd.f32 0.0, %v9678
        %v9680 = vpop.f32.mrf.mxu0
        %9681 = vdwg.mxu0
        %v9682 = vmax.f32 %v9679, 0.0
        %v9683 = vpack.c.bf16 %v9682, %v9682
        %v9684 = vld [vmem:[%s6] sm:$0xf]
        %vm9685 = vcmask 64512
        %v9687 = vsel %vm9685, %v9683, 0
        %vm9689 = vcmask 1043456
        %v9691 = vsel %vm9689, %v9684, 0
        %9693 = vmatpush.bf16.msra.mxu0 0
        %9694 = vmatpush.bf16.msra.mxu0 0
        %9695 = vmatpush.bf16.msra.mxu0 0
        %9696 = vmatpush.bf16.msra.mxu0 0
        %9697 = vmatpush.bf16.msra.mxu0 0
        %9698 = vmatpush.bf16.msra.mxu0 0
        %9699 = vmatpush.bf16.msra.mxu0 0
        %9700 = vmatpush.bf16.msra.mxu0 %v9691
        %9701 = vmatmul.bf16.gmra.mxu0 %v9687
        %v9702 = vpop.f32.mrf.mxu0
        %v9703 = vadd.f32 0.0, %v9702
        %v9704 = vpop.f32.mrf.mxu0
        %9705 = vdwg.mxu0
        %v9706 = vsub.f32 0.0, %v9703
        %v9707 = vmul.f32 %v9706, 1.442695
        %v9708 = vpow.pop %v9707
        %v9709 = vadd.f32 %v9708, 1.0
        %v9710 = vrcp.pop %v9709
        %v9711 = vmul.f32 %v9709, %v9710
        %v9712 = vsub.f32 1.0, %v9711
        %v9713 = vmul.f32 %v9710, %v9712
        %v9714 = vadd.f32 %v9710, %v9713
        %vm9715 = vweird.f32 %v9709
        %vm9716 = vweird.f32 %v9710
        %vm9717 = vmor %vm9715, %vm9716
        %v9718 = vsel %vm9717, %v9710, %v9714
        %v9719 = vand.u32 2147483647, %v9709
        %vm9720 = vcmp.eq.f32.partialorder %v9719, 8.507059e+37
        %v9721 = vand.u32 %v9709, 2147483648
        %v9722 = vor.u32 1.1754944e-38, %v9721
        %v9723 = vsel %vm9720, %v9722, %v9718
        %v9724 = vmul.f32 1.0, %v9723
        %v9725 = vperm.slane %v9724, 0
        %v9726 = vmul.f32 %v9527, %v9725
        %v9727 = vmul.f32 %v9528, %v9725
        %v9728 = vmul.f32 %v9529, %v9725
        %v9729 = vmul.f32 %v9530, %v9725
        %v9730 = vmul.f32 %v9531, %v9725
        %v9731 = vmul.f32 %v9532, %v9725
        %v9732 = vmul.f32 %v9533, %v9725
        %v9733 = vmul.f32 %v9534, %v9725
        %v9734 = vmul.f32 %v9535, %v9725
        %v9735 = vmul.f32 %v9536, %v9725
        %v9736 = vmul.f32 %v9537, %v9725
        %v9737 = vmul.f32 %v9538, %v9725
        %v9738 = vmul.f32 %v9539, %v9725
        %v9739 = vmul.f32 %v9540, %v9725
        %v9740 = vmul.f32 %v9541, %v9725
        %v9741 = vmul.f32 %v9542, %v9725
        %v9742 = vmul.f32 %v9543, %v9725
        %v9743 = vmul.f32 %v9544, %v9725
        %v9744 = vmul.f32 %v9545, %v9725
        %v9745 = vmul.f32 %v9546, %v9725
        %v9746 = vmul.f32 %v9547, %v9725
        %v9747 = vmul.f32 %v9548, %v9725
        %v9748 = vmul.f32 %v9549, %v9725
        %v9749 = vmul.f32 %v9550, %v9725
        %v9750 = vmul.f32 %v9551, %v9725
        %v9751 = vmul.f32 %v9552, %v9725
        %v9752 = vmul.f32 %v9553, %v9725
        %v9753 = vmul.f32 %v9554, %v9725
        %v9754 = vmul.f32 %v9555, %v9725
        %v9755 = vmul.f32 %v9556, %v9725
        %v9756 = vmul.f32 %v9557, %v9725
        %v9757 = vmul.f32 %v9558, %v9725
        %v9758 = vld [vmem:[%s427] sm:$0xf]
        %v9759 = vld [vmem:[%s427 + $0x4] sm:$0xf]
        %v9760 = vld [vmem:[%s427 + $0x8] sm:$0xf]
        %v9761 = vld [vmem:[%s427 + $0xc] sm:$0xf]
        %v9762 = vld [vmem:[%s427 + $0x10] sm:$0xf]
        %v9763 = vld [vmem:[%s427 + $0x14] sm:$0xf]
        %v9764 = vld [vmem:[%s427 + $0x18] sm:$0xf]
        %v9765 = vld [vmem:[%s427 + $0x1c] sm:$0xf]
        %v9766 = vld [vmem:[%s427 + $0x20] sm:$0xf]
        %v9767 = vld [vmem:[%s427 + $0x24] sm:$0xf]
        %v9768 = vld [vmem:[%s427 + $0x28] sm:$0xf]
        %v9769 = vld [vmem:[%s427 + $0x2c] sm:$0xf]
        %v9770 = vld [vmem:[%s427 + $0x30] sm:$0xf]
        %v9771 = vld [vmem:[%s427 + $0x34] sm:$0xf]
        %v9772 = vld [vmem:[%s427 + $0x38] sm:$0xf]
        %v9773 = vld [vmem:[%s427 + $0x3c] sm:$0xf]
        %v9774 = vld [vmem:[%s427 + $0x40] sm:$0xf]
        %v9775 = vld [vmem:[%s427 + $0x44] sm:$0xf]
        %v9776 = vld [vmem:[%s427 + $0x48] sm:$0xf]
        %v9777 = vld [vmem:[%s427 + $0x4c] sm:$0xf]
        %v9778 = vld [vmem:[%s427 + $0x50] sm:$0xf]
        %v9779 = vld [vmem:[%s427 + $0x54] sm:$0xf]
        %v9780 = vld [vmem:[%s427 + $0x58] sm:$0xf]
        %v9781 = vld [vmem:[%s427 + $0x5c] sm:$0xf]
        %v9782 = vld [vmem:[%s427 + $0x60] sm:$0xf]
        %v9783 = vld [vmem:[%s427 + $0x64] sm:$0xf]
        %v9784 = vld [vmem:[%s427 + $0x68] sm:$0xf]
        %v9785 = vld [vmem:[%s427 + $0x6c] sm:$0xf]
        %v9786 = vld [vmem:[%s427 + $0x70] sm:$0xf]
        %v9787 = vld [vmem:[%s427 + $0x74] sm:$0xf]
        %v9788 = vld [vmem:[%s427 + $0x78] sm:$0xf]
        %v9789 = vld [vmem:[%s427 + $0x7c] sm:$0xf]
        %v9790 = vld [vmem:[%s4] sm:$0xf]
        %v9791 = vld [vmem:[%s4 + $0x4] sm:$0xf]
        %v9792 = vld [vmem:[%s4 + $0x8] sm:$0xf]
        %v9793 = vld [vmem:[%s4 + $0xc] sm:$0xf]
        %v9794 = vld [vmem:[%s4 + $0x10] sm:$0xf]
        %v9795 = vld [vmem:[%s4 + $0x14] sm:$0xf]
        %v9796 = vld [vmem:[%s4 + $0x18] sm:$0xf]
        %v9797 = vld [vmem:[%s4 + $0x1c] sm:$0xf]
        %v9798 = vld [vmem:[%s4 + $0x20] sm:$0xf]
        %v9799 = vld [vmem:[%s4 + $0x24] sm:$0xf]
        %v9800 = vld [vmem:[%s4 + $0x28] sm:$0xf]
        %v9801 = vld [vmem:[%s4 + $0x2c] sm:$0xf]
        %v9802 = vld [vmem:[%s4 + $0x30] sm:$0xf]
        %v9803 = vld [vmem:[%s4 + $0x34] sm:$0xf]
        %v9804 = vld [vmem:[%s4 + $0x38] sm:$0xf]
        %v9805 = vld [vmem:[%s4 + $0x3c] sm:$0xf]
        %v9806 = vld [vmem:[%s10] sm:$0x1]
        %v9808 = vperm.slane %v9806, 0
        %v9842 = vunpack.c.l.b16 %v9758
        %v9843 = vunpack.c.l.b16 %v9759
        %v9844 = vunpack.c.l.b16 %v9760
        %v9845 = vunpack.c.l.b16 %v9761
        %v9846 = vunpack.c.l.b16 %v9762
        %v9847 = vunpack.c.l.b16 %v9763
        %v9848 = vunpack.c.l.b16 %v9764
        %v9849 = vunpack.c.l.b16 %v9765
        %v9850 = vunpack.c.l.b16 %v9766
        %v9851 = vunpack.c.l.b16 %v9767
        %v9852 = vunpack.c.l.b16 %v9768
        %v9853 = vunpack.c.l.b16 %v9769
        %v9854 = vunpack.c.l.b16 %v9770
        %v9855 = vunpack.c.l.b16 %v9771
        %v9856 = vunpack.c.l.b16 %v9772
        %v9857 = vunpack.c.l.b16 %v9773
        %v9858 = vunpack.c.l.b16 %v9774
        %v9859 = vunpack.c.l.b16 %v9775
        %v9860 = vunpack.c.l.b16 %v9776
        %v9861 = vunpack.c.l.b16 %v9777
        %v9862 = vunpack.c.l.b16 %v9778
        %v9863 = vunpack.c.l.b16 %v9779
        %v9864 = vunpack.c.l.b16 %v9780
        %v9865 = vunpack.c.l.b16 %v9781
        %v9866 = vunpack.c.l.b16 %v9782
        %v9867 = vunpack.c.l.b16 %v9783
        %v9868 = vunpack.c.l.b16 %v9784
        %v9869 = vunpack.c.l.b16 %v9785
        %v9870 = vunpack.c.l.b16 %v9786
        %v9871 = vunpack.c.l.b16 %v9787
        %v9872 = vunpack.c.l.b16 %v9788
        %v9873 = vunpack.c.l.b16 %v9789
        %v9874 = vpack.c.b16 %v9843, %v9842
        %v9875 = vpack.c.b16 %v9845, %v9844
        %v9876 = vpack.c.b16 %v9847, %v9846
        %v9877 = vpack.c.b16 %v9849, %v9848
        %v9878 = vpack.c.b16 %v9851, %v9850
        %v9879 = vpack.c.b16 %v9853, %v9852
        %v9880 = vpack.c.b16 %v9855, %v9854
        %v9881 = vpack.c.b16 %v9857, %v9856
        %v9882 = vpack.c.b16 %v9859, %v9858
        %v9883 = vpack.c.b16 %v9861, %v9860
        %v9884 = vpack.c.b16 %v9863, %v9862
        %v9885 = vpack.c.b16 %v9865, %v9864
        %v9886 = vpack.c.b16 %v9867, %v9866
        %v9887 = vpack.c.b16 %v9869, %v9868
        %v9888 = vpack.c.b16 %v9871, %v9870
        %v9889 = vpack.c.b16 %v9873, %v9872
        %v9922 = vunpack.c.l.b16 %v9790
        %v9923 = vunpack.c.l.b16 %v9791
        %v9924 = vunpack.c.l.b16 %v9792
        %v9925 = vunpack.c.l.b16 %v9793
        %v9926 = vunpack.c.l.b16 %v9794
        %v9927 = vunpack.c.l.b16 %v9795
        %v9928 = vunpack.c.l.b16 %v9796
        %v9929 = vunpack.c.l.b16 %v9797
        %v9930 = vunpack.c.l.b16 %v9798
        %v9931 = vunpack.c.l.b16 %v9799
        %v9932 = vunpack.c.l.b16 %v9800
        %v9933 = vunpack.c.l.b16 %v9801
        %v9934 = vunpack.c.l.b16 %v9802
        %v9935 = vunpack.c.l.b16 %v9803
        %v9936 = vunpack.c.l.b16 %v9804
        %v9937 = vunpack.c.l.b16 %v9805
        %v9938 = vpack.c.b16 %v9923, %v9922
        %v9939 = vpack.c.b16 %v9925, %v9924
        %v9940 = vpack.c.b16 %v9927, %v9926
        %v9941 = vpack.c.b16 %v9929, %v9928
        %v9942 = vpack.c.b16 %v9931, %v9930
        %v9943 = vpack.c.b16 %v9933, %v9932
        %v9944 = vpack.c.b16 %v9935, %v9934
        %v9945 = vpack.c.b16 %v9937, %v9936
        %9954 = vmatpush.bf16.msra.mxu0 %v9945
        %9955 = vmatpush.bf16.msra.mxu0 %v9944
        %9956 = vmatpush.bf16.msra.mxu0 %v9943
        %9957 = vmatpush.bf16.msra.mxu0 %v9942
        %9958 = vmatpush.bf16.msra.mxu0 %v9941
        %9959 = vmatpush.bf16.msra.mxu0 %v9940
        %9960 = vmatpush.bf16.msra.mxu0 %v9939
        %9961 = vmatpush.bf16.msra.mxu0 %v9938
        %9962 = vmatmul.bf16.gmra.mxu0 %v9874
        %v9963 = vpop.f32.mrf.mxu0
        %v9964 = vadd.f32 %v9808, %v9963
        %v9965 = vpop.f32.mrf.mxu0
        %v9966 = vadd.f32 %v9808, %v9965
        %9967 = vmatmul.bf16.gmra.mxu0 %v9875
        %v9968 = vpop.f32.mrf.mxu0
        %v9969 = vadd.f32 %v9808, %v9968
        %v9970 = vpop.f32.mrf.mxu0
        %v9971 = vadd.f32 %v9808, %v9970
        %9972 = vmatmul.bf16.gmra.mxu0 %v9876
        %v9973 = vpop.f32.mrf.mxu0
        %v9974 = vadd.f32 %v9808, %v9973
        %v9975 = vpop.f32.mrf.mxu0
        %v9976 = vadd.f32 %v9808, %v9975
        %9977 = vmatmul.bf16.gmra.mxu0 %v9877
        %v9978 = vpop.f32.mrf.mxu0
        %v9979 = vadd.f32 %v9808, %v9978
        %v9980 = vpop.f32.mrf.mxu0
        %v9981 = vadd.f32 %v9808, %v9980
        %9982 = vmatmul.bf16.gmra.mxu0 %v9878
        %v9983 = vpop.f32.mrf.mxu0
        %v9984 = vadd.f32 %v9808, %v9983
        %v9985 = vpop.f32.mrf.mxu0
        %v9986 = vadd.f32 %v9808, %v9985
        %9987 = vmatmul.bf16.gmra.mxu0 %v9879
        %v9988 = vpop.f32.mrf.mxu0
        %v9989 = vadd.f32 %v9808, %v9988
        %v9990 = vpop.f32.mrf.mxu0
        %v9991 = vadd.f32 %v9808, %v9990
        %9992 = vmatmul.bf16.gmra.mxu0 %v9880
        %v9993 = vpop.f32.mrf.mxu0
        %v9994 = vadd.f32 %v9808, %v9993
        %v9995 = vpop.f32.mrf.mxu0
        %v9996 = vadd.f32 %v9808, %v9995
        %9997 = vmatmul.bf16.gmra.mxu0 %v9881
        %v9998 = vpop.f32.mrf.mxu0
        %v9999 = vadd.f32 %v9808, %v9998
        %v10000 = vpop.f32.mrf.mxu0
        %v10001 = vadd.f32 %v9808, %v10000
        %10002 = vmatmul.bf16.gmra.mxu0 %v9882
        %v10003 = vpop.f32.mrf.mxu0
        %v10004 = vadd.f32 %v9808, %v10003
        %v10005 = vpop.f32.mrf.mxu0
        %v10006 = vadd.f32 %v9808, %v10005
        %10007 = vmatmul.bf16.gmra.mxu0 %v9883
        %v10008 = vpop.f32.mrf.mxu0
        %v10009 = vadd.f32 %v9808, %v10008
        %v10010 = vpop.f32.mrf.mxu0
        %v10011 = vadd.f32 %v9808, %v10010
        %10012 = vmatmul.bf16.gmra.mxu0 %v9884
        %v10013 = vpop.f32.mrf.mxu0
        %v10014 = vadd.f32 %v9808, %v10013
        %v10015 = vpop.f32.mrf.mxu0
        %v10016 = vadd.f32 %v9808, %v10015
        %10017 = vmatmul.bf16.gmra.mxu0 %v9885
        %v10018 = vpop.f32.mrf.mxu0
        %v10019 = vadd.f32 %v9808, %v10018
        %v10020 = vpop.f32.mrf.mxu0
        %v10021 = vadd.f32 %v9808, %v10020
        %10022 = vmatmul.bf16.gmra.mxu0 %v9886
        %v10023 = vpop.f32.mrf.mxu0
        %v10024 = vadd.f32 %v9808, %v10023
        %v10025 = vpop.f32.mrf.mxu0
        %v10026 = vadd.f32 %v9808, %v10025
        %10027 = vmatmul.bf16.gmra.mxu0 %v9887
        %v10028 = vpop.f32.mrf.mxu0
        %v10029 = vadd.f32 %v9808, %v10028
        %v10030 = vpop.f32.mrf.mxu0
        %v10031 = vadd.f32 %v9808, %v10030
        %10032 = vmatmul.bf16.gmra.mxu0 %v9888
        %v10033 = vpop.f32.mrf.mxu0
        %v10034 = vadd.f32 %v9808, %v10033
        %v10035 = vpop.f32.mrf.mxu0
        %v10036 = vadd.f32 %v9808, %v10035
        %10037 = vmatmul.bf16.gmra.mxu0 %v9889
        %v10038 = vpop.f32.mrf.mxu0
        %v10039 = vadd.f32 %v9808, %v10038
        %v10040 = vpop.f32.mrf.mxu0
        %v10041 = vadd.f32 %v9808, %v10040
        %10042 = vdwg.mxu0
        %v10043 = vadd.f32 %v9964, %v9726
        %v10044 = vadd.f32 %v9966, %v9727
        %v10045 = vadd.f32 %v9969, %v9728
        %v10046 = vadd.f32 %v9971, %v9729
        %v10047 = vadd.f32 %v9974, %v9730
        %v10048 = vadd.f32 %v9976, %v9731
        %v10049 = vadd.f32 %v9979, %v9732
        %v10050 = vadd.f32 %v9981, %v9733
        %v10051 = vadd.f32 %v9984, %v9734
        %v10052 = vadd.f32 %v9986, %v9735
        %v10053 = vadd.f32 %v9989, %v9736
        %v10054 = vadd.f32 %v9991, %v9737
        %v10055 = vadd.f32 %v9994, %v9738
        %v10056 = vadd.f32 %v9996, %v9739
        %v10057 = vadd.f32 %v9999, %v9740
        %v10058 = vadd.f32 %v10001, %v9741
        %v10059 = vadd.f32 %v10004, %v9742
        %v10060 = vadd.f32 %v10006, %v9743
        %v10061 = vadd.f32 %v10009, %v9744
        %v10062 = vadd.f32 %v10011, %v9745
        %v10063 = vadd.f32 %v10014, %v9746
        %v10064 = vadd.f32 %v10016, %v9747
        %v10065 = vadd.f32 %v10019, %v9748
        %v10066 = vadd.f32 %v10021, %v9749
        %v10067 = vadd.f32 %v10024, %v9750
        %v10068 = vadd.f32 %v10026, %v9751
        %v10069 = vadd.f32 %v10029, %v9752
        %v10070 = vadd.f32 %v10031, %v9753
        %v10071 = vadd.f32 %v10034, %v9754
        %v10072 = vadd.f32 %v10036, %v9755
        %v10073 = vadd.f32 %v10039, %v9756
        %v10074 = vadd.f32 %v10041, %v9757
        %10075 = vst [vmem:[%s481] sm:$0xff] %v10043
        %10076 = vst [vmem:[%s481 + $0x8] sm:$0xff] %v10044
        %10077 = vst [vmem:[%s481 + $0x10] sm:$0xff] %v10045
        %10078 = vst [vmem:[%s481 + $0x18] sm:$0xff] %v10046
        %10079 = vst [vmem:[%s481 + $0x20] sm:$0xff] %v10047
        %10080 = vst [vmem:[%s481 + $0x28] sm:$0xff] %v10048
        %10081 = vst [vmem:[%s481 + $0x30] sm:$0xff] %v10049
        %10082 = vst [vmem:[%s481 + $0x38] sm:$0xff] %v10050
        %10083 = vst [vmem:[%s481 + $0x40] sm:$0xff] %v10051
        %10084 = vst [vmem:[%s481 + $0x48] sm:$0xff] %v10052
        %10085 = vst [vmem:[%s481 + $0x50] sm:$0xff] %v10053
        %10086 = vst [vmem:[%s481 + $0x58] sm:$0xff] %v10054
        %10087 = vst [vmem:[%s481 + $0x60] sm:$0xff] %v10055
        %10088 = vst [vmem:[%s481 + $0x68] sm:$0xff] %v10056
        %10089 = vst [vmem:[%s481 + $0x70] sm:$0xff] %v10057
        %10090 = vst [vmem:[%s481 + $0x78] sm:$0xff] %v10058
        %10091 = vst [vmem:[%s481 + $0x80] sm:$0xff] %v10059
        %10092 = vst [vmem:[%s481 + $0x88] sm:$0xff] %v10060
        %10093 = vst [vmem:[%s481 + $0x90] sm:$0xff] %v10061
        %10094 = vst [vmem:[%s481 + $0x98] sm:$0xff] %v10062
        %10095 = vst [vmem:[%s481 + $0xa0] sm:$0xff] %v10063
        %10096 = vst [vmem:[%s481 + $0xa8] sm:$0xff] %v10064
        %10097 = vst [vmem:[%s481 + $0xb0] sm:$0xff] %v10065
        %10098 = vst [vmem:[%s481 + $0xb8] sm:$0xff] %v10066
        %10099 = vst [vmem:[%s481 + $0xc0] sm:$0xff] %v10067
        %10100 = vst [vmem:[%s481 + $0xc8] sm:$0xff] %v10068
        %10101 = vst [vmem:[%s481 + $0xd0] sm:$0xff] %v10069
        %10102 = vst [vmem:[%s481 + $0xd8] sm:$0xff] %v10070
        %10103 = vst [vmem:[%s481 + $0xe0] sm:$0xff] %v10071
        %10104 = vst [vmem:[%s481 + $0xe8] sm:$0xff] %v10072
        %10105 = vst [vmem:[%s481 + $0xf0] sm:$0xff] %v10073
        %10106 = vst [vmem:[%s481 + $0xf8] sm:$0xff] %v10074
        %s10107 = sand.u32 %s281, 1
        %s10108 = scalar_lea.sflag [#allocation5], %s10107
        %s10109 = sand.u32 %s281, 1
        %s10110 = smul.addr %s10109, 256
        %s10111 = scalar_lea.vmem [#allocation11], %s10110
        // Predicated region
        $region81: #{tpu_custom_call.1} parent=63 // pred_check
          %p10112 = pneg %p291
        $region82: #{tpu_custom_call.1} parent=63 // pred_check_branch
          %10114 = sbr.rel (%p10112) target = $region84
        $region83: #{tpu_custom_call.1} parent=63 // pred_region
          %10116 = vsyncadd %s10108, 0
          %s10117 = smul.addr %s32, 32
          %s10118 = smul.addr %s10117, 8
          %s10119 = scalar_lea.hbm %s11, %s10118
          %s10120 = sshll.u32 %s10111, 4
          %s10121 = int_to_ptr.vmem [resolvable:$true] %s10120
          %s10122 = sshll.u32 %s10119, 4
          %s10123 = int_to_ptr.hbm [resolvable:$true] %s10122
          %10128 = dma.vmem_to_hbm [thread:$0]  %s10121, 4096, %s10123, %s10108, 128, 128, 8
        $region84: #{tpu_custom_call.1} parent=63 // pred_fallthru
          _
      $region64: #{tpu_custom_call.1} parent=5 // pred_fallthru
        _
      %p10129 = scmp.le.s32.totalorder 2, %s27
      // Predicated region
      $region85: #{tpu_custom_call.1} parent=5 // pred_check
        %p10130 = pneg %p10129
      $region86: #{tpu_custom_call.1} parent=5 // pred_check_branch
        %10132 = sbr.rel (%p10130) target = $region88
      $region87: #{tpu_custom_call.1} parent=5 // pred_region
        %s10133 = ssub.s32 %s27, 2
        // Predicated region
        $region89: #{tpu_custom_call.1} parent=87 // pred_check
          %p10134 = pneg %p297
        $region90: #{tpu_custom_call.1} parent=87 // pred_check_branch
          %10136 = sbr.rel (%p10134) target = $region92
        $region91: #{tpu_custom_call.1} parent=87 // pred_region
          %s10137 = sand.u32 %s282, 1
          %s10138 = scalar_lea.sflag [#allocation5], %s10137
          %s10139 = sand.u32 %s282, 1
          %s10140 = smul.addr %s10139, 256
          %s10141 = scalar_lea.vmem [#allocation11], %s10140
          %10143 = dma.done %s10138, 4096
        $region92: #{tpu_custom_call.1} parent=87 // pred_fallthru
          _
      $region88: #{tpu_custom_call.1} parent=5 // pred_fallthru
        _
    $region6: #{tpu_custom_call.1} parent=1 // loop_footer
      %s31 = sadd.s32 1, %s27
    $region7: #{tpu_custom_call.1} parent=1 // loop_footer_branch
      %26 = sbr.rel target = $region3
    $region8: #{tpu_custom_call.1} parent=1 // loop_exit
      _
    %10144 = vsyncpa [#allocation4], 1
    %s10145 = scalar_lea.sflag [#allocation4], 1
    %10146 = vsyncpa %s10145, 1
    %10147 = vsyncpa [#allocation7], 1
    %s10148 = scalar_lea.sflag [#allocation7], 1
    %10149 = vsyncpa %s10148, 1
    %10150 = vsyncpa [#allocation10], 1
    %10151 = vsyncpa [#allocation5], 1
    %s10152 = scalar_lea.sflag [#allocation5], 1
    %10153 = vsyncpa %s10152, 1

</llo_original>
